<compile_context>
chip_gen: v7x
topology: tpu7x:2x2x1
jax: 0.10.0
libtpu: 0.0.40
codegen_flags: <defaults>
</compile_context>

<pallas_src>
import functools

import jax
import jax.numpy as jnp
from jax import lax
from jax.experimental import pallas as pl
from jax.experimental.pallas import tpu as pltpu


def _basic_block_kernel(x_ref, w1_ref, s1_ref, t1_ref, w2_ref, s2_ref, t2_ref,
                        out_ref, rowcat_ref, y_ref, *, H, W, TM):
    """One image: relu(bn2(conv2(relu(bn1(conv1(x))))) + x), NHWC flattened to (H*W, C)."""
    HW = H * W
    C = x_ref.shape[-1]           # input channels
    CO = out_ref.shape[-1]        # output channels (== C, identity residual)
    f32 = jnp.float32

    # Halo rows of the im2col scratch (model the +/-1 padding along H):
    # rows [0, W) and [(H+1)*W, (H+2)*W) must be zero.  The interior rows are
    # fully overwritten below, so only these two small bands are cleared.
    zero_band = jnp.zeros((W, rowcat_ref.shape[-1]), rowcat_ref.dtype)
    rowcat_ref[0:W, :] = zero_band
    rowcat_ref[(H + 1) * W:(H + 2) * W, :] = zero_band

    # Per-row column index (w = flat_row % W) masks for the W halo.
    col = lax.broadcasted_iota(jnp.int32, (HW, 1), 0) % W
    not_first_col = col != 0
    not_last_col = col != (W - 1)

    def fill_rowcat(src):
        # src: (HW, C) bf16 activation.  rowcat row (kh*W + h*W + w) holds
        # [src[h+kh-1, w-1] | src[h+kh-1, w] | src[h+kh-1, w+1]] on the lane
        # axis (zeros outside the image), so conv = sum_kh dot(row slab, w[kh]).
        src32 = src.astype(f32)                      # roll on 32-bit layout
        rowcat_ref[W:W + HW, C:2 * C] = src          # kw = 1 (center), aligned store
        left = jnp.where(not_first_col, pltpu.roll(src32, shift=1, axis=0), 0.0)
        rowcat_ref[W:W + HW, 0:C] = left.astype(rowcat_ref.dtype)            # kw = 0
        right = jnp.where(not_last_col, pltpu.roll(src32, shift=HW - 1, axis=0), 0.0)
        rowcat_ref[W:W + HW, 2 * C:3 * C] = right.astype(rowcat_ref.dtype)   # kw = 2

    def conv3x3(w_ref, consume):
        # 3 wide-K (K = 3*C) MXU matmuls per M tile, taps accumulated
        # back-to-back into a register-resident f32 accumulator.
        for m in range(0, HW, TM):                   # static, HW % TM == 0
            acc = jnp.zeros((TM, CO), f32)
            for kh in range(3):
                patch = rowcat_ref[kh * W + m:kh * W + m + TM, :]   # aligned slice
                acc = acc + jnp.dot(patch, w_ref[kh],
                                    preferred_element_type=f32)
            consume(m, acc)

    # ---- conv1 + bn1 + relu -------------------------------------------------
    s1 = s1_ref[...]
    t1 = t1_ref[...]

    def store_y(m, acc):
        y = jnp.maximum(acc * s1 + t1, 0.0)
        y_ref[m:m + TM, :] = y.astype(y_ref.dtype)

    fill_rowcat(x_ref[0])
    conv3x3(w1_ref, store_y)

    # ---- conv2 + bn2 + identity residual + relu ------------------------------
    s2 = s2_ref[...]
    t2 = t2_ref[...]

    def store_out(m, acc):
        res = x_ref[0, m:m + TM, :].astype(f32)
        z = acc * s2 + t2 + res
        out_ref[0, m:m + TM, :] = jnp.maximum(z, 0.0).astype(out_ref.dtype)

    fill_rowcat(y_ref[...])
    conv3x3(w2_ref, store_out)


def _fold_bn(gamma, beta, mean, var, eps):
    # Inference-mode BatchNorm: y = x * scale + shift
    scale = gamma / jnp.sqrt(var + eps)
    shift = beta - mean * scale
    return (scale.reshape(1, -1).astype(jnp.float32),
            shift.reshape(1, -1).astype(jnp.float32))


def basic_block_forward(x_nchw, conv1_w, bn1, conv2_w, bn2, *,
                        stride=1, downsample=None, eps=1e-5):
    """BasicBlock forward.  x is NCHW (PyTorch layout), conv weights are HWIO.

    bn1/bn2 are (gamma, beta, running_mean, running_var) tuples (eval-mode BN).
    """
    # TODO(synk): stride > 1 and the downsample(x) residual branch (non-default
    # configuration) and training-mode BN batch statistics are not implemented.
    assert stride == 1 and downsample is None
    N, C, H, W = x_nchw.shape
    co = conv1_w.shape[-1]
    assert conv1_w.shape == (3, 3, C, co)
    assert conv2_w.shape == (3, 3, co, co)
    assert C == co, "identity residual requires inplanes == planes"

    # NCHW -> NHWC (channels on lanes), flattened spatial, bf16 MXU inputs.
    x = jnp.transpose(x_nchw, (0, 2, 3, 1)).reshape(N, H * W, C).astype(jnp.bfloat16)
    # (3,3,C,co) -> (3, 3*C, co): merge (kw, ci) so each kh is one wide-K matmul.
    w1 = conv1_w.reshape(3, 3 * C, co).astype(jnp.bfloat16)
    w2 = conv2_w.reshape(3, 3 * co, co).astype(jnp.bfloat16)
    s1, t1 = _fold_bn(*bn1, eps)
    s2, t2 = _fold_bn(*bn2, eps)

    hw = H * W
    TM = next((t for t in (128, 64, 32, 16, 8) if hw % t == 0), hw)

    kernel = functools.partial(_basic_block_kernel, H=H, W=W, TM=TM)

    out = pl.pallas_call(
        kernel,
        out_shape=jax.ShapeDtypeStruct((N, hw, co), x_nchw.dtype),
        grid_spec=pltpu.PrefetchScalarGridSpec(
            num_scalar_prefetch=0,
            grid=(N,),
            in_specs=[
                pl.BlockSpec((1, hw, C), lambda n: (n, 0, 0)),          # x (flat NHWC)
                pl.BlockSpec((3, 3 * C, co), lambda n: (0, 0, 0)),      # w1 (kh, 3C, co)
                pl.BlockSpec((1, co), lambda n: (0, 0)),                # bn1 scale
                pl.BlockSpec((1, co), lambda n: (0, 0)),                # bn1 shift
                pl.BlockSpec((3, 3 * co, co), lambda n: (0, 0, 0)),     # w2
                pl.BlockSpec((1, co), lambda n: (0, 0)),                # bn2 scale
                pl.BlockSpec((1, co), lambda n: (0, 0)),                # bn2 shift
            ],
            out_specs=pl.BlockSpec((1, hw, co), lambda n: (n, 0, 0)),
            scratch_shapes=[
                pltpu.VMEM(((H + 2) * hw // H, 3 * C), jnp.bfloat16)    # im2col rowcat
                if False else pltpu.VMEM(((H + 2) * W, 3 * C), jnp.bfloat16),
                pltpu.VMEM((hw, co), jnp.bfloat16),                     # relu(bn1(conv1))
            ],
        ),
        compiler_params=pltpu.CompilerParams(
            dimension_semantics=("parallel",),
        ),
    )(x, w1, s1, t1, w2, s2, t2)

    return jnp.transpose(out.reshape(N, H, W, co), (0, 3, 1, 2))  # NHWC -> NCHW


def _reference(x_nchw, conv1_w, bn1, conv2_w, bn2, eps=1e-5):
    """Plain-JAX reference using the same bf16-input / f32-accumulate convs."""
    bf16, f32 = jnp.bfloat16, jnp.float32
    x = jnp.transpose(x_nchw, (0, 2, 3, 1)).astype(bf16)
    dn = ('NHWC', 'HWIO', 'NHWC')

    def conv(z, w):
        return lax.conv_general_dilated(z.astype(bf16), w.astype(bf16), (1, 1),
                                        [(1, 1), (1, 1)], dimension_numbers=dn,
                                        preferred_element_type=f32)

    def bn(z, p):
        g, b, m, v = p
        scale = g / jnp.sqrt(v + eps)
        return z * scale + (b - m * scale)

    y = jnp.maximum(bn(conv(x, conv1_w), bn1), 0.0)
    y = bn(conv(y, conv2_w), bn2) + x.astype(f32)
    y = jnp.maximum(y, 0.0)
    return jnp.transpose(y, (0, 3, 1, 2))


if __name__ == "__main__":
    # Small, lane-aligned configuration: inplanes == planes == 128, 16x16, N=2.
    N, C, H, W = 2, 128, 16, 16

    key = jax.random.PRNGKey(0)
    k = jax.random.split(key, 11)
    x = jax.random.normal(k[0], (N, C, H, W), jnp.float32)

    fan = C * 9
    conv1_w = jax.random.normal(k[1], (3, 3, C, C), jnp.float32) * (2.0 / fan) ** 0.5
    conv2_w = jax.random.normal(k[2], (3, 3, C, C), jnp.float32) * (2.0 / fan) ** 0.5

    def bn_params(k_g, k_b, k_m, k_v):
        gamma = 1.0 + 0.1 * jax.random.normal(k_g, (C,), jnp.float32)
        beta = 0.1 * jax.random.normal(k_b, (C,), jnp.float32)
        mean = 0.05 * jax.random.normal(k_m, (C,), jnp.float32)
        var = jnp.abs(1.0 + 0.1 * jax.random.normal(k_v, (C,), jnp.float32))
        return (gamma, beta, mean, var)

    bn1 = bn_params(k[3], k[4], k[5], k[6])
    bn2 = bn_params(k[7], k[8], k[9], k[10])

    out = basic_block_forward(x, conv1_w, bn1, conv2_w, bn2)
    out = jax.block_until_ready(out)
    assert out.shape == (N, C, H, W)

    ref = _reference(x, conv1_w, bn1, conv2_w, bn2)
    if not jnp.allclose(out, ref, atol=1e-2, rtol=1e-2):
        err = jnp.max(jnp.abs(out - ref))
        raise AssertionError(f"Pallas kernel mismatch, max abs err = {err}")
    print("KERNEL_OK")
</pallas_src>

<mosaic_0001>
module attributes {stable_mosaic.version = 11 : i64} {
  func.func @_basic_block_kernel(%arg0: i32, %arg1: memref<1x256x128xbf16, #tpu.memory_space<vmem>>, %arg2: memref<3x384x128xbf16, #tpu.memory_space<vmem>>, %arg3: memref<1x128xf32, #tpu.memory_space<vmem>>, %arg4: memref<1x128xf32, #tpu.memory_space<vmem>>, %arg5: memref<3x384x128xbf16, #tpu.memory_space<vmem>>, %arg6: memref<1x128xf32, #tpu.memory_space<vmem>>, %arg7: memref<1x128xf32, #tpu.memory_space<vmem>>, %arg8: memref<1x256x128xf32, #tpu.memory_space<vmem>>, %arg9: memref<288x384xbf16, #tpu.memory_space<vmem>>, %arg10: memref<256x128xbf16, #tpu.memory_space<vmem>>) attributes {dimension_semantics = [#tpu.dimension_semantics<parallel>], iteration_bounds = array<i64: 2>, scalar_prefetch = 0 : i64, scratch_operands = 2 : i64, tpu.core_type = #tpu.core_type<tc>, window_params = [{transform_indices = @transform_0, window_bounds = array<i64: 1, 256, 128>}, {pipeline_mode = #tpu.pipeline_mode<synchronous>, transform_indices = @transform_1, window_bounds = array<i64: 3, 384, 128>}, {pipeline_mode = #tpu.pipeline_mode<synchronous>, transform_indices = @transform_2, window_bounds = array<i64: 1, 128>}, {pipeline_mode = #tpu.pipeline_mode<synchronous>, transform_indices = @transform_3, window_bounds = array<i64: 1, 128>}, {pipeline_mode = #tpu.pipeline_mode<synchronous>, transform_indices = @transform_4, window_bounds = array<i64: 3, 384, 128>}, {pipeline_mode = #tpu.pipeline_mode<synchronous>, transform_indices = @transform_5, window_bounds = array<i64: 1, 128>}, {pipeline_mode = #tpu.pipeline_mode<synchronous>, transform_indices = @transform_6, window_bounds = array<i64: 1, 128>}, {transform_indices = @transform_7, window_bounds = array<i64: 1, 256, 128>}]} {
    %cst = arith.constant 0.000000e+00 : bf16
    %0 = vector.broadcast %cst : bf16 to vector<16x384xbf16>
    %c0 = arith.constant 0 : index
    %c0_0 = arith.constant 0 : index
    %1 = vector.load %arg9[%c0, %c0_0] : memref<288x384xbf16, #tpu.memory_space<vmem>>, vector<16x384xbf16>
    tpu.vector_store %arg9[%c0, %c0_0], %0 {strides = array<i32>} : memref<288x384xbf16, #tpu.memory_space<vmem>>, vector<16x384xbf16>,
    %c272 = arith.constant 272 : index
    %c0_1 = arith.constant 0 : index
    %2 = vector.load %arg9[%c272, %c0_1] : memref<288x384xbf16, #tpu.memory_space<vmem>>, vector<16x384xbf16>
    tpu.vector_store %arg9[%c272, %c0_1], %0 {strides = array<i32>} : memref<288x384xbf16, #tpu.memory_space<vmem>>, vector<16x384xbf16>,
    %3 = tpu.iota {dimensions = array<i32: 0>} : vector<256x1xi32>
    %c16_i32 = arith.constant 16 : i32
    %c0_i32 = arith.constant 0 : i32
    %4 = arith.cmpi eq, %c16_i32, %c0_i32 : i32
    %c1_i32 = arith.constant 1 : i32
    %5 = arith.select %4, %c1_i32, %c16_i32 : i32
    %6 = vector.broadcast %5 : i32 to vector<256x1xi32>
    %7 = arith.remsi %3, %6 : vector<256x1xi32>
    %c0_i32_2 = arith.constant 0 : i32
    %8 = vector.broadcast %c0_i32_2 : i32 to vector<256x1xi32>
    %9 = arith.cmpi ne, %7, %8 : vector<256x1xi32>
    %c0_i32_3 = arith.constant 0 : i32
    %10 = vector.broadcast %c0_i32_3 : i32 to vector<256x1xi32>
    %11 = arith.cmpi slt, %7, %10 : vector<256x1xi32>
    %c0_i32_4 = arith.constant 0 : i32
    %12 = arith.cmpi slt, %5, %c0_i32_4 : i32
    %13 = vector.broadcast %12 : i1 to vector<256x1xi1>
    %14 = vector.broadcast %13 : vector<256x1xi1> to vector<256x1xi1>
    %15 = arith.xori %11, %14 : vector<256x1xi1>
    %16 = arith.andi %15, %9 : vector<256x1xi1>
    %17 = vector.broadcast %5 : i32 to vector<256x1xi32>
    %18 = arith.addi %7, %17 : vector<256x1xi32>
    %19 = arith.select %16, %18, %7 : vector<256x1xi1>, vector<256x1xi32>
    %c0_i32_5 = arith.constant 0 : i32
    %20 = vector.broadcast %c0_i32_5 : i32 to vector<256x1xi32>
    %21 = arith.cmpi ne, %19, %20 : vector<256x1xi32>
    %c15_i32 = arith.constant 15 : i32
    %22 = vector.broadcast %c15_i32 : i32 to vector<256x1xi32>
    %23 = arith.cmpi ne, %19, %22 : vector<256x1xi32>
    %c0_6 = arith.constant 0 : index
    %c0_7 = arith.constant 0 : index
    %24 = vector.load %arg3[%c0_6, %c0_7] : memref<1x128xf32, #tpu.memory_space<vmem>>, vector<1x128xf32>
    %c0_8 = arith.constant 0 : index
    %c0_9 = arith.constant 0 : index
    %25 = vector.load %arg4[%c0_8, %c0_9] : memref<1x128xf32, #tpu.memory_space<vmem>>, vector<1x128xf32>
    %c0_10 = arith.constant 0 : index
    %c0_11 = arith.constant 0 : index
    %c0_12 = arith.constant 0 : index
    %26 = vector.load %arg1[%c0_10, %c0_11, %c0_12] : memref<1x256x128xbf16, #tpu.memory_space<vmem>>, vector<1x256x128xbf16>
    %27 = vector.shape_cast %26 : vector<1x256x128xbf16> to vector<256x128xbf16>
    %28 = arith.extf %27 : vector<256x128xbf16> to vector<256x128xf32>
    %c16 = arith.constant 16 : index
    %c128 = arith.constant 128 : index
    %29 = vector.load %arg9[%c16, %c128] : memref<288x384xbf16, #tpu.memory_space<vmem>>, vector<256x128xbf16>
    tpu.vector_store %arg9[%c16, %c128], %27 {strides = array<i32>} : memref<288x384xbf16, #tpu.memory_space<vmem>>, vector<256x128xbf16>,
    %c1_i32_13 = arith.constant 1 : i32
    %30 = tpu.dynamic_rotate %28 by %c1_i32_13 dim 0 : vector<256x128xf32>, i32 -> vector<256x128xf32>
    %cst_14 = arith.constant 0.000000e+00 : f32
    %31 = vector.shape_cast %21 : vector<256x1xi1> to vector<256x1xi1>
    %32 = vector.broadcast %31 : vector<256x1xi1> to vector<256x128xi1>
    %33 = vector.broadcast %cst_14 : f32 to vector<256x128xf32>
    %34 = arith.select %32, %30, %33 : vector<256x128xi1>, vector<256x128xf32>
    %35 = arith.truncf %34 : vector<256x128xf32> to vector<256x128xbf16>
    %c16_15 = arith.constant 16 : index
    %c0_16 = arith.constant 0 : index
    %36 = vector.load %arg9[%c16_15, %c0_16] : memref<288x384xbf16, #tpu.memory_space<vmem>>, vector<256x128xbf16>
    tpu.vector_store %arg9[%c16_15, %c0_16], %35 {strides = array<i32>} : memref<288x384xbf16, #tpu.memory_space<vmem>>, vector<256x128xbf16>,
    %c255_i32 = arith.constant 255 : i32
    %37 = tpu.dynamic_rotate %28 by %c255_i32 dim 0 : vector<256x128xf32>, i32 -> vector<256x128xf32>
    %cst_17 = arith.constant 0.000000e+00 : f32
    %38 = vector.shape_cast %23 : vector<256x1xi1> to vector<256x1xi1>
    %39 = vector.broadcast %38 : vector<256x1xi1> to vector<256x128xi1>
    %40 = vector.broadcast %cst_17 : f32 to vector<256x128xf32>
    %41 = arith.select %39, %37, %40 : vector<256x128xi1>, vector<256x128xf32>
    %42 = arith.truncf %41 : vector<256x128xf32> to vector<256x128xbf16>
    %c16_18 = arith.constant 16 : index
    %c256 = arith.constant 256 : index
    %43 = vector.load %arg9[%c16_18, %c256] : memref<288x384xbf16, #tpu.memory_space<vmem>>, vector<256x128xbf16>
    tpu.vector_store %arg9[%c16_18, %c256], %42 {strides = array<i32>} : memref<288x384xbf16, #tpu.memory_space<vmem>>, vector<256x128xbf16>,
    %cst_19 = arith.constant 0.000000e+00 : f32
    %44 = vector.broadcast %cst_19 : f32 to vector<128x128xf32>
    %c0_20 = arith.constant 0 : index
    %c0_21 = arith.constant 0 : index
    %45 = vector.load %arg9[%c0_20, %c0_21] : memref<288x384xbf16, #tpu.memory_space<vmem>>, vector<128x384xbf16>
    %c0_22 = arith.constant 0 : index
    %c0_23 = arith.constant 0 : index
    %c0_24 = arith.constant 0 : index
    %46 = vector.load %arg2[%c0_22, %c0_23, %c0_24] : memref<3x384x128xbf16, #tpu.memory_space<vmem>>, vector<1x384x128xbf16>
    %47 = vector.shape_cast %46 : vector<1x384x128xbf16> to vector<384x128xbf16>
    %cst_25 = arith.constant dense<0.000000e+00> : vector<128x128xf32>
    %48 = tpu.matmul %45, %47, %cst_25 {dimension_numbers = #tpu.dot_dimension_numbers<[1], [0], [0], [1], [0, 0, 1, 1], [], []>} : vector<128x384xbf16>, vector<384x128xbf16>, vector<128x128xf32> -> vector<128x128xf32>
    %49 = arith.addf %44, %48 : vector<128x128xf32>
    %c16_26 = arith.constant 16 : index
    %c0_27 = arith.constant 0 : index
    %50 = vector.load %arg9[%c16_26, %c0_27] : memref<288x384xbf16, #tpu.memory_space<vmem>>, vector<128x384xbf16>
    %c1 = arith.constant 1 : index
    %c0_28 = arith.constant 0 : index
    %c0_29 = arith.constant 0 : index
    %51 = vector.load %arg2[%c1, %c0_28, %c0_29] : memref<3x384x128xbf16, #tpu.memory_space<vmem>>, vector<1x384x128xbf16>
    %52 = vector.shape_cast %51 : vector<1x384x128xbf16> to vector<384x128xbf16>
    %cst_30 = arith.constant dense<0.000000e+00> : vector<128x128xf32>
    %53 = tpu.matmul %50, %52, %cst_30 {dimension_numbers = #tpu.dot_dimension_numbers<[1], [0], [0], [1], [0, 0, 1, 1], [], []>} : vector<128x384xbf16>, vector<384x128xbf16>, vector<128x128xf32> -> vector<128x128xf32>
    %54 = arith.addf %49, %53 : vector<128x128xf32>
    %c32 = arith.constant 32 : index
    %c0_31 = arith.constant 0 : index
    %55 = vector.load %arg9[%c32, %c0_31] : memref<288x384xbf16, #tpu.memory_space<vmem>>, vector<128x384xbf16>
    %c2 = arith.constant 2 : index
    %c0_32 = arith.constant 0 : index
    %c0_33 = arith.constant 0 : index
    %56 = vector.load %arg2[%c2, %c0_32, %c0_33] : memref<3x384x128xbf16, #tpu.memory_space<vmem>>, vector<1x384x128xbf16>
    %57 = vector.shape_cast %56 : vector<1x384x128xbf16> to vector<384x128xbf16>
    %cst_34 = arith.constant dense<0.000000e+00> : vector<128x128xf32>
    %58 = tpu.matmul %55, %57, %cst_34 {dimension_numbers = #tpu.dot_dimension_numbers<[1], [0], [0], [1], [0, 0, 1, 1], [], []>} : vector<128x384xbf16>, vector<384x128xbf16>, vector<128x128xf32> -> vector<128x128xf32>
    %59 = arith.addf %54, %58 : vector<128x128xf32>
    %60 = vector.broadcast %24 : vector<1x128xf32> to vector<128x128xf32>
    %61 = arith.mulf %59, %60 : vector<128x128xf32>
    %62 = vector.broadcast %25 : vector<1x128xf32> to vector<128x128xf32>
    %63 = arith.addf %61, %62 : vector<128x128xf32>
    %cst_35 = arith.constant 0.000000e+00 : f32
    %64 = vector.broadcast %cst_35 : f32 to vector<128x128xf32>
    %65 = arith.maximumf %63, %64 : vector<128x128xf32>
    %66 = arith.truncf %65 : vector<128x128xf32> to vector<128x128xbf16>
    %c0_36 = arith.constant 0 : index
    %c0_37 = arith.constant 0 : index
    %67 = vector.load %arg10[%c0_36, %c0_37] : memref<256x128xbf16, #tpu.memory_space<vmem>>, vector<128x128xbf16>
    tpu.vector_store %arg10[%c0_36, %c0_37], %66 {strides = array<i32>} : memref<256x128xbf16, #tpu.memory_space<vmem>>, vector<128x128xbf16>,
    %cst_38 = arith.constant 0.000000e+00 : f32
    %68 = vector.broadcast %cst_38 : f32 to vector<128x128xf32>
    %c128_39 = arith.constant 128 : index
    %c0_40 = arith.constant 0 : index
    %69 = vector.load %arg9[%c128_39, %c0_40] : memref<288x384xbf16, #tpu.memory_space<vmem>>, vector<128x384xbf16>
    %c0_41 = arith.constant 0 : index
    %c0_42 = arith.constant 0 : index
    %c0_43 = arith.constant 0 : index
    %70 = vector.load %arg2[%c0_41, %c0_42, %c0_43] : memref<3x384x128xbf16, #tpu.memory_space<vmem>>, vector<1x384x128xbf16>
    %71 = vector.shape_cast %70 : vector<1x384x128xbf16> to vector<384x128xbf16>
    %cst_44 = arith.constant dense<0.000000e+00> : vector<128x128xf32>
    %72 = tpu.matmul %69, %71, %cst_44 {dimension_numbers = #tpu.dot_dimension_numbers<[1], [0], [0], [1], [0, 0, 1, 1], [], []>} : vector<128x384xbf16>, vector<384x128xbf16>, vector<128x128xf32> -> vector<128x128xf32>
    %73 = arith.addf %68, %72 : vector<128x128xf32>
    %c144 = arith.constant 144 : index
    %c0_45 = arith.constant 0 : index
    %74 = vector.load %arg9[%c144, %c0_45] : memref<288x384xbf16, #tpu.memory_space<vmem>>, vector<128x384xbf16>
    %c1_46 = arith.constant 1 : index
    %c0_47 = arith.constant 0 : index
    %c0_48 = arith.constant 0 : index
    %75 = vector.load %arg2[%c1_46, %c0_47, %c0_48] : memref<3x384x128xbf16, #tpu.memory_space<vmem>>, vector<1x384x128xbf16>
    %76 = vector.shape_cast %75 : vector<1x384x128xbf16> to vector<384x128xbf16>
    %cst_49 = arith.constant dense<0.000000e+00> : vector<128x128xf32>
    %77 = tpu.matmul %74, %76, %cst_49 {dimension_numbers = #tpu.dot_dimension_numbers<[1], [0], [0], [1], [0, 0, 1, 1], [], []>} : vector<128x384xbf16>, vector<384x128xbf16>, vector<128x128xf32> -> vector<128x128xf32>
    %78 = arith.addf %73, %77 : vector<128x128xf32>
    %c160 = arith.constant 160 : index
    %c0_50 = arith.constant 0 : index
    %79 = vector.load %arg9[%c160, %c0_50] : memref<288x384xbf16, #tpu.memory_space<vmem>>, vector<128x384xbf16>
    %c2_51 = arith.constant 2 : index
    %c0_52 = arith.constant 0 : index
    %c0_53 = arith.constant 0 : index
    %80 = vector.load %arg2[%c2_51, %c0_52, %c0_53] : memref<3x384x128xbf16, #tpu.memory_space<vmem>>, vector<1x384x128xbf16>
    %81 = vector.shape_cast %80 : vector<1x384x128xbf16> to vector<384x128xbf16>
    %cst_54 = arith.constant dense<0.000000e+00> : vector<128x128xf32>
    %82 = tpu.matmul %79, %81, %cst_54 {dimension_numbers = #tpu.dot_dimension_numbers<[1], [0], [0], [1], [0, 0, 1, 1], [], []>} : vector<128x384xbf16>, vector<384x128xbf16>, vector<128x128xf32> -> vector<128x128xf32>
    %83 = arith.addf %78, %82 : vector<128x128xf32>
    %84 = vector.broadcast %24 : vector<1x128xf32> to vector<128x128xf32>
    %85 = arith.mulf %83, %84 : vector<128x128xf32>
    %86 = vector.broadcast %25 : vector<1x128xf32> to vector<128x128xf32>
    %87 = arith.addf %85, %86 : vector<128x128xf32>
    %cst_55 = arith.constant 0.000000e+00 : f32
    %88 = vector.broadcast %cst_55 : f32 to vector<128x128xf32>
    %89 = arith.maximumf %87, %88 : vector<128x128xf32>
    %90 = arith.truncf %89 : vector<128x128xf32> to vector<128x128xbf16>
    %c128_56 = arith.constant 128 : index
    %c0_57 = arith.constant 0 : index
    %91 = vector.load %arg10[%c128_56, %c0_57] : memref<256x128xbf16, #tpu.memory_space<vmem>>, vector<128x128xbf16>
    tpu.vector_store %arg10[%c128_56, %c0_57], %90 {strides = array<i32>} : memref<256x128xbf16, #tpu.memory_space<vmem>>, vector<128x128xbf16>,
    %c0_58 = arith.constant 0 : index
    %c0_59 = arith.constant 0 : index
    %92 = vector.load %arg6[%c0_58, %c0_59] : memref<1x128xf32, #tpu.memory_space<vmem>>, vector<1x128xf32>
    %c0_60 = arith.constant 0 : index
    %c0_61 = arith.constant 0 : index
    %93 = vector.load %arg7[%c0_60, %c0_61] : memref<1x128xf32, #tpu.memory_space<vmem>>, vector<1x128xf32>
    %c0_62 = arith.constant 0 : index
    %c0_63 = arith.constant 0 : index
    %94 = vector.load %arg10[%c0_62, %c0_63] : memref<256x128xbf16, #tpu.memory_space<vmem>>, vector<256x128xbf16>
    %95 = arith.extf %94 : vector<256x128xbf16> to vector<256x128xf32>
    %c16_64 = arith.constant 16 : index
    %c128_65 = arith.constant 128 : index
    %96 = vector.load %arg9[%c16_64, %c128_65] : memref<288x384xbf16, #tpu.memory_space<vmem>>, vector<256x128xbf16>
    tpu.vector_store %arg9[%c16_64, %c128_65], %94 {strides = array<i32>} : memref<288x384xbf16, #tpu.memory_space<vmem>>, vector<256x128xbf16>,
    %c1_i32_66 = arith.constant 1 : i32
    %97 = tpu.dynamic_rotate %95 by %c1_i32_66 dim 0 : vector<256x128xf32>, i32 -> vector<256x128xf32>
    %cst_67 = arith.constant 0.000000e+00 : f32
    %98 = vector.shape_cast %21 : vector<256x1xi1> to vector<256x1xi1>
    %99 = vector.broadcast %98 : vector<256x1xi1> to vector<256x128xi1>
    %100 = vector.broadcast %cst_67 : f32 to vector<256x128xf32>
    %101 = arith.select %99, %97, %100 : vector<256x128xi1>, vector<256x128xf32>
    %102 = arith.truncf %101 : vector<256x128xf32> to vector<256x128xbf16>
    %c16_68 = arith.constant 16 : index
    %c0_69 = arith.constant 0 : index
    %103 = vector.load %arg9[%c16_68, %c0_69] : memref<288x384xbf16, #tpu.memory_space<vmem>>, vector<256x128xbf16>
    tpu.vector_store %arg9[%c16_68, %c0_69], %102 {strides = array<i32>} : memref<288x384xbf16, #tpu.memory_space<vmem>>, vector<256x128xbf16>,
    %c255_i32_70 = arith.constant 255 : i32
    %104 = tpu.dynamic_rotate %95 by %c255_i32_70 dim 0 : vector<256x128xf32>, i32 -> vector<256x128xf32>
    %cst_71 = arith.constant 0.000000e+00 : f32
    %105 = vector.shape_cast %23 : vector<256x1xi1> to vector<256x1xi1>
    %106 = vector.broadcast %105 : vector<256x1xi1> to vector<256x128xi1>
    %107 = vector.broadcast %cst_71 : f32 to vector<256x128xf32>
    %108 = arith.select %106, %104, %107 : vector<256x128xi1>, vector<256x128xf32>
    %109 = arith.truncf %108 : vector<256x128xf32> to vector<256x128xbf16>
    %c16_72 = arith.constant 16 : index
    %c256_73 = arith.constant 256 : index
    %110 = vector.load %arg9[%c16_72, %c256_73] : memref<288x384xbf16, #tpu.memory_space<vmem>>, vector<256x128xbf16>
    tpu.vector_store %arg9[%c16_72, %c256_73], %109 {strides = array<i32>} : memref<288x384xbf16, #tpu.memory_space<vmem>>, vector<256x128xbf16>,
    %cst_74 = arith.constant 0.000000e+00 : f32
    %111 = vector.broadcast %cst_74 : f32 to vector<128x128xf32>
    %c0_75 = arith.constant 0 : index
    %c0_76 = arith.constant 0 : index
    %112 = vector.load %arg9[%c0_75, %c0_76] : memref<288x384xbf16, #tpu.memory_space<vmem>>, vector<128x384xbf16>
    %c0_77 = arith.constant 0 : index
    %c0_78 = arith.constant 0 : index
    %c0_79 = arith.constant 0 : index
    %113 = vector.load %arg5[%c0_77, %c0_78, %c0_79] : memref<3x384x128xbf16, #tpu.memory_space<vmem>>, vector<1x384x128xbf16>
    %114 = vector.shape_cast %113 : vector<1x384x128xbf16> to vector<384x128xbf16>
    %cst_80 = arith.constant dense<0.000000e+00> : vector<128x128xf32>
    %115 = tpu.matmul %112, %114, %cst_80 {dimension_numbers = #tpu.dot_dimension_numbers<[1], [0], [0], [1], [0, 0, 1, 1], [], []>} : vector<128x384xbf16>, vector<384x128xbf16>, vector<128x128xf32> -> vector<128x128xf32>
    %116 = arith.addf %111, %115 : vector<128x128xf32>
    %c16_81 = arith.constant 16 : index
    %c0_82 = arith.constant 0 : index
    %117 = vector.load %arg9[%c16_81, %c0_82] : memref<288x384xbf16, #tpu.memory_space<vmem>>, vector<128x384xbf16>
    %c1_83 = arith.constant 1 : index
    %c0_84 = arith.constant 0 : index
    %c0_85 = arith.constant 0 : index
    %118 = vector.load %arg5[%c1_83, %c0_84, %c0_85] : memref<3x384x128xbf16, #tpu.memory_space<vmem>>, vector<1x384x128xbf16>
    %119 = vector.shape_cast %118 : vector<1x384x128xbf16> to vector<384x128xbf16>
    %cst_86 = arith.constant dense<0.000000e+00> : vector<128x128xf32>
    %120 = tpu.matmul %117, %119, %cst_86 {dimension_numbers = #tpu.dot_dimension_numbers<[1], [0], [0], [1], [0, 0, 1, 1], [], []>} : vector<128x384xbf16>, vector<384x128xbf16>, vector<128x128xf32> -> vector<128x128xf32>
    %121 = arith.addf %116, %120 : vector<128x128xf32>
    %c32_87 = arith.constant 32 : index
    %c0_88 = arith.constant 0 : index
    %122 = vector.load %arg9[%c32_87, %c0_88] : memref<288x384xbf16, #tpu.memory_space<vmem>>, vector<128x384xbf16>
    %c2_89 = arith.constant 2 : index
    %c0_90 = arith.constant 0 : index
    %c0_91 = arith.constant 0 : index
    %123 = vector.load %arg5[%c2_89, %c0_90, %c0_91] : memref<3x384x128xbf16, #tpu.memory_space<vmem>>, vector<1x384x128xbf16>
    %124 = vector.shape_cast %123 : vector<1x384x128xbf16> to vector<384x128xbf16>
    %cst_92 = arith.constant dense<0.000000e+00> : vector<128x128xf32>
    %125 = tpu.matmul %122, %124, %cst_92 {dimension_numbers = #tpu.dot_dimension_numbers<[1], [0], [0], [1], [0, 0, 1, 1], [], []>} : vector<128x384xbf16>, vector<384x128xbf16>, vector<128x128xf32> -> vector<128x128xf32>
    %126 = arith.addf %121, %125 : vector<128x128xf32>
    %c0_93 = arith.constant 0 : index
    %c0_94 = arith.constant 0 : index
    %c0_95 = arith.constant 0 : index
    %127 = vector.load %arg1[%c0_93, %c0_94, %c0_95] : memref<1x256x128xbf16, #tpu.memory_space<vmem>>, vector<1x128x128xbf16>
    %128 = vector.shape_cast %127 : vector<1x128x128xbf16> to vector<128x128xbf16>
    %129 = arith.extf %128 : vector<128x128xbf16> to vector<128x128xf32>
    %130 = vector.broadcast %92 : vector<1x128xf32> to vector<128x128xf32>
    %131 = arith.mulf %126, %130 : vector<128x128xf32>
    %132 = vector.broadcast %93 : vector<1x128xf32> to vector<128x128xf32>
    %133 = arith.addf %131, %132 : vector<128x128xf32>
    %134 = arith.addf %133, %129 : vector<128x128xf32>
    %cst_96 = arith.constant 0.000000e+00 : f32
    %135 = vector.broadcast %cst_96 : f32 to vector<128x128xf32>
    %136 = arith.maximumf %134, %135 : vector<128x128xf32>
    %c0_97 = arith.constant 0 : index
    %c0_98 = arith.constant 0 : index
    %c0_99 = arith.constant 0 : index
    %137 = vector.load %arg8[%c0_97, %c0_98, %c0_99] : memref<1x256x128xf32, #tpu.memory_space<vmem>>, vector<1x128x128xf32>
    %138 = vector.shape_cast %137 : vector<1x128x128xf32> to vector<128x128xf32>
    %139 = vector.shape_cast %136 : vector<128x128xf32> to vector<1x128x128xf32>
    tpu.vector_store %arg8[%c0_97, %c0_98, %c0_99], %139 {strides = array<i32>} : memref<1x256x128xf32, #tpu.memory_space<vmem>>, vector<1x128x128xf32>,
    %cst_100 = arith.constant 0.000000e+00 : f32
    %140 = vector.broadcast %cst_100 : f32 to vector<128x128xf32>
    %c128_101 = arith.constant 128 : index
    %c0_102 = arith.constant 0 : index
    %141 = vector.load %arg9[%c128_101, %c0_102] : memref<288x384xbf16, #tpu.memory_space<vmem>>, vector<128x384xbf16>
    %c0_103 = arith.constant 0 : index
    %c0_104 = arith.constant 0 : index
    %c0_105 = arith.constant 0 : index
    %142 = vector.load %arg5[%c0_103, %c0_104, %c0_105] : memref<3x384x128xbf16, #tpu.memory_space<vmem>>, vector<1x384x128xbf16>
    %143 = vector.shape_cast %142 : vector<1x384x128xbf16> to vector<384x128xbf16>
    %cst_106 = arith.constant dense<0.000000e+00> : vector<128x128xf32>
    %144 = tpu.matmul %141, %143, %cst_106 {dimension_numbers = #tpu.dot_dimension_numbers<[1], [0], [0], [1], [0, 0, 1, 1], [], []>} : vector<128x384xbf16>, vector<384x128xbf16>, vector<128x128xf32> -> vector<128x128xf32>
    %145 = arith.addf %140, %144 : vector<128x128xf32>
    %c144_107 = arith.constant 144 : index
    %c0_108 = arith.constant 0 : index
    %146 = vector.load %arg9[%c144_107, %c0_108] : memref<288x384xbf16, #tpu.memory_space<vmem>>, vector<128x384xbf16>
    %c1_109 = arith.constant 1 : index
    %c0_110 = arith.constant 0 : index
    %c0_111 = arith.constant 0 : index
    %147 = vector.load %arg5[%c1_109, %c0_110, %c0_111] : memref<3x384x128xbf16, #tpu.memory_space<vmem>>, vector<1x384x128xbf16>
    %148 = vector.shape_cast %147 : vector<1x384x128xbf16> to vector<384x128xbf16>
    %cst_112 = arith.constant dense<0.000000e+00> : vector<128x128xf32>
    %149 = tpu.matmul %146, %148, %cst_112 {dimension_numbers = #tpu.dot_dimension_numbers<[1], [0], [0], [1], [0, 0, 1, 1], [], []>} : vector<128x384xbf16>, vector<384x128xbf16>, vector<128x128xf32> -> vector<128x128xf32>
    %150 = arith.addf %145, %149 : vector<128x128xf32>
    %c160_113 = arith.constant 160 : index
    %c0_114 = arith.constant 0 : index
    %151 = vector.load %arg9[%c160_113, %c0_114] : memref<288x384xbf16, #tpu.memory_space<vmem>>, vector<128x384xbf16>
    %c2_115 = arith.constant 2 : index
    %c0_116 = arith.constant 0 : index
    %c0_117 = arith.constant 0 : index
    %152 = vector.load %arg5[%c2_115, %c0_116, %c0_117] : memref<3x384x128xbf16, #tpu.memory_space<vmem>>, vector<1x384x128xbf16>
    %153 = vector.shape_cast %152 : vector<1x384x128xbf16> to vector<384x128xbf16>
    %cst_118 = arith.constant dense<0.000000e+00> : vector<128x128xf32>
    %154 = tpu.matmul %151, %153, %cst_118 {dimension_numbers = #tpu.dot_dimension_numbers<[1], [0], [0], [1], [0, 0, 1, 1], [], []>} : vector<128x384xbf16>, vector<384x128xbf16>, vector<128x128xf32> -> vector<128x128xf32>
    %155 = arith.addf %150, %154 : vector<128x128xf32>
    %c0_119 = arith.constant 0 : index
    %c128_120 = arith.constant 128 : index
    %c0_121 = arith.constant 0 : index
    %156 = vector.load %arg1[%c0_119, %c128_120, %c0_121] : memref<1x256x128xbf16, #tpu.memory_space<vmem>>, vector<1x128x128xbf16>
    %157 = vector.shape_cast %156 : vector<1x128x128xbf16> to vector<128x128xbf16>
    %158 = arith.extf %157 : vector<128x128xbf16> to vector<128x128xf32>
    %159 = vector.broadcast %92 : vector<1x128xf32> to vector<128x128xf32>
    %160 = arith.mulf %155, %159 : vector<128x128xf32>
    %161 = vector.broadcast %93 : vector<1x128xf32> to vector<128x128xf32>
    %162 = arith.addf %160, %161 : vector<128x128xf32>
    %163 = arith.addf %162, %158 : vector<128x128xf32>
    %cst_122 = arith.constant 0.000000e+00 : f32
    %164 = vector.broadcast %cst_122 : f32 to vector<128x128xf32>
    %165 = arith.maximumf %163, %164 : vector<128x128xf32>
    %c0_123 = arith.constant 0 : index
    %c128_124 = arith.constant 128 : index
    %c0_125 = arith.constant 0 : index
    %166 = vector.load %arg8[%c0_123, %c128_124, %c0_125] : memref<1x256x128xf32, #tpu.memory_space<vmem>>, vector<1x128x128xf32>
    %167 = vector.shape_cast %166 : vector<1x128x128xf32> to vector<128x128xf32>
    %168 = vector.shape_cast %165 : vector<128x128xf32> to vector<1x128x128xf32>
    tpu.vector_store %arg8[%c0_123, %c128_124, %c0_125], %168 {strides = array<i32>} : memref<1x256x128xf32, #tpu.memory_space<vmem>>, vector<1x128x128xf32>,
    return
  }
  func.func @transform_0(%arg0: i32) -> (i32, i32, i32) {
    %c0_i32 = arith.constant 0 : i32
    %c0_i32_0 = arith.constant 0 : i32
    %c0_i32_1 = arith.constant 0 : i32
    return %arg0, %c0_i32, %c0_i32_0 : i32, i32, i32
  }
  func.func @transform_1(%arg0: i32) -> (i32, i32, i32) {
    %c0_i32 = arith.constant 0 : i32
    %c0_i32_0 = arith.constant 0 : i32
    %c0_i32_1 = arith.constant 0 : i32
    %c0_i32_2 = arith.constant 0 : i32
    return %c0_i32, %c0_i32_0, %c0_i32_1 : i32, i32, i32
  }
  func.func @transform_2(%arg0: i32) -> (i32, i32) {
    %c0_i32 = arith.constant 0 : i32
    %c0_i32_0 = arith.constant 0 : i32
    %c0_i32_1 = arith.constant 0 : i32
    return %c0_i32, %c0_i32_0 : i32, i32
  }
  func.func @transform_3(%arg0: i32) -> (i32, i32) {
    %c0_i32 = arith.constant 0 : i32
    %c0_i32_0 = arith.constant 0 : i32
    %c0_i32_1 = arith.constant 0 : i32
    return %c0_i32, %c0_i32_0 : i32, i32
  }
  func.func @transform_4(%arg0: i32) -> (i32, i32, i32) {
    %c0_i32 = arith.constant 0 : i32
    %c0_i32_0 = arith.constant 0 : i32
    %c0_i32_1 = arith.constant 0 : i32
    %c0_i32_2 = arith.constant 0 : i32
    return %c0_i32, %c0_i32_0, %c0_i32_1 : i32, i32, i32
  }
  func.func @transform_5(%arg0: i32) -> (i32, i32) {
    %c0_i32 = arith.constant 0 : i32
    %c0_i32_0 = arith.constant 0 : i32
    %c0_i32_1 = arith.constant 0 : i32
    return %c0_i32, %c0_i32_0 : i32, i32
  }
  func.func @transform_6(%arg0: i32) -> (i32, i32) {
    %c0_i32 = arith.constant 0 : i32
    %c0_i32_0 = arith.constant 0 : i32
    %c0_i32_1 = arith.constant 0 : i32
    return %c0_i32, %c0_i32_0 : i32, i32
  }
  func.func @transform_7(%arg0: i32) -> (i32, i32, i32) {
    %c0_i32 = arith.constant 0 : i32
    %c0_i32_0 = arith.constant 0 : i32
    %c0_i32_1 = arith.constant 0 : i32
    return %arg0, %c0_i32, %c0_i32_0 : i32, i32, i32
  }
}

</mosaic_0001>

<llo_original>
// kernel: tpu_custom_call.1
$region0: #{tpu_custom_call.1}
  #allocation0 [shape = 'u32[]', space=smem, size = 0x4, offset = 0x4, fixed_abs, tag = 'smem constant byte address 0x4 - core index']
  #allocation1 [shape = 'u32[144,128]{1,0:T(1,128)}', space=vmem, size = 0x12000, scoped, tag = 'internal scratch']
  #allocation2 [shape = 'bf16[288,384]{1,0:T(16,128)(2,1)}', space=vmem, size = 0x36000, scoped, tag = 'scratch operand']
  #allocation3 [shape = 'bf16[256,128]{1,0:T(16,128)(2,1)}', space=vmem, size = 0x10000, scoped, tag = 'scratch operand']
  %s0 = inlined_call_operand.hbm [shape: bf16[2,256,128], index: 0, kind: input, shape index: {}]
  %s1 = inlined_call_operand.hbm [shape: bf16[3,384,128], index: 1, kind: input, shape index: {}]
  %s2 = inlined_call_operand.vmem [shape: f32[1,128], index: 2, kind: input, shape index: {}]
  %s3 = inlined_call_operand.vmem [shape: f32[1,128], index: 3, kind: input, shape index: {}]
  %s4 = inlined_call_operand.hbm [shape: bf16[3,384,128], index: 4, kind: input, shape index: {}]
  %s5 = inlined_call_operand.vmem [shape: f32[1,128], index: 5, kind: input, shape index: {}]
  %s6 = inlined_call_operand.vmem [shape: f32[1,128], index: 6, kind: input, shape index: {}]
  %s7 = inlined_call_operand.hbm [shape: f32[2,256,128], index: 7, kind: output, shape index: {}]
  %s8 = sld [smem:[#allocation0]]
  $region73: #{tpu_custom_call.1} parent=0
    _
  %s10 = ssub.s32 1, %s8
  %s11 = scalar_select 0, %s10, %s8
  $region1: #{tpu_custom_call.1} parent=0
    #allocation4 [shape = 'u8[131072]{0}', space=vmem, size = 0x20000, scoped, tag = 'input window, operand 0']
    #allocation5 [shape = 's32[2]{0}', space=sflag, size = 0x8, scoped, tag = 'scoped memory for tpu_custom_call.1']
    #allocation6 [shape = 's32[2]{0}', space=sflag, size = 0x8, scoped, tag = 'scoped memory for tpu_custom_call.1']
    #allocation7 [shape = 'u8[294912]{0}', space=vmem, size = 0x48000, scoped, tag = 'input window, operand 1, single buffered']
    #allocation8 [shape = 's32[1]{0}', space=sflag, size = 0x4, scoped, tag = 'scoped memory for tpu_custom_call.1']
    #allocation9 [shape = 'u8[294912]{0}', space=vmem, size = 0x48000, scoped, tag = 'input window, operand 4, single buffered']
    #allocation10 [shape = 'u8[262144]{0}', space=vmem, size = 0x40000, scoped, tag = 'output window, operand 0']
    %12 = vsyncpa [#allocation5], 0
    %s13 = scalar_lea.sflag [#allocation5], 1
    %14 = vsyncpa %s13, 0
    %15 = vsyncpa [#allocation8], 0
    %16 = vsyncpa [#allocation6], 0
    %s17 = scalar_lea.sflag [#allocation6], 1
    %18 = vsyncpa %s17, 0
    loop: start=0, step=1, limit=4
    $region2: #{tpu_custom_call.1} parent=1 // loop_pre_header
      _
    $region3: #{tpu_custom_call.1} parent=1 // loop_header
      %s20 = sphi 0, %s24
      %p21 = scmp.ge.s32.totalorder %s20, 4
      %s30 = sphi 0, %s32
      %s33 = sphi 0, %s30
      %s34 = sphi 0, %s33
      %s50 = sphi 0, %s34
      %s54 = sphi 0, %s54
      %s56 = sphi 0, %s54
      %s57 = sphi 0, %s56
      %s71 = sphi 0, %s57
      %s75 = sphi 0, %s75
      %s77 = sphi 0, %s75
      %s78 = sphi 0, %s77
      %s92 = sphi 0, %s78
      %s96 = sphi 0, %s96
      %s98 = sphi 0, %s96
      %s99 = sphi 0, %s98
      %s113 = sphi 0, %s99
      %s117 = sphi 0, %s117
      %s119 = sphi 0, %s117
      %s120 = sphi 0, %s119
      %s134 = sphi 0, %s120
      %s138 = sphi 0, %s138
      %s140 = sphi 0, %s138
      %s141 = sphi 0, %s140
      %s155 = sphi 0, %s141
      %s159 = sphi 0, %s159
      %s161 = sphi 0, %s159
      %s162 = sphi 0, %s161
      %s176 = sphi 0, %s162
      %s182 = sphi 0, %s184
      %s185 = sphi 0, %s182
      %s186 = sphi 0, %s185
      %s202 = sphi 0, %s186
    $region4: #{tpu_custom_call.1} parent=1 // loop_header_branch
      %23 = sbr.rel (%p21) target = $region8
    $region5: #{tpu_custom_call.1} parent=1 // loop_body
      %s25 = ssub.s32 %s20, 1
      %s26 = ssub.s32 %s20, 2
      %s27 = sadd.s32 %s20, 1
      %s28 = ssub.s32 %s20, %s27
      %p29 = scmp.eq.s32.totalorder %s28, 0
      %s31 = sadd.s32 %s30, 1
      %s32 = scalar_select %p29, %s30, %s31
      %p35 = pneg %p29
      %p36 = scmp.eq.s32.totalorder %s20, 1
      %p37 = por %p35, %p36
      %p38 = scmp.ne.s32.totalorder %s30, %s33
      %p39 = scmp.eq.s32.totalorder %s20, 0
      %p40 = por %p38, %p39
      %p41 = scmp.ne.s32.totalorder %s30, %s33
      %p42 = scmp.eq.s32.totalorder %s25, 1
      %p43 = por %p41, %p42
      %p44 = scmp.ne.s32.totalorder %s33, %s34
      %p45 = scmp.eq.s32.totalorder %s25, 0
      %p46 = por %p44, %p45
      %p47 = scmp.ne.s32.totalorder %s33, %s34
      %p48 = scmp.eq.s32.totalorder %s26, 1
      %p49 = por %p47, %p48
      %p51 = scmp.ne.s32.totalorder %s34, %s50
      %p52 = scmp.eq.s32.totalorder %s26, 0
      %p53 = por %p51, %p52
      %s55 = sadd.s32 %s54, 1
      %p58 = scmp.eq.s32.totalorder %s20, 1
      %p59 = scmp.ne.s32.totalorder %s54, %s56
      %p60 = scmp.eq.s32.totalorder %s20, 0
      %p61 = por %p59, %p60
      %p62 = scmp.ne.s32.totalorder %s54, %s56
      %p63 = scmp.eq.s32.totalorder %s25, 1
      %p64 = por %p62, %p63
      %p65 = scmp.ne.s32.totalorder %s56, %s57
      %p66 = scmp.eq.s32.totalorder %s25, 0
      %p67 = por %p65, %p66
      %p68 = scmp.ne.s32.totalorder %s56, %s57
      %p69 = scmp.eq.s32.totalorder %s26, 1
      %p70 = por %p68, %p69
      %p72 = scmp.ne.s32.totalorder %s57, %s71
      %p73 = scmp.eq.s32.totalorder %s26, 0
      %p74 = por %p72, %p73
      %s76 = sadd.s32 %s75, 1
      %p79 = scmp.eq.s32.totalorder %s20, 1
      %p80 = scmp.ne.s32.totalorder %s75, %s77
      %p81 = scmp.eq.s32.totalorder %s20, 0
      %p82 = por %p80, %p81
      %p83 = scmp.ne.s32.totalorder %s75, %s77
      %p84 = scmp.eq.s32.totalorder %s25, 1
      %p85 = por %p83, %p84
      %p86 = scmp.ne.s32.totalorder %s77, %s78
      %p87 = scmp.eq.s32.totalorder %s25, 0
      %p88 = por %p86, %p87
      %p89 = scmp.ne.s32.totalorder %s77, %s78
      %p90 = scmp.eq.s32.totalorder %s26, 1
      %p91 = por %p89, %p90
      %p93 = scmp.ne.s32.totalorder %s78, %s92
      %p94 = scmp.eq.s32.totalorder %s26, 0
      %p95 = por %p93, %p94
      %s97 = sadd.s32 %s96, 1
      %p100 = scmp.eq.s32.totalorder %s20, 1
      %p101 = scmp.ne.s32.totalorder %s96, %s98
      %p102 = scmp.eq.s32.totalorder %s20, 0
      %p103 = por %p101, %p102
      %p104 = scmp.ne.s32.totalorder %s96, %s98
      %p105 = scmp.eq.s32.totalorder %s25, 1
      %p106 = por %p104, %p105
      %p107 = scmp.ne.s32.totalorder %s98, %s99
      %p108 = scmp.eq.s32.totalorder %s25, 0
      %p109 = por %p107, %p108
      %p110 = scmp.ne.s32.totalorder %s98, %s99
      %p111 = scmp.eq.s32.totalorder %s26, 1
      %p112 = por %p110, %p111
      %p114 = scmp.ne.s32.totalorder %s99, %s113
      %p115 = scmp.eq.s32.totalorder %s26, 0
      %p116 = por %p114, %p115
      %s118 = sadd.s32 %s117, 1
      %p121 = scmp.eq.s32.totalorder %s20, 1
      %p122 = scmp.ne.s32.totalorder %s117, %s119
      %p123 = scmp.eq.s32.totalorder %s20, 0
      %p124 = por %p122, %p123
      %p125 = scmp.ne.s32.totalorder %s117, %s119
      %p126 = scmp.eq.s32.totalorder %s25, 1
      %p127 = por %p125, %p126
      %p128 = scmp.ne.s32.totalorder %s119, %s120
      %p129 = scmp.eq.s32.totalorder %s25, 0
      %p130 = por %p128, %p129
      %p131 = scmp.ne.s32.totalorder %s119, %s120
      %p132 = scmp.eq.s32.totalorder %s26, 1
      %p133 = por %p131, %p132
      %p135 = scmp.ne.s32.totalorder %s120, %s134
      %p136 = scmp.eq.s32.totalorder %s26, 0
      %p137 = por %p135, %p136
      %s139 = sadd.s32 %s138, 1
      %p142 = scmp.eq.s32.totalorder %s20, 1
      %p143 = scmp.ne.s32.totalorder %s138, %s140
      %p144 = scmp.eq.s32.totalorder %s20, 0
      %p145 = por %p143, %p144
      %p146 = scmp.ne.s32.totalorder %s138, %s140
      %p147 = scmp.eq.s32.totalorder %s25, 1
      %p148 = por %p146, %p147
      %p149 = scmp.ne.s32.totalorder %s140, %s141
      %p150 = scmp.eq.s32.totalorder %s25, 0
      %p151 = por %p149, %p150
      %p152 = scmp.ne.s32.totalorder %s140, %s141
      %p153 = scmp.eq.s32.totalorder %s26, 1
      %p154 = por %p152, %p153
      %p156 = scmp.ne.s32.totalorder %s141, %s155
      %p157 = scmp.eq.s32.totalorder %s26, 0
      %p158 = por %p156, %p157
      %s160 = sadd.s32 %s159, 1
      %p163 = scmp.eq.s32.totalorder %s20, 1
      %p164 = scmp.ne.s32.totalorder %s159, %s161
      %p165 = scmp.eq.s32.totalorder %s20, 0
      %p166 = por %p164, %p165
      %p167 = scmp.ne.s32.totalorder %s159, %s161
      %p168 = scmp.eq.s32.totalorder %s25, 1
      %p169 = por %p167, %p168
      %p170 = scmp.ne.s32.totalorder %s161, %s162
      %p171 = scmp.eq.s32.totalorder %s25, 0
      %p172 = por %p170, %p171
      %p173 = scmp.ne.s32.totalorder %s161, %s162
      %p174 = scmp.eq.s32.totalorder %s26, 1
      %p175 = por %p173, %p174
      %p177 = scmp.ne.s32.totalorder %s162, %s176
      %p178 = scmp.eq.s32.totalorder %s26, 0
      %p179 = por %p177, %p178
      %s180 = ssub.s32 %s20, %s27
      %p181 = scmp.eq.s32.totalorder %s180, 0
      %s183 = sadd.s32 %s182, 1
      %s184 = scalar_select %p181, %s182, %s183
      %p187 = pneg %p181
      %p188 = scmp.eq.s32.totalorder %s20, 1
      %p189 = por %p187, %p188
      %p190 = scmp.ne.s32.totalorder %s182, %s185
      %p191 = scmp.eq.s32.totalorder %s20, 0
      %p192 = por %p190, %p191
      %p193 = scmp.ne.s32.totalorder %s182, %s185
      %p194 = scmp.eq.s32.totalorder %s25, 1
      %p195 = por %p193, %p194
      %p196 = scmp.ne.s32.totalorder %s185, %s186
      %p197 = scmp.eq.s32.totalorder %s25, 0
      %p198 = por %p196, %p197
      %p199 = scmp.ne.s32.totalorder %s185, %s186
      %p200 = scmp.eq.s32.totalorder %s26, 1
      %p201 = por %p199, %p200
      %p203 = scmp.ne.s32.totalorder %s186, %s202
      %p204 = scmp.eq.s32.totalorder %s26, 0
      %p205 = por %p203, %p204
      %p206 = scmp.le.s32.totalorder 1, %s20
      %p207 = scmp.lt.s32.totalorder %s20, 3
      %p208 = pnand %p206, %p207
      %p209 = pneg %p208
      // Predicated region
      $region9: #{tpu_custom_call.1} parent=5 // pred_check
        _
      $region10: #{tpu_custom_call.1} parent=5 // pred_check_branch
        %211 = sbr.rel (%p208) target = $region12
      $region11: #{tpu_custom_call.1} parent=5 // pred_region
        %s212 = ssub.s32 %s20, 1
        // Predicated region
        $region13: #{tpu_custom_call.1} parent=11 // pred_check
          %p213 = pneg %p67
        $region14: #{tpu_custom_call.1} parent=11 // pred_check_branch
          %215 = sbr.rel (%p213) target = $region16
        $region15: #{tpu_custom_call.1} parent=11 // pred_region
          %s217 = ssub.s32 9216, 9216
          %218 = vsyncadd [#allocation8], %s217
          %s219 = sshll.u32 [#allocation7], 4
          %s220 = int_to_ptr.vmem [resolvable:$true] %s219
          %225 = dma.hbm_to_vmem [thread:$0]  %s1, 9216, %s220, [#allocation8], 64, 64, 4
        $region16: #{tpu_custom_call.1} parent=11 // pred_fallthru
          _
        // Predicated region
        $region17: #{tpu_custom_call.1} parent=11 // pred_check
          %p226 = pneg %p88
        $region18: #{tpu_custom_call.1} parent=11 // pred_check_branch
          %228 = sbr.rel (%p226) target = $region20
        $region19: #{tpu_custom_call.1} parent=11 // pred_region
          _
        $region20: #{tpu_custom_call.1} parent=11 // pred_fallthru
          _
        // Predicated region
        $region21: #{tpu_custom_call.1} parent=11 // pred_check
          %p229 = pneg %p109
        $region22: #{tpu_custom_call.1} parent=11 // pred_check_branch
          %231 = sbr.rel (%p229) target = $region24
        $region23: #{tpu_custom_call.1} parent=11 // pred_region
          _
        $region24: #{tpu_custom_call.1} parent=11 // pred_fallthru
          _
        // Predicated region
        $region25: #{tpu_custom_call.1} parent=11 // pred_check
          %p232 = pneg %p130
        $region26: #{tpu_custom_call.1} parent=11 // pred_check_branch
          %234 = sbr.rel (%p232) target = $region28
        $region27: #{tpu_custom_call.1} parent=11 // pred_region
          %s236 = ssub.s32 9216, 9216
          %237 = vsyncadd [#allocation8], %s236
          %s238 = sshll.u32 [#allocation9], 4
          %s239 = int_to_ptr.vmem [resolvable:$true] %s238
          %244 = dma.hbm_to_vmem [thread:$0]  %s4, 9216, %s239, [#allocation8], 64, 64, 4
        $region28: #{tpu_custom_call.1} parent=11 // pred_fallthru
          _
        // Predicated region
        $region29: #{tpu_custom_call.1} parent=11 // pred_check
          %p245 = pneg %p151
        $region30: #{tpu_custom_call.1} parent=11 // pred_check_branch
          %247 = sbr.rel (%p245) target = $region32
        $region31: #{tpu_custom_call.1} parent=11 // pred_region
          _
        $region32: #{tpu_custom_call.1} parent=11 // pred_fallthru
          _
        // Predicated region
        $region33: #{tpu_custom_call.1} parent=11 // pred_check
          %p248 = pneg %p172
        $region34: #{tpu_custom_call.1} parent=11 // pred_check_branch
          %250 = sbr.rel (%p248) target = $region36
        $region35: #{tpu_custom_call.1} parent=11 // pred_region
          _
        $region36: #{tpu_custom_call.1} parent=11 // pred_fallthru
          _
      $region12: #{tpu_custom_call.1} parent=5 // pred_fallthru
        _
      %p251 = scmp.lt.s32.totalorder %s20, 2
      // Predicated region
      $region37: #{tpu_custom_call.1} parent=5 // pred_check
        %p252 = pneg %p251
      $region38: #{tpu_custom_call.1} parent=5 // pred_check_branch
        %254 = sbr.rel (%p252) target = $region40
      $region39: #{tpu_custom_call.1} parent=5 // pred_region
        // Predicated region
        $region41: #{tpu_custom_call.1} parent=39 // pred_check
          %p255 = pneg %p40
        $region42: #{tpu_custom_call.1} parent=39 // pred_check_branch
          %257 = sbr.rel (%p255) target = $region44
        $region43: #{tpu_custom_call.1} parent=39 // pred_region
          %s258 = sand.u32 %s30, 1
          %s259 = scalar_lea.sflag [#allocation5], %s258
          %s260 = sand.u32 %s30, 1
          %s261 = smul.addr %s260, 128
          %s262 = scalar_lea.vmem [#allocation4], %s261
          %s264 = ssub.s32 2048, 2048
          %265 = vsyncadd %s259, %s264
          %s266 = smul.addr %s20, 32
          %s267 = smul.addr %s266, 64
          %s268 = scalar_lea.hbm %s0, %s267
          %s269 = sshll.u32 %s262, 4
          %s270 = int_to_ptr.vmem [resolvable:$true] %s269
          %275 = dma.hbm_to_vmem [thread:$0]  %s268, 2048, %s270, %s259, 64, 64, 4
        $region44: #{tpu_custom_call.1} parent=39 // pred_fallthru
          _
      $region40: #{tpu_custom_call.1} parent=5 // pred_fallthru
        _
      %p276 = scmp.le.s32.totalorder 1, %s20
      %p277 = scmp.lt.s32.totalorder %s20, 3
      %p278 = pnand %p276, %p277
      %p279 = pneg %p278
      // Predicated region
      $region45: #{tpu_custom_call.1} parent=5 // pred_check
        _
      $region46: #{tpu_custom_call.1} parent=5 // pred_check_branch
        %281 = sbr.rel (%p278) target = $region48
      $region47: #{tpu_custom_call.1} parent=5 // pred_region
        %s282 = ssub.s32 %s20, 1
        %s283 = sand.u32 %s33, 1
        %s284 = scalar_lea.sflag [#allocation5], %s283
        %s285 = sand.u32 %s33, 1
        %s286 = smul.addr %s285, 128
        %s287 = scalar_lea.vmem [#allocation4], %s286
        // Predicated region
        $region49: #{tpu_custom_call.1} parent=47 // pred_check
          %p288 = pneg %p46
        $region50: #{tpu_custom_call.1} parent=47 // pred_check_branch
          %290 = sbr.rel (%p288) target = $region52
        $region51: #{tpu_custom_call.1} parent=47 // pred_region
          %291 = dma.done %s284, 2048
        $region52: #{tpu_custom_call.1} parent=47 // pred_fallthru
          _
        // Predicated region
        $region53: #{tpu_custom_call.1} parent=47 // pred_check
          %p292 = pneg %p67
        $region54: #{tpu_custom_call.1} parent=47 // pred_check_branch
          %294 = sbr.rel (%p292) target = $region56
        $region55: #{tpu_custom_call.1} parent=47 // pred_region
          %295 = dma.done [#allocation8], 9216
        $region56: #{tpu_custom_call.1} parent=47 // pred_fallthru
          _
        // Predicated region
        $region57: #{tpu_custom_call.1} parent=47 // pred_check
          %p296 = pneg %p130
        $region58: #{tpu_custom_call.1} parent=47 // pred_check_branch
          %298 = sbr.rel (%p296) target = $region60
        $region59: #{tpu_custom_call.1} parent=47 // pred_region
          %299 = dma.done [#allocation8], 9216
        $region60: #{tpu_custom_call.1} parent=47 // pred_fallthru
          _
        %s300 = sand.u32 %s33, 1
        %s301 = scalar_lea.sflag [#allocation5], %s300
        %s302 = sand.u32 %s33, 1
        %s303 = smul.addr %s302, 128
        %s304 = scalar_lea.vmem [#allocation4], %s303
        %p305 = pneg %p46
        %p306 = pneg %p43
        %p307 = pneg %p67
        %p308 = pneg %p64
        %p309 = pneg %p88
        %p310 = pneg %p85
        %p311 = pneg %p109
        %p312 = pneg %p106
        %p313 = pneg %p130
        %p314 = pneg %p127
        %p315 = pneg %p151
        %p316 = pneg %p148
        %p317 = pneg %p172
        %p318 = pneg %p169
        %p319 = pneg %p198
        %p320 = pneg %p195
        %s321 = sand.u32 %s185, 1
        %s322 = scalar_lea.sflag [#allocation6], %s321
        %s323 = sand.u32 %s185, 1
        %s324 = smul.addr %s323, 256
        %s325 = scalar_lea.vmem [#allocation10], %s324
        %327 = vst [vmem:[#allocation2] sm:$0xff] 0
        %328 = vst [vmem:[#allocation2 + $0x8] sm:$0xff] 0
        %329 = vst [vmem:[#allocation2 + $0x10] sm:$0xff] 0
        %330 = vst [vmem:[#allocation2 + $0x198] sm:$0xff] 0
        %331 = vst [vmem:[#allocation2 + $0x1a0] sm:$0xff] 0
        %332 = vst [vmem:[#allocation2 + $0x1a8] sm:$0xff] 0
        %v333 = vlaneseq
        %v334 = vshrl.u32 %v333, 7
        %v335 = vadd.s32 %v334, 8
        %v336 = vadd.s32 %v334, 16
        %v337 = vadd.s32 %v334, 24
        %v338 = vadd.s32 %v334, 32
        %v339 = vadd.s32 %v334, 40
        %v340 = vadd.s32 %v334, 48
        %v341 = vadd.s32 %v334, 56
        %v342 = vadd.s32 %v334, 64
        %v343 = vadd.s32 %v334, 72
        %v344 = vadd.s32 %v334, 80
        %v345 = vadd.s32 %v334, 88
        %v346 = vadd.s32 %v334, 96
        %v347 = vadd.s32 %v334, 104
        %v348 = vadd.s32 %v334, 112
        %v349 = vadd.s32 %v334, 120
        %v350 = vadd.s32 %v334, 128
        %v351 = vadd.s32 %v334, 136
        %v352 = vadd.s32 %v334, 144
        %v353 = vadd.s32 %v334, 152
        %v354 = vadd.s32 %v334, 160
        %v355 = vadd.s32 %v334, 168
        %v356 = vadd.s32 %v334, 176
        %v357 = vadd.s32 %v334, 184
        %v358 = vadd.s32 %v334, 192
        %v359 = vadd.s32 %v334, 200
        %v360 = vadd.s32 %v334, 208
        %v361 = vadd.s32 %v334, 216
        %v362 = vadd.s32 %v334, 224
        %v363 = vadd.s32 %v334, 232
        %v364 = vadd.s32 %v334, 240
        %v365 = vadd.s32 %v334, 248
        %vm366 = vcmp.lt.s32.totalorder %v334, 0
        %v367 = vsub.s32 0, %v334
        %v368 = vsel %vm366, %v367, %v334
        %v369 = vshrl.u32 %v368, 4
        %v370 = vand.u32 %v368, 15
        %v371 = vsub.s32 0, %v370
        %v372 = vsel %vm366, %v371, %v370
        %vm373 = vcmp.lt.s32.totalorder %v335, 0
        %v374 = vsub.s32 0, %v335
        %v375 = vsel %vm373, %v374, %v335
        %v376 = vshrl.u32 %v375, 4
        %v377 = vand.u32 %v375, 15
        %v378 = vsub.s32 0, %v377
        %v379 = vsel %vm373, %v378, %v377
        %vm380 = vcmp.lt.s32.totalorder %v336, 0
        %v381 = vsub.s32 0, %v336
        %v382 = vsel %vm380, %v381, %v336
        %v383 = vshrl.u32 %v382, 4
        %v384 = vand.u32 %v382, 15
        %v385 = vsub.s32 0, %v384
        %v386 = vsel %vm380, %v385, %v384
        %vm387 = vcmp.lt.s32.totalorder %v337, 0
        %v388 = vsub.s32 0, %v337
        %v389 = vsel %vm387, %v388, %v337
        %v390 = vshrl.u32 %v389, 4
        %v391 = vand.u32 %v389, 15
        %v392 = vsub.s32 0, %v391
        %v393 = vsel %vm387, %v392, %v391
        %vm394 = vcmp.lt.s32.totalorder %v338, 0
        %v395 = vsub.s32 0, %v338
        %v396 = vsel %vm394, %v395, %v338
        %v397 = vshrl.u32 %v396, 4
        %v398 = vand.u32 %v396, 15
        %v399 = vsub.s32 0, %v398
        %v400 = vsel %vm394, %v399, %v398
        %vm401 = vcmp.lt.s32.totalorder %v339, 0
        %v402 = vsub.s32 0, %v339
        %v403 = vsel %vm401, %v402, %v339
        %v404 = vshrl.u32 %v403, 4
        %v405 = vand.u32 %v403, 15
        %v406 = vsub.s32 0, %v405
        %v407 = vsel %vm401, %v406, %v405
        %vm408 = vcmp.lt.s32.totalorder %v340, 0
        %v409 = vsub.s32 0, %v340
        %v410 = vsel %vm408, %v409, %v340
        %v411 = vshrl.u32 %v410, 4
        %v412 = vand.u32 %v410, 15
        %v413 = vsub.s32 0, %v412
        %v414 = vsel %vm408, %v413, %v412
        %vm415 = vcmp.lt.s32.totalorder %v341, 0
        %v416 = vsub.s32 0, %v341
        %v417 = vsel %vm415, %v416, %v341
        %v418 = vshrl.u32 %v417, 4
        %v419 = vand.u32 %v417, 15
        %v420 = vsub.s32 0, %v419
        %v421 = vsel %vm415, %v420, %v419
        %vm422 = vcmp.lt.s32.totalorder %v342, 0
        %v423 = vsub.s32 0, %v342
        %v424 = vsel %vm422, %v423, %v342
        %v425 = vshrl.u32 %v424, 4
        %v426 = vand.u32 %v424, 15
        %v427 = vsub.s32 0, %v426
        %v428 = vsel %vm422, %v427, %v426
        %vm429 = vcmp.lt.s32.totalorder %v343, 0
        %v430 = vsub.s32 0, %v343
        %v431 = vsel %vm429, %v430, %v343
        %v432 = vshrl.u32 %v431, 4
        %v433 = vand.u32 %v431, 15
        %v434 = vsub.s32 0, %v433
        %v435 = vsel %vm429, %v434, %v433
        %vm436 = vcmp.lt.s32.totalorder %v344, 0
        %v437 = vsub.s32 0, %v344
        %v438 = vsel %vm436, %v437, %v344
        %v439 = vshrl.u32 %v438, 4
        %v440 = vand.u32 %v438, 15
        %v441 = vsub.s32 0, %v440
        %v442 = vsel %vm436, %v441, %v440
        %vm443 = vcmp.lt.s32.totalorder %v345, 0
        %v444 = vsub.s32 0, %v345
        %v445 = vsel %vm443, %v444, %v345
        %v446 = vshrl.u32 %v445, 4
        %v447 = vand.u32 %v445, 15
        %v448 = vsub.s32 0, %v447
        %v449 = vsel %vm443, %v448, %v447
        %vm450 = vcmp.lt.s32.totalorder %v346, 0
        %v451 = vsub.s32 0, %v346
        %v452 = vsel %vm450, %v451, %v346
        %v453 = vshrl.u32 %v452, 4
        %v454 = vand.u32 %v452, 15
        %v455 = vsub.s32 0, %v454
        %v456 = vsel %vm450, %v455, %v454
        %vm457 = vcmp.lt.s32.totalorder %v347, 0
        %v458 = vsub.s32 0, %v347
        %v459 = vsel %vm457, %v458, %v347
        %v460 = vshrl.u32 %v459, 4
        %v461 = vand.u32 %v459, 15
        %v462 = vsub.s32 0, %v461
        %v463 = vsel %vm457, %v462, %v461
        %vm464 = vcmp.lt.s32.totalorder %v348, 0
        %v465 = vsub.s32 0, %v348
        %v466 = vsel %vm464, %v465, %v348
        %v467 = vshrl.u32 %v466, 4
        %v468 = vand.u32 %v466, 15
        %v469 = vsub.s32 0, %v468
        %v470 = vsel %vm464, %v469, %v468
        %vm471 = vcmp.lt.s32.totalorder %v349, 0
        %v472 = vsub.s32 0, %v349
        %v473 = vsel %vm471, %v472, %v349
        %v474 = vshrl.u32 %v473, 4
        %v475 = vand.u32 %v473, 15
        %v476 = vsub.s32 0, %v475
        %v477 = vsel %vm471, %v476, %v475
        %vm478 = vcmp.lt.s32.totalorder %v350, 0
        %v479 = vsub.s32 0, %v350
        %v480 = vsel %vm478, %v479, %v350
        %v481 = vshrl.u32 %v480, 4
        %v482 = vand.u32 %v480, 15
        %v483 = vsub.s32 0, %v482
        %v484 = vsel %vm478, %v483, %v482
        %vm485 = vcmp.lt.s32.totalorder %v351, 0
        %v486 = vsub.s32 0, %v351
        %v487 = vsel %vm485, %v486, %v351
        %v488 = vshrl.u32 %v487, 4
        %v489 = vand.u32 %v487, 15
        %v490 = vsub.s32 0, %v489
        %v491 = vsel %vm485, %v490, %v489
        %vm492 = vcmp.lt.s32.totalorder %v352, 0
        %v493 = vsub.s32 0, %v352
        %v494 = vsel %vm492, %v493, %v352
        %v495 = vshrl.u32 %v494, 4
        %v496 = vand.u32 %v494, 15
        %v497 = vsub.s32 0, %v496
        %v498 = vsel %vm492, %v497, %v496
        %vm499 = vcmp.lt.s32.totalorder %v353, 0
        %v500 = vsub.s32 0, %v353
        %v501 = vsel %vm499, %v500, %v353
        %v502 = vshrl.u32 %v501, 4
        %v503 = vand.u32 %v501, 15
        %v504 = vsub.s32 0, %v503
        %v505 = vsel %vm499, %v504, %v503
        %vm506 = vcmp.lt.s32.totalorder %v354, 0
        %v507 = vsub.s32 0, %v354
        %v508 = vsel %vm506, %v507, %v354
        %v509 = vshrl.u32 %v508, 4
        %v510 = vand.u32 %v508, 15
        %v511 = vsub.s32 0, %v510
        %v512 = vsel %vm506, %v511, %v510
        %vm513 = vcmp.lt.s32.totalorder %v355, 0
        %v514 = vsub.s32 0, %v355
        %v515 = vsel %vm513, %v514, %v355
        %v516 = vshrl.u32 %v515, 4
        %v517 = vand.u32 %v515, 15
        %v518 = vsub.s32 0, %v517
        %v519 = vsel %vm513, %v518, %v517
        %vm520 = vcmp.lt.s32.totalorder %v356, 0
        %v521 = vsub.s32 0, %v356
        %v522 = vsel %vm520, %v521, %v356
        %v523 = vshrl.u32 %v522, 4
        %v524 = vand.u32 %v522, 15
        %v525 = vsub.s32 0, %v524
        %v526 = vsel %vm520, %v525, %v524
        %vm527 = vcmp.lt.s32.totalorder %v357, 0
        %v528 = vsub.s32 0, %v357
        %v529 = vsel %vm527, %v528, %v357
        %v530 = vshrl.u32 %v529, 4
        %v531 = vand.u32 %v529, 15
        %v532 = vsub.s32 0, %v531
        %v533 = vsel %vm527, %v532, %v531
        %vm534 = vcmp.lt.s32.totalorder %v358, 0
        %v535 = vsub.s32 0, %v358
        %v536 = vsel %vm534, %v535, %v358
        %v537 = vshrl.u32 %v536, 4
        %v538 = vand.u32 %v536, 15
        %v539 = vsub.s32 0, %v538
        %v540 = vsel %vm534, %v539, %v538
        %vm541 = vcmp.lt.s32.totalorder %v359, 0
        %v542 = vsub.s32 0, %v359
        %v543 = vsel %vm541, %v542, %v359
        %v544 = vshrl.u32 %v543, 4
        %v545 = vand.u32 %v543, 15
        %v546 = vsub.s32 0, %v545
        %v547 = vsel %vm541, %v546, %v545
        %vm548 = vcmp.lt.s32.totalorder %v360, 0
        %v549 = vsub.s32 0, %v360
        %v550 = vsel %vm548, %v549, %v360
        %v551 = vshrl.u32 %v550, 4
        %v552 = vand.u32 %v550, 15
        %v553 = vsub.s32 0, %v552
        %v554 = vsel %vm548, %v553, %v552
        %vm555 = vcmp.lt.s32.totalorder %v361, 0
        %v556 = vsub.s32 0, %v361
        %v557 = vsel %vm555, %v556, %v361
        %v558 = vshrl.u32 %v557, 4
        %v559 = vand.u32 %v557, 15
        %v560 = vsub.s32 0, %v559
        %v561 = vsel %vm555, %v560, %v559
        %vm562 = vcmp.lt.s32.totalorder %v362, 0
        %v563 = vsub.s32 0, %v362
        %v564 = vsel %vm562, %v563, %v362
        %v565 = vshrl.u32 %v564, 4
        %v566 = vand.u32 %v564, 15
        %v567 = vsub.s32 0, %v566
        %v568 = vsel %vm562, %v567, %v566
        %vm569 = vcmp.lt.s32.totalorder %v363, 0
        %v570 = vsub.s32 0, %v363
        %v571 = vsel %vm569, %v570, %v363
        %v572 = vshrl.u32 %v571, 4
        %v573 = vand.u32 %v571, 15
        %v574 = vsub.s32 0, %v573
        %v575 = vsel %vm569, %v574, %v573
        %vm576 = vcmp.lt.s32.totalorder %v364, 0
        %v577 = vsub.s32 0, %v364
        %v578 = vsel %vm576, %v577, %v364
        %v579 = vshrl.u32 %v578, 4
        %v580 = vand.u32 %v578, 15
        %v581 = vsub.s32 0, %v580
        %v582 = vsel %vm576, %v581, %v580
        %vm583 = vcmp.lt.s32.totalorder %v365, 0
        %v584 = vsub.s32 0, %v365
        %v585 = vsel %vm583, %v584, %v365
        %v586 = vshrl.u32 %v585, 4
        %v587 = vand.u32 %v585, 15
        %v588 = vsub.s32 0, %v587
        %v589 = vsel %vm583, %v588, %v587
        %vm590 = vcmp.ne.s32.totalorder %v372, 0
        %vm591 = vcmp.ne.s32.totalorder %v379, 0
        %vm592 = vcmp.ne.s32.totalorder %v386, 0
        %vm593 = vcmp.ne.s32.totalorder %v393, 0
        %vm594 = vcmp.ne.s32.totalorder %v400, 0
        %vm595 = vcmp.ne.s32.totalorder %v407, 0
        %vm596 = vcmp.ne.s32.totalorder %v414, 0
        %vm597 = vcmp.ne.s32.totalorder %v421, 0
        %vm598 = vcmp.ne.s32.totalorder %v428, 0
        %vm599 = vcmp.ne.s32.totalorder %v435, 0
        %vm600 = vcmp.ne.s32.totalorder %v442, 0
        %vm601 = vcmp.ne.s32.totalorder %v449, 0
        %vm602 = vcmp.ne.s32.totalorder %v456, 0
        %vm603 = vcmp.ne.s32.totalorder %v463, 0
        %vm604 = vcmp.ne.s32.totalorder %v470, 0
        %vm605 = vcmp.ne.s32.totalorder %v477, 0
        %vm606 = vcmp.ne.s32.totalorder %v484, 0
        %vm607 = vcmp.ne.s32.totalorder %v491, 0
        %vm608 = vcmp.ne.s32.totalorder %v498, 0
        %vm609 = vcmp.ne.s32.totalorder %v505, 0
        %vm610 = vcmp.ne.s32.totalorder %v512, 0
        %vm611 = vcmp.ne.s32.totalorder %v519, 0
        %vm612 = vcmp.ne.s32.totalorder %v526, 0
        %vm613 = vcmp.ne.s32.totalorder %v533, 0
        %vm614 = vcmp.ne.s32.totalorder %v540, 0
        %vm615 = vcmp.ne.s32.totalorder %v547, 0
        %vm616 = vcmp.ne.s32.totalorder %v554, 0
        %vm617 = vcmp.ne.s32.totalorder %v561, 0
        %vm618 = vcmp.ne.s32.totalorder %v568, 0
        %vm619 = vcmp.ne.s32.totalorder %v575, 0
        %vm620 = vcmp.ne.s32.totalorder %v582, 0
        %vm621 = vcmp.ne.s32.totalorder %v589, 0
        %vm622 = vcmp.lt.s32.totalorder %v372, 0
        %vm623 = vcmp.lt.s32.totalorder %v379, 0
        %vm624 = vcmp.lt.s32.totalorder %v386, 0
        %vm625 = vcmp.lt.s32.totalorder %v393, 0
        %vm626 = vcmp.lt.s32.totalorder %v400, 0
        %vm627 = vcmp.lt.s32.totalorder %v407, 0
        %vm628 = vcmp.lt.s32.totalorder %v414, 0
        %vm629 = vcmp.lt.s32.totalorder %v421, 0
        %vm630 = vcmp.lt.s32.totalorder %v428, 0
        %vm631 = vcmp.lt.s32.totalorder %v435, 0
        %vm632 = vcmp.lt.s32.totalorder %v442, 0
        %vm633 = vcmp.lt.s32.totalorder %v449, 0
        %vm634 = vcmp.lt.s32.totalorder %v456, 0
        %vm635 = vcmp.lt.s32.totalorder %v463, 0
        %vm636 = vcmp.lt.s32.totalorder %v470, 0
        %vm637 = vcmp.lt.s32.totalorder %v477, 0
        %vm638 = vcmp.lt.s32.totalorder %v484, 0
        %vm639 = vcmp.lt.s32.totalorder %v491, 0
        %vm640 = vcmp.lt.s32.totalorder %v498, 0
        %vm641 = vcmp.lt.s32.totalorder %v505, 0
        %vm642 = vcmp.lt.s32.totalorder %v512, 0
        %vm643 = vcmp.lt.s32.totalorder %v519, 0
        %vm644 = vcmp.lt.s32.totalorder %v526, 0
        %vm645 = vcmp.lt.s32.totalorder %v533, 0
        %vm646 = vcmp.lt.s32.totalorder %v540, 0
        %vm647 = vcmp.lt.s32.totalorder %v547, 0
        %vm648 = vcmp.lt.s32.totalorder %v554, 0
        %vm649 = vcmp.lt.s32.totalorder %v561, 0
        %vm650 = vcmp.lt.s32.totalorder %v568, 0
        %vm651 = vcmp.lt.s32.totalorder %v575, 0
        %vm652 = vcmp.lt.s32.totalorder %v582, 0
        %vm653 = vcmp.lt.s32.totalorder %v589, 0
        %vm654 = vmand %vm622, %vm590
        %vm655 = vmand %vm623, %vm591
        %vm656 = vmand %vm624, %vm592
        %vm657 = vmand %vm625, %vm593
        %vm658 = vmand %vm626, %vm594
        %vm659 = vmand %vm627, %vm595
        %vm660 = vmand %vm628, %vm596
        %vm661 = vmand %vm629, %vm597
        %vm662 = vmand %vm630, %vm598
        %vm663 = vmand %vm631, %vm599
        %vm664 = vmand %vm632, %vm600
        %vm665 = vmand %vm633, %vm601
        %vm666 = vmand %vm634, %vm602
        %vm667 = vmand %vm635, %vm603
        %vm668 = vmand %vm636, %vm604
        %vm669 = vmand %vm637, %vm605
        %vm670 = vmand %vm638, %vm606
        %vm671 = vmand %vm639, %vm607
        %vm672 = vmand %vm640, %vm608
        %vm673 = vmand %vm641, %vm609
        %vm674 = vmand %vm642, %vm610
        %vm675 = vmand %vm643, %vm611
        %vm676 = vmand %vm644, %vm612
        %vm677 = vmand %vm645, %vm613
        %vm678 = vmand %vm646, %vm614
        %vm679 = vmand %vm647, %vm615
        %vm680 = vmand %vm648, %vm616
        %vm681 = vmand %vm649, %vm617
        %vm682 = vmand %vm650, %vm618
        %vm683 = vmand %vm651, %vm619
        %vm684 = vmand %vm652, %vm620
        %vm685 = vmand %vm653, %vm621
        %v686 = vadd.s32 %v372, 16
        %v687 = vadd.s32 %v379, 16
        %v688 = vadd.s32 %v386, 16
        %v689 = vadd.s32 %v393, 16
        %v690 = vadd.s32 %v400, 16
        %v691 = vadd.s32 %v407, 16
        %v692 = vadd.s32 %v414, 16
        %v693 = vadd.s32 %v421, 16
        %v694 = vadd.s32 %v428, 16
        %v695 = vadd.s32 %v435, 16
        %v696 = vadd.s32 %v442, 16
        %v697 = vadd.s32 %v449, 16
        %v698 = vadd.s32 %v456, 16
        %v699 = vadd.s32 %v463, 16
        %v700 = vadd.s32 %v470, 16
        %v701 = vadd.s32 %v477, 16
        %v702 = vadd.s32 %v484, 16
        %v703 = vadd.s32 %v491, 16
        %v704 = vadd.s32 %v498, 16
        %v705 = vadd.s32 %v505, 16
        %v706 = vadd.s32 %v512, 16
        %v707 = vadd.s32 %v519, 16
        %v708 = vadd.s32 %v526, 16
        %v709 = vadd.s32 %v533, 16
        %v710 = vadd.s32 %v540, 16
        %v711 = vadd.s32 %v547, 16
        %v712 = vadd.s32 %v554, 16
        %v713 = vadd.s32 %v561, 16
        %v714 = vadd.s32 %v568, 16
        %v715 = vadd.s32 %v575, 16
        %v716 = vadd.s32 %v582, 16
        %v717 = vadd.s32 %v589, 16
        %v718 = vsel %vm654, %v686, %v372
        %v719 = vsel %vm655, %v687, %v379
        %v720 = vsel %vm656, %v688, %v386
        %v721 = vsel %vm657, %v689, %v393
        %v722 = vsel %vm658, %v690, %v400
        %v723 = vsel %vm659, %v691, %v407
        %v724 = vsel %vm660, %v692, %v414
        %v725 = vsel %vm661, %v693, %v421
        %v726 = vsel %vm662, %v694, %v428
        %v727 = vsel %vm663, %v695, %v435
        %v728 = vsel %vm664, %v696, %v442
        %v729 = vsel %vm665, %v697, %v449
        %v730 = vsel %vm666, %v698, %v456
        %v731 = vsel %vm667, %v699, %v463
        %v732 = vsel %vm668, %v700, %v470
        %v733 = vsel %vm669, %v701, %v477
        %v734 = vsel %vm670, %v702, %v484
        %v735 = vsel %vm671, %v703, %v491
        %v736 = vsel %vm672, %v704, %v498
        %v737 = vsel %vm673, %v705, %v505
        %v738 = vsel %vm674, %v706, %v512
        %v739 = vsel %vm675, %v707, %v519
        %v740 = vsel %vm676, %v708, %v526
        %v741 = vsel %vm677, %v709, %v533
        %v742 = vsel %vm678, %v710, %v540
        %v743 = vsel %vm679, %v711, %v547
        %v744 = vsel %vm680, %v712, %v554
        %v745 = vsel %vm681, %v713, %v561
        %v746 = vsel %vm682, %v714, %v568
        %v747 = vsel %vm683, %v715, %v575
        %v748 = vsel %vm684, %v716, %v582
        %v749 = vsel %vm685, %v717, %v589
        %vm750 = vcmp.ne.s32.totalorder %v718, 0
        %vm751 = vcmp.ne.s32.totalorder %v719, 0
        %vm752 = vcmp.ne.s32.totalorder %v720, 0
        %vm753 = vcmp.ne.s32.totalorder %v721, 0
        %vm754 = vcmp.ne.s32.totalorder %v722, 0
        %vm755 = vcmp.ne.s32.totalorder %v723, 0
        %vm756 = vcmp.ne.s32.totalorder %v724, 0
        %vm757 = vcmp.ne.s32.totalorder %v725, 0
        %vm758 = vcmp.ne.s32.totalorder %v726, 0
        %vm759 = vcmp.ne.s32.totalorder %v727, 0
        %vm760 = vcmp.ne.s32.totalorder %v728, 0
        %vm761 = vcmp.ne.s32.totalorder %v729, 0
        %vm762 = vcmp.ne.s32.totalorder %v730, 0
        %vm763 = vcmp.ne.s32.totalorder %v731, 0
        %vm764 = vcmp.ne.s32.totalorder %v732, 0
        %vm765 = vcmp.ne.s32.totalorder %v733, 0
        %vm766 = vcmp.ne.s32.totalorder %v734, 0
        %vm767 = vcmp.ne.s32.totalorder %v735, 0
        %vm768 = vcmp.ne.s32.totalorder %v736, 0
        %vm769 = vcmp.ne.s32.totalorder %v737, 0
        %vm770 = vcmp.ne.s32.totalorder %v738, 0
        %vm771 = vcmp.ne.s32.totalorder %v739, 0
        %vm772 = vcmp.ne.s32.totalorder %v740, 0
        %vm773 = vcmp.ne.s32.totalorder %v741, 0
        %vm774 = vcmp.ne.s32.totalorder %v742, 0
        %vm775 = vcmp.ne.s32.totalorder %v743, 0
        %vm776 = vcmp.ne.s32.totalorder %v744, 0
        %vm777 = vcmp.ne.s32.totalorder %v745, 0
        %vm778 = vcmp.ne.s32.totalorder %v746, 0
        %vm779 = vcmp.ne.s32.totalorder %v747, 0
        %vm780 = vcmp.ne.s32.totalorder %v748, 0
        %vm781 = vcmp.ne.s32.totalorder %v749, 0
        %vm782 = vcmp.ne.s32.totalorder %v718, 15
        %vm783 = vcmp.ne.s32.totalorder %v719, 15
        %vm784 = vcmp.ne.s32.totalorder %v720, 15
        %vm785 = vcmp.ne.s32.totalorder %v721, 15
        %vm786 = vcmp.ne.s32.totalorder %v722, 15
        %vm787 = vcmp.ne.s32.totalorder %v723, 15
        %vm788 = vcmp.ne.s32.totalorder %v724, 15
        %vm789 = vcmp.ne.s32.totalorder %v725, 15
        %vm790 = vcmp.ne.s32.totalorder %v726, 15
        %vm791 = vcmp.ne.s32.totalorder %v727, 15
        %vm792 = vcmp.ne.s32.totalorder %v728, 15
        %vm793 = vcmp.ne.s32.totalorder %v729, 15
        %vm794 = vcmp.ne.s32.totalorder %v730, 15
        %vm795 = vcmp.ne.s32.totalorder %v731, 15
        %vm796 = vcmp.ne.s32.totalorder %v732, 15
        %vm797 = vcmp.ne.s32.totalorder %v733, 15
        %vm798 = vcmp.ne.s32.totalorder %v734, 15
        %vm799 = vcmp.ne.s32.totalorder %v735, 15
        %vm800 = vcmp.ne.s32.totalorder %v736, 15
        %vm801 = vcmp.ne.s32.totalorder %v737, 15
        %vm802 = vcmp.ne.s32.totalorder %v738, 15
        %vm803 = vcmp.ne.s32.totalorder %v739, 15
        %vm804 = vcmp.ne.s32.totalorder %v740, 15
        %vm805 = vcmp.ne.s32.totalorder %v741, 15
        %vm806 = vcmp.ne.s32.totalorder %v742, 15
        %vm807 = vcmp.ne.s32.totalorder %v743, 15
        %vm808 = vcmp.ne.s32.totalorder %v744, 15
        %vm809 = vcmp.ne.s32.totalorder %v745, 15
        %vm810 = vcmp.ne.s32.totalorder %v746, 15
        %vm811 = vcmp.ne.s32.totalorder %v747, 15
        %vm812 = vcmp.ne.s32.totalorder %v748, 15
        %vm813 = vcmp.ne.s32.totalorder %v749, 15
        %v814 = vld [vmem:[%s2] sm:$0x1]
        %v815 = vld [vmem:[%s3] sm:$0x1]
        %v816 = vld [vmem:[%s287] sm:$0xf]
        %v817 = vld [vmem:[%s287 + $0x4] sm:$0xf]
        %v818 = vld [vmem:[%s287 + $0x8] sm:$0xf]
        %v819 = vld [vmem:[%s287 + $0xc] sm:$0xf]
        %v820 = vld [vmem:[%s287 + $0x10] sm:$0xf]
        %v821 = vld [vmem:[%s287 + $0x14] sm:$0xf]
        %v822 = vld [vmem:[%s287 + $0x18] sm:$0xf]
        %v823 = vld [vmem:[%s287 + $0x1c] sm:$0xf]
        %v824 = vld [vmem:[%s287 + $0x20] sm:$0xf]
        %v825 = vld [vmem:[%s287 + $0x24] sm:$0xf]
        %v826 = vld [vmem:[%s287 + $0x28] sm:$0xf]
        %v827 = vld [vmem:[%s287 + $0x2c] sm:$0xf]
        %v828 = vld [vmem:[%s287 + $0x30] sm:$0xf]
        %v829 = vld [vmem:[%s287 + $0x34] sm:$0xf]
        %v830 = vld [vmem:[%s287 + $0x38] sm:$0xf]
        %v831 = vld [vmem:[%s287 + $0x3c] sm:$0xf]
        %v832 = vld [vmem:[%s287 + $0x40] sm:$0xf]
        %v833 = vld [vmem:[%s287 + $0x44] sm:$0xf]
        %v834 = vld [vmem:[%s287 + $0x48] sm:$0xf]
        %v835 = vld [vmem:[%s287 + $0x4c] sm:$0xf]
        %v836 = vld [vmem:[%s287 + $0x50] sm:$0xf]
        %v837 = vld [vmem:[%s287 + $0x54] sm:$0xf]
        %v838 = vld [vmem:[%s287 + $0x58] sm:$0xf]
        %v839 = vld [vmem:[%s287 + $0x5c] sm:$0xf]
        %v840 = vld [vmem:[%s287 + $0x60] sm:$0xf]
        %v841 = vld [vmem:[%s287 + $0x64] sm:$0xf]
        %v842 = vld [vmem:[%s287 + $0x68] sm:$0xf]
        %v843 = vld [vmem:[%s287 + $0x6c] sm:$0xf]
        %v844 = vld [vmem:[%s287 + $0x70] sm:$0xf]
        %v845 = vld [vmem:[%s287 + $0x74] sm:$0xf]
        %v846 = vld [vmem:[%s287 + $0x78] sm:$0xf]
        %v847 = vld [vmem:[%s287 + $0x7c] sm:$0xf]
        %v848 = vunpack.c.l.bf16 %v816
        %v849 = vunpack.c.l.bf16 %v817
        %v850 = vunpack.c.l.bf16 %v818
        %v851 = vunpack.c.l.bf16 %v819
        %v852 = vunpack.c.l.bf16 %v820
        %v853 = vunpack.c.l.bf16 %v821
        %v854 = vunpack.c.l.bf16 %v822
        %v855 = vunpack.c.l.bf16 %v823
        %v856 = vunpack.c.l.bf16 %v824
        %v857 = vunpack.c.l.bf16 %v825
        %v858 = vunpack.c.l.bf16 %v826
        %v859 = vunpack.c.l.bf16 %v827
        %v860 = vunpack.c.l.bf16 %v828
        %v861 = vunpack.c.l.bf16 %v829
        %v862 = vunpack.c.l.bf16 %v830
        %v863 = vunpack.c.l.bf16 %v831
        %v864 = vunpack.c.l.bf16 %v832
        %v865 = vunpack.c.l.bf16 %v833
        %v866 = vunpack.c.l.bf16 %v834
        %v867 = vunpack.c.l.bf16 %v835
        %v868 = vunpack.c.l.bf16 %v836
        %v869 = vunpack.c.l.bf16 %v837
        %v870 = vunpack.c.l.bf16 %v838
        %v871 = vunpack.c.l.bf16 %v839
        %v872 = vunpack.c.l.bf16 %v840
        %v873 = vunpack.c.l.bf16 %v841
        %v874 = vunpack.c.l.bf16 %v842
        %v875 = vunpack.c.l.bf16 %v843
        %v876 = vunpack.c.l.bf16 %v844
        %v877 = vunpack.c.l.bf16 %v845
        %v878 = vunpack.c.l.bf16 %v846
        %v879 = vunpack.c.l.bf16 %v847
        %v912 = vunpack.c.l.b16 %v816
        %v913 = vunpack.c.l.b16 %v817
        %v914 = vunpack.c.l.b16 %v818
        %v915 = vunpack.c.l.b16 %v819
        %v916 = vunpack.c.l.b16 %v820
        %v917 = vunpack.c.l.b16 %v821
        %v918 = vunpack.c.l.b16 %v822
        %v919 = vunpack.c.l.b16 %v823
        %v920 = vunpack.c.l.b16 %v824
        %v921 = vunpack.c.l.b16 %v825
        %v922 = vunpack.c.l.b16 %v826
        %v923 = vunpack.c.l.b16 %v827
        %v924 = vunpack.c.l.b16 %v828
        %v925 = vunpack.c.l.b16 %v829
        %v926 = vunpack.c.l.b16 %v830
        %v927 = vunpack.c.l.b16 %v831
        %v928 = vunpack.c.l.b16 %v832
        %v929 = vunpack.c.l.b16 %v833
        %v930 = vunpack.c.l.b16 %v834
        %v931 = vunpack.c.l.b16 %v835
        %v932 = vunpack.c.l.b16 %v836
        %v933 = vunpack.c.l.b16 %v837
        %v934 = vunpack.c.l.b16 %v838
        %v935 = vunpack.c.l.b16 %v839
        %v936 = vunpack.c.l.b16 %v840
        %v937 = vunpack.c.l.b16 %v841
        %v938 = vunpack.c.l.b16 %v842
        %v939 = vunpack.c.l.b16 %v843
        %v940 = vunpack.c.l.b16 %v844
        %v941 = vunpack.c.l.b16 %v845
        %v942 = vunpack.c.l.b16 %v846
        %v943 = vunpack.c.l.b16 %v847
        %v944 = vpack.c.b16 %v913, %v912
        %v945 = vpack.c.b16 %v915, %v914
        %v946 = vpack.c.b16 %v917, %v916
        %v947 = vpack.c.b16 %v919, %v918
        %v948 = vpack.c.b16 %v921, %v920
        %v949 = vpack.c.b16 %v923, %v922
        %v950 = vpack.c.b16 %v925, %v924
        %v951 = vpack.c.b16 %v927, %v926
        %v952 = vpack.c.b16 %v929, %v928
        %v953 = vpack.c.b16 %v931, %v930
        %v954 = vpack.c.b16 %v933, %v932
        %v955 = vpack.c.b16 %v935, %v934
        %v956 = vpack.c.b16 %v937, %v936
        %v957 = vpack.c.b16 %v939, %v938
        %v958 = vpack.c.b16 %v941, %v940
        %v959 = vpack.c.b16 %v943, %v942
        %976 = vst [vmem:[#allocation2 + $0x20] sm:$0xff] %v944
        %977 = vst [vmem:[#allocation2 + $0x38] sm:$0xff] %v945
        %978 = vst [vmem:[#allocation2 + $0x50] sm:$0xff] %v946
        %979 = vst [vmem:[#allocation2 + $0x68] sm:$0xff] %v947
        %980 = vst [vmem:[#allocation2 + $0x80] sm:$0xff] %v948
        %981 = vst [vmem:[#allocation2 + $0x98] sm:$0xff] %v949
        %982 = vst [vmem:[#allocation2 + $0xb0] sm:$0xff] %v950
        %983 = vst [vmem:[#allocation2 + $0xc8] sm:$0xff] %v951
        %984 = vst [vmem:[#allocation2 + $0xe0] sm:$0xff] %v952
        %985 = vst [vmem:[#allocation2 + $0xf8] sm:$0xff] %v953
        %986 = vst [vmem:[#allocation2 + $0x110] sm:$0xff] %v954
        %987 = vst [vmem:[#allocation2 + $0x128] sm:$0xff] %v955
        %988 = vst [vmem:[#allocation2 + $0x140] sm:$0xff] %v956
        %989 = vst [vmem:[#allocation2 + $0x158] sm:$0xff] %v957
        %990 = vst [vmem:[#allocation2 + $0x170] sm:$0xff] %v958
        %991 = vst [vmem:[#allocation2 + $0x188] sm:$0xff] %v959
        %v992 = vrot.slane %v848, 7
        %v993 = vrot.slane %v849, 7
        %v994 = vrot.slane %v850, 7
        %v995 = vrot.slane %v851, 7
        %v996 = vrot.slane %v852, 7
        %v997 = vrot.slane %v853, 7
        %v998 = vrot.slane %v854, 7
        %v999 = vrot.slane %v855, 7
        %v1000 = vrot.slane %v856, 7
        %v1001 = vrot.slane %v857, 7
        %v1002 = vrot.slane %v858, 7
        %v1003 = vrot.slane %v859, 7
        %v1004 = vrot.slane %v860, 7
        %v1005 = vrot.slane %v861, 7
        %v1006 = vrot.slane %v862, 7
        %v1007 = vrot.slane %v863, 7
        %v1008 = vrot.slane %v864, 7
        %v1009 = vrot.slane %v865, 7
        %v1010 = vrot.slane %v866, 7
        %v1011 = vrot.slane %v867, 7
        %v1012 = vrot.slane %v868, 7
        %v1013 = vrot.slane %v869, 7
        %v1014 = vrot.slane %v870, 7
        %v1015 = vrot.slane %v871, 7
        %v1016 = vrot.slane %v872, 7
        %v1017 = vrot.slane %v873, 7
        %v1018 = vrot.slane %v874, 7
        %v1019 = vrot.slane %v875, 7
        %v1020 = vrot.slane %v876, 7
        %v1021 = vrot.slane %v877, 7
        %v1022 = vrot.slane %v878, 7
        %v1023 = vrot.slane %v879, 7
        %vm1024 = vcmp.lt.s32.totalorder %v334, 1
        %v1025 = vsel %vm1024, %v1022, %v1023
        %v1026 = vsel %vm1024, %v1021, %v1022
        %v1027 = vsel %vm1024, %v1020, %v1021
        %v1028 = vsel %vm1024, %v1019, %v1020
        %v1029 = vsel %vm1024, %v1018, %v1019
        %v1030 = vsel %vm1024, %v1017, %v1018
        %v1031 = vsel %vm1024, %v1016, %v1017
        %v1032 = vsel %vm1024, %v1015, %v1016
        %v1033 = vsel %vm1024, %v1014, %v1015
        %v1034 = vsel %vm1024, %v1013, %v1014
        %v1035 = vsel %vm1024, %v1012, %v1013
        %v1036 = vsel %vm1024, %v1011, %v1012
        %v1037 = vsel %vm1024, %v1010, %v1011
        %v1038 = vsel %vm1024, %v1009, %v1010
        %v1039 = vsel %vm1024, %v1008, %v1009
        %v1040 = vsel %vm1024, %v1007, %v1008
        %v1041 = vsel %vm1024, %v1006, %v1007
        %v1042 = vsel %vm1024, %v1005, %v1006
        %v1043 = vsel %vm1024, %v1004, %v1005
        %v1044 = vsel %vm1024, %v1003, %v1004
        %v1045 = vsel %vm1024, %v1002, %v1003
        %v1046 = vsel %vm1024, %v1001, %v1002
        %v1047 = vsel %vm1024, %v1000, %v1001
        %v1048 = vsel %vm1024, %v999, %v1000
        %v1049 = vsel %vm1024, %v998, %v999
        %v1050 = vsel %vm1024, %v997, %v998
        %v1051 = vsel %vm1024, %v996, %v997
        %v1052 = vsel %vm1024, %v995, %v996
        %v1053 = vsel %vm1024, %v994, %v995
        %v1054 = vsel %vm1024, %v993, %v994
        %v1055 = vsel %vm1024, %v992, %v993
        %v1056 = vsel %vm1024, %v1023, %v992
        %v1057 = vsel %vm750, 1, 0
        %v1058 = vsel %vm751, 1, 0
        %v1059 = vsel %vm752, 1, 0
        %v1060 = vsel %vm753, 1, 0
        %v1061 = vsel %vm754, 1, 0
        %v1062 = vsel %vm755, 1, 0
        %v1063 = vsel %vm756, 1, 0
        %v1064 = vsel %vm757, 1, 0
        %v1065 = vsel %vm758, 1, 0
        %v1066 = vsel %vm759, 1, 0
        %v1067 = vsel %vm760, 1, 0
        %v1068 = vsel %vm761, 1, 0
        %v1069 = vsel %vm762, 1, 0
        %v1070 = vsel %vm763, 1, 0
        %v1071 = vsel %vm764, 1, 0
        %v1072 = vsel %vm765, 1, 0
        %v1073 = vsel %vm766, 1, 0
        %v1074 = vsel %vm767, 1, 0
        %v1075 = vsel %vm768, 1, 0
        %v1076 = vsel %vm769, 1, 0
        %v1077 = vsel %vm770, 1, 0
        %v1078 = vsel %vm771, 1, 0
        %v1079 = vsel %vm772, 1, 0
        %v1080 = vsel %vm773, 1, 0
        %v1081 = vsel %vm774, 1, 0
        %v1082 = vsel %vm775, 1, 0
        %v1083 = vsel %vm776, 1, 0
        %v1084 = vsel %vm777, 1, 0
        %v1085 = vsel %vm778, 1, 0
        %v1086 = vsel %vm779, 1, 0
        %v1087 = vsel %vm780, 1, 0
        %v1088 = vsel %vm781, 1, 0
        %vm1089 = vcmp.eq.s32.totalorder %v1057, 1
        %vm1090 = vcmp.eq.s32.totalorder %v1058, 1
        %vm1091 = vcmp.eq.s32.totalorder %v1059, 1
        %vm1092 = vcmp.eq.s32.totalorder %v1060, 1
        %vm1093 = vcmp.eq.s32.totalorder %v1061, 1
        %vm1094 = vcmp.eq.s32.totalorder %v1062, 1
        %vm1095 = vcmp.eq.s32.totalorder %v1063, 1
        %vm1096 = vcmp.eq.s32.totalorder %v1064, 1
        %vm1097 = vcmp.eq.s32.totalorder %v1065, 1
        %vm1098 = vcmp.eq.s32.totalorder %v1066, 1
        %vm1099 = vcmp.eq.s32.totalorder %v1067, 1
        %vm1100 = vcmp.eq.s32.totalorder %v1068, 1
        %vm1101 = vcmp.eq.s32.totalorder %v1069, 1
        %vm1102 = vcmp.eq.s32.totalorder %v1070, 1
        %vm1103 = vcmp.eq.s32.totalorder %v1071, 1
        %vm1104 = vcmp.eq.s32.totalorder %v1072, 1
        %vm1105 = vcmp.eq.s32.totalorder %v1073, 1
        %vm1106 = vcmp.eq.s32.totalorder %v1074, 1
        %vm1107 = vcmp.eq.s32.totalorder %v1075, 1
        %vm1108 = vcmp.eq.s32.totalorder %v1076, 1
        %vm1109 = vcmp.eq.s32.totalorder %v1077, 1
        %vm1110 = vcmp.eq.s32.totalorder %v1078, 1
        %vm1111 = vcmp.eq.s32.totalorder %v1079, 1
        %vm1112 = vcmp.eq.s32.totalorder %v1080, 1
        %vm1113 = vcmp.eq.s32.totalorder %v1081, 1
        %vm1114 = vcmp.eq.s32.totalorder %v1082, 1
        %vm1115 = vcmp.eq.s32.totalorder %v1083, 1
        %vm1116 = vcmp.eq.s32.totalorder %v1084, 1
        %vm1117 = vcmp.eq.s32.totalorder %v1085, 1
        %vm1118 = vcmp.eq.s32.totalorder %v1086, 1
        %vm1119 = vcmp.eq.s32.totalorder %v1087, 1
        %vm1120 = vcmp.eq.s32.totalorder %v1088, 1
        %v1121 = vsel %vm1089, %v1056, 0.0
        %v1122 = vsel %vm1090, %v1055, 0.0
        %v1123 = vsel %vm1091, %v1054, 0.0
        %v1124 = vsel %vm1092, %v1053, 0.0
        %v1125 = vsel %vm1093, %v1052, 0.0
        %v1126 = vsel %vm1094, %v1051, 0.0
        %v1127 = vsel %vm1095, %v1050, 0.0
        %v1128 = vsel %vm1096, %v1049, 0.0
        %v1129 = vsel %vm1097, %v1048, 0.0
        %v1130 = vsel %vm1098, %v1047, 0.0
        %v1131 = vsel %vm1099, %v1046, 0.0
        %v1132 = vsel %vm1100, %v1045, 0.0
        %v1133 = vsel %vm1101, %v1044, 0.0
        %v1134 = vsel %vm1102, %v1043, 0.0
        %v1135 = vsel %vm1103, %v1042, 0.0
        %v1136 = vsel %vm1104, %v1041, 0.0
        %v1137 = vsel %vm1105, %v1040, 0.0
        %v1138 = vsel %vm1106, %v1039, 0.0
        %v1139 = vsel %vm1107, %v1038, 0.0
        %v1140 = vsel %vm1108, %v1037, 0.0
        %v1141 = vsel %vm1109, %v1036, 0.0
        %v1142 = vsel %vm1110, %v1035, 0.0
        %v1143 = vsel %vm1111, %v1034, 0.0
        %v1144 = vsel %vm1112, %v1033, 0.0
        %v1145 = vsel %vm1113, %v1032, 0.0
        %v1146 = vsel %vm1114, %v1031, 0.0
        %v1147 = vsel %vm1115, %v1030, 0.0
        %v1148 = vsel %vm1116, %v1029, 0.0
        %v1149 = vsel %vm1117, %v1028, 0.0
        %v1150 = vsel %vm1118, %v1027, 0.0
        %v1151 = vsel %vm1119, %v1026, 0.0
        %v1152 = vsel %vm1120, %v1025, 0.0
        %v1153 = vpack.c.bf16 %v1122, %v1121
        %v1154 = vpack.c.bf16 %v1124, %v1123
        %v1155 = vpack.c.bf16 %v1126, %v1125
        %v1156 = vpack.c.bf16 %v1128, %v1127
        %v1157 = vpack.c.bf16 %v1130, %v1129
        %v1158 = vpack.c.bf16 %v1132, %v1131
        %v1159 = vpack.c.bf16 %v1134, %v1133
        %v1160 = vpack.c.bf16 %v1136, %v1135
        %v1161 = vpack.c.bf16 %v1138, %v1137
        %v1162 = vpack.c.bf16 %v1140, %v1139
        %v1163 = vpack.c.bf16 %v1142, %v1141
        %v1164 = vpack.c.bf16 %v1144, %v1143
        %v1165 = vpack.c.bf16 %v1146, %v1145
        %v1166 = vpack.c.bf16 %v1148, %v1147
        %v1167 = vpack.c.bf16 %v1150, %v1149
        %v1168 = vpack.c.bf16 %v1152, %v1151
        %1169 = vst [vmem:[#allocation2 + $0x18] sm:$0xff] %v1153
        %1170 = vst [vmem:[#allocation2 + $0x30] sm:$0xff] %v1154
        %1171 = vst [vmem:[#allocation2 + $0x48] sm:$0xff] %v1155
        %1172 = vst [vmem:[#allocation2 + $0x60] sm:$0xff] %v1156
        %1173 = vst [vmem:[#allocation2 + $0x78] sm:$0xff] %v1157
        %1174 = vst [vmem:[#allocation2 + $0x90] sm:$0xff] %v1158
        %1175 = vst [vmem:[#allocation2 + $0xa8] sm:$0xff] %v1159
        %1176 = vst [vmem:[#allocation2 + $0xc0] sm:$0xff] %v1160
        %1177 = vst [vmem:[#allocation2 + $0xd8] sm:$0xff] %v1161
        %1178 = vst [vmem:[#allocation2 + $0xf0] sm:$0xff] %v1162
        %1179 = vst [vmem:[#allocation2 + $0x108] sm:$0xff] %v1163
        %1180 = vst [vmem:[#allocation2 + $0x120] sm:$0xff] %v1164
        %1181 = vst [vmem:[#allocation2 + $0x138] sm:$0xff] %v1165
        %1182 = vst [vmem:[#allocation2 + $0x150] sm:$0xff] %v1166
        %1183 = vst [vmem:[#allocation2 + $0x168] sm:$0xff] %v1167
        %1184 = vst [vmem:[#allocation2 + $0x180] sm:$0xff] %v1168
        %v1185 = vrot.slane %v848, 1
        %v1186 = vrot.slane %v849, 1
        %v1187 = vrot.slane %v850, 1
        %v1188 = vrot.slane %v851, 1
        %v1189 = vrot.slane %v852, 1
        %v1190 = vrot.slane %v853, 1
        %v1191 = vrot.slane %v854, 1
        %v1192 = vrot.slane %v855, 1
        %v1193 = vrot.slane %v856, 1
        %v1194 = vrot.slane %v857, 1
        %v1195 = vrot.slane %v858, 1
        %v1196 = vrot.slane %v859, 1
        %v1197 = vrot.slane %v860, 1
        %v1198 = vrot.slane %v861, 1
        %v1199 = vrot.slane %v862, 1
        %v1200 = vrot.slane %v863, 1
        %v1201 = vrot.slane %v864, 1
        %v1202 = vrot.slane %v865, 1
        %v1203 = vrot.slane %v866, 1
        %v1204 = vrot.slane %v867, 1
        %v1205 = vrot.slane %v868, 1
        %v1206 = vrot.slane %v869, 1
        %v1207 = vrot.slane %v870, 1
        %v1208 = vrot.slane %v871, 1
        %v1209 = vrot.slane %v872, 1
        %v1210 = vrot.slane %v873, 1
        %v1211 = vrot.slane %v874, 1
        %v1212 = vrot.slane %v875, 1
        %v1213 = vrot.slane %v876, 1
        %v1214 = vrot.slane %v877, 1
        %v1215 = vrot.slane %v878, 1
        %v1216 = vrot.slane %v879, 1
        %vm1217 = vcmp.lt.s32.totalorder %v334, 7
        %v1218 = vsel %vm1217, %v1215, %v1216
        %v1219 = vsel %vm1217, %v1214, %v1215
        %v1220 = vsel %vm1217, %v1213, %v1214
        %v1221 = vsel %vm1217, %v1212, %v1213
        %v1222 = vsel %vm1217, %v1211, %v1212
        %v1223 = vsel %vm1217, %v1210, %v1211
        %v1224 = vsel %vm1217, %v1209, %v1210
        %v1225 = vsel %vm1217, %v1208, %v1209
        %v1226 = vsel %vm1217, %v1207, %v1208
        %v1227 = vsel %vm1217, %v1206, %v1207
        %v1228 = vsel %vm1217, %v1205, %v1206
        %v1229 = vsel %vm1217, %v1204, %v1205
        %v1230 = vsel %vm1217, %v1203, %v1204
        %v1231 = vsel %vm1217, %v1202, %v1203
        %v1232 = vsel %vm1217, %v1201, %v1202
        %v1233 = vsel %vm1217, %v1200, %v1201
        %v1234 = vsel %vm1217, %v1199, %v1200
        %v1235 = vsel %vm1217, %v1198, %v1199
        %v1236 = vsel %vm1217, %v1197, %v1198
        %v1237 = vsel %vm1217, %v1196, %v1197
        %v1238 = vsel %vm1217, %v1195, %v1196
        %v1239 = vsel %vm1217, %v1194, %v1195
        %v1240 = vsel %vm1217, %v1193, %v1194
        %v1241 = vsel %vm1217, %v1192, %v1193
        %v1242 = vsel %vm1217, %v1191, %v1192
        %v1243 = vsel %vm1217, %v1190, %v1191
        %v1244 = vsel %vm1217, %v1189, %v1190
        %v1245 = vsel %vm1217, %v1188, %v1189
        %v1246 = vsel %vm1217, %v1187, %v1188
        %v1247 = vsel %vm1217, %v1186, %v1187
        %v1248 = vsel %vm1217, %v1185, %v1186
        %v1249 = vsel %vm1217, %v1216, %v1185
        %v1250 = vsel %vm782, 1, 0
        %v1251 = vsel %vm783, 1, 0
        %v1252 = vsel %vm784, 1, 0
        %v1253 = vsel %vm785, 1, 0
        %v1254 = vsel %vm786, 1, 0
        %v1255 = vsel %vm787, 1, 0
        %v1256 = vsel %vm788, 1, 0
        %v1257 = vsel %vm789, 1, 0
        %v1258 = vsel %vm790, 1, 0
        %v1259 = vsel %vm791, 1, 0
        %v1260 = vsel %vm792, 1, 0
        %v1261 = vsel %vm793, 1, 0
        %v1262 = vsel %vm794, 1, 0
        %v1263 = vsel %vm795, 1, 0
        %v1264 = vsel %vm796, 1, 0
        %v1265 = vsel %vm797, 1, 0
        %v1266 = vsel %vm798, 1, 0
        %v1267 = vsel %vm799, 1, 0
        %v1268 = vsel %vm800, 1, 0
        %v1269 = vsel %vm801, 1, 0
        %v1270 = vsel %vm802, 1, 0
        %v1271 = vsel %vm803, 1, 0
        %v1272 = vsel %vm804, 1, 0
        %v1273 = vsel %vm805, 1, 0
        %v1274 = vsel %vm806, 1, 0
        %v1275 = vsel %vm807, 1, 0
        %v1276 = vsel %vm808, 1, 0
        %v1277 = vsel %vm809, 1, 0
        %v1278 = vsel %vm810, 1, 0
        %v1279 = vsel %vm811, 1, 0
        %v1280 = vsel %vm812, 1, 0
        %v1281 = vsel %vm813, 1, 0
        %vm1282 = vcmp.eq.s32.totalorder %v1250, 1
        %vm1283 = vcmp.eq.s32.totalorder %v1251, 1
        %vm1284 = vcmp.eq.s32.totalorder %v1252, 1
        %vm1285 = vcmp.eq.s32.totalorder %v1253, 1
        %vm1286 = vcmp.eq.s32.totalorder %v1254, 1
        %vm1287 = vcmp.eq.s32.totalorder %v1255, 1
        %vm1288 = vcmp.eq.s32.totalorder %v1256, 1
        %vm1289 = vcmp.eq.s32.totalorder %v1257, 1
        %vm1290 = vcmp.eq.s32.totalorder %v1258, 1
        %vm1291 = vcmp.eq.s32.totalorder %v1259, 1
        %vm1292 = vcmp.eq.s32.totalorder %v1260, 1
        %vm1293 = vcmp.eq.s32.totalorder %v1261, 1
        %vm1294 = vcmp.eq.s32.totalorder %v1262, 1
        %vm1295 = vcmp.eq.s32.totalorder %v1263, 1
        %vm1296 = vcmp.eq.s32.totalorder %v1264, 1
        %vm1297 = vcmp.eq.s32.totalorder %v1265, 1
        %vm1298 = vcmp.eq.s32.totalorder %v1266, 1
        %vm1299 = vcmp.eq.s32.totalorder %v1267, 1
        %vm1300 = vcmp.eq.s32.totalorder %v1268, 1
        %vm1301 = vcmp.eq.s32.totalorder %v1269, 1
        %vm1302 = vcmp.eq.s32.totalorder %v1270, 1
        %vm1303 = vcmp.eq.s32.totalorder %v1271, 1
        %vm1304 = vcmp.eq.s32.totalorder %v1272, 1
        %vm1305 = vcmp.eq.s32.totalorder %v1273, 1
        %vm1306 = vcmp.eq.s32.totalorder %v1274, 1
        %vm1307 = vcmp.eq.s32.totalorder %v1275, 1
        %vm1308 = vcmp.eq.s32.totalorder %v1276, 1
        %vm1309 = vcmp.eq.s32.totalorder %v1277, 1
        %vm1310 = vcmp.eq.s32.totalorder %v1278, 1
        %vm1311 = vcmp.eq.s32.totalorder %v1279, 1
        %vm1312 = vcmp.eq.s32.totalorder %v1280, 1
        %vm1313 = vcmp.eq.s32.totalorder %v1281, 1
        %v1314 = vsel %vm1282, %v1248, 0.0
        %v1315 = vsel %vm1283, %v1247, 0.0
        %v1316 = vsel %vm1284, %v1246, 0.0
        %v1317 = vsel %vm1285, %v1245, 0.0
        %v1318 = vsel %vm1286, %v1244, 0.0
        %v1319 = vsel %vm1287, %v1243, 0.0
        %v1320 = vsel %vm1288, %v1242, 0.0
        %v1321 = vsel %vm1289, %v1241, 0.0
        %v1322 = vsel %vm1290, %v1240, 0.0
        %v1323 = vsel %vm1291, %v1239, 0.0
        %v1324 = vsel %vm1292, %v1238, 0.0
        %v1325 = vsel %vm1293, %v1237, 0.0
        %v1326 = vsel %vm1294, %v1236, 0.0
        %v1327 = vsel %vm1295, %v1235, 0.0
        %v1328 = vsel %vm1296, %v1234, 0.0
        %v1329 = vsel %vm1297, %v1233, 0.0
        %v1330 = vsel %vm1298, %v1232, 0.0
        %v1331 = vsel %vm1299, %v1231, 0.0
        %v1332 = vsel %vm1300, %v1230, 0.0
        %v1333 = vsel %vm1301, %v1229, 0.0
        %v1334 = vsel %vm1302, %v1228, 0.0
        %v1335 = vsel %vm1303, %v1227, 0.0
        %v1336 = vsel %vm1304, %v1226, 0.0
        %v1337 = vsel %vm1305, %v1225, 0.0
        %v1338 = vsel %vm1306, %v1224, 0.0
        %v1339 = vsel %vm1307, %v1223, 0.0
        %v1340 = vsel %vm1308, %v1222, 0.0
        %v1341 = vsel %vm1309, %v1221, 0.0
        %v1342 = vsel %vm1310, %v1220, 0.0
        %v1343 = vsel %vm1311, %v1219, 0.0
        %v1344 = vsel %vm1312, %v1218, 0.0
        %v1345 = vsel %vm1313, %v1249, 0.0
        %v1346 = vpack.c.bf16 %v1315, %v1314
        %v1347 = vpack.c.bf16 %v1317, %v1316
        %v1348 = vpack.c.bf16 %v1319, %v1318
        %v1349 = vpack.c.bf16 %v1321, %v1320
        %v1350 = vpack.c.bf16 %v1323, %v1322
        %v1351 = vpack.c.bf16 %v1325, %v1324
        %v1352 = vpack.c.bf16 %v1327, %v1326
        %v1353 = vpack.c.bf16 %v1329, %v1328
        %v1354 = vpack.c.bf16 %v1331, %v1330
        %v1355 = vpack.c.bf16 %v1333, %v1332
        %v1356 = vpack.c.bf16 %v1335, %v1334
        %v1357 = vpack.c.bf16 %v1337, %v1336
        %v1358 = vpack.c.bf16 %v1339, %v1338
        %v1359 = vpack.c.bf16 %v1341, %v1340
        %v1360 = vpack.c.bf16 %v1343, %v1342
        %v1361 = vpack.c.bf16 %v1345, %v1344
        %1362 = vst [vmem:[#allocation2 + $0x28] sm:$0xff] %v1346
        %1363 = vst [vmem:[#allocation2 + $0x40] sm:$0xff] %v1347
        %1364 = vst [vmem:[#allocation2 + $0x58] sm:$0xff] %v1348
        %1365 = vst [vmem:[#allocation2 + $0x70] sm:$0xff] %v1349
        %1366 = vst [vmem:[#allocation2 + $0x88] sm:$0xff] %v1350
        %1367 = vst [vmem:[#allocation2 + $0xa0] sm:$0xff] %v1351
        %1368 = vst [vmem:[#allocation2 + $0xb8] sm:$0xff] %v1352
        %1369 = vst [vmem:[#allocation2 + $0xd0] sm:$0xff] %v1353
        %1370 = vst [vmem:[#allocation2 + $0xe8] sm:$0xff] %v1354
        %1371 = vst [vmem:[#allocation2 + $0x100] sm:$0xff] %v1355
        %1372 = vst [vmem:[#allocation2 + $0x118] sm:$0xff] %v1356
        %1373 = vst [vmem:[#allocation2 + $0x130] sm:$0xff] %v1357
        %1374 = vst [vmem:[#allocation2 + $0x148] sm:$0xff] %v1358
        %1375 = vst [vmem:[#allocation2 + $0x160] sm:$0xff] %v1359
        %1376 = vst [vmem:[#allocation2 + $0x178] sm:$0xff] %v1360
        %1377 = vst [vmem:[#allocation2 + $0x190] sm:$0xff] %v1361
        %v1378 = vld [vmem:[#allocation2] sm:$0xff]
        %v1379 = vld [vmem:[#allocation2 + $0x8] sm:$0xff]
        %v1380 = vld [vmem:[#allocation2 + $0x10] sm:$0xff]
        %v1381 = vld [vmem:[#allocation2 + $0x18] sm:$0xff]
        %v1382 = vld [vmem:[#allocation2 + $0x20] sm:$0xff]
        %v1383 = vld [vmem:[#allocation2 + $0x28] sm:$0xff]
        %v1384 = vld [vmem:[#allocation2 + $0x30] sm:$0xff]
        %v1385 = vld [vmem:[#allocation2 + $0x38] sm:$0xff]
        %v1386 = vld [vmem:[#allocation2 + $0x40] sm:$0xff]
        %v1387 = vld [vmem:[#allocation2 + $0x48] sm:$0xff]
        %v1388 = vld [vmem:[#allocation2 + $0x50] sm:$0xff]
        %v1389 = vld [vmem:[#allocation2 + $0x58] sm:$0xff]
        %v1390 = vld [vmem:[#allocation2 + $0x60] sm:$0xff]
        %v1391 = vld [vmem:[#allocation2 + $0x68] sm:$0xff]
        %v1392 = vld [vmem:[#allocation2 + $0x70] sm:$0xff]
        %v1393 = vld [vmem:[#allocation2 + $0x78] sm:$0xff]
        %v1394 = vld [vmem:[#allocation2 + $0x80] sm:$0xff]
        %v1395 = vld [vmem:[#allocation2 + $0x88] sm:$0xff]
        %v1396 = vld [vmem:[#allocation2 + $0x90] sm:$0xff]
        %v1397 = vld [vmem:[#allocation2 + $0x98] sm:$0xff]
        %v1398 = vld [vmem:[#allocation2 + $0xa0] sm:$0xff]
        %v1399 = vld [vmem:[#allocation2 + $0xa8] sm:$0xff]
        %v1400 = vld [vmem:[#allocation2 + $0xb0] sm:$0xff]
        %v1401 = vld [vmem:[#allocation2 + $0xb8] sm:$0xff]
        %v1402 = vld [vmem:[#allocation7] sm:$0xf]
        %v1403 = vld [vmem:[#allocation7 + $0x4] sm:$0xf]
        %v1404 = vld [vmem:[#allocation7 + $0x8] sm:$0xf]
        %v1405 = vld [vmem:[#allocation7 + $0xc] sm:$0xf]
        %v1406 = vld [vmem:[#allocation7 + $0x10] sm:$0xf]
        %v1407 = vld [vmem:[#allocation7 + $0x14] sm:$0xf]
        %v1408 = vld [vmem:[#allocation7 + $0x18] sm:$0xf]
        %v1409 = vld [vmem:[#allocation7 + $0x1c] sm:$0xf]
        %v1410 = vld [vmem:[#allocation7 + $0x20] sm:$0xf]
        %v1411 = vld [vmem:[#allocation7 + $0x24] sm:$0xf]
        %v1412 = vld [vmem:[#allocation7 + $0x28] sm:$0xf]
        %v1413 = vld [vmem:[#allocation7 + $0x2c] sm:$0xf]
        %v1414 = vld [vmem:[#allocation7 + $0x30] sm:$0xf]
        %v1415 = vld [vmem:[#allocation7 + $0x34] sm:$0xf]
        %v1416 = vld [vmem:[#allocation7 + $0x38] sm:$0xf]
        %v1417 = vld [vmem:[#allocation7 + $0x3c] sm:$0xf]
        %v1418 = vld [vmem:[#allocation7 + $0x40] sm:$0xf]
        %v1419 = vld [vmem:[#allocation7 + $0x44] sm:$0xf]
        %v1420 = vld [vmem:[#allocation7 + $0x48] sm:$0xf]
        %v1421 = vld [vmem:[#allocation7 + $0x4c] sm:$0xf]
        %v1422 = vld [vmem:[#allocation7 + $0x50] sm:$0xf]
        %v1423 = vld [vmem:[#allocation7 + $0x54] sm:$0xf]
        %v1424 = vld [vmem:[#allocation7 + $0x58] sm:$0xf]
        %v1425 = vld [vmem:[#allocation7 + $0x5c] sm:$0xf]
        %v1426 = vld [vmem:[#allocation7 + $0x60] sm:$0xf]
        %v1427 = vld [vmem:[#allocation7 + $0x64] sm:$0xf]
        %v1428 = vld [vmem:[#allocation7 + $0x68] sm:$0xf]
        %v1429 = vld [vmem:[#allocation7 + $0x6c] sm:$0xf]
        %v1430 = vld [vmem:[#allocation7 + $0x70] sm:$0xf]
        %v1431 = vld [vmem:[#allocation7 + $0x74] sm:$0xf]
        %v1432 = vld [vmem:[#allocation7 + $0x78] sm:$0xf]
        %v1433 = vld [vmem:[#allocation7 + $0x7c] sm:$0xf]
        %v1434 = vld [vmem:[#allocation7 + $0x80] sm:$0xf]
        %v1435 = vld [vmem:[#allocation7 + $0x84] sm:$0xf]
        %v1436 = vld [vmem:[#allocation7 + $0x88] sm:$0xf]
        %v1437 = vld [vmem:[#allocation7 + $0x8c] sm:$0xf]
        %v1438 = vld [vmem:[#allocation7 + $0x90] sm:$0xf]
        %v1439 = vld [vmem:[#allocation7 + $0x94] sm:$0xf]
        %v1440 = vld [vmem:[#allocation7 + $0x98] sm:$0xf]
        %v1441 = vld [vmem:[#allocation7 + $0x9c] sm:$0xf]
        %v1442 = vld [vmem:[#allocation7 + $0xa0] sm:$0xf]
        %v1443 = vld [vmem:[#allocation7 + $0xa4] sm:$0xf]
        %v1444 = vld [vmem:[#allocation7 + $0xa8] sm:$0xf]
        %v1445 = vld [vmem:[#allocation7 + $0xac] sm:$0xf]
        %v1446 = vld [vmem:[#allocation7 + $0xb0] sm:$0xf]
        %v1447 = vld [vmem:[#allocation7 + $0xb4] sm:$0xf]
        %v1448 = vld [vmem:[#allocation7 + $0xb8] sm:$0xf]
        %v1449 = vld [vmem:[#allocation7 + $0xbc] sm:$0xf]
        %v1450 = vld [vmem:[#allocation2 + $0xc0] sm:$0xff]
        %v1451 = vld [vmem:[#allocation2 + $0xc8] sm:$0xff]
        %v1452 = vld [vmem:[#allocation2 + $0xd0] sm:$0xff]
        %s1453 = scalar_lea.vmem [#allocation7], 192
        %v1454 = vld [vmem:[%s1453] sm:$0xf]
        %v1455 = vld [vmem:[%s1453 + $0x4] sm:$0xf]
        %v1456 = vld [vmem:[%s1453 + $0x8] sm:$0xf]
        %v1457 = vld [vmem:[%s1453 + $0xc] sm:$0xf]
        %v1458 = vld [vmem:[%s1453 + $0x10] sm:$0xf]
        %v1459 = vld [vmem:[%s1453 + $0x14] sm:$0xf]
        %v1460 = vld [vmem:[%s1453 + $0x18] sm:$0xf]
        %v1461 = vld [vmem:[%s1453 + $0x1c] sm:$0xf]
        %v1462 = vld [vmem:[%s1453 + $0x20] sm:$0xf]
        %v1463 = vld [vmem:[%s1453 + $0x24] sm:$0xf]
        %v1464 = vld [vmem:[%s1453 + $0x28] sm:$0xf]
        %v1465 = vld [vmem:[%s1453 + $0x2c] sm:$0xf]
        %v1466 = vld [vmem:[%s1453 + $0x30] sm:$0xf]
        %v1467 = vld [vmem:[%s1453 + $0x34] sm:$0xf]
        %v1468 = vld [vmem:[%s1453 + $0x38] sm:$0xf]
        %v1469 = vld [vmem:[%s1453 + $0x3c] sm:$0xf]
        %v1470 = vld [vmem:[%s1453 + $0x40] sm:$0xf]
        %v1471 = vld [vmem:[%s1453 + $0x44] sm:$0xf]
        %v1472 = vld [vmem:[%s1453 + $0x48] sm:$0xf]
        %v1473 = vld [vmem:[%s1453 + $0x4c] sm:$0xf]
        %v1474 = vld [vmem:[%s1453 + $0x50] sm:$0xf]
        %v1475 = vld [vmem:[%s1453 + $0x54] sm:$0xf]
        %v1476 = vld [vmem:[%s1453 + $0x58] sm:$0xf]
        %v1477 = vld [vmem:[%s1453 + $0x5c] sm:$0xf]
        %v1478 = vld [vmem:[%s1453 + $0x60] sm:$0xf]
        %v1479 = vld [vmem:[%s1453 + $0x64] sm:$0xf]
        %v1480 = vld [vmem:[%s1453 + $0x68] sm:$0xf]
        %v1481 = vld [vmem:[%s1453 + $0x6c] sm:$0xf]
        %v1482 = vld [vmem:[%s1453 + $0x70] sm:$0xf]
        %v1483 = vld [vmem:[%s1453 + $0x74] sm:$0xf]
        %v1484 = vld [vmem:[%s1453 + $0x78] sm:$0xf]
        %v1485 = vld [vmem:[%s1453 + $0x7c] sm:$0xf]
        %v1486 = vld [vmem:[%s1453 + $0x80] sm:$0xf]
        %v1487 = vld [vmem:[%s1453 + $0x84] sm:$0xf]
        %v1488 = vld [vmem:[%s1453 + $0x88] sm:$0xf]
        %v1489 = vld [vmem:[%s1453 + $0x8c] sm:$0xf]
        %v1490 = vld [vmem:[%s1453 + $0x90] sm:$0xf]
        %v1491 = vld [vmem:[%s1453 + $0x94] sm:$0xf]
        %v1492 = vld [vmem:[%s1453 + $0x98] sm:$0xf]
        %v1493 = vld [vmem:[%s1453 + $0x9c] sm:$0xf]
        %v1494 = vld [vmem:[%s1453 + $0xa0] sm:$0xf]
        %v1495 = vld [vmem:[%s1453 + $0xa4] sm:$0xf]
        %v1496 = vld [vmem:[%s1453 + $0xa8] sm:$0xf]
        %v1497 = vld [vmem:[%s1453 + $0xac] sm:$0xf]
        %v1498 = vld [vmem:[%s1453 + $0xb0] sm:$0xf]
        %v1499 = vld [vmem:[%s1453 + $0xb4] sm:$0xf]
        %v1500 = vld [vmem:[%s1453 + $0xb8] sm:$0xf]
        %v1501 = vld [vmem:[%s1453 + $0xbc] sm:$0xf]
        %v1550 = vunpack.c.l.b16 %v1454
        %v1551 = vunpack.c.l.b16 %v1455
        %v1552 = vunpack.c.l.b16 %v1456
        %v1553 = vunpack.c.l.b16 %v1457
        %v1554 = vunpack.c.l.b16 %v1458
        %v1555 = vunpack.c.l.b16 %v1459
        %v1556 = vunpack.c.l.b16 %v1460
        %v1557 = vunpack.c.l.b16 %v1461
        %v1558 = vunpack.c.l.b16 %v1462
        %v1559 = vunpack.c.l.b16 %v1463
        %v1560 = vunpack.c.l.b16 %v1464
        %v1561 = vunpack.c.l.b16 %v1465
        %v1562 = vunpack.c.l.b16 %v1466
        %v1563 = vunpack.c.l.b16 %v1467
        %v1564 = vunpack.c.l.b16 %v1468
        %v1565 = vunpack.c.l.b16 %v1469
        %v1566 = vunpack.c.l.b16 %v1470
        %v1567 = vunpack.c.l.b16 %v1471
        %v1568 = vunpack.c.l.b16 %v1472
        %v1569 = vunpack.c.l.b16 %v1473
        %v1570 = vunpack.c.l.b16 %v1474
        %v1571 = vunpack.c.l.b16 %v1475
        %v1572 = vunpack.c.l.b16 %v1476
        %v1573 = vunpack.c.l.b16 %v1477
        %v1574 = vunpack.c.l.b16 %v1478
        %v1575 = vunpack.c.l.b16 %v1479
        %v1576 = vunpack.c.l.b16 %v1480
        %v1577 = vunpack.c.l.b16 %v1481
        %v1578 = vunpack.c.l.b16 %v1482
        %v1579 = vunpack.c.l.b16 %v1483
        %v1580 = vunpack.c.l.b16 %v1484
        %v1581 = vunpack.c.l.b16 %v1485
        %v1582 = vunpack.c.l.b16 %v1486
        %v1583 = vunpack.c.l.b16 %v1487
        %v1584 = vunpack.c.l.b16 %v1488
        %v1585 = vunpack.c.l.b16 %v1489
        %v1586 = vunpack.c.l.b16 %v1490
        %v1587 = vunpack.c.l.b16 %v1491
        %v1588 = vunpack.c.l.b16 %v1492
        %v1589 = vunpack.c.l.b16 %v1493
        %v1590 = vunpack.c.l.b16 %v1494
        %v1591 = vunpack.c.l.b16 %v1495
        %v1592 = vunpack.c.l.b16 %v1496
        %v1593 = vunpack.c.l.b16 %v1497
        %v1594 = vunpack.c.l.b16 %v1498
        %v1595 = vunpack.c.l.b16 %v1499
        %v1596 = vunpack.c.l.b16 %v1500
        %v1597 = vunpack.c.l.b16 %v1501
        %v1598 = vpack.c.b16 %v1551, %v1550
        %v1599 = vpack.c.b16 %v1553, %v1552
        %v1600 = vpack.c.b16 %v1555, %v1554
        %v1601 = vpack.c.b16 %v1557, %v1556
        %v1602 = vpack.c.b16 %v1559, %v1558
        %v1603 = vpack.c.b16 %v1561, %v1560
        %v1604 = vpack.c.b16 %v1563, %v1562
        %v1605 = vpack.c.b16 %v1565, %v1564
        %v1606 = vpack.c.b16 %v1567, %v1566
        %v1607 = vpack.c.b16 %v1569, %v1568
        %v1608 = vpack.c.b16 %v1571, %v1570
        %v1609 = vpack.c.b16 %v1573, %v1572
        %v1610 = vpack.c.b16 %v1575, %v1574
        %v1611 = vpack.c.b16 %v1577, %v1576
        %v1612 = vpack.c.b16 %v1579, %v1578
        %v1613 = vpack.c.b16 %v1581, %v1580
        %v1614 = vpack.c.b16 %v1583, %v1582
        %v1615 = vpack.c.b16 %v1585, %v1584
        %v1616 = vpack.c.b16 %v1587, %v1586
        %v1617 = vpack.c.b16 %v1589, %v1588
        %v1618 = vpack.c.b16 %v1591, %v1590
        %v1619 = vpack.c.b16 %v1593, %v1592
        %v1620 = vpack.c.b16 %v1595, %v1594
        %v1621 = vpack.c.b16 %v1597, %v1596
        %1646 = vmatprep.subr.bf16.mxu0 0
        %1647 = vmatpush1.bf16.msra.mxu0 %v1598
        %1648 = vmatprep.subr.bf16.mxu0 0
        %1649 = vmatpush1.bf16.msra.mxu0 %v1599
        %1650 = vmatprep.subr.bf16.mxu0 0
        %1651 = vmatpush1.bf16.msra.mxu0 %v1600
        %1652 = vmatprep.subr.bf16.mxu0 0
        %1653 = vmatpush1.bf16.msra.mxu0 %v1601
        %1654 = vmatprep.subr.bf16.mxu0 0
        %1655 = vmatpush1.bf16.msra.mxu0 %v1602
        %1656 = vmatprep.subr.bf16.mxu0 0
        %1657 = vmatpush1.bf16.msra.mxu0 %v1603
        %1658 = vmatprep.subr.bf16.mxu0 0
        %1659 = vmatpush1.bf16.msra.mxu0 %v1604
        %1660 = vmatprep.subr.bf16.mxu0 0
        %1661 = vmatpush1.bf16.msra.mxu0 %v1605
        %1662 = vmatprep.subr.bf16.mxu0 0
        %1663 = vmatpush1.bf16.msra.mxu0 %v1606
        %1664 = vmatprep.subr.bf16.mxu0 0
        %1665 = vmatpush1.bf16.msra.mxu0 %v1607
        %1666 = vmatprep.subr.bf16.mxu0 0
        %1667 = vmatpush1.bf16.msra.mxu0 %v1608
        %1668 = vmatprep.subr.bf16.mxu0 0
        %1669 = vmatpush1.bf16.msra.mxu0 %v1609
        %1670 = vmatprep.subr.bf16.mxu0 0
        %1671 = vmatpush1.bf16.msra.mxu0 %v1610
        %1672 = vmatprep.subr.bf16.mxu0 0
        %1673 = vmatpush1.bf16.msra.mxu0 %v1611
        %1674 = vmatprep.subr.bf16.mxu0 0
        %1675 = vmatpush1.bf16.msra.mxu0 %v1612
        %1676 = vmatprep.subr.bf16.mxu0 0
        %1677 = vmatpush1.bf16.msra.mxu0 %v1613
        %1678 = vmatprep.mubr.bf16.mxu0 %v1382
        %1679 = vmatmul.mubr.bf16.gmra.mrb[0].mxu0 %v1381
        %v1680 = vpop.f32.mrb[0].mxu0
        %v1681 = vadd.f32 0.0, %v1680
        %v1682 = vpop.f32.mrb[0].mxu0
        %v1683 = vpop.f32.mrb[0].mxu0
        %v1684 = vadd.f32 0.0, %v1683
        %v1685 = vpop.f32.mrb[0].mxu0
        %1686 = vmatprep.mubr.bf16.mxu0 %v1385
        %1687 = vmatmul.mubr.bf16.gmra.mrb[0].mxu0 %v1384
        %v1688 = vpop.f32.mrb[0].mxu0
        %v1689 = vadd.f32 0.0, %v1688
        %v1690 = vpop.f32.mrb[0].mxu0
        %v1691 = vpop.f32.mrb[0].mxu0
        %v1692 = vadd.f32 0.0, %v1691
        %v1693 = vpop.f32.mrb[0].mxu0
        %1694 = vmatprep.mubr.bf16.mxu0 %v1388
        %1695 = vmatmul.mubr.bf16.gmra.mrb[0].mxu0 %v1387
        %v1696 = vpop.f32.mrb[0].mxu0
        %v1697 = vadd.f32 0.0, %v1696
        %v1698 = vpop.f32.mrb[0].mxu0
        %v1699 = vpop.f32.mrb[0].mxu0
        %v1700 = vadd.f32 0.0, %v1699
        %v1701 = vpop.f32.mrb[0].mxu0
        %1702 = vmatprep.mubr.bf16.mxu0 %v1391
        %1703 = vmatmul.mubr.bf16.gmra.mrb[0].mxu0 %v1390
        %v1704 = vpop.f32.mrb[0].mxu0
        %v1705 = vadd.f32 0.0, %v1704
        %v1706 = vpop.f32.mrb[0].mxu0
        %v1707 = vpop.f32.mrb[0].mxu0
        %v1708 = vadd.f32 0.0, %v1707
        %v1709 = vpop.f32.mrb[0].mxu0
        %1710 = vmatprep.mubr.bf16.mxu0 %v1394
        %1711 = vmatmul.mubr.bf16.gmra.mrb[0].mxu0 %v1393
        %v1712 = vpop.f32.mrb[0].mxu0
        %v1713 = vadd.f32 0.0, %v1712
        %v1714 = vpop.f32.mrb[0].mxu0
        %v1715 = vpop.f32.mrb[0].mxu0
        %v1716 = vadd.f32 0.0, %v1715
        %v1717 = vpop.f32.mrb[0].mxu0
        %1718 = vmatprep.mubr.bf16.mxu0 %v1397
        %1719 = vmatmul.mubr.bf16.gmra.mrb[0].mxu0 %v1396
        %v1720 = vpop.f32.mrb[0].mxu0
        %v1721 = vadd.f32 0.0, %v1720
        %v1722 = vpop.f32.mrb[0].mxu0
        %v1723 = vpop.f32.mrb[0].mxu0
        %v1724 = vadd.f32 0.0, %v1723
        %v1725 = vpop.f32.mrb[0].mxu0
        %1726 = vmatprep.mubr.bf16.mxu0 %v1400
        %1727 = vmatmul.mubr.bf16.gmra.mrb[0].mxu0 %v1399
        %v1728 = vpop.f32.mrb[0].mxu0
        %v1729 = vadd.f32 0.0, %v1728
        %v1730 = vpop.f32.mrb[0].mxu0
        %v1731 = vpop.f32.mrb[0].mxu0
        %v1732 = vadd.f32 0.0, %v1731
        %v1733 = vpop.f32.mrb[0].mxu0
        %1734 = vmatprep.mubr.bf16.mxu0 %v1451
        %1735 = vmatmul.mubr.bf16.gmra.mrb[0].mxu0 %v1450
        %v1736 = vpop.f32.mrb[0].mxu0
        %v1737 = vadd.f32 0.0, %v1736
        %v1738 = vpop.f32.mrb[0].mxu0
        %v1739 = vpop.f32.mrb[0].mxu0
        %v1740 = vadd.f32 0.0, %v1739
        %v1741 = vpop.f32.mrb[0].mxu0
        %1742 = vdwg.mxu0
        %1743 = vmatprep.subr.bf16.mxu0 0
        %1744 = vmatpush1.bf16.msra.mxu0 %v1614
        %1745 = vmatprep.subr.bf16.mxu0 0
        %1746 = vmatpush1.bf16.msra.mxu0 %v1615
        %1747 = vmatprep.subr.bf16.mxu0 0
        %1748 = vmatpush1.bf16.msra.mxu0 %v1616
        %1749 = vmatprep.subr.bf16.mxu0 0
        %1750 = vmatpush1.bf16.msra.mxu0 %v1617
        %1751 = vmatprep.subr.bf16.mxu0 0
        %1752 = vmatpush1.bf16.msra.mxu0 %v1618
        %1753 = vmatprep.subr.bf16.mxu0 0
        %1754 = vmatpush1.bf16.msra.mxu0 %v1619
        %1755 = vmatprep.subr.bf16.mxu0 0
        %1756 = vmatpush1.bf16.msra.mxu0 %v1620
        %1757 = vmatprep.subr.bf16.mxu0 0
        %1758 = vmatpush1.bf16.msra.mxu0 %v1621
        %1759 = vmatprep.subr.bf16.mxu0 0
        %1760 = vmatpush1.bf16.msra.mxu0 0
        %1761 = vmatprep.subr.bf16.mxu0 0
        %1762 = vmatpush1.bf16.msra.mxu0 0
        %1763 = vmatprep.subr.bf16.mxu0 0
        %1764 = vmatpush1.bf16.msra.mxu0 0
        %1765 = vmatprep.subr.bf16.mxu0 0
        %1766 = vmatpush1.bf16.msra.mxu0 0
        %1767 = vmatprep.subr.bf16.mxu0 0
        %1768 = vmatpush1.bf16.msra.mxu0 0
        %1769 = vmatprep.subr.bf16.mxu0 0
        %1770 = vmatpush1.bf16.msra.mxu0 0
        %1771 = vmatprep.subr.bf16.mxu0 0
        %1772 = vmatpush1.bf16.msra.mxu0 0
        %1773 = vmatprep.subr.bf16.mxu0 0
        %1774 = vmatpush1.bf16.msra.mxu0 0
        %1775 = vmatprep.mubr.bf16.mxu0 0
        %1776 = vmatmul.mubr.bf16.gmra.mrb[0].mxu0 %v1383
        %v1777 = vpop.f32.mrb[0].mxu0
        %v1778 = vadd.f32 %v1681, %v1777
        %v1779 = vpop.f32.mrb[0].mxu0
        %v1780 = vpop.f32.mrb[0].mxu0
        %v1781 = vadd.f32 %v1684, %v1780
        %v1782 = vpop.f32.mrb[0].mxu0
        %1783 = vmatprep.mubr.bf16.mxu0 0
        %1784 = vmatmul.mubr.bf16.gmra.mrb[0].mxu0 %v1386
        %v1785 = vpop.f32.mrb[0].mxu0
        %v1786 = vadd.f32 %v1689, %v1785
        %v1787 = vpop.f32.mrb[0].mxu0
        %v1788 = vpop.f32.mrb[0].mxu0
        %v1789 = vadd.f32 %v1692, %v1788
        %v1790 = vpop.f32.mrb[0].mxu0
        %1791 = vmatprep.mubr.bf16.mxu0 0
        %1792 = vmatmul.mubr.bf16.gmra.mrb[0].mxu0 %v1389
        %v1793 = vpop.f32.mrb[0].mxu0
        %v1794 = vadd.f32 %v1697, %v1793
        %v1795 = vpop.f32.mrb[0].mxu0
        %v1796 = vpop.f32.mrb[0].mxu0
        %v1797 = vadd.f32 %v1700, %v1796
        %v1798 = vpop.f32.mrb[0].mxu0
        %1799 = vmatprep.mubr.bf16.mxu0 0
        %1800 = vmatmul.mubr.bf16.gmra.mrb[0].mxu0 %v1392
        %v1801 = vpop.f32.mrb[0].mxu0
        %v1802 = vadd.f32 %v1705, %v1801
        %v1803 = vpop.f32.mrb[0].mxu0
        %v1804 = vpop.f32.mrb[0].mxu0
        %v1805 = vadd.f32 %v1708, %v1804
        %v1806 = vpop.f32.mrb[0].mxu0
        %1807 = vmatprep.mubr.bf16.mxu0 0
        %1808 = vmatmul.mubr.bf16.gmra.mrb[0].mxu0 %v1395
        %v1809 = vpop.f32.mrb[0].mxu0
        %v1810 = vadd.f32 %v1713, %v1809
        %v1811 = vpop.f32.mrb[0].mxu0
        %v1812 = vpop.f32.mrb[0].mxu0
        %v1813 = vadd.f32 %v1716, %v1812
        %v1814 = vpop.f32.mrb[0].mxu0
        %1815 = vmatprep.mubr.bf16.mxu0 0
        %1816 = vmatmul.mubr.bf16.gmra.mrb[0].mxu0 %v1398
        %v1817 = vpop.f32.mrb[0].mxu0
        %v1818 = vadd.f32 %v1721, %v1817
        %v1819 = vpop.f32.mrb[0].mxu0
        %v1820 = vpop.f32.mrb[0].mxu0
        %v1821 = vadd.f32 %v1724, %v1820
        %v1822 = vpop.f32.mrb[0].mxu0
        %1823 = vmatprep.mubr.bf16.mxu0 0
        %1824 = vmatmul.mubr.bf16.gmra.mrb[0].mxu0 %v1401
        %v1825 = vpop.f32.mrb[0].mxu0
        %v1826 = vadd.f32 %v1729, %v1825
        %v1827 = vpop.f32.mrb[0].mxu0
        %v1828 = vpop.f32.mrb[0].mxu0
        %v1829 = vadd.f32 %v1732, %v1828
        %v1830 = vpop.f32.mrb[0].mxu0
        %1831 = vmatprep.mubr.bf16.mxu0 0
        %1832 = vmatmul.mubr.bf16.gmra.mrb[0].mxu0 %v1452
        %v1833 = vpop.f32.mrb[0].mxu0
        %v1834 = vadd.f32 %v1737, %v1833
        %v1835 = vpop.f32.mrb[0].mxu0
        %v1836 = vpop.f32.mrb[0].mxu0
        %v1837 = vadd.f32 %v1740, %v1836
        %v1838 = vpop.f32.mrb[0].mxu0
        %1839 = vdwg.mxu0
        %v1888 = vunpack.c.l.b16 %v1402
        %v1889 = vunpack.c.l.b16 %v1403
        %v1890 = vunpack.c.l.b16 %v1404
        %v1891 = vunpack.c.l.b16 %v1405
        %v1892 = vunpack.c.l.b16 %v1406
        %v1893 = vunpack.c.l.b16 %v1407
        %v1894 = vunpack.c.l.b16 %v1408
        %v1895 = vunpack.c.l.b16 %v1409
        %v1896 = vunpack.c.l.b16 %v1410
        %v1897 = vunpack.c.l.b16 %v1411
        %v1898 = vunpack.c.l.b16 %v1412
        %v1899 = vunpack.c.l.b16 %v1413
        %v1900 = vunpack.c.l.b16 %v1414
        %v1901 = vunpack.c.l.b16 %v1415
        %v1902 = vunpack.c.l.b16 %v1416
        %v1903 = vunpack.c.l.b16 %v1417
        %v1904 = vunpack.c.l.b16 %v1418
        %v1905 = vunpack.c.l.b16 %v1419
        %v1906 = vunpack.c.l.b16 %v1420
        %v1907 = vunpack.c.l.b16 %v1421
        %v1908 = vunpack.c.l.b16 %v1422
        %v1909 = vunpack.c.l.b16 %v1423
        %v1910 = vunpack.c.l.b16 %v1424
        %v1911 = vunpack.c.l.b16 %v1425
        %v1912 = vunpack.c.l.b16 %v1426
        %v1913 = vunpack.c.l.b16 %v1427
        %v1914 = vunpack.c.l.b16 %v1428
        %v1915 = vunpack.c.l.b16 %v1429
        %v1916 = vunpack.c.l.b16 %v1430
        %v1917 = vunpack.c.l.b16 %v1431
        %v1918 = vunpack.c.l.b16 %v1432
        %v1919 = vunpack.c.l.b16 %v1433
        %v1920 = vunpack.c.l.b16 %v1434
        %v1921 = vunpack.c.l.b16 %v1435
        %v1922 = vunpack.c.l.b16 %v1436
        %v1923 = vunpack.c.l.b16 %v1437
        %v1924 = vunpack.c.l.b16 %v1438
        %v1925 = vunpack.c.l.b16 %v1439
        %v1926 = vunpack.c.l.b16 %v1440
        %v1927 = vunpack.c.l.b16 %v1441
        %v1928 = vunpack.c.l.b16 %v1442
        %v1929 = vunpack.c.l.b16 %v1443
        %v1930 = vunpack.c.l.b16 %v1444
        %v1931 = vunpack.c.l.b16 %v1445
        %v1932 = vunpack.c.l.b16 %v1446
        %v1933 = vunpack.c.l.b16 %v1447
        %v1934 = vunpack.c.l.b16 %v1448
        %v1935 = vunpack.c.l.b16 %v1449
        %v1936 = vpack.c.b16 %v1889, %v1888
        %v1937 = vpack.c.b16 %v1891, %v1890
        %v1938 = vpack.c.b16 %v1893, %v1892
        %v1939 = vpack.c.b16 %v1895, %v1894
        %v1940 = vpack.c.b16 %v1897, %v1896
        %v1941 = vpack.c.b16 %v1899, %v1898
        %v1942 = vpack.c.b16 %v1901, %v1900
        %v1943 = vpack.c.b16 %v1903, %v1902
        %v1944 = vpack.c.b16 %v1905, %v1904
        %v1945 = vpack.c.b16 %v1907, %v1906
        %v1946 = vpack.c.b16 %v1909, %v1908
        %v1947 = vpack.c.b16 %v1911, %v1910
        %v1948 = vpack.c.b16 %v1913, %v1912
        %v1949 = vpack.c.b16 %v1915, %v1914
        %v1950 = vpack.c.b16 %v1917, %v1916
        %v1951 = vpack.c.b16 %v1919, %v1918
        %v1952 = vpack.c.b16 %v1921, %v1920
        %v1953 = vpack.c.b16 %v1923, %v1922
        %v1954 = vpack.c.b16 %v1925, %v1924
        %v1955 = vpack.c.b16 %v1927, %v1926
        %v1956 = vpack.c.b16 %v1929, %v1928
        %v1957 = vpack.c.b16 %v1931, %v1930
        %v1958 = vpack.c.b16 %v1933, %v1932
        %v1959 = vpack.c.b16 %v1935, %v1934
        %1984 = vmatprep.subr.bf16.mxu0 0
        %1985 = vmatpush1.bf16.msra.mxu0 %v1936
        %1986 = vmatprep.subr.bf16.mxu0 0
        %1987 = vmatpush1.bf16.msra.mxu0 %v1937
        %1988 = vmatprep.subr.bf16.mxu0 0
        %1989 = vmatpush1.bf16.msra.mxu0 %v1938
        %1990 = vmatprep.subr.bf16.mxu0 0
        %1991 = vmatpush1.bf16.msra.mxu0 %v1939
        %1992 = vmatprep.subr.bf16.mxu0 0
        %1993 = vmatpush1.bf16.msra.mxu0 %v1940
        %1994 = vmatprep.subr.bf16.mxu0 0
        %1995 = vmatpush1.bf16.msra.mxu0 %v1941
        %1996 = vmatprep.subr.bf16.mxu0 0
        %1997 = vmatpush1.bf16.msra.mxu0 %v1942
        %1998 = vmatprep.subr.bf16.mxu0 0
        %1999 = vmatpush1.bf16.msra.mxu0 %v1943
        %2000 = vmatprep.subr.bf16.mxu0 0
        %2001 = vmatpush1.bf16.msra.mxu0 %v1944
        %2002 = vmatprep.subr.bf16.mxu0 0
        %2003 = vmatpush1.bf16.msra.mxu0 %v1945
        %2004 = vmatprep.subr.bf16.mxu0 0
        %2005 = vmatpush1.bf16.msra.mxu0 %v1946
        %2006 = vmatprep.subr.bf16.mxu0 0
        %2007 = vmatpush1.bf16.msra.mxu0 %v1947
        %2008 = vmatprep.subr.bf16.mxu0 0
        %2009 = vmatpush1.bf16.msra.mxu0 %v1948
        %2010 = vmatprep.subr.bf16.mxu0 0
        %2011 = vmatpush1.bf16.msra.mxu0 %v1949
        %2012 = vmatprep.subr.bf16.mxu0 0
        %2013 = vmatpush1.bf16.msra.mxu0 %v1950
        %2014 = vmatprep.subr.bf16.mxu0 0
        %2015 = vmatpush1.bf16.msra.mxu0 %v1951
        %2016 = vmatprep.mubr.bf16.mxu0 %v1379
        %2017 = vmatmul.mubr.bf16.gmra.mrb[0].mxu0 %v1378
        %v2018 = vpop.f32.mrb[0].mxu0
        %v2019 = vadd.f32 %v1778, %v2018
        %v2020 = vpop.f32.mrb[0].mxu0
        %v2021 = vpop.f32.mrb[0].mxu0
        %v2022 = vadd.f32 %v1781, %v2021
        %v2023 = vpop.f32.mrb[0].mxu0
        %2024 = vmatprep.mubr.bf16.mxu0 %v1382
        %2025 = vmatmul.mubr.bf16.gmra.mrb[0].mxu0 %v1381
        %v2026 = vpop.f32.mrb[0].mxu0
        %v2027 = vadd.f32 %v1786, %v2026
        %v2028 = vpop.f32.mrb[0].mxu0
        %v2029 = vpop.f32.mrb[0].mxu0
        %v2030 = vadd.f32 %v1789, %v2029
        %v2031 = vpop.f32.mrb[0].mxu0
        %2032 = vmatprep.mubr.bf16.mxu0 %v1385
        %2033 = vmatmul.mubr.bf16.gmra.mrb[0].mxu0 %v1384
        %v2034 = vpop.f32.mrb[0].mxu0
        %v2035 = vadd.f32 %v1794, %v2034
        %v2036 = vpop.f32.mrb[0].mxu0
        %v2037 = vpop.f32.mrb[0].mxu0
        %v2038 = vadd.f32 %v1797, %v2037
        %v2039 = vpop.f32.mrb[0].mxu0
        %2040 = vmatprep.mubr.bf16.mxu0 %v1388
        %2041 = vmatmul.mubr.bf16.gmra.mrb[0].mxu0 %v1387
        %v2042 = vpop.f32.mrb[0].mxu0
        %v2043 = vadd.f32 %v1802, %v2042
        %v2044 = vpop.f32.mrb[0].mxu0
        %v2045 = vpop.f32.mrb[0].mxu0
        %v2046 = vadd.f32 %v1805, %v2045
        %v2047 = vpop.f32.mrb[0].mxu0
        %2048 = vmatprep.mubr.bf16.mxu0 %v1391
        %2049 = vmatmul.mubr.bf16.gmra.mrb[0].mxu0 %v1390
        %v2050 = vpop.f32.mrb[0].mxu0
        %v2051 = vadd.f32 %v1810, %v2050
        %v2052 = vpop.f32.mrb[0].mxu0
        %v2053 = vpop.f32.mrb[0].mxu0
        %v2054 = vadd.f32 %v1813, %v2053
        %v2055 = vpop.f32.mrb[0].mxu0
        %2056 = vmatprep.mubr.bf16.mxu0 %v1394
        %2057 = vmatmul.mubr.bf16.gmra.mrb[0].mxu0 %v1393
        %v2058 = vpop.f32.mrb[0].mxu0
        %v2059 = vadd.f32 %v1818, %v2058
        %v2060 = vpop.f32.mrb[0].mxu0
        %v2061 = vpop.f32.mrb[0].mxu0
        %v2062 = vadd.f32 %v1821, %v2061
        %v2063 = vpop.f32.mrb[0].mxu0
        %2064 = vmatprep.mubr.bf16.mxu0 %v1397
        %2065 = vmatmul.mubr.bf16.gmra.mrb[0].mxu0 %v1396
        %v2066 = vpop.f32.mrb[0].mxu0
        %v2067 = vadd.f32 %v1826, %v2066
        %v2068 = vpop.f32.mrb[0].mxu0
        %v2069 = vpop.f32.mrb[0].mxu0
        %v2070 = vadd.f32 %v1829, %v2069
        %v2071 = vpop.f32.mrb[0].mxu0
        %2072 = vmatprep.mubr.bf16.mxu0 %v1400
        %2073 = vmatmul.mubr.bf16.gmra.mrb[0].mxu0 %v1399
        %v2074 = vpop.f32.mrb[0].mxu0
        %v2075 = vadd.f32 %v1834, %v2074
        %v2076 = vpop.f32.mrb[0].mxu0
        %v2077 = vpop.f32.mrb[0].mxu0
        %v2078 = vadd.f32 %v1837, %v2077
        %v2079 = vpop.f32.mrb[0].mxu0
        %2080 = vdwg.mxu0
        %2081 = vmatprep.subr.bf16.mxu0 0
        %2082 = vmatpush1.bf16.msra.mxu0 %v1952
        %2083 = vmatprep.subr.bf16.mxu0 0
        %2084 = vmatpush1.bf16.msra.mxu0 %v1953
        %2085 = vmatprep.subr.bf16.mxu0 0
        %2086 = vmatpush1.bf16.msra.mxu0 %v1954
        %2087 = vmatprep.subr.bf16.mxu0 0
        %2088 = vmatpush1.bf16.msra.mxu0 %v1955
        %2089 = vmatprep.subr.bf16.mxu0 0
        %2090 = vmatpush1.bf16.msra.mxu0 %v1956
        %2091 = vmatprep.subr.bf16.mxu0 0
        %2092 = vmatpush1.bf16.msra.mxu0 %v1957
        %2093 = vmatprep.subr.bf16.mxu0 0
        %2094 = vmatpush1.bf16.msra.mxu0 %v1958
        %2095 = vmatprep.subr.bf16.mxu0 0
        %2096 = vmatpush1.bf16.msra.mxu0 %v1959
        %2097 = vmatprep.subr.bf16.mxu0 0
        %2098 = vmatpush1.bf16.msra.mxu0 0
        %2099 = vmatprep.subr.bf16.mxu0 0
        %2100 = vmatpush1.bf16.msra.mxu0 0
        %2101 = vmatprep.subr.bf16.mxu0 0
        %2102 = vmatpush1.bf16.msra.mxu0 0
        %2103 = vmatprep.subr.bf16.mxu0 0
        %2104 = vmatpush1.bf16.msra.mxu0 0
        %2105 = vmatprep.subr.bf16.mxu0 0
        %2106 = vmatpush1.bf16.msra.mxu0 0
        %2107 = vmatprep.subr.bf16.mxu0 0
        %2108 = vmatpush1.bf16.msra.mxu0 0
        %2109 = vmatprep.subr.bf16.mxu0 0
        %2110 = vmatpush1.bf16.msra.mxu0 0
        %2111 = vmatprep.subr.bf16.mxu0 0
        %2112 = vmatpush1.bf16.msra.mxu0 0
        %2113 = vmatprep.mubr.bf16.mxu0 0
        %2114 = vmatmul.mubr.bf16.gmra.mrb[0].mxu0 %v1380
        %v2115 = vpop.f32.mrb[0].mxu0
        %v2116 = vadd.f32 %v2019, %v2115
        %v2117 = vpop.f32.mrb[0].mxu0
        %v2118 = vpop.f32.mrb[0].mxu0
        %v2119 = vadd.f32 %v2022, %v2118
        %v2120 = vpop.f32.mrb[0].mxu0
        %2121 = vmatprep.mubr.bf16.mxu0 0
        %2122 = vmatmul.mubr.bf16.gmra.mrb[0].mxu0 %v1383
        %v2123 = vpop.f32.mrb[0].mxu0
        %v2124 = vadd.f32 %v2027, %v2123
        %v2125 = vpop.f32.mrb[0].mxu0
        %v2126 = vpop.f32.mrb[0].mxu0
        %v2127 = vadd.f32 %v2030, %v2126
        %v2128 = vpop.f32.mrb[0].mxu0
        %2129 = vmatprep.mubr.bf16.mxu0 0
        %2130 = vmatmul.mubr.bf16.gmra.mrb[0].mxu0 %v1386
        %v2131 = vpop.f32.mrb[0].mxu0
        %v2132 = vadd.f32 %v2035, %v2131
        %v2133 = vpop.f32.mrb[0].mxu0
        %v2134 = vpop.f32.mrb[0].mxu0
        %v2135 = vadd.f32 %v2038, %v2134
        %v2136 = vpop.f32.mrb[0].mxu0
        %2137 = vmatprep.mubr.bf16.mxu0 0
        %2138 = vmatmul.mubr.bf16.gmra.mrb[0].mxu0 %v1389
        %v2139 = vpop.f32.mrb[0].mxu0
        %v2140 = vadd.f32 %v2043, %v2139
        %v2141 = vpop.f32.mrb[0].mxu0
        %v2142 = vpop.f32.mrb[0].mxu0
        %v2143 = vadd.f32 %v2046, %v2142
        %v2144 = vpop.f32.mrb[0].mxu0
        %2145 = vmatprep.mubr.bf16.mxu0 0
        %2146 = vmatmul.mubr.bf16.gmra.mrb[0].mxu0 %v1392
        %v2147 = vpop.f32.mrb[0].mxu0
        %v2148 = vadd.f32 %v2051, %v2147
        %v2149 = vpop.f32.mrb[0].mxu0
        %v2150 = vpop.f32.mrb[0].mxu0
        %v2151 = vadd.f32 %v2054, %v2150
        %v2152 = vpop.f32.mrb[0].mxu0
        %2153 = vmatprep.mubr.bf16.mxu0 0
        %2154 = vmatmul.mubr.bf16.gmra.mrb[0].mxu0 %v1395
        %v2155 = vpop.f32.mrb[0].mxu0
        %v2156 = vadd.f32 %v2059, %v2155
        %v2157 = vpop.f32.mrb[0].mxu0
        %v2158 = vpop.f32.mrb[0].mxu0
        %v2159 = vadd.f32 %v2062, %v2158
        %v2160 = vpop.f32.mrb[0].mxu0
        %2161 = vmatprep.mubr.bf16.mxu0 0
        %2162 = vmatmul.mubr.bf16.gmra.mrb[0].mxu0 %v1398
        %v2163 = vpop.f32.mrb[0].mxu0
        %v2164 = vadd.f32 %v2067, %v2163
        %v2165 = vpop.f32.mrb[0].mxu0
        %v2166 = vpop.f32.mrb[0].mxu0
        %v2167 = vadd.f32 %v2070, %v2166
        %v2168 = vpop.f32.mrb[0].mxu0
        %2169 = vmatprep.mubr.bf16.mxu0 0
        %2170 = vmatmul.mubr.bf16.gmra.mrb[0].mxu0 %v1401
        %v2171 = vpop.f32.mrb[0].mxu0
        %v2172 = vadd.f32 %v2075, %v2171
        %v2173 = vpop.f32.mrb[0].mxu0
        %v2174 = vpop.f32.mrb[0].mxu0
        %v2175 = vadd.f32 %v2078, %v2174
        %v2176 = vpop.f32.mrb[0].mxu0
        %2177 = vdwg.mxu0
        %v2178 = vld [vmem:[#allocation2 + $0x30] sm:$0xff]
        %v2179 = vld [vmem:[#allocation2 + $0x38] sm:$0xff]
        %v2180 = vld [vmem:[#allocation2 + $0x40] sm:$0xff]
        %v2181 = vld [vmem:[#allocation2 + $0x48] sm:$0xff]
        %v2182 = vld [vmem:[#allocation2 + $0x50] sm:$0xff]
        %v2183 = vld [vmem:[#allocation2 + $0x58] sm:$0xff]
        %v2184 = vld [vmem:[#allocation2 + $0x60] sm:$0xff]
        %v2185 = vld [vmem:[#allocation2 + $0x68] sm:$0xff]
        %v2186 = vld [vmem:[#allocation2 + $0x70] sm:$0xff]
        %v2187 = vld [vmem:[#allocation2 + $0x78] sm:$0xff]
        %v2188 = vld [vmem:[#allocation2 + $0x80] sm:$0xff]
        %v2189 = vld [vmem:[#allocation2 + $0x88] sm:$0xff]
        %v2190 = vld [vmem:[#allocation2 + $0x90] sm:$0xff]
        %v2191 = vld [vmem:[#allocation2 + $0x98] sm:$0xff]
        %v2192 = vld [vmem:[#allocation2 + $0xa0] sm:$0xff]
        %v2193 = vld [vmem:[#allocation2 + $0xa8] sm:$0xff]
        %v2194 = vld [vmem:[#allocation2 + $0xb0] sm:$0xff]
        %v2195 = vld [vmem:[#allocation2 + $0xb8] sm:$0xff]
        %v2196 = vld [vmem:[#allocation2 + $0xc0] sm:$0xff]
        %v2197 = vld [vmem:[#allocation2 + $0xc8] sm:$0xff]
        %v2198 = vld [vmem:[#allocation2 + $0xd0] sm:$0xff]
        %v2199 = vld [vmem:[#allocation2 + $0xd8] sm:$0xff]
        %v2200 = vld [vmem:[#allocation2 + $0xe0] sm:$0xff]
        %v2201 = vld [vmem:[#allocation2 + $0xe8] sm:$0xff]
        %s2202 = scalar_lea.vmem [#allocation7], 384
        %v2203 = vld [vmem:[%s2202] sm:$0xf]
        %v2204 = vld [vmem:[%s2202 + $0x4] sm:$0xf]
        %v2205 = vld [vmem:[%s2202 + $0x8] sm:$0xf]
        %v2206 = vld [vmem:[%s2202 + $0xc] sm:$0xf]
        %v2207 = vld [vmem:[%s2202 + $0x10] sm:$0xf]
        %v2208 = vld [vmem:[%s2202 + $0x14] sm:$0xf]
        %v2209 = vld [vmem:[%s2202 + $0x18] sm:$0xf]
        %v2210 = vld [vmem:[%s2202 + $0x1c] sm:$0xf]
        %v2211 = vld [vmem:[%s2202 + $0x20] sm:$0xf]
        %v2212 = vld [vmem:[%s2202 + $0x24] sm:$0xf]
        %v2213 = vld [vmem:[%s2202 + $0x28] sm:$0xf]
        %v2214 = vld [vmem:[%s2202 + $0x2c] sm:$0xf]
        %v2215 = vld [vmem:[%s2202 + $0x30] sm:$0xf]
        %v2216 = vld [vmem:[%s2202 + $0x34] sm:$0xf]
        %v2217 = vld [vmem:[%s2202 + $0x38] sm:$0xf]
        %v2218 = vld [vmem:[%s2202 + $0x3c] sm:$0xf]
        %v2219 = vld [vmem:[%s2202 + $0x40] sm:$0xf]
        %v2220 = vld [vmem:[%s2202 + $0x44] sm:$0xf]
        %v2221 = vld [vmem:[%s2202 + $0x48] sm:$0xf]
        %v2222 = vld [vmem:[%s2202 + $0x4c] sm:$0xf]
        %v2223 = vld [vmem:[%s2202 + $0x50] sm:$0xf]
        %v2224 = vld [vmem:[%s2202 + $0x54] sm:$0xf]
        %v2225 = vld [vmem:[%s2202 + $0x58] sm:$0xf]
        %v2226 = vld [vmem:[%s2202 + $0x5c] sm:$0xf]
        %v2227 = vld [vmem:[%s2202 + $0x60] sm:$0xf]
        %v2228 = vld [vmem:[%s2202 + $0x64] sm:$0xf]
        %v2229 = vld [vmem:[%s2202 + $0x68] sm:$0xf]
        %v2230 = vld [vmem:[%s2202 + $0x6c] sm:$0xf]
        %v2231 = vld [vmem:[%s2202 + $0x70] sm:$0xf]
        %v2232 = vld [vmem:[%s2202 + $0x74] sm:$0xf]
        %v2233 = vld [vmem:[%s2202 + $0x78] sm:$0xf]
        %v2234 = vld [vmem:[%s2202 + $0x7c] sm:$0xf]
        %v2235 = vld [vmem:[%s2202 + $0x80] sm:$0xf]
        %v2236 = vld [vmem:[%s2202 + $0x84] sm:$0xf]
        %v2237 = vld [vmem:[%s2202 + $0x88] sm:$0xf]
        %v2238 = vld [vmem:[%s2202 + $0x8c] sm:$0xf]
        %v2239 = vld [vmem:[%s2202 + $0x90] sm:$0xf]
        %v2240 = vld [vmem:[%s2202 + $0x94] sm:$0xf]
        %v2241 = vld [vmem:[%s2202 + $0x98] sm:$0xf]
        %v2242 = vld [vmem:[%s2202 + $0x9c] sm:$0xf]
        %v2243 = vld [vmem:[%s2202 + $0xa0] sm:$0xf]
        %v2244 = vld [vmem:[%s2202 + $0xa4] sm:$0xf]
        %v2245 = vld [vmem:[%s2202 + $0xa8] sm:$0xf]
        %v2246 = vld [vmem:[%s2202 + $0xac] sm:$0xf]
        %v2247 = vld [vmem:[%s2202 + $0xb0] sm:$0xf]
        %v2248 = vld [vmem:[%s2202 + $0xb4] sm:$0xf]
        %v2249 = vld [vmem:[%s2202 + $0xb8] sm:$0xf]
        %v2250 = vld [vmem:[%s2202 + $0xbc] sm:$0xf]
        %v2299 = vunpack.c.l.b16 %v2203
        %v2300 = vunpack.c.l.b16 %v2204
        %v2301 = vunpack.c.l.b16 %v2205
        %v2302 = vunpack.c.l.b16 %v2206
        %v2303 = vunpack.c.l.b16 %v2207
        %v2304 = vunpack.c.l.b16 %v2208
        %v2305 = vunpack.c.l.b16 %v2209
        %v2306 = vunpack.c.l.b16 %v2210
        %v2307 = vunpack.c.l.b16 %v2211
        %v2308 = vunpack.c.l.b16 %v2212
        %v2309 = vunpack.c.l.b16 %v2213
        %v2310 = vunpack.c.l.b16 %v2214
        %v2311 = vunpack.c.l.b16 %v2215
        %v2312 = vunpack.c.l.b16 %v2216
        %v2313 = vunpack.c.l.b16 %v2217
        %v2314 = vunpack.c.l.b16 %v2218
        %v2315 = vunpack.c.l.b16 %v2219
        %v2316 = vunpack.c.l.b16 %v2220
        %v2317 = vunpack.c.l.b16 %v2221
        %v2318 = vunpack.c.l.b16 %v2222
        %v2319 = vunpack.c.l.b16 %v2223
        %v2320 = vunpack.c.l.b16 %v2224
        %v2321 = vunpack.c.l.b16 %v2225
        %v2322 = vunpack.c.l.b16 %v2226
        %v2323 = vunpack.c.l.b16 %v2227
        %v2324 = vunpack.c.l.b16 %v2228
        %v2325 = vunpack.c.l.b16 %v2229
        %v2326 = vunpack.c.l.b16 %v2230
        %v2327 = vunpack.c.l.b16 %v2231
        %v2328 = vunpack.c.l.b16 %v2232
        %v2329 = vunpack.c.l.b16 %v2233
        %v2330 = vunpack.c.l.b16 %v2234
        %v2331 = vunpack.c.l.b16 %v2235
        %v2332 = vunpack.c.l.b16 %v2236
        %v2333 = vunpack.c.l.b16 %v2237
        %v2334 = vunpack.c.l.b16 %v2238
        %v2335 = vunpack.c.l.b16 %v2239
        %v2336 = vunpack.c.l.b16 %v2240
        %v2337 = vunpack.c.l.b16 %v2241
        %v2338 = vunpack.c.l.b16 %v2242
        %v2339 = vunpack.c.l.b16 %v2243
        %v2340 = vunpack.c.l.b16 %v2244
        %v2341 = vunpack.c.l.b16 %v2245
        %v2342 = vunpack.c.l.b16 %v2246
        %v2343 = vunpack.c.l.b16 %v2247
        %v2344 = vunpack.c.l.b16 %v2248
        %v2345 = vunpack.c.l.b16 %v2249
        %v2346 = vunpack.c.l.b16 %v2250
        %v2347 = vpack.c.b16 %v2300, %v2299
        %v2348 = vpack.c.b16 %v2302, %v2301
        %v2349 = vpack.c.b16 %v2304, %v2303
        %v2350 = vpack.c.b16 %v2306, %v2305
        %v2351 = vpack.c.b16 %v2308, %v2307
        %v2352 = vpack.c.b16 %v2310, %v2309
        %v2353 = vpack.c.b16 %v2312, %v2311
        %v2354 = vpack.c.b16 %v2314, %v2313
        %v2355 = vpack.c.b16 %v2316, %v2315
        %v2356 = vpack.c.b16 %v2318, %v2317
        %v2357 = vpack.c.b16 %v2320, %v2319
        %v2358 = vpack.c.b16 %v2322, %v2321
        %v2359 = vpack.c.b16 %v2324, %v2323
        %v2360 = vpack.c.b16 %v2326, %v2325
        %v2361 = vpack.c.b16 %v2328, %v2327
        %v2362 = vpack.c.b16 %v2330, %v2329
        %v2363 = vpack.c.b16 %v2332, %v2331
        %v2364 = vpack.c.b16 %v2334, %v2333
        %v2365 = vpack.c.b16 %v2336, %v2335
        %v2366 = vpack.c.b16 %v2338, %v2337
        %v2367 = vpack.c.b16 %v2340, %v2339
        %v2368 = vpack.c.b16 %v2342, %v2341
        %v2369 = vpack.c.b16 %v2344, %v2343
        %v2370 = vpack.c.b16 %v2346, %v2345
        %2395 = vmatprep.subr.bf16.mxu0 0
        %2396 = vmatpush1.bf16.msra.mxu0 %v2347
        %2397 = vmatprep.subr.bf16.mxu0 0
        %2398 = vmatpush1.bf16.msra.mxu0 %v2348
        %2399 = vmatprep.subr.bf16.mxu0 0
        %2400 = vmatpush1.bf16.msra.mxu0 %v2349
        %2401 = vmatprep.subr.bf16.mxu0 0
        %2402 = vmatpush1.bf16.msra.mxu0 %v2350
        %2403 = vmatprep.subr.bf16.mxu0 0
        %2404 = vmatpush1.bf16.msra.mxu0 %v2351
        %2405 = vmatprep.subr.bf16.mxu0 0
        %2406 = vmatpush1.bf16.msra.mxu0 %v2352
        %2407 = vmatprep.subr.bf16.mxu0 0
        %2408 = vmatpush1.bf16.msra.mxu0 %v2353
        %2409 = vmatprep.subr.bf16.mxu0 0
        %2410 = vmatpush1.bf16.msra.mxu0 %v2354
        %2411 = vmatprep.subr.bf16.mxu0 0
        %2412 = vmatpush1.bf16.msra.mxu0 %v2355
        %2413 = vmatprep.subr.bf16.mxu0 0
        %2414 = vmatpush1.bf16.msra.mxu0 %v2356
        %2415 = vmatprep.subr.bf16.mxu0 0
        %2416 = vmatpush1.bf16.msra.mxu0 %v2357
        %2417 = vmatprep.subr.bf16.mxu0 0
        %2418 = vmatpush1.bf16.msra.mxu0 %v2358
        %2419 = vmatprep.subr.bf16.mxu0 0
        %2420 = vmatpush1.bf16.msra.mxu0 %v2359
        %2421 = vmatprep.subr.bf16.mxu0 0
        %2422 = vmatpush1.bf16.msra.mxu0 %v2360
        %2423 = vmatprep.subr.bf16.mxu0 0
        %2424 = vmatpush1.bf16.msra.mxu0 %v2361
        %2425 = vmatprep.subr.bf16.mxu0 0
        %2426 = vmatpush1.bf16.msra.mxu0 %v2362
        %2427 = vmatprep.mubr.bf16.mxu0 %v2179
        %2428 = vmatmul.mubr.bf16.gmra.mrb[0].mxu0 %v2178
        %v2429 = vpop.f32.mrb[0].mxu0
        %v2430 = vadd.f32 0.0, %v2429
        %v2431 = vpop.f32.mrb[0].mxu0
        %v2432 = vpop.f32.mrb[0].mxu0
        %v2433 = vadd.f32 0.0, %v2432
        %v2434 = vpop.f32.mrb[0].mxu0
        %2435 = vmatprep.mubr.bf16.mxu0 %v2182
        %2436 = vmatmul.mubr.bf16.gmra.mrb[0].mxu0 %v2181
        %v2437 = vpop.f32.mrb[0].mxu0
        %v2438 = vadd.f32 0.0, %v2437
        %v2439 = vpop.f32.mrb[0].mxu0
        %v2440 = vpop.f32.mrb[0].mxu0
        %v2441 = vadd.f32 0.0, %v2440
        %v2442 = vpop.f32.mrb[0].mxu0
        %2443 = vmatprep.mubr.bf16.mxu0 %v2185
        %2444 = vmatmul.mubr.bf16.gmra.mrb[0].mxu0 %v2184
        %v2445 = vpop.f32.mrb[0].mxu0
        %v2446 = vadd.f32 0.0, %v2445
        %v2447 = vpop.f32.mrb[0].mxu0
        %v2448 = vpop.f32.mrb[0].mxu0
        %v2449 = vadd.f32 0.0, %v2448
        %v2450 = vpop.f32.mrb[0].mxu0
        %2451 = vmatprep.mubr.bf16.mxu0 %v2188
        %2452 = vmatmul.mubr.bf16.gmra.mrb[0].mxu0 %v2187
        %v2453 = vpop.f32.mrb[0].mxu0
        %v2454 = vadd.f32 0.0, %v2453
        %v2455 = vpop.f32.mrb[0].mxu0
        %v2456 = vpop.f32.mrb[0].mxu0
        %v2457 = vadd.f32 0.0, %v2456
        %v2458 = vpop.f32.mrb[0].mxu0
        %2459 = vmatprep.mubr.bf16.mxu0 %v2191
        %2460 = vmatmul.mubr.bf16.gmra.mrb[0].mxu0 %v2190
        %v2461 = vpop.f32.mrb[0].mxu0
        %v2462 = vadd.f32 0.0, %v2461
        %v2463 = vpop.f32.mrb[0].mxu0
        %v2464 = vpop.f32.mrb[0].mxu0
        %v2465 = vadd.f32 0.0, %v2464
        %v2466 = vpop.f32.mrb[0].mxu0
        %2467 = vmatprep.mubr.bf16.mxu0 %v2194
        %2468 = vmatmul.mubr.bf16.gmra.mrb[0].mxu0 %v2193
        %v2469 = vpop.f32.mrb[0].mxu0
        %v2470 = vadd.f32 0.0, %v2469
        %v2471 = vpop.f32.mrb[0].mxu0
        %v2472 = vpop.f32.mrb[0].mxu0
        %v2473 = vadd.f32 0.0, %v2472
        %v2474 = vpop.f32.mrb[0].mxu0
        %2475 = vmatprep.mubr.bf16.mxu0 %v2197
        %2476 = vmatmul.mubr.bf16.gmra.mrb[0].mxu0 %v2196
        %v2477 = vpop.f32.mrb[0].mxu0
        %v2478 = vadd.f32 0.0, %v2477
        %v2479 = vpop.f32.mrb[0].mxu0
        %v2480 = vpop.f32.mrb[0].mxu0
        %v2481 = vadd.f32 0.0, %v2480
        %v2482 = vpop.f32.mrb[0].mxu0
        %2483 = vmatprep.mubr.bf16.mxu0 %v2200
        %2484 = vmatmul.mubr.bf16.gmra.mrb[0].mxu0 %v2199
        %v2485 = vpop.f32.mrb[0].mxu0
        %v2486 = vadd.f32 0.0, %v2485
        %v2487 = vpop.f32.mrb[0].mxu0
        %v2488 = vpop.f32.mrb[0].mxu0
        %v2489 = vadd.f32 0.0, %v2488
        %v2490 = vpop.f32.mrb[0].mxu0
        %2491 = vdwg.mxu0
        %2492 = vmatprep.subr.bf16.mxu0 0
        %2493 = vmatpush1.bf16.msra.mxu0 %v2363
        %2494 = vmatprep.subr.bf16.mxu0 0
        %2495 = vmatpush1.bf16.msra.mxu0 %v2364
        %2496 = vmatprep.subr.bf16.mxu0 0
        %2497 = vmatpush1.bf16.msra.mxu0 %v2365
        %2498 = vmatprep.subr.bf16.mxu0 0
        %2499 = vmatpush1.bf16.msra.mxu0 %v2366
        %2500 = vmatprep.subr.bf16.mxu0 0
        %2501 = vmatpush1.bf16.msra.mxu0 %v2367
        %2502 = vmatprep.subr.bf16.mxu0 0
        %2503 = vmatpush1.bf16.msra.mxu0 %v2368
        %2504 = vmatprep.subr.bf16.mxu0 0
        %2505 = vmatpush1.bf16.msra.mxu0 %v2369
        %2506 = vmatprep.subr.bf16.mxu0 0
        %2507 = vmatpush1.bf16.msra.mxu0 %v2370
        %2508 = vmatprep.subr.bf16.mxu0 0
        %2509 = vmatpush1.bf16.msra.mxu0 0
        %2510 = vmatprep.subr.bf16.mxu0 0
        %2511 = vmatpush1.bf16.msra.mxu0 0
        %2512 = vmatprep.subr.bf16.mxu0 0
        %2513 = vmatpush1.bf16.msra.mxu0 0
        %2514 = vmatprep.subr.bf16.mxu0 0
        %2515 = vmatpush1.bf16.msra.mxu0 0
        %2516 = vmatprep.subr.bf16.mxu0 0
        %2517 = vmatpush1.bf16.msra.mxu0 0
        %2518 = vmatprep.subr.bf16.mxu0 0
        %2519 = vmatpush1.bf16.msra.mxu0 0
        %2520 = vmatprep.subr.bf16.mxu0 0
        %2521 = vmatpush1.bf16.msra.mxu0 0
        %2522 = vmatprep.subr.bf16.mxu0 0
        %2523 = vmatpush1.bf16.msra.mxu0 0
        %2524 = vmatprep.mubr.bf16.mxu0 0
        %2525 = vmatmul.mubr.bf16.gmra.mrb[0].mxu0 %v2180
        %v2526 = vpop.f32.mrb[0].mxu0
        %v2527 = vadd.f32 %v2430, %v2526
        %v2528 = vpop.f32.mrb[0].mxu0
        %v2529 = vpop.f32.mrb[0].mxu0
        %v2530 = vadd.f32 %v2433, %v2529
        %v2531 = vpop.f32.mrb[0].mxu0
        %2532 = vmatprep.mubr.bf16.mxu0 0
        %2533 = vmatmul.mubr.bf16.gmra.mrb[0].mxu0 %v2183
        %v2534 = vpop.f32.mrb[0].mxu0
        %v2535 = vadd.f32 %v2438, %v2534
        %v2536 = vpop.f32.mrb[0].mxu0
        %v2537 = vpop.f32.mrb[0].mxu0
        %v2538 = vadd.f32 %v2441, %v2537
        %v2539 = vpop.f32.mrb[0].mxu0
        %2540 = vmatprep.mubr.bf16.mxu0 0
        %2541 = vmatmul.mubr.bf16.gmra.mrb[0].mxu0 %v2186
        %v2542 = vpop.f32.mrb[0].mxu0
        %v2543 = vadd.f32 %v2446, %v2542
        %v2544 = vpop.f32.mrb[0].mxu0
        %v2545 = vpop.f32.mrb[0].mxu0
        %v2546 = vadd.f32 %v2449, %v2545
        %v2547 = vpop.f32.mrb[0].mxu0
        %2548 = vmatprep.mubr.bf16.mxu0 0
        %2549 = vmatmul.mubr.bf16.gmra.mrb[0].mxu0 %v2189
        %v2550 = vpop.f32.mrb[0].mxu0
        %v2551 = vadd.f32 %v2454, %v2550
        %v2552 = vpop.f32.mrb[0].mxu0
        %v2553 = vpop.f32.mrb[0].mxu0
        %v2554 = vadd.f32 %v2457, %v2553
        %v2555 = vpop.f32.mrb[0].mxu0
        %2556 = vmatprep.mubr.bf16.mxu0 0
        %2557 = vmatmul.mubr.bf16.gmra.mrb[0].mxu0 %v2192
        %v2558 = vpop.f32.mrb[0].mxu0
        %v2559 = vadd.f32 %v2462, %v2558
        %v2560 = vpop.f32.mrb[0].mxu0
        %v2561 = vpop.f32.mrb[0].mxu0
        %v2562 = vadd.f32 %v2465, %v2561
        %v2563 = vpop.f32.mrb[0].mxu0
        %2564 = vmatprep.mubr.bf16.mxu0 0
        %2565 = vmatmul.mubr.bf16.gmra.mrb[0].mxu0 %v2195
        %v2566 = vpop.f32.mrb[0].mxu0
        %v2567 = vadd.f32 %v2470, %v2566
        %v2568 = vpop.f32.mrb[0].mxu0
        %v2569 = vpop.f32.mrb[0].mxu0
        %v2570 = vadd.f32 %v2473, %v2569
        %v2571 = vpop.f32.mrb[0].mxu0
        %2572 = vmatprep.mubr.bf16.mxu0 0
        %2573 = vmatmul.mubr.bf16.gmra.mrb[0].mxu0 %v2198
        %v2574 = vpop.f32.mrb[0].mxu0
        %v2575 = vadd.f32 %v2478, %v2574
        %v2576 = vpop.f32.mrb[0].mxu0
        %v2577 = vpop.f32.mrb[0].mxu0
        %v2578 = vadd.f32 %v2481, %v2577
        %v2579 = vpop.f32.mrb[0].mxu0
        %2580 = vmatprep.mubr.bf16.mxu0 0
        %2581 = vmatmul.mubr.bf16.gmra.mrb[0].mxu0 %v2201
        %v2582 = vpop.f32.mrb[0].mxu0
        %v2583 = vadd.f32 %v2486, %v2582
        %v2584 = vpop.f32.mrb[0].mxu0
        %v2585 = vpop.f32.mrb[0].mxu0
        %v2586 = vadd.f32 %v2489, %v2585
        %v2587 = vpop.f32.mrb[0].mxu0
        %2588 = vdwg.mxu0
        %v2589 = vadd.f32 %v2116, %v2527
        %v2590 = vadd.f32 %v2119, %v2530
        %v2591 = vadd.f32 %v2124, %v2535
        %v2592 = vadd.f32 %v2127, %v2538
        %v2593 = vadd.f32 %v2132, %v2543
        %v2594 = vadd.f32 %v2135, %v2546
        %v2595 = vadd.f32 %v2140, %v2551
        %v2596 = vadd.f32 %v2143, %v2554
        %v2597 = vadd.f32 %v2148, %v2559
        %v2598 = vadd.f32 %v2151, %v2562
        %v2599 = vadd.f32 %v2156, %v2567
        %v2600 = vadd.f32 %v2159, %v2570
        %v2601 = vadd.f32 %v2164, %v2575
        %v2602 = vadd.f32 %v2167, %v2578
        %v2603 = vadd.f32 %v2172, %v2583
        %v2604 = vadd.f32 %v2175, %v2586
        %v2606 = vlaneseq
        %v2607 = vshrl.u32 %v2606, 7
        %v2608 = vsub.s32 0, %v2607
        %v2609 = vrot.slane %v814, %v2608
        %v2611 = vmul.f32 %v2589, %v2609
        %v2612 = vmul.f32 %v2590, %v2609
        %v2613 = vmul.f32 %v2591, %v2609
        %v2614 = vmul.f32 %v2592, %v2609
        %v2615 = vmul.f32 %v2593, %v2609
        %v2616 = vmul.f32 %v2594, %v2609
        %v2617 = vmul.f32 %v2595, %v2609
        %v2618 = vmul.f32 %v2596, %v2609
        %v2619 = vmul.f32 %v2597, %v2609
        %v2620 = vmul.f32 %v2598, %v2609
        %v2621 = vmul.f32 %v2599, %v2609
        %v2622 = vmul.f32 %v2600, %v2609
        %v2623 = vmul.f32 %v2601, %v2609
        %v2624 = vmul.f32 %v2602, %v2609
        %v2625 = vmul.f32 %v2603, %v2609
        %v2626 = vmul.f32 %v2604, %v2609
        %v2628 = vlaneseq
        %v2629 = vshrl.u32 %v2628, 7
        %v2630 = vsub.s32 0, %v2629
        %v2631 = vrot.slane %v815, %v2630
        %v2633 = vadd.f32 %v2611, %v2631
        %v2634 = vadd.f32 %v2612, %v2631
        %v2635 = vadd.f32 %v2613, %v2631
        %v2636 = vadd.f32 %v2614, %v2631
        %v2637 = vadd.f32 %v2615, %v2631
        %v2638 = vadd.f32 %v2616, %v2631
        %v2639 = vadd.f32 %v2617, %v2631
        %v2640 = vadd.f32 %v2618, %v2631
        %v2641 = vadd.f32 %v2619, %v2631
        %v2642 = vadd.f32 %v2620, %v2631
        %v2643 = vadd.f32 %v2621, %v2631
        %v2644 = vadd.f32 %v2622, %v2631
        %v2645 = vadd.f32 %v2623, %v2631
        %v2646 = vadd.f32 %v2624, %v2631
        %v2647 = vadd.f32 %v2625, %v2631
        %v2648 = vadd.f32 %v2626, %v2631
        %v2649 = vmax.f32 %v2633, 0.0
        %v2650 = vmax.f32 %v2634, 0.0
        %v2651 = vmax.f32 %v2635, 0.0
        %v2652 = vmax.f32 %v2636, 0.0
        %v2653 = vmax.f32 %v2637, 0.0
        %v2654 = vmax.f32 %v2638, 0.0
        %v2655 = vmax.f32 %v2639, 0.0
        %v2656 = vmax.f32 %v2640, 0.0
        %v2657 = vmax.f32 %v2641, 0.0
        %v2658 = vmax.f32 %v2642, 0.0
        %v2659 = vmax.f32 %v2643, 0.0
        %v2660 = vmax.f32 %v2644, 0.0
        %v2661 = vmax.f32 %v2645, 0.0
        %v2662 = vmax.f32 %v2646, 0.0
        %v2663 = vmax.f32 %v2647, 0.0
        %v2664 = vmax.f32 %v2648, 0.0
        %v2665 = vpack.c.bf16 %v2650, %v2649
        %v2666 = vpack.c.bf16 %v2652, %v2651
        %v2667 = vpack.c.bf16 %v2654, %v2653
        %v2668 = vpack.c.bf16 %v2656, %v2655
        %v2669 = vpack.c.bf16 %v2658, %v2657
        %v2670 = vpack.c.bf16 %v2660, %v2659
        %v2671 = vpack.c.bf16 %v2662, %v2661
        %v2672 = vpack.c.bf16 %v2664, %v2663
        %2673 = vst [vmem:[#allocation3] sm:$0xff] %v2665
        %2674 = vst [vmem:[#allocation3 + $0x8] sm:$0xff] %v2666
        %2675 = vst [vmem:[#allocation3 + $0x10] sm:$0xff] %v2667
        %2676 = vst [vmem:[#allocation3 + $0x18] sm:$0xff] %v2668
        %2677 = vst [vmem:[#allocation3 + $0x20] sm:$0xff] %v2669
        %2678 = vst [vmem:[#allocation3 + $0x28] sm:$0xff] %v2670
        %2679 = vst [vmem:[#allocation3 + $0x30] sm:$0xff] %v2671
        %2680 = vst [vmem:[#allocation3 + $0x38] sm:$0xff] %v2672
        %v2681 = vld [vmem:[#allocation2 + $0xc0] sm:$0xff]
        %v2682 = vld [vmem:[#allocation2 + $0xc8] sm:$0xff]
        %v2683 = vld [vmem:[#allocation2 + $0xd0] sm:$0xff]
        %v2684 = vld [vmem:[#allocation2 + $0xd8] sm:$0xff]
        %v2685 = vld [vmem:[#allocation2 + $0xe0] sm:$0xff]
        %v2686 = vld [vmem:[#allocation2 + $0xe8] sm:$0xff]
        %v2687 = vld [vmem:[#allocation2 + $0xf0] sm:$0xff]
        %v2688 = vld [vmem:[#allocation2 + $0xf8] sm:$0xff]
        %v2689 = vld [vmem:[#allocation2 + $0x100] sm:$0xff]
        %v2690 = vld [vmem:[#allocation2 + $0x108] sm:$0xff]
        %v2691 = vld [vmem:[#allocation2 + $0x110] sm:$0xff]
        %v2692 = vld [vmem:[#allocation2 + $0x118] sm:$0xff]
        %v2693 = vld [vmem:[#allocation2 + $0x120] sm:$0xff]
        %v2694 = vld [vmem:[#allocation2 + $0x128] sm:$0xff]
        %v2695 = vld [vmem:[#allocation2 + $0x130] sm:$0xff]
        %v2696 = vld [vmem:[#allocation2 + $0x138] sm:$0xff]
        %v2697 = vld [vmem:[#allocation2 + $0x140] sm:$0xff]
        %v2698 = vld [vmem:[#allocation2 + $0x148] sm:$0xff]
        %v2699 = vld [vmem:[#allocation2 + $0x150] sm:$0xff]
        %v2700 = vld [vmem:[#allocation2 + $0x158] sm:$0xff]
        %v2701 = vld [vmem:[#allocation2 + $0x160] sm:$0xff]
        %v2702 = vld [vmem:[#allocation2 + $0x168] sm:$0xff]
        %v2703 = vld [vmem:[#allocation2 + $0x170] sm:$0xff]
        %v2704 = vld [vmem:[#allocation2 + $0x178] sm:$0xff]
        %v2705 = vld [vmem:[#allocation7] sm:$0xf]
        %v2706 = vld [vmem:[#allocation7 + $0x4] sm:$0xf]
        %v2707 = vld [vmem:[#allocation7 + $0x8] sm:$0xf]
        %v2708 = vld [vmem:[#allocation7 + $0xc] sm:$0xf]
        %v2709 = vld [vmem:[#allocation7 + $0x10] sm:$0xf]
        %v2710 = vld [vmem:[#allocation7 + $0x14] sm:$0xf]
        %v2711 = vld [vmem:[#allocation7 + $0x18] sm:$0xf]
        %v2712 = vld [vmem:[#allocation7 + $0x1c] sm:$0xf]
        %v2713 = vld [vmem:[#allocation7 + $0x20] sm:$0xf]
        %v2714 = vld [vmem:[#allocation7 + $0x24] sm:$0xf]
        %v2715 = vld [vmem:[#allocation7 + $0x28] sm:$0xf]
        %v2716 = vld [vmem:[#allocation7 + $0x2c] sm:$0xf]
        %v2717 = vld [vmem:[#allocation7 + $0x30] sm:$0xf]
        %v2718 = vld [vmem:[#allocation7 + $0x34] sm:$0xf]
        %v2719 = vld [vmem:[#allocation7 + $0x38] sm:$0xf]
        %v2720 = vld [vmem:[#allocation7 + $0x3c] sm:$0xf]
        %v2721 = vld [vmem:[#allocation7 + $0x40] sm:$0xf]
        %v2722 = vld [vmem:[#allocation7 + $0x44] sm:$0xf]
        %v2723 = vld [vmem:[#allocation7 + $0x48] sm:$0xf]
        %v2724 = vld [vmem:[#allocation7 + $0x4c] sm:$0xf]
        %v2725 = vld [vmem:[#allocation7 + $0x50] sm:$0xf]
        %v2726 = vld [vmem:[#allocation7 + $0x54] sm:$0xf]
        %v2727 = vld [vmem:[#allocation7 + $0x58] sm:$0xf]
        %v2728 = vld [vmem:[#allocation7 + $0x5c] sm:$0xf]
        %v2729 = vld [vmem:[#allocation7 + $0x60] sm:$0xf]
        %v2730 = vld [vmem:[#allocation7 + $0x64] sm:$0xf]
        %v2731 = vld [vmem:[#allocation7 + $0x68] sm:$0xf]
        %v2732 = vld [vmem:[#allocation7 + $0x6c] sm:$0xf]
        %v2733 = vld [vmem:[#allocation7 + $0x70] sm:$0xf]
        %v2734 = vld [vmem:[#allocation7 + $0x74] sm:$0xf]
        %v2735 = vld [vmem:[#allocation7 + $0x78] sm:$0xf]
        %v2736 = vld [vmem:[#allocation7 + $0x7c] sm:$0xf]
        %v2737 = vld [vmem:[#allocation7 + $0x80] sm:$0xf]
        %v2738 = vld [vmem:[#allocation7 + $0x84] sm:$0xf]
        %v2739 = vld [vmem:[#allocation7 + $0x88] sm:$0xf]
        %v2740 = vld [vmem:[#allocation7 + $0x8c] sm:$0xf]
        %v2741 = vld [vmem:[#allocation7 + $0x90] sm:$0xf]
        %v2742 = vld [vmem:[#allocation7 + $0x94] sm:$0xf]
        %v2743 = vld [vmem:[#allocation7 + $0x98] sm:$0xf]
        %v2744 = vld [vmem:[#allocation7 + $0x9c] sm:$0xf]
        %v2745 = vld [vmem:[#allocation7 + $0xa0] sm:$0xf]
        %v2746 = vld [vmem:[#allocation7 + $0xa4] sm:$0xf]
        %v2747 = vld [vmem:[#allocation7 + $0xa8] sm:$0xf]
        %v2748 = vld [vmem:[#allocation7 + $0xac] sm:$0xf]
        %v2749 = vld [vmem:[#allocation7 + $0xb0] sm:$0xf]
        %v2750 = vld [vmem:[#allocation7 + $0xb4] sm:$0xf]
        %v2751 = vld [vmem:[#allocation7 + $0xb8] sm:$0xf]
        %v2752 = vld [vmem:[#allocation7 + $0xbc] sm:$0xf]
        %v2753 = vld [vmem:[#allocation2 + $0x180] sm:$0xff]
        %v2754 = vld [vmem:[#allocation2 + $0x188] sm:$0xff]
        %v2755 = vld [vmem:[#allocation2 + $0x190] sm:$0xff]
        %v2756 = vld [vmem:[%s1453] sm:$0xf]
        %v2757 = vld [vmem:[%s1453 + $0x4] sm:$0xf]
        %v2758 = vld [vmem:[%s1453 + $0x8] sm:$0xf]
        %v2759 = vld [vmem:[%s1453 + $0xc] sm:$0xf]
        %v2760 = vld [vmem:[%s1453 + $0x10] sm:$0xf]
        %v2761 = vld [vmem:[%s1453 + $0x14] sm:$0xf]
        %v2762 = vld [vmem:[%s1453 + $0x18] sm:$0xf]
        %v2763 = vld [vmem:[%s1453 + $0x1c] sm:$0xf]
        %v2764 = vld [vmem:[%s1453 + $0x20] sm:$0xf]
        %v2765 = vld [vmem:[%s1453 + $0x24] sm:$0xf]
        %v2766 = vld [vmem:[%s1453 + $0x28] sm:$0xf]
        %v2767 = vld [vmem:[%s1453 + $0x2c] sm:$0xf]
        %v2768 = vld [vmem:[%s1453 + $0x30] sm:$0xf]
        %v2769 = vld [vmem:[%s1453 + $0x34] sm:$0xf]
        %v2770 = vld [vmem:[%s1453 + $0x38] sm:$0xf]
        %v2771 = vld [vmem:[%s1453 + $0x3c] sm:$0xf]
        %v2772 = vld [vmem:[%s1453 + $0x40] sm:$0xf]
        %v2773 = vld [vmem:[%s1453 + $0x44] sm:$0xf]
        %v2774 = vld [vmem:[%s1453 + $0x48] sm:$0xf]
        %v2775 = vld [vmem:[%s1453 + $0x4c] sm:$0xf]
        %v2776 = vld [vmem:[%s1453 + $0x50] sm:$0xf]
        %v2777 = vld [vmem:[%s1453 + $0x54] sm:$0xf]
        %v2778 = vld [vmem:[%s1453 + $0x58] sm:$0xf]
        %v2779 = vld [vmem:[%s1453 + $0x5c] sm:$0xf]
        %v2780 = vld [vmem:[%s1453 + $0x60] sm:$0xf]
        %v2781 = vld [vmem:[%s1453 + $0x64] sm:$0xf]
        %v2782 = vld [vmem:[%s1453 + $0x68] sm:$0xf]
        %v2783 = vld [vmem:[%s1453 + $0x6c] sm:$0xf]
        %v2784 = vld [vmem:[%s1453 + $0x70] sm:$0xf]
        %v2785 = vld [vmem:[%s1453 + $0x74] sm:$0xf]
        %v2786 = vld [vmem:[%s1453 + $0x78] sm:$0xf]
        %v2787 = vld [vmem:[%s1453 + $0x7c] sm:$0xf]
        %v2788 = vld [vmem:[%s1453 + $0x80] sm:$0xf]
        %v2789 = vld [vmem:[%s1453 + $0x84] sm:$0xf]
        %v2790 = vld [vmem:[%s1453 + $0x88] sm:$0xf]
        %v2791 = vld [vmem:[%s1453 + $0x8c] sm:$0xf]
        %v2792 = vld [vmem:[%s1453 + $0x90] sm:$0xf]
        %v2793 = vld [vmem:[%s1453 + $0x94] sm:$0xf]
        %v2794 = vld [vmem:[%s1453 + $0x98] sm:$0xf]
        %v2795 = vld [vmem:[%s1453 + $0x9c] sm:$0xf]
        %v2796 = vld [vmem:[%s1453 + $0xa0] sm:$0xf]
        %v2797 = vld [vmem:[%s1453 + $0xa4] sm:$0xf]
        %v2798 = vld [vmem:[%s1453 + $0xa8] sm:$0xf]
        %v2799 = vld [vmem:[%s1453 + $0xac] sm:$0xf]
        %v2800 = vld [vmem:[%s1453 + $0xb0] sm:$0xf]
        %v2801 = vld [vmem:[%s1453 + $0xb4] sm:$0xf]
        %v2802 = vld [vmem:[%s1453 + $0xb8] sm:$0xf]
        %v2803 = vld [vmem:[%s1453 + $0xbc] sm:$0xf]
        %v2852 = vunpack.c.l.b16 %v2756
        %v2853 = vunpack.c.l.b16 %v2757
        %v2854 = vunpack.c.l.b16 %v2758
        %v2855 = vunpack.c.l.b16 %v2759
        %v2856 = vunpack.c.l.b16 %v2760
        %v2857 = vunpack.c.l.b16 %v2761
        %v2858 = vunpack.c.l.b16 %v2762
        %v2859 = vunpack.c.l.b16 %v2763
        %v2860 = vunpack.c.l.b16 %v2764
        %v2861 = vunpack.c.l.b16 %v2765
        %v2862 = vunpack.c.l.b16 %v2766
        %v2863 = vunpack.c.l.b16 %v2767
        %v2864 = vunpack.c.l.b16 %v2768
        %v2865 = vunpack.c.l.b16 %v2769
        %v2866 = vunpack.c.l.b16 %v2770
        %v2867 = vunpack.c.l.b16 %v2771
        %v2868 = vunpack.c.l.b16 %v2772
        %v2869 = vunpack.c.l.b16 %v2773
        %v2870 = vunpack.c.l.b16 %v2774
        %v2871 = vunpack.c.l.b16 %v2775
        %v2872 = vunpack.c.l.b16 %v2776
        %v2873 = vunpack.c.l.b16 %v2777
        %v2874 = vunpack.c.l.b16 %v2778
        %v2875 = vunpack.c.l.b16 %v2779
        %v2876 = vunpack.c.l.b16 %v2780
        %v2877 = vunpack.c.l.b16 %v2781
        %v2878 = vunpack.c.l.b16 %v2782
        %v2879 = vunpack.c.l.b16 %v2783
        %v2880 = vunpack.c.l.b16 %v2784
        %v2881 = vunpack.c.l.b16 %v2785
        %v2882 = vunpack.c.l.b16 %v2786
        %v2883 = vunpack.c.l.b16 %v2787
        %v2884 = vunpack.c.l.b16 %v2788
        %v2885 = vunpack.c.l.b16 %v2789
        %v2886 = vunpack.c.l.b16 %v2790
        %v2887 = vunpack.c.l.b16 %v2791
        %v2888 = vunpack.c.l.b16 %v2792
        %v2889 = vunpack.c.l.b16 %v2793
        %v2890 = vunpack.c.l.b16 %v2794
        %v2891 = vunpack.c.l.b16 %v2795
        %v2892 = vunpack.c.l.b16 %v2796
        %v2893 = vunpack.c.l.b16 %v2797
        %v2894 = vunpack.c.l.b16 %v2798
        %v2895 = vunpack.c.l.b16 %v2799
        %v2896 = vunpack.c.l.b16 %v2800
        %v2897 = vunpack.c.l.b16 %v2801
        %v2898 = vunpack.c.l.b16 %v2802
        %v2899 = vunpack.c.l.b16 %v2803
        %v2900 = vpack.c.b16 %v2853, %v2852
        %v2901 = vpack.c.b16 %v2855, %v2854
        %v2902 = vpack.c.b16 %v2857, %v2856
        %v2903 = vpack.c.b16 %v2859, %v2858
        %v2904 = vpack.c.b16 %v2861, %v2860
        %v2905 = vpack.c.b16 %v2863, %v2862
        %v2906 = vpack.c.b16 %v2865, %v2864
        %v2907 = vpack.c.b16 %v2867, %v2866
        %v2908 = vpack.c.b16 %v2869, %v2868
        %v2909 = vpack.c.b16 %v2871, %v2870
        %v2910 = vpack.c.b16 %v2873, %v2872
        %v2911 = vpack.c.b16 %v2875, %v2874
        %v2912 = vpack.c.b16 %v2877, %v2876
        %v2913 = vpack.c.b16 %v2879, %v2878
        %v2914 = vpack.c.b16 %v2881, %v2880
        %v2915 = vpack.c.b16 %v2883, %v2882
        %v2916 = vpack.c.b16 %v2885, %v2884
        %v2917 = vpack.c.b16 %v2887, %v2886
        %v2918 = vpack.c.b16 %v2889, %v2888
        %v2919 = vpack.c.b16 %v2891, %v2890
        %v2920 = vpack.c.b16 %v2893, %v2892
        %v2921 = vpack.c.b16 %v2895, %v2894
        %v2922 = vpack.c.b16 %v2897, %v2896
        %v2923 = vpack.c.b16 %v2899, %v2898
        %2948 = vmatprep.subr.bf16.mxu0 0
        %2949 = vmatpush1.bf16.msra.mxu0 %v2900
        %2950 = vmatprep.subr.bf16.mxu0 0
        %2951 = vmatpush1.bf16.msra.mxu0 %v2901
        %2952 = vmatprep.subr.bf16.mxu0 0
        %2953 = vmatpush1.bf16.msra.mxu0 %v2902
        %2954 = vmatprep.subr.bf16.mxu0 0
        %2955 = vmatpush1.bf16.msra.mxu0 %v2903
        %2956 = vmatprep.subr.bf16.mxu0 0
        %2957 = vmatpush1.bf16.msra.mxu0 %v2904
        %2958 = vmatprep.subr.bf16.mxu0 0
        %2959 = vmatpush1.bf16.msra.mxu0 %v2905
        %2960 = vmatprep.subr.bf16.mxu0 0
        %2961 = vmatpush1.bf16.msra.mxu0 %v2906
        %2962 = vmatprep.subr.bf16.mxu0 0
        %2963 = vmatpush1.bf16.msra.mxu0 %v2907
        %2964 = vmatprep.subr.bf16.mxu0 0
        %2965 = vmatpush1.bf16.msra.mxu0 %v2908
        %2966 = vmatprep.subr.bf16.mxu0 0
        %2967 = vmatpush1.bf16.msra.mxu0 %v2909
        %2968 = vmatprep.subr.bf16.mxu0 0
        %2969 = vmatpush1.bf16.msra.mxu0 %v2910
        %2970 = vmatprep.subr.bf16.mxu0 0
        %2971 = vmatpush1.bf16.msra.mxu0 %v2911
        %2972 = vmatprep.subr.bf16.mxu0 0
        %2973 = vmatpush1.bf16.msra.mxu0 %v2912
        %2974 = vmatprep.subr.bf16.mxu0 0
        %2975 = vmatpush1.bf16.msra.mxu0 %v2913
        %2976 = vmatprep.subr.bf16.mxu0 0
        %2977 = vmatpush1.bf16.msra.mxu0 %v2914
        %2978 = vmatprep.subr.bf16.mxu0 0
        %2979 = vmatpush1.bf16.msra.mxu0 %v2915
        %2980 = vmatprep.mubr.bf16.mxu0 %v2685
        %2981 = vmatmul.mubr.bf16.gmra.mrb[0].mxu0 %v2684
        %v2982 = vpop.f32.mrb[0].mxu0
        %v2983 = vadd.f32 0.0, %v2982
        %v2984 = vpop.f32.mrb[0].mxu0
        %v2985 = vpop.f32.mrb[0].mxu0
        %v2986 = vadd.f32 0.0, %v2985
        %v2987 = vpop.f32.mrb[0].mxu0
        %2988 = vmatprep.mubr.bf16.mxu0 %v2688
        %2989 = vmatmul.mubr.bf16.gmra.mrb[0].mxu0 %v2687
        %v2990 = vpop.f32.mrb[0].mxu0
        %v2991 = vadd.f32 0.0, %v2990
        %v2992 = vpop.f32.mrb[0].mxu0
        %v2993 = vpop.f32.mrb[0].mxu0
        %v2994 = vadd.f32 0.0, %v2993
        %v2995 = vpop.f32.mrb[0].mxu0
        %2996 = vmatprep.mubr.bf16.mxu0 %v2691
        %2997 = vmatmul.mubr.bf16.gmra.mrb[0].mxu0 %v2690
        %v2998 = vpop.f32.mrb[0].mxu0
        %v2999 = vadd.f32 0.0, %v2998
        %v3000 = vpop.f32.mrb[0].mxu0
        %v3001 = vpop.f32.mrb[0].mxu0
        %v3002 = vadd.f32 0.0, %v3001
        %v3003 = vpop.f32.mrb[0].mxu0
        %3004 = vmatprep.mubr.bf16.mxu0 %v2694
        %3005 = vmatmul.mubr.bf16.gmra.mrb[0].mxu0 %v2693
        %v3006 = vpop.f32.mrb[0].mxu0
        %v3007 = vadd.f32 0.0, %v3006
        %v3008 = vpop.f32.mrb[0].mxu0
        %v3009 = vpop.f32.mrb[0].mxu0
        %v3010 = vadd.f32 0.0, %v3009
        %v3011 = vpop.f32.mrb[0].mxu0
        %3012 = vmatprep.mubr.bf16.mxu0 %v2697
        %3013 = vmatmul.mubr.bf16.gmra.mrb[0].mxu0 %v2696
        %v3014 = vpop.f32.mrb[0].mxu0
        %v3015 = vadd.f32 0.0, %v3014
        %v3016 = vpop.f32.mrb[0].mxu0
        %v3017 = vpop.f32.mrb[0].mxu0
        %v3018 = vadd.f32 0.0, %v3017
        %v3019 = vpop.f32.mrb[0].mxu0
        %3020 = vmatprep.mubr.bf16.mxu0 %v2700
        %3021 = vmatmul.mubr.bf16.gmra.mrb[0].mxu0 %v2699
        %v3022 = vpop.f32.mrb[0].mxu0
        %v3023 = vadd.f32 0.0, %v3022
        %v3024 = vpop.f32.mrb[0].mxu0
        %v3025 = vpop.f32.mrb[0].mxu0
        %v3026 = vadd.f32 0.0, %v3025
        %v3027 = vpop.f32.mrb[0].mxu0
        %3028 = vmatprep.mubr.bf16.mxu0 %v2703
        %3029 = vmatmul.mubr.bf16.gmra.mrb[0].mxu0 %v2702
        %v3030 = vpop.f32.mrb[0].mxu0
        %v3031 = vadd.f32 0.0, %v3030
        %v3032 = vpop.f32.mrb[0].mxu0
        %v3033 = vpop.f32.mrb[0].mxu0
        %v3034 = vadd.f32 0.0, %v3033
        %v3035 = vpop.f32.mrb[0].mxu0
        %3036 = vmatprep.mubr.bf16.mxu0 %v2754
        %3037 = vmatmul.mubr.bf16.gmra.mrb[0].mxu0 %v2753
        %v3038 = vpop.f32.mrb[0].mxu0
        %v3039 = vadd.f32 0.0, %v3038
        %v3040 = vpop.f32.mrb[0].mxu0
        %v3041 = vpop.f32.mrb[0].mxu0
        %v3042 = vadd.f32 0.0, %v3041
        %v3043 = vpop.f32.mrb[0].mxu0
        %3044 = vdwg.mxu0
        %3045 = vmatprep.subr.bf16.mxu0 0
        %3046 = vmatpush1.bf16.msra.mxu0 %v2916
        %3047 = vmatprep.subr.bf16.mxu0 0
        %3048 = vmatpush1.bf16.msra.mxu0 %v2917
        %3049 = vmatprep.subr.bf16.mxu0 0
        %3050 = vmatpush1.bf16.msra.mxu0 %v2918
        %3051 = vmatprep.subr.bf16.mxu0 0
        %3052 = vmatpush1.bf16.msra.mxu0 %v2919
        %3053 = vmatprep.subr.bf16.mxu0 0
        %3054 = vmatpush1.bf16.msra.mxu0 %v2920
        %3055 = vmatprep.subr.bf16.mxu0 0
        %3056 = vmatpush1.bf16.msra.mxu0 %v2921
        %3057 = vmatprep.subr.bf16.mxu0 0
        %3058 = vmatpush1.bf16.msra.mxu0 %v2922
        %3059 = vmatprep.subr.bf16.mxu0 0
        %3060 = vmatpush1.bf16.msra.mxu0 %v2923
        %3061 = vmatprep.subr.bf16.mxu0 0
        %3062 = vmatpush1.bf16.msra.mxu0 0
        %3063 = vmatprep.subr.bf16.mxu0 0
        %3064 = vmatpush1.bf16.msra.mxu0 0
        %3065 = vmatprep.subr.bf16.mxu0 0
        %3066 = vmatpush1.bf16.msra.mxu0 0
        %3067 = vmatprep.subr.bf16.mxu0 0
        %3068 = vmatpush1.bf16.msra.mxu0 0
        %3069 = vmatprep.subr.bf16.mxu0 0
        %3070 = vmatpush1.bf16.msra.mxu0 0
        %3071 = vmatprep.subr.bf16.mxu0 0
        %3072 = vmatpush1.bf16.msra.mxu0 0
        %3073 = vmatprep.subr.bf16.mxu0 0
        %3074 = vmatpush1.bf16.msra.mxu0 0
        %3075 = vmatprep.subr.bf16.mxu0 0
        %3076 = vmatpush1.bf16.msra.mxu0 0
        %3077 = vmatprep.mubr.bf16.mxu0 0
        %3078 = vmatmul.mubr.bf16.gmra.mrb[0].mxu0 %v2686
        %v3079 = vpop.f32.mrb[0].mxu0
        %v3080 = vadd.f32 %v2983, %v3079
        %v3081 = vpop.f32.mrb[0].mxu0
        %v3082 = vpop.f32.mrb[0].mxu0
        %v3083 = vadd.f32 %v2986, %v3082
        %v3084 = vpop.f32.mrb[0].mxu0
        %3085 = vmatprep.mubr.bf16.mxu0 0
        %3086 = vmatmul.mubr.bf16.gmra.mrb[0].mxu0 %v2689
        %v3087 = vpop.f32.mrb[0].mxu0
        %v3088 = vadd.f32 %v2991, %v3087
        %v3089 = vpop.f32.mrb[0].mxu0
        %v3090 = vpop.f32.mrb[0].mxu0
        %v3091 = vadd.f32 %v2994, %v3090
        %v3092 = vpop.f32.mrb[0].mxu0
        %3093 = vmatprep.mubr.bf16.mxu0 0
        %3094 = vmatmul.mubr.bf16.gmra.mrb[0].mxu0 %v2692
        %v3095 = vpop.f32.mrb[0].mxu0
        %v3096 = vadd.f32 %v2999, %v3095
        %v3097 = vpop.f32.mrb[0].mxu0
        %v3098 = vpop.f32.mrb[0].mxu0
        %v3099 = vadd.f32 %v3002, %v3098
        %v3100 = vpop.f32.mrb[0].mxu0
        %3101 = vmatprep.mubr.bf16.mxu0 0
        %3102 = vmatmul.mubr.bf16.gmra.mrb[0].mxu0 %v2695
        %v3103 = vpop.f32.mrb[0].mxu0
        %v3104 = vadd.f32 %v3007, %v3103
        %v3105 = vpop.f32.mrb[0].mxu0
        %v3106 = vpop.f32.mrb[0].mxu0
        %v3107 = vadd.f32 %v3010, %v3106
        %v3108 = vpop.f32.mrb[0].mxu0
        %3109 = vmatprep.mubr.bf16.mxu0 0
        %3110 = vmatmul.mubr.bf16.gmra.mrb[0].mxu0 %v2698
        %v3111 = vpop.f32.mrb[0].mxu0
        %v3112 = vadd.f32 %v3015, %v3111
        %v3113 = vpop.f32.mrb[0].mxu0
        %v3114 = vpop.f32.mrb[0].mxu0
        %v3115 = vadd.f32 %v3018, %v3114
        %v3116 = vpop.f32.mrb[0].mxu0
        %3117 = vmatprep.mubr.bf16.mxu0 0
        %3118 = vmatmul.mubr.bf16.gmra.mrb[0].mxu0 %v2701
        %v3119 = vpop.f32.mrb[0].mxu0
        %v3120 = vadd.f32 %v3023, %v3119
        %v3121 = vpop.f32.mrb[0].mxu0
        %v3122 = vpop.f32.mrb[0].mxu0
        %v3123 = vadd.f32 %v3026, %v3122
        %v3124 = vpop.f32.mrb[0].mxu0
        %3125 = vmatprep.mubr.bf16.mxu0 0
        %3126 = vmatmul.mubr.bf16.gmra.mrb[0].mxu0 %v2704
        %v3127 = vpop.f32.mrb[0].mxu0
        %v3128 = vadd.f32 %v3031, %v3127
        %v3129 = vpop.f32.mrb[0].mxu0
        %v3130 = vpop.f32.mrb[0].mxu0
        %v3131 = vadd.f32 %v3034, %v3130
        %v3132 = vpop.f32.mrb[0].mxu0
        %3133 = vmatprep.mubr.bf16.mxu0 0
        %3134 = vmatmul.mubr.bf16.gmra.mrb[0].mxu0 %v2755
        %v3135 = vpop.f32.mrb[0].mxu0
        %v3136 = vadd.f32 %v3039, %v3135
        %v3137 = vpop.f32.mrb[0].mxu0
        %v3138 = vpop.f32.mrb[0].mxu0
        %v3139 = vadd.f32 %v3042, %v3138
        %v3140 = vpop.f32.mrb[0].mxu0
        %3141 = vdwg.mxu0
        %v3190 = vunpack.c.l.b16 %v2705
        %v3191 = vunpack.c.l.b16 %v2706
        %v3192 = vunpack.c.l.b16 %v2707
        %v3193 = vunpack.c.l.b16 %v2708
        %v3194 = vunpack.c.l.b16 %v2709
        %v3195 = vunpack.c.l.b16 %v2710
        %v3196 = vunpack.c.l.b16 %v2711
        %v3197 = vunpack.c.l.b16 %v2712
        %v3198 = vunpack.c.l.b16 %v2713
        %v3199 = vunpack.c.l.b16 %v2714
        %v3200 = vunpack.c.l.b16 %v2715
        %v3201 = vunpack.c.l.b16 %v2716
        %v3202 = vunpack.c.l.b16 %v2717
        %v3203 = vunpack.c.l.b16 %v2718
        %v3204 = vunpack.c.l.b16 %v2719
        %v3205 = vunpack.c.l.b16 %v2720
        %v3206 = vunpack.c.l.b16 %v2721
        %v3207 = vunpack.c.l.b16 %v2722
        %v3208 = vunpack.c.l.b16 %v2723
        %v3209 = vunpack.c.l.b16 %v2724
        %v3210 = vunpack.c.l.b16 %v2725
        %v3211 = vunpack.c.l.b16 %v2726
        %v3212 = vunpack.c.l.b16 %v2727
        %v3213 = vunpack.c.l.b16 %v2728
        %v3214 = vunpack.c.l.b16 %v2729
        %v3215 = vunpack.c.l.b16 %v2730
        %v3216 = vunpack.c.l.b16 %v2731
        %v3217 = vunpack.c.l.b16 %v2732
        %v3218 = vunpack.c.l.b16 %v2733
        %v3219 = vunpack.c.l.b16 %v2734
        %v3220 = vunpack.c.l.b16 %v2735
        %v3221 = vunpack.c.l.b16 %v2736
        %v3222 = vunpack.c.l.b16 %v2737
        %v3223 = vunpack.c.l.b16 %v2738
        %v3224 = vunpack.c.l.b16 %v2739
        %v3225 = vunpack.c.l.b16 %v2740
        %v3226 = vunpack.c.l.b16 %v2741
        %v3227 = vunpack.c.l.b16 %v2742
        %v3228 = vunpack.c.l.b16 %v2743
        %v3229 = vunpack.c.l.b16 %v2744
        %v3230 = vunpack.c.l.b16 %v2745
        %v3231 = vunpack.c.l.b16 %v2746
        %v3232 = vunpack.c.l.b16 %v2747
        %v3233 = vunpack.c.l.b16 %v2748
        %v3234 = vunpack.c.l.b16 %v2749
        %v3235 = vunpack.c.l.b16 %v2750
        %v3236 = vunpack.c.l.b16 %v2751
        %v3237 = vunpack.c.l.b16 %v2752
        %v3238 = vpack.c.b16 %v3191, %v3190
        %v3239 = vpack.c.b16 %v3193, %v3192
        %v3240 = vpack.c.b16 %v3195, %v3194
        %v3241 = vpack.c.b16 %v3197, %v3196
        %v3242 = vpack.c.b16 %v3199, %v3198
        %v3243 = vpack.c.b16 %v3201, %v3200
        %v3244 = vpack.c.b16 %v3203, %v3202
        %v3245 = vpack.c.b16 %v3205, %v3204
        %v3246 = vpack.c.b16 %v3207, %v3206
        %v3247 = vpack.c.b16 %v3209, %v3208
        %v3248 = vpack.c.b16 %v3211, %v3210
        %v3249 = vpack.c.b16 %v3213, %v3212
        %v3250 = vpack.c.b16 %v3215, %v3214
        %v3251 = vpack.c.b16 %v3217, %v3216
        %v3252 = vpack.c.b16 %v3219, %v3218
        %v3253 = vpack.c.b16 %v3221, %v3220
        %v3254 = vpack.c.b16 %v3223, %v3222
        %v3255 = vpack.c.b16 %v3225, %v3224
        %v3256 = vpack.c.b16 %v3227, %v3226
        %v3257 = vpack.c.b16 %v3229, %v3228
        %v3258 = vpack.c.b16 %v3231, %v3230
        %v3259 = vpack.c.b16 %v3233, %v3232
        %v3260 = vpack.c.b16 %v3235, %v3234
        %v3261 = vpack.c.b16 %v3237, %v3236
        %3286 = vmatprep.subr.bf16.mxu0 0
        %3287 = vmatpush1.bf16.msra.mxu0 %v3238
        %3288 = vmatprep.subr.bf16.mxu0 0
        %3289 = vmatpush1.bf16.msra.mxu0 %v3239
        %3290 = vmatprep.subr.bf16.mxu0 0
        %3291 = vmatpush1.bf16.msra.mxu0 %v3240
        %3292 = vmatprep.subr.bf16.mxu0 0
        %3293 = vmatpush1.bf16.msra.mxu0 %v3241
        %3294 = vmatprep.subr.bf16.mxu0 0
        %3295 = vmatpush1.bf16.msra.mxu0 %v3242
        %3296 = vmatprep.subr.bf16.mxu0 0
        %3297 = vmatpush1.bf16.msra.mxu0 %v3243
        %3298 = vmatprep.subr.bf16.mxu0 0
        %3299 = vmatpush1.bf16.msra.mxu0 %v3244
        %3300 = vmatprep.subr.bf16.mxu0 0
        %3301 = vmatpush1.bf16.msra.mxu0 %v3245
        %3302 = vmatprep.subr.bf16.mxu0 0
        %3303 = vmatpush1.bf16.msra.mxu0 %v3246
        %3304 = vmatprep.subr.bf16.mxu0 0
        %3305 = vmatpush1.bf16.msra.mxu0 %v3247
        %3306 = vmatprep.subr.bf16.mxu0 0
        %3307 = vmatpush1.bf16.msra.mxu0 %v3248
        %3308 = vmatprep.subr.bf16.mxu0 0
        %3309 = vmatpush1.bf16.msra.mxu0 %v3249
        %3310 = vmatprep.subr.bf16.mxu0 0
        %3311 = vmatpush1.bf16.msra.mxu0 %v3250
        %3312 = vmatprep.subr.bf16.mxu0 0
        %3313 = vmatpush1.bf16.msra.mxu0 %v3251
        %3314 = vmatprep.subr.bf16.mxu0 0
        %3315 = vmatpush1.bf16.msra.mxu0 %v3252
        %3316 = vmatprep.subr.bf16.mxu0 0
        %3317 = vmatpush1.bf16.msra.mxu0 %v3253
        %3318 = vmatprep.mubr.bf16.mxu0 %v2682
        %3319 = vmatmul.mubr.bf16.gmra.mrb[0].mxu0 %v2681
        %v3320 = vpop.f32.mrb[0].mxu0
        %v3321 = vadd.f32 %v3080, %v3320
        %v3322 = vpop.f32.mrb[0].mxu0
        %v3323 = vpop.f32.mrb[0].mxu0
        %v3324 = vadd.f32 %v3083, %v3323
        %v3325 = vpop.f32.mrb[0].mxu0
        %3326 = vmatprep.mubr.bf16.mxu0 %v2685
        %3327 = vmatmul.mubr.bf16.gmra.mrb[0].mxu0 %v2684
        %v3328 = vpop.f32.mrb[0].mxu0
        %v3329 = vadd.f32 %v3088, %v3328
        %v3330 = vpop.f32.mrb[0].mxu0
        %v3331 = vpop.f32.mrb[0].mxu0
        %v3332 = vadd.f32 %v3091, %v3331
        %v3333 = vpop.f32.mrb[0].mxu0
        %3334 = vmatprep.mubr.bf16.mxu0 %v2688
        %3335 = vmatmul.mubr.bf16.gmra.mrb[0].mxu0 %v2687
        %v3336 = vpop.f32.mrb[0].mxu0
        %v3337 = vadd.f32 %v3096, %v3336
        %v3338 = vpop.f32.mrb[0].mxu0
        %v3339 = vpop.f32.mrb[0].mxu0
        %v3340 = vadd.f32 %v3099, %v3339
        %v3341 = vpop.f32.mrb[0].mxu0
        %3342 = vmatprep.mubr.bf16.mxu0 %v2691
        %3343 = vmatmul.mubr.bf16.gmra.mrb[0].mxu0 %v2690
        %v3344 = vpop.f32.mrb[0].mxu0
        %v3345 = vadd.f32 %v3104, %v3344
        %v3346 = vpop.f32.mrb[0].mxu0
        %v3347 = vpop.f32.mrb[0].mxu0
        %v3348 = vadd.f32 %v3107, %v3347
        %v3349 = vpop.f32.mrb[0].mxu0
        %3350 = vmatprep.mubr.bf16.mxu0 %v2694
        %3351 = vmatmul.mubr.bf16.gmra.mrb[0].mxu0 %v2693
        %v3352 = vpop.f32.mrb[0].mxu0
        %v3353 = vadd.f32 %v3112, %v3352
        %v3354 = vpop.f32.mrb[0].mxu0
        %v3355 = vpop.f32.mrb[0].mxu0
        %v3356 = vadd.f32 %v3115, %v3355
        %v3357 = vpop.f32.mrb[0].mxu0
        %3358 = vmatprep.mubr.bf16.mxu0 %v2697
        %3359 = vmatmul.mubr.bf16.gmra.mrb[0].mxu0 %v2696
        %v3360 = vpop.f32.mrb[0].mxu0
        %v3361 = vadd.f32 %v3120, %v3360
        %v3362 = vpop.f32.mrb[0].mxu0
        %v3363 = vpop.f32.mrb[0].mxu0
        %v3364 = vadd.f32 %v3123, %v3363
        %v3365 = vpop.f32.mrb[0].mxu0
        %3366 = vmatprep.mubr.bf16.mxu0 %v2700
        %3367 = vmatmul.mubr.bf16.gmra.mrb[0].mxu0 %v2699
        %v3368 = vpop.f32.mrb[0].mxu0
        %v3369 = vadd.f32 %v3128, %v3368
        %v3370 = vpop.f32.mrb[0].mxu0
        %v3371 = vpop.f32.mrb[0].mxu0
        %v3372 = vadd.f32 %v3131, %v3371
        %v3373 = vpop.f32.mrb[0].mxu0
        %3374 = vmatprep.mubr.bf16.mxu0 %v2703
        %3375 = vmatmul.mubr.bf16.gmra.mrb[0].mxu0 %v2702
        %v3376 = vpop.f32.mrb[0].mxu0
        %v3377 = vadd.f32 %v3136, %v3376
        %v3378 = vpop.f32.mrb[0].mxu0
        %v3379 = vpop.f32.mrb[0].mxu0
        %v3380 = vadd.f32 %v3139, %v3379
        %v3381 = vpop.f32.mrb[0].mxu0
        %3382 = vdwg.mxu0
        %3383 = vmatprep.subr.bf16.mxu0 0
        %3384 = vmatpush1.bf16.msra.mxu0 %v3254
        %3385 = vmatprep.subr.bf16.mxu0 0
        %3386 = vmatpush1.bf16.msra.mxu0 %v3255
        %3387 = vmatprep.subr.bf16.mxu0 0
        %3388 = vmatpush1.bf16.msra.mxu0 %v3256
        %3389 = vmatprep.subr.bf16.mxu0 0
        %3390 = vmatpush1.bf16.msra.mxu0 %v3257
        %3391 = vmatprep.subr.bf16.mxu0 0
        %3392 = vmatpush1.bf16.msra.mxu0 %v3258
        %3393 = vmatprep.subr.bf16.mxu0 0
        %3394 = vmatpush1.bf16.msra.mxu0 %v3259
        %3395 = vmatprep.subr.bf16.mxu0 0
        %3396 = vmatpush1.bf16.msra.mxu0 %v3260
        %3397 = vmatprep.subr.bf16.mxu0 0
        %3398 = vmatpush1.bf16.msra.mxu0 %v3261
        %3399 = vmatprep.subr.bf16.mxu0 0
        %3400 = vmatpush1.bf16.msra.mxu0 0
        %3401 = vmatprep.subr.bf16.mxu0 0
        %3402 = vmatpush1.bf16.msra.mxu0 0
        %3403 = vmatprep.subr.bf16.mxu0 0
        %3404 = vmatpush1.bf16.msra.mxu0 0
        %3405 = vmatprep.subr.bf16.mxu0 0
        %3406 = vmatpush1.bf16.msra.mxu0 0
        %3407 = vmatprep.subr.bf16.mxu0 0
        %3408 = vmatpush1.bf16.msra.mxu0 0
        %3409 = vmatprep.subr.bf16.mxu0 0
        %3410 = vmatpush1.bf16.msra.mxu0 0
        %3411 = vmatprep.subr.bf16.mxu0 0
        %3412 = vmatpush1.bf16.msra.mxu0 0
        %3413 = vmatprep.subr.bf16.mxu0 0
        %3414 = vmatpush1.bf16.msra.mxu0 0
        %3415 = vmatprep.mubr.bf16.mxu0 0
        %3416 = vmatmul.mubr.bf16.gmra.mrb[0].mxu0 %v2683
        %v3417 = vpop.f32.mrb[0].mxu0
        %v3418 = vadd.f32 %v3321, %v3417
        %v3419 = vpop.f32.mrb[0].mxu0
        %v3420 = vpop.f32.mrb[0].mxu0
        %v3421 = vadd.f32 %v3324, %v3420
        %v3422 = vpop.f32.mrb[0].mxu0
        %3423 = vmatprep.mubr.bf16.mxu0 0
        %3424 = vmatmul.mubr.bf16.gmra.mrb[0].mxu0 %v2686
        %v3425 = vpop.f32.mrb[0].mxu0
        %v3426 = vadd.f32 %v3329, %v3425
        %v3427 = vpop.f32.mrb[0].mxu0
        %v3428 = vpop.f32.mrb[0].mxu0
        %v3429 = vadd.f32 %v3332, %v3428
        %v3430 = vpop.f32.mrb[0].mxu0
        %3431 = vmatprep.mubr.bf16.mxu0 0
        %3432 = vmatmul.mubr.bf16.gmra.mrb[0].mxu0 %v2689
        %v3433 = vpop.f32.mrb[0].mxu0
        %v3434 = vadd.f32 %v3337, %v3433
        %v3435 = vpop.f32.mrb[0].mxu0
        %v3436 = vpop.f32.mrb[0].mxu0
        %v3437 = vadd.f32 %v3340, %v3436
        %v3438 = vpop.f32.mrb[0].mxu0
        %3439 = vmatprep.mubr.bf16.mxu0 0
        %3440 = vmatmul.mubr.bf16.gmra.mrb[0].mxu0 %v2692
        %v3441 = vpop.f32.mrb[0].mxu0
        %v3442 = vadd.f32 %v3345, %v3441
        %v3443 = vpop.f32.mrb[0].mxu0
        %v3444 = vpop.f32.mrb[0].mxu0
        %v3445 = vadd.f32 %v3348, %v3444
        %v3446 = vpop.f32.mrb[0].mxu0
        %3447 = vmatprep.mubr.bf16.mxu0 0
        %3448 = vmatmul.mubr.bf16.gmra.mrb[0].mxu0 %v2695
        %v3449 = vpop.f32.mrb[0].mxu0
        %v3450 = vadd.f32 %v3353, %v3449
        %v3451 = vpop.f32.mrb[0].mxu0
        %v3452 = vpop.f32.mrb[0].mxu0
        %v3453 = vadd.f32 %v3356, %v3452
        %v3454 = vpop.f32.mrb[0].mxu0
        %3455 = vmatprep.mubr.bf16.mxu0 0
        %3456 = vmatmul.mubr.bf16.gmra.mrb[0].mxu0 %v2698
        %v3457 = vpop.f32.mrb[0].mxu0
        %v3458 = vadd.f32 %v3361, %v3457
        %v3459 = vpop.f32.mrb[0].mxu0
        %v3460 = vpop.f32.mrb[0].mxu0
        %v3461 = vadd.f32 %v3364, %v3460
        %v3462 = vpop.f32.mrb[0].mxu0
        %3463 = vmatprep.mubr.bf16.mxu0 0
        %3464 = vmatmul.mubr.bf16.gmra.mrb[0].mxu0 %v2701
        %v3465 = vpop.f32.mrb[0].mxu0
        %v3466 = vadd.f32 %v3369, %v3465
        %v3467 = vpop.f32.mrb[0].mxu0
        %v3468 = vpop.f32.mrb[0].mxu0
        %v3469 = vadd.f32 %v3372, %v3468
        %v3470 = vpop.f32.mrb[0].mxu0
        %3471 = vmatprep.mubr.bf16.mxu0 0
        %3472 = vmatmul.mubr.bf16.gmra.mrb[0].mxu0 %v2704
        %v3473 = vpop.f32.mrb[0].mxu0
        %v3474 = vadd.f32 %v3377, %v3473
        %v3475 = vpop.f32.mrb[0].mxu0
        %v3476 = vpop.f32.mrb[0].mxu0
        %v3477 = vadd.f32 %v3380, %v3476
        %v3478 = vpop.f32.mrb[0].mxu0
        %3479 = vdwg.mxu0
        %v3480 = vld [vmem:[#allocation2 + $0xf0] sm:$0xff]
        %v3481 = vld [vmem:[#allocation2 + $0xf8] sm:$0xff]
        %v3482 = vld [vmem:[#allocation2 + $0x100] sm:$0xff]
        %v3483 = vld [vmem:[#allocation2 + $0x108] sm:$0xff]
        %v3484 = vld [vmem:[#allocation2 + $0x110] sm:$0xff]
        %v3485 = vld [vmem:[#allocation2 + $0x118] sm:$0xff]
        %v3486 = vld [vmem:[#allocation2 + $0x120] sm:$0xff]
        %v3487 = vld [vmem:[#allocation2 + $0x128] sm:$0xff]
        %v3488 = vld [vmem:[#allocation2 + $0x130] sm:$0xff]
        %v3489 = vld [vmem:[#allocation2 + $0x138] sm:$0xff]
        %v3490 = vld [vmem:[#allocation2 + $0x140] sm:$0xff]
        %v3491 = vld [vmem:[#allocation2 + $0x148] sm:$0xff]
        %v3492 = vld [vmem:[#allocation2 + $0x150] sm:$0xff]
        %v3493 = vld [vmem:[#allocation2 + $0x158] sm:$0xff]
        %v3494 = vld [vmem:[#allocation2 + $0x160] sm:$0xff]
        %v3495 = vld [vmem:[#allocation2 + $0x168] sm:$0xff]
        %v3496 = vld [vmem:[#allocation2 + $0x170] sm:$0xff]
        %v3497 = vld [vmem:[#allocation2 + $0x178] sm:$0xff]
        %v3498 = vld [vmem:[#allocation2 + $0x180] sm:$0xff]
        %v3499 = vld [vmem:[#allocation2 + $0x188] sm:$0xff]
        %v3500 = vld [vmem:[#allocation2 + $0x190] sm:$0xff]
        %v3501 = vld [vmem:[#allocation2 + $0x198] sm:$0xff]
        %v3502 = vld [vmem:[#allocation2 + $0x1a0] sm:$0xff]
        %v3503 = vld [vmem:[#allocation2 + $0x1a8] sm:$0xff]
        %v3504 = vld [vmem:[%s2202] sm:$0xf]
        %v3505 = vld [vmem:[%s2202 + $0x4] sm:$0xf]
        %v3506 = vld [vmem:[%s2202 + $0x8] sm:$0xf]
        %v3507 = vld [vmem:[%s2202 + $0xc] sm:$0xf]
        %v3508 = vld [vmem:[%s2202 + $0x10] sm:$0xf]
        %v3509 = vld [vmem:[%s2202 + $0x14] sm:$0xf]
        %v3510 = vld [vmem:[%s2202 + $0x18] sm:$0xf]
        %v3511 = vld [vmem:[%s2202 + $0x1c] sm:$0xf]
        %v3512 = vld [vmem:[%s2202 + $0x20] sm:$0xf]
        %v3513 = vld [vmem:[%s2202 + $0x24] sm:$0xf]
        %v3514 = vld [vmem:[%s2202 + $0x28] sm:$0xf]
        %v3515 = vld [vmem:[%s2202 + $0x2c] sm:$0xf]
        %v3516 = vld [vmem:[%s2202 + $0x30] sm:$0xf]
        %v3517 = vld [vmem:[%s2202 + $0x34] sm:$0xf]
        %v3518 = vld [vmem:[%s2202 + $0x38] sm:$0xf]
        %v3519 = vld [vmem:[%s2202 + $0x3c] sm:$0xf]
        %v3520 = vld [vmem:[%s2202 + $0x40] sm:$0xf]
        %v3521 = vld [vmem:[%s2202 + $0x44] sm:$0xf]
        %v3522 = vld [vmem:[%s2202 + $0x48] sm:$0xf]
        %v3523 = vld [vmem:[%s2202 + $0x4c] sm:$0xf]
        %v3524 = vld [vmem:[%s2202 + $0x50] sm:$0xf]
        %v3525 = vld [vmem:[%s2202 + $0x54] sm:$0xf]
        %v3526 = vld [vmem:[%s2202 + $0x58] sm:$0xf]
        %v3527 = vld [vmem:[%s2202 + $0x5c] sm:$0xf]
        %v3528 = vld [vmem:[%s2202 + $0x60] sm:$0xf]
        %v3529 = vld [vmem:[%s2202 + $0x64] sm:$0xf]
        %v3530 = vld [vmem:[%s2202 + $0x68] sm:$0xf]
        %v3531 = vld [vmem:[%s2202 + $0x6c] sm:$0xf]
        %v3532 = vld [vmem:[%s2202 + $0x70] sm:$0xf]
        %v3533 = vld [vmem:[%s2202 + $0x74] sm:$0xf]
        %v3534 = vld [vmem:[%s2202 + $0x78] sm:$0xf]
        %v3535 = vld [vmem:[%s2202 + $0x7c] sm:$0xf]
        %v3536 = vld [vmem:[%s2202 + $0x80] sm:$0xf]
        %v3537 = vld [vmem:[%s2202 + $0x84] sm:$0xf]
        %v3538 = vld [vmem:[%s2202 + $0x88] sm:$0xf]
        %v3539 = vld [vmem:[%s2202 + $0x8c] sm:$0xf]
        %v3540 = vld [vmem:[%s2202 + $0x90] sm:$0xf]
        %v3541 = vld [vmem:[%s2202 + $0x94] sm:$0xf]
        %v3542 = vld [vmem:[%s2202 + $0x98] sm:$0xf]
        %v3543 = vld [vmem:[%s2202 + $0x9c] sm:$0xf]
        %v3544 = vld [vmem:[%s2202 + $0xa0] sm:$0xf]
        %v3545 = vld [vmem:[%s2202 + $0xa4] sm:$0xf]
        %v3546 = vld [vmem:[%s2202 + $0xa8] sm:$0xf]
        %v3547 = vld [vmem:[%s2202 + $0xac] sm:$0xf]
        %v3548 = vld [vmem:[%s2202 + $0xb0] sm:$0xf]
        %v3549 = vld [vmem:[%s2202 + $0xb4] sm:$0xf]
        %v3550 = vld [vmem:[%s2202 + $0xb8] sm:$0xf]
        %v3551 = vld [vmem:[%s2202 + $0xbc] sm:$0xf]
        %v3600 = vunpack.c.l.b16 %v3504
        %v3601 = vunpack.c.l.b16 %v3505
        %v3602 = vunpack.c.l.b16 %v3506
        %v3603 = vunpack.c.l.b16 %v3507
        %v3604 = vunpack.c.l.b16 %v3508
        %v3605 = vunpack.c.l.b16 %v3509
        %v3606 = vunpack.c.l.b16 %v3510
        %v3607 = vunpack.c.l.b16 %v3511
        %v3608 = vunpack.c.l.b16 %v3512
        %v3609 = vunpack.c.l.b16 %v3513
        %v3610 = vunpack.c.l.b16 %v3514
        %v3611 = vunpack.c.l.b16 %v3515
        %v3612 = vunpack.c.l.b16 %v3516
        %v3613 = vunpack.c.l.b16 %v3517
        %v3614 = vunpack.c.l.b16 %v3518
        %v3615 = vunpack.c.l.b16 %v3519
        %v3616 = vunpack.c.l.b16 %v3520
        %v3617 = vunpack.c.l.b16 %v3521
        %v3618 = vunpack.c.l.b16 %v3522
        %v3619 = vunpack.c.l.b16 %v3523
        %v3620 = vunpack.c.l.b16 %v3524
        %v3621 = vunpack.c.l.b16 %v3525
        %v3622 = vunpack.c.l.b16 %v3526
        %v3623 = vunpack.c.l.b16 %v3527
        %v3624 = vunpack.c.l.b16 %v3528
        %v3625 = vunpack.c.l.b16 %v3529
        %v3626 = vunpack.c.l.b16 %v3530
        %v3627 = vunpack.c.l.b16 %v3531
        %v3628 = vunpack.c.l.b16 %v3532
        %v3629 = vunpack.c.l.b16 %v3533
        %v3630 = vunpack.c.l.b16 %v3534
        %v3631 = vunpack.c.l.b16 %v3535
        %v3632 = vunpack.c.l.b16 %v3536
        %v3633 = vunpack.c.l.b16 %v3537
        %v3634 = vunpack.c.l.b16 %v3538
        %v3635 = vunpack.c.l.b16 %v3539
        %v3636 = vunpack.c.l.b16 %v3540
        %v3637 = vunpack.c.l.b16 %v3541
        %v3638 = vunpack.c.l.b16 %v3542
        %v3639 = vunpack.c.l.b16 %v3543
        %v3640 = vunpack.c.l.b16 %v3544
        %v3641 = vunpack.c.l.b16 %v3545
        %v3642 = vunpack.c.l.b16 %v3546
        %v3643 = vunpack.c.l.b16 %v3547
        %v3644 = vunpack.c.l.b16 %v3548
        %v3645 = vunpack.c.l.b16 %v3549
        %v3646 = vunpack.c.l.b16 %v3550
        %v3647 = vunpack.c.l.b16 %v3551
        %v3648 = vpack.c.b16 %v3601, %v3600
        %v3649 = vpack.c.b16 %v3603, %v3602
        %v3650 = vpack.c.b16 %v3605, %v3604
        %v3651 = vpack.c.b16 %v3607, %v3606
        %v3652 = vpack.c.b16 %v3609, %v3608
        %v3653 = vpack.c.b16 %v3611, %v3610
        %v3654 = vpack.c.b16 %v3613, %v3612
        %v3655 = vpack.c.b16 %v3615, %v3614
        %v3656 = vpack.c.b16 %v3617, %v3616
        %v3657 = vpack.c.b16 %v3619, %v3618
        %v3658 = vpack.c.b16 %v3621, %v3620
        %v3659 = vpack.c.b16 %v3623, %v3622
        %v3660 = vpack.c.b16 %v3625, %v3624
        %v3661 = vpack.c.b16 %v3627, %v3626
        %v3662 = vpack.c.b16 %v3629, %v3628
        %v3663 = vpack.c.b16 %v3631, %v3630
        %v3664 = vpack.c.b16 %v3633, %v3632
        %v3665 = vpack.c.b16 %v3635, %v3634
        %v3666 = vpack.c.b16 %v3637, %v3636
        %v3667 = vpack.c.b16 %v3639, %v3638
        %v3668 = vpack.c.b16 %v3641, %v3640
        %v3669 = vpack.c.b16 %v3643, %v3642
        %v3670 = vpack.c.b16 %v3645, %v3644
        %v3671 = vpack.c.b16 %v3647, %v3646
        %3696 = vmatprep.subr.bf16.mxu0 0
        %3697 = vmatpush1.bf16.msra.mxu0 %v3648
        %3698 = vmatprep.subr.bf16.mxu0 0
        %3699 = vmatpush1.bf16.msra.mxu0 %v3649
        %3700 = vmatprep.subr.bf16.mxu0 0
        %3701 = vmatpush1.bf16.msra.mxu0 %v3650
        %3702 = vmatprep.subr.bf16.mxu0 0
        %3703 = vmatpush1.bf16.msra.mxu0 %v3651
        %3704 = vmatprep.subr.bf16.mxu0 0
        %3705 = vmatpush1.bf16.msra.mxu0 %v3652
        %3706 = vmatprep.subr.bf16.mxu0 0
        %3707 = vmatpush1.bf16.msra.mxu0 %v3653
        %3708 = vmatprep.subr.bf16.mxu0 0
        %3709 = vmatpush1.bf16.msra.mxu0 %v3654
        %3710 = vmatprep.subr.bf16.mxu0 0
        %3711 = vmatpush1.bf16.msra.mxu0 %v3655
        %3712 = vmatprep.subr.bf16.mxu0 0
        %3713 = vmatpush1.bf16.msra.mxu0 %v3656
        %3714 = vmatprep.subr.bf16.mxu0 0
        %3715 = vmatpush1.bf16.msra.mxu0 %v3657
        %3716 = vmatprep.subr.bf16.mxu0 0
        %3717 = vmatpush1.bf16.msra.mxu0 %v3658
        %3718 = vmatprep.subr.bf16.mxu0 0
        %3719 = vmatpush1.bf16.msra.mxu0 %v3659
        %3720 = vmatprep.subr.bf16.mxu0 0
        %3721 = vmatpush1.bf16.msra.mxu0 %v3660
        %3722 = vmatprep.subr.bf16.mxu0 0
        %3723 = vmatpush1.bf16.msra.mxu0 %v3661
        %3724 = vmatprep.subr.bf16.mxu0 0
        %3725 = vmatpush1.bf16.msra.mxu0 %v3662
        %3726 = vmatprep.subr.bf16.mxu0 0
        %3727 = vmatpush1.bf16.msra.mxu0 %v3663
        %3728 = vmatprep.mubr.bf16.mxu0 %v3481
        %3729 = vmatmul.mubr.bf16.gmra.mrb[0].mxu0 %v3480
        %v3730 = vpop.f32.mrb[0].mxu0
        %v3731 = vadd.f32 0.0, %v3730
        %v3732 = vpop.f32.mrb[0].mxu0
        %v3733 = vpop.f32.mrb[0].mxu0
        %v3734 = vadd.f32 0.0, %v3733
        %v3735 = vpop.f32.mrb[0].mxu0
        %3736 = vmatprep.mubr.bf16.mxu0 %v3484
        %3737 = vmatmul.mubr.bf16.gmra.mrb[0].mxu0 %v3483
        %v3738 = vpop.f32.mrb[0].mxu0
        %v3739 = vadd.f32 0.0, %v3738
        %v3740 = vpop.f32.mrb[0].mxu0
        %v3741 = vpop.f32.mrb[0].mxu0
        %v3742 = vadd.f32 0.0, %v3741
        %v3743 = vpop.f32.mrb[0].mxu0
        %3744 = vmatprep.mubr.bf16.mxu0 %v3487
        %3745 = vmatmul.mubr.bf16.gmra.mrb[0].mxu0 %v3486
        %v3746 = vpop.f32.mrb[0].mxu0
        %v3747 = vadd.f32 0.0, %v3746
        %v3748 = vpop.f32.mrb[0].mxu0
        %v3749 = vpop.f32.mrb[0].mxu0
        %v3750 = vadd.f32 0.0, %v3749
        %v3751 = vpop.f32.mrb[0].mxu0
        %3752 = vmatprep.mubr.bf16.mxu0 %v3490
        %3753 = vmatmul.mubr.bf16.gmra.mrb[0].mxu0 %v3489
        %v3754 = vpop.f32.mrb[0].mxu0
        %v3755 = vadd.f32 0.0, %v3754
        %v3756 = vpop.f32.mrb[0].mxu0
        %v3757 = vpop.f32.mrb[0].mxu0
        %v3758 = vadd.f32 0.0, %v3757
        %v3759 = vpop.f32.mrb[0].mxu0
        %3760 = vmatprep.mubr.bf16.mxu0 %v3493
        %3761 = vmatmul.mubr.bf16.gmra.mrb[0].mxu0 %v3492
        %v3762 = vpop.f32.mrb[0].mxu0
        %v3763 = vadd.f32 0.0, %v3762
        %v3764 = vpop.f32.mrb[0].mxu0
        %v3765 = vpop.f32.mrb[0].mxu0
        %v3766 = vadd.f32 0.0, %v3765
        %v3767 = vpop.f32.mrb[0].mxu0
        %3768 = vmatprep.mubr.bf16.mxu0 %v3496
        %3769 = vmatmul.mubr.bf16.gmra.mrb[0].mxu0 %v3495
        %v3770 = vpop.f32.mrb[0].mxu0
        %v3771 = vadd.f32 0.0, %v3770
        %v3772 = vpop.f32.mrb[0].mxu0
        %v3773 = vpop.f32.mrb[0].mxu0
        %v3774 = vadd.f32 0.0, %v3773
        %v3775 = vpop.f32.mrb[0].mxu0
        %3776 = vmatprep.mubr.bf16.mxu0 %v3499
        %3777 = vmatmul.mubr.bf16.gmra.mrb[0].mxu0 %v3498
        %v3778 = vpop.f32.mrb[0].mxu0
        %v3779 = vadd.f32 0.0, %v3778
        %v3780 = vpop.f32.mrb[0].mxu0
        %v3781 = vpop.f32.mrb[0].mxu0
        %v3782 = vadd.f32 0.0, %v3781
        %v3783 = vpop.f32.mrb[0].mxu0
        %3784 = vmatprep.mubr.bf16.mxu0 %v3502
        %3785 = vmatmul.mubr.bf16.gmra.mrb[0].mxu0 %v3501
        %v3786 = vpop.f32.mrb[0].mxu0
        %v3787 = vadd.f32 0.0, %v3786
        %v3788 = vpop.f32.mrb[0].mxu0
        %v3789 = vpop.f32.mrb[0].mxu0
        %v3790 = vadd.f32 0.0, %v3789
        %v3791 = vpop.f32.mrb[0].mxu0
        %3792 = vdwg.mxu0
        %3793 = vmatprep.subr.bf16.mxu0 0
        %3794 = vmatpush1.bf16.msra.mxu0 %v3664
        %3795 = vmatprep.subr.bf16.mxu0 0
        %3796 = vmatpush1.bf16.msra.mxu0 %v3665
        %3797 = vmatprep.subr.bf16.mxu0 0
        %3798 = vmatpush1.bf16.msra.mxu0 %v3666
        %3799 = vmatprep.subr.bf16.mxu0 0
        %3800 = vmatpush1.bf16.msra.mxu0 %v3667
        %3801 = vmatprep.subr.bf16.mxu0 0
        %3802 = vmatpush1.bf16.msra.mxu0 %v3668
        %3803 = vmatprep.subr.bf16.mxu0 0
        %3804 = vmatpush1.bf16.msra.mxu0 %v3669
        %3805 = vmatprep.subr.bf16.mxu0 0
        %3806 = vmatpush1.bf16.msra.mxu0 %v3670
        %3807 = vmatprep.subr.bf16.mxu0 0
        %3808 = vmatpush1.bf16.msra.mxu0 %v3671
        %3809 = vmatprep.subr.bf16.mxu0 0
        %3810 = vmatpush1.bf16.msra.mxu0 0
        %3811 = vmatprep.subr.bf16.mxu0 0
        %3812 = vmatpush1.bf16.msra.mxu0 0
        %3813 = vmatprep.subr.bf16.mxu0 0
        %3814 = vmatpush1.bf16.msra.mxu0 0
        %3815 = vmatprep.subr.bf16.mxu0 0
        %3816 = vmatpush1.bf16.msra.mxu0 0
        %3817 = vmatprep.subr.bf16.mxu0 0
        %3818 = vmatpush1.bf16.msra.mxu0 0
        %3819 = vmatprep.subr.bf16.mxu0 0
        %3820 = vmatpush1.bf16.msra.mxu0 0
        %3821 = vmatprep.subr.bf16.mxu0 0
        %3822 = vmatpush1.bf16.msra.mxu0 0
        %3823 = vmatprep.subr.bf16.mxu0 0
        %3824 = vmatpush1.bf16.msra.mxu0 0
        %3825 = vmatprep.mubr.bf16.mxu0 0
        %3826 = vmatmul.mubr.bf16.gmra.mrb[0].mxu0 %v3482
        %v3827 = vpop.f32.mrb[0].mxu0
        %v3828 = vadd.f32 %v3731, %v3827
        %v3829 = vpop.f32.mrb[0].mxu0
        %v3830 = vpop.f32.mrb[0].mxu0
        %v3831 = vadd.f32 %v3734, %v3830
        %v3832 = vpop.f32.mrb[0].mxu0
        %3833 = vmatprep.mubr.bf16.mxu0 0
        %3834 = vmatmul.mubr.bf16.gmra.mrb[0].mxu0 %v3485
        %v3835 = vpop.f32.mrb[0].mxu0
        %v3836 = vadd.f32 %v3739, %v3835
        %v3837 = vpop.f32.mrb[0].mxu0
        %v3838 = vpop.f32.mrb[0].mxu0
        %v3839 = vadd.f32 %v3742, %v3838
        %v3840 = vpop.f32.mrb[0].mxu0
        %3841 = vmatprep.mubr.bf16.mxu0 0
        %3842 = vmatmul.mubr.bf16.gmra.mrb[0].mxu0 %v3488
        %v3843 = vpop.f32.mrb[0].mxu0
        %v3844 = vadd.f32 %v3747, %v3843
        %v3845 = vpop.f32.mrb[0].mxu0
        %v3846 = vpop.f32.mrb[0].mxu0
        %v3847 = vadd.f32 %v3750, %v3846
        %v3848 = vpop.f32.mrb[0].mxu0
        %3849 = vmatprep.mubr.bf16.mxu0 0
        %3850 = vmatmul.mubr.bf16.gmra.mrb[0].mxu0 %v3491
        %v3851 = vpop.f32.mrb[0].mxu0
        %v3852 = vadd.f32 %v3755, %v3851
        %v3853 = vpop.f32.mrb[0].mxu0
        %v3854 = vpop.f32.mrb[0].mxu0
        %v3855 = vadd.f32 %v3758, %v3854
        %v3856 = vpop.f32.mrb[0].mxu0
        %3857 = vmatprep.mubr.bf16.mxu0 0
        %3858 = vmatmul.mubr.bf16.gmra.mrb[0].mxu0 %v3494
        %v3859 = vpop.f32.mrb[0].mxu0
        %v3860 = vadd.f32 %v3763, %v3859
        %v3861 = vpop.f32.mrb[0].mxu0
        %v3862 = vpop.f32.mrb[0].mxu0
        %v3863 = vadd.f32 %v3766, %v3862
        %v3864 = vpop.f32.mrb[0].mxu0
        %3865 = vmatprep.mubr.bf16.mxu0 0
        %3866 = vmatmul.mubr.bf16.gmra.mrb[0].mxu0 %v3497
        %v3867 = vpop.f32.mrb[0].mxu0
        %v3868 = vadd.f32 %v3771, %v3867
        %v3869 = vpop.f32.mrb[0].mxu0
        %v3870 = vpop.f32.mrb[0].mxu0
        %v3871 = vadd.f32 %v3774, %v3870
        %v3872 = vpop.f32.mrb[0].mxu0
        %3873 = vmatprep.mubr.bf16.mxu0 0
        %3874 = vmatmul.mubr.bf16.gmra.mrb[0].mxu0 %v3500
        %v3875 = vpop.f32.mrb[0].mxu0
        %v3876 = vadd.f32 %v3779, %v3875
        %v3877 = vpop.f32.mrb[0].mxu0
        %v3878 = vpop.f32.mrb[0].mxu0
        %v3879 = vadd.f32 %v3782, %v3878
        %v3880 = vpop.f32.mrb[0].mxu0
        %3881 = vmatprep.mubr.bf16.mxu0 0
        %3882 = vmatmul.mubr.bf16.gmra.mrb[0].mxu0 %v3503
        %v3883 = vpop.f32.mrb[0].mxu0
        %v3884 = vadd.f32 %v3787, %v3883
        %v3885 = vpop.f32.mrb[0].mxu0
        %v3886 = vpop.f32.mrb[0].mxu0
        %v3887 = vadd.f32 %v3790, %v3886
        %v3888 = vpop.f32.mrb[0].mxu0
        %3889 = vdwg.mxu0
        %v3890 = vadd.f32 %v3418, %v3828
        %v3891 = vadd.f32 %v3421, %v3831
        %v3892 = vadd.f32 %v3426, %v3836
        %v3893 = vadd.f32 %v3429, %v3839
        %v3894 = vadd.f32 %v3434, %v3844
        %v3895 = vadd.f32 %v3437, %v3847
        %v3896 = vadd.f32 %v3442, %v3852
        %v3897 = vadd.f32 %v3445, %v3855
        %v3898 = vadd.f32 %v3450, %v3860
        %v3899 = vadd.f32 %v3453, %v3863
        %v3900 = vadd.f32 %v3458, %v3868
        %v3901 = vadd.f32 %v3461, %v3871
        %v3902 = vadd.f32 %v3466, %v3876
        %v3903 = vadd.f32 %v3469, %v3879
        %v3904 = vadd.f32 %v3474, %v3884
        %v3905 = vadd.f32 %v3477, %v3887
        %v3906 = vmul.f32 %v3890, %v2609
        %v3907 = vmul.f32 %v3891, %v2609
        %v3908 = vmul.f32 %v3892, %v2609
        %v3909 = vmul.f32 %v3893, %v2609
        %v3910 = vmul.f32 %v3894, %v2609
        %v3911 = vmul.f32 %v3895, %v2609
        %v3912 = vmul.f32 %v3896, %v2609
        %v3913 = vmul.f32 %v3897, %v2609
        %v3914 = vmul.f32 %v3898, %v2609
        %v3915 = vmul.f32 %v3899, %v2609
        %v3916 = vmul.f32 %v3900, %v2609
        %v3917 = vmul.f32 %v3901, %v2609
        %v3918 = vmul.f32 %v3902, %v2609
        %v3919 = vmul.f32 %v3903, %v2609
        %v3920 = vmul.f32 %v3904, %v2609
        %v3921 = vmul.f32 %v3905, %v2609
        %v3922 = vadd.f32 %v3906, %v2631
        %v3923 = vadd.f32 %v3907, %v2631
        %v3924 = vadd.f32 %v3908, %v2631
        %v3925 = vadd.f32 %v3909, %v2631
        %v3926 = vadd.f32 %v3910, %v2631
        %v3927 = vadd.f32 %v3911, %v2631
        %v3928 = vadd.f32 %v3912, %v2631
        %v3929 = vadd.f32 %v3913, %v2631
        %v3930 = vadd.f32 %v3914, %v2631
        %v3931 = vadd.f32 %v3915, %v2631
        %v3932 = vadd.f32 %v3916, %v2631
        %v3933 = vadd.f32 %v3917, %v2631
        %v3934 = vadd.f32 %v3918, %v2631
        %v3935 = vadd.f32 %v3919, %v2631
        %v3936 = vadd.f32 %v3920, %v2631
        %v3937 = vadd.f32 %v3921, %v2631
        %v3938 = vmax.f32 %v3922, 0.0
        %v3939 = vmax.f32 %v3923, 0.0
        %v3940 = vmax.f32 %v3924, 0.0
        %v3941 = vmax.f32 %v3925, 0.0
        %v3942 = vmax.f32 %v3926, 0.0
        %v3943 = vmax.f32 %v3927, 0.0
        %v3944 = vmax.f32 %v3928, 0.0
        %v3945 = vmax.f32 %v3929, 0.0
        %v3946 = vmax.f32 %v3930, 0.0
        %v3947 = vmax.f32 %v3931, 0.0
        %v3948 = vmax.f32 %v3932, 0.0
        %v3949 = vmax.f32 %v3933, 0.0
        %v3950 = vmax.f32 %v3934, 0.0
        %v3951 = vmax.f32 %v3935, 0.0
        %v3952 = vmax.f32 %v3936, 0.0
        %v3953 = vmax.f32 %v3937, 0.0
        %v3954 = vpack.c.bf16 %v3939, %v3938
        %v3955 = vpack.c.bf16 %v3941, %v3940
        %v3956 = vpack.c.bf16 %v3943, %v3942
        %v3957 = vpack.c.bf16 %v3945, %v3944
        %v3958 = vpack.c.bf16 %v3947, %v3946
        %v3959 = vpack.c.bf16 %v3949, %v3948
        %v3960 = vpack.c.bf16 %v3951, %v3950
        %v3961 = vpack.c.bf16 %v3953, %v3952
        %3962 = vst [vmem:[#allocation3 + $0x40] sm:$0xff] %v3954
        %3963 = vst [vmem:[#allocation3 + $0x48] sm:$0xff] %v3955
        %3964 = vst [vmem:[#allocation3 + $0x50] sm:$0xff] %v3956
        %3965 = vst [vmem:[#allocation3 + $0x58] sm:$0xff] %v3957
        %3966 = vst [vmem:[#allocation3 + $0x60] sm:$0xff] %v3958
        %3967 = vst [vmem:[#allocation3 + $0x68] sm:$0xff] %v3959
        %3968 = vst [vmem:[#allocation3 + $0x70] sm:$0xff] %v3960
        %3969 = vst [vmem:[#allocation3 + $0x78] sm:$0xff] %v3961
        %v3970 = vld [vmem:[%s5] sm:$0x1]
        %v3971 = vld [vmem:[%s6] sm:$0x1]
        %v3972 = vld [vmem:[#allocation3] sm:$0xff]
        %v3973 = vld [vmem:[#allocation3 + $0x8] sm:$0xff]
        %v3974 = vld [vmem:[#allocation3 + $0x10] sm:$0xff]
        %v3975 = vld [vmem:[#allocation3 + $0x18] sm:$0xff]
        %v3976 = vld [vmem:[#allocation3 + $0x20] sm:$0xff]
        %v3977 = vld [vmem:[#allocation3 + $0x28] sm:$0xff]
        %v3978 = vld [vmem:[#allocation3 + $0x30] sm:$0xff]
        %v3979 = vld [vmem:[#allocation3 + $0x38] sm:$0xff]
        %v3980 = vld [vmem:[#allocation3 + $0x40] sm:$0xff]
        %v3981 = vld [vmem:[#allocation3 + $0x48] sm:$0xff]
        %v3982 = vld [vmem:[#allocation3 + $0x50] sm:$0xff]
        %v3983 = vld [vmem:[#allocation3 + $0x58] sm:$0xff]
        %v3984 = vld [vmem:[#allocation3 + $0x60] sm:$0xff]
        %v3985 = vld [vmem:[#allocation3 + $0x68] sm:$0xff]
        %v3986 = vld [vmem:[#allocation3 + $0x70] sm:$0xff]
        %v3987 = vld [vmem:[#allocation3 + $0x78] sm:$0xff]
        %v3988 = vunpack.c.l.bf16 %v3972
        %v3989 = vunpack.c.h.bf16 %v3972
        %v3990 = vunpack.c.l.bf16 %v3973
        %v3991 = vunpack.c.h.bf16 %v3973
        %v3992 = vunpack.c.l.bf16 %v3974
        %v3993 = vunpack.c.h.bf16 %v3974
        %v3994 = vunpack.c.l.bf16 %v3975
        %v3995 = vunpack.c.h.bf16 %v3975
        %v3996 = vunpack.c.l.bf16 %v3976
        %v3997 = vunpack.c.h.bf16 %v3976
        %v3998 = vunpack.c.l.bf16 %v3977
        %v3999 = vunpack.c.h.bf16 %v3977
        %v4000 = vunpack.c.l.bf16 %v3978
        %v4001 = vunpack.c.h.bf16 %v3978
        %v4002 = vunpack.c.l.bf16 %v3979
        %v4003 = vunpack.c.h.bf16 %v3979
        %v4004 = vunpack.c.l.bf16 %v3980
        %v4005 = vunpack.c.h.bf16 %v3980
        %v4006 = vunpack.c.l.bf16 %v3981
        %v4007 = vunpack.c.h.bf16 %v3981
        %v4008 = vunpack.c.l.bf16 %v3982
        %v4009 = vunpack.c.h.bf16 %v3982
        %v4010 = vunpack.c.l.bf16 %v3983
        %v4011 = vunpack.c.h.bf16 %v3983
        %v4012 = vunpack.c.l.bf16 %v3984
        %v4013 = vunpack.c.h.bf16 %v3984
        %v4014 = vunpack.c.l.bf16 %v3985
        %v4015 = vunpack.c.h.bf16 %v3985
        %v4016 = vunpack.c.l.bf16 %v3986
        %v4017 = vunpack.c.h.bf16 %v3986
        %v4018 = vunpack.c.l.bf16 %v3987
        %v4019 = vunpack.c.h.bf16 %v3987
        %4020 = vst [vmem:[#allocation2 + $0x20] sm:$0xff] %v3972
        %4021 = vst [vmem:[#allocation2 + $0x38] sm:$0xff] %v3973
        %4022 = vst [vmem:[#allocation2 + $0x50] sm:$0xff] %v3974
        %4023 = vst [vmem:[#allocation2 + $0x68] sm:$0xff] %v3975
        %4024 = vst [vmem:[#allocation2 + $0x80] sm:$0xff] %v3976
        %4025 = vst [vmem:[#allocation2 + $0x98] sm:$0xff] %v3977
        %4026 = vst [vmem:[#allocation2 + $0xb0] sm:$0xff] %v3978
        %4027 = vst [vmem:[#allocation2 + $0xc8] sm:$0xff] %v3979
        %4028 = vst [vmem:[#allocation2 + $0xe0] sm:$0xff] %v3980
        %4029 = vst [vmem:[#allocation2 + $0xf8] sm:$0xff] %v3981
        %4030 = vst [vmem:[#allocation2 + $0x110] sm:$0xff] %v3982
        %4031 = vst [vmem:[#allocation2 + $0x128] sm:$0xff] %v3983
        %4032 = vst [vmem:[#allocation2 + $0x140] sm:$0xff] %v3984
        %4033 = vst [vmem:[#allocation2 + $0x158] sm:$0xff] %v3985
        %4034 = vst [vmem:[#allocation2 + $0x170] sm:$0xff] %v3986
        %4035 = vst [vmem:[#allocation2 + $0x188] sm:$0xff] %v3987
        %v4036 = vrot.slane %v3988, 7
        %v4037 = vrot.slane %v3989, 7
        %v4038 = vrot.slane %v3990, 7
        %v4039 = vrot.slane %v3991, 7
        %v4040 = vrot.slane %v3992, 7
        %v4041 = vrot.slane %v3993, 7
        %v4042 = vrot.slane %v3994, 7
        %v4043 = vrot.slane %v3995, 7
        %v4044 = vrot.slane %v3996, 7
        %v4045 = vrot.slane %v3997, 7
        %v4046 = vrot.slane %v3998, 7
        %v4047 = vrot.slane %v3999, 7
        %v4048 = vrot.slane %v4000, 7
        %v4049 = vrot.slane %v4001, 7
        %v4050 = vrot.slane %v4002, 7
        %v4051 = vrot.slane %v4003, 7
        %v4052 = vrot.slane %v4004, 7
        %v4053 = vrot.slane %v4005, 7
        %v4054 = vrot.slane %v4006, 7
        %v4055 = vrot.slane %v4007, 7
        %v4056 = vrot.slane %v4008, 7
        %v4057 = vrot.slane %v4009, 7
        %v4058 = vrot.slane %v4010, 7
        %v4059 = vrot.slane %v4011, 7
        %v4060 = vrot.slane %v4012, 7
        %v4061 = vrot.slane %v4013, 7
        %v4062 = vrot.slane %v4014, 7
        %v4063 = vrot.slane %v4015, 7
        %v4064 = vrot.slane %v4016, 7
        %v4065 = vrot.slane %v4017, 7
        %v4066 = vrot.slane %v4018, 7
        %v4067 = vrot.slane %v4019, 7
        %v4068 = vsel %vm1024, %v4066, %v4067
        %v4069 = vsel %vm1024, %v4065, %v4066
        %v4070 = vsel %vm1024, %v4064, %v4065
        %v4071 = vsel %vm1024, %v4063, %v4064
        %v4072 = vsel %vm1024, %v4062, %v4063
        %v4073 = vsel %vm1024, %v4061, %v4062
        %v4074 = vsel %vm1024, %v4060, %v4061
        %v4075 = vsel %vm1024, %v4059, %v4060
        %v4076 = vsel %vm1024, %v4058, %v4059
        %v4077 = vsel %vm1024, %v4057, %v4058
        %v4078 = vsel %vm1024, %v4056, %v4057
        %v4079 = vsel %vm1024, %v4055, %v4056
        %v4080 = vsel %vm1024, %v4054, %v4055
        %v4081 = vsel %vm1024, %v4053, %v4054
        %v4082 = vsel %vm1024, %v4052, %v4053
        %v4083 = vsel %vm1024, %v4051, %v4052
        %v4084 = vsel %vm1024, %v4050, %v4051
        %v4085 = vsel %vm1024, %v4049, %v4050
        %v4086 = vsel %vm1024, %v4048, %v4049
        %v4087 = vsel %vm1024, %v4047, %v4048
        %v4088 = vsel %vm1024, %v4046, %v4047
        %v4089 = vsel %vm1024, %v4045, %v4046
        %v4090 = vsel %vm1024, %v4044, %v4045
        %v4091 = vsel %vm1024, %v4043, %v4044
        %v4092 = vsel %vm1024, %v4042, %v4043
        %v4093 = vsel %vm1024, %v4041, %v4042
        %v4094 = vsel %vm1024, %v4040, %v4041
        %v4095 = vsel %vm1024, %v4039, %v4040
        %v4096 = vsel %vm1024, %v4038, %v4039
        %v4097 = vsel %vm1024, %v4037, %v4038
        %v4098 = vsel %vm1024, %v4036, %v4037
        %v4099 = vsel %vm1024, %v4067, %v4036
        %v4100 = vsel %vm1089, %v4099, 0.0
        %v4101 = vsel %vm1090, %v4098, 0.0
        %v4102 = vsel %vm1091, %v4097, 0.0
        %v4103 = vsel %vm1092, %v4096, 0.0
        %v4104 = vsel %vm1093, %v4095, 0.0
        %v4105 = vsel %vm1094, %v4094, 0.0
        %v4106 = vsel %vm1095, %v4093, 0.0
        %v4107 = vsel %vm1096, %v4092, 0.0
        %v4108 = vsel %vm1097, %v4091, 0.0
        %v4109 = vsel %vm1098, %v4090, 0.0
        %v4110 = vsel %vm1099, %v4089, 0.0
        %v4111 = vsel %vm1100, %v4088, 0.0
        %v4112 = vsel %vm1101, %v4087, 0.0
        %v4113 = vsel %vm1102, %v4086, 0.0
        %v4114 = vsel %vm1103, %v4085, 0.0
        %v4115 = vsel %vm1104, %v4084, 0.0
        %v4116 = vsel %vm1105, %v4083, 0.0
        %v4117 = vsel %vm1106, %v4082, 0.0
        %v4118 = vsel %vm1107, %v4081, 0.0
        %v4119 = vsel %vm1108, %v4080, 0.0
        %v4120 = vsel %vm1109, %v4079, 0.0
        %v4121 = vsel %vm1110, %v4078, 0.0
        %v4122 = vsel %vm1111, %v4077, 0.0
        %v4123 = vsel %vm1112, %v4076, 0.0
        %v4124 = vsel %vm1113, %v4075, 0.0
        %v4125 = vsel %vm1114, %v4074, 0.0
        %v4126 = vsel %vm1115, %v4073, 0.0
        %v4127 = vsel %vm1116, %v4072, 0.0
        %v4128 = vsel %vm1117, %v4071, 0.0
        %v4129 = vsel %vm1118, %v4070, 0.0
        %v4130 = vsel %vm1119, %v4069, 0.0
        %v4131 = vsel %vm1120, %v4068, 0.0
        %v4132 = vpack.c.bf16 %v4101, %v4100
        %v4133 = vpack.c.bf16 %v4103, %v4102
        %v4134 = vpack.c.bf16 %v4105, %v4104
        %v4135 = vpack.c.bf16 %v4107, %v4106
        %v4136 = vpack.c.bf16 %v4109, %v4108
        %v4137 = vpack.c.bf16 %v4111, %v4110
        %v4138 = vpack.c.bf16 %v4113, %v4112
        %v4139 = vpack.c.bf16 %v4115, %v4114
        %v4140 = vpack.c.bf16 %v4117, %v4116
        %v4141 = vpack.c.bf16 %v4119, %v4118
        %v4142 = vpack.c.bf16 %v4121, %v4120
        %v4143 = vpack.c.bf16 %v4123, %v4122
        %v4144 = vpack.c.bf16 %v4125, %v4124
        %v4145 = vpack.c.bf16 %v4127, %v4126
        %v4146 = vpack.c.bf16 %v4129, %v4128
        %v4147 = vpack.c.bf16 %v4131, %v4130
        %4148 = vst [vmem:[#allocation2 + $0x18] sm:$0xff] %v4132
        %4149 = vst [vmem:[#allocation2 + $0x30] sm:$0xff] %v4133
        %4150 = vst [vmem:[#allocation2 + $0x48] sm:$0xff] %v4134
        %4151 = vst [vmem:[#allocation2 + $0x60] sm:$0xff] %v4135
        %4152 = vst [vmem:[#allocation2 + $0x78] sm:$0xff] %v4136
        %4153 = vst [vmem:[#allocation2 + $0x90] sm:$0xff] %v4137
        %4154 = vst [vmem:[#allocation2 + $0xa8] sm:$0xff] %v4138
        %4155 = vst [vmem:[#allocation2 + $0xc0] sm:$0xff] %v4139
        %4156 = vst [vmem:[#allocation2 + $0xd8] sm:$0xff] %v4140
        %4157 = vst [vmem:[#allocation2 + $0xf0] sm:$0xff] %v4141
        %4158 = vst [vmem:[#allocation2 + $0x108] sm:$0xff] %v4142
        %4159 = vst [vmem:[#allocation2 + $0x120] sm:$0xff] %v4143
        %4160 = vst [vmem:[#allocation2 + $0x138] sm:$0xff] %v4144
        %4161 = vst [vmem:[#allocation2 + $0x150] sm:$0xff] %v4145
        %4162 = vst [vmem:[#allocation2 + $0x168] sm:$0xff] %v4146
        %4163 = vst [vmem:[#allocation2 + $0x180] sm:$0xff] %v4147
        %v4164 = vrot.slane %v3988, 1
        %v4165 = vrot.slane %v3989, 1
        %v4166 = vrot.slane %v3990, 1
        %v4167 = vrot.slane %v3991, 1
        %v4168 = vrot.slane %v3992, 1
        %v4169 = vrot.slane %v3993, 1
        %v4170 = vrot.slane %v3994, 1
        %v4171 = vrot.slane %v3995, 1
        %v4172 = vrot.slane %v3996, 1
        %v4173 = vrot.slane %v3997, 1
        %v4174 = vrot.slane %v3998, 1
        %v4175 = vrot.slane %v3999, 1
        %v4176 = vrot.slane %v4000, 1
        %v4177 = vrot.slane %v4001, 1
        %v4178 = vrot.slane %v4002, 1
        %v4179 = vrot.slane %v4003, 1
        %v4180 = vrot.slane %v4004, 1
        %v4181 = vrot.slane %v4005, 1
        %v4182 = vrot.slane %v4006, 1
        %v4183 = vrot.slane %v4007, 1
        %v4184 = vrot.slane %v4008, 1
        %v4185 = vrot.slane %v4009, 1
        %v4186 = vrot.slane %v4010, 1
        %v4187 = vrot.slane %v4011, 1
        %v4188 = vrot.slane %v4012, 1
        %v4189 = vrot.slane %v4013, 1
        %v4190 = vrot.slane %v4014, 1
        %v4191 = vrot.slane %v4015, 1
        %v4192 = vrot.slane %v4016, 1
        %v4193 = vrot.slane %v4017, 1
        %v4194 = vrot.slane %v4018, 1
        %v4195 = vrot.slane %v4019, 1
        %v4196 = vsel %vm1217, %v4194, %v4195
        %v4197 = vsel %vm1217, %v4193, %v4194
        %v4198 = vsel %vm1217, %v4192, %v4193
        %v4199 = vsel %vm1217, %v4191, %v4192
        %v4200 = vsel %vm1217, %v4190, %v4191
        %v4201 = vsel %vm1217, %v4189, %v4190
        %v4202 = vsel %vm1217, %v4188, %v4189
        %v4203 = vsel %vm1217, %v4187, %v4188
        %v4204 = vsel %vm1217, %v4186, %v4187
        %v4205 = vsel %vm1217, %v4185, %v4186
        %v4206 = vsel %vm1217, %v4184, %v4185
        %v4207 = vsel %vm1217, %v4183, %v4184
        %v4208 = vsel %vm1217, %v4182, %v4183
        %v4209 = vsel %vm1217, %v4181, %v4182
        %v4210 = vsel %vm1217, %v4180, %v4181
        %v4211 = vsel %vm1217, %v4179, %v4180
        %v4212 = vsel %vm1217, %v4178, %v4179
        %v4213 = vsel %vm1217, %v4177, %v4178
        %v4214 = vsel %vm1217, %v4176, %v4177
        %v4215 = vsel %vm1217, %v4175, %v4176
        %v4216 = vsel %vm1217, %v4174, %v4175
        %v4217 = vsel %vm1217, %v4173, %v4174
        %v4218 = vsel %vm1217, %v4172, %v4173
        %v4219 = vsel %vm1217, %v4171, %v4172
        %v4220 = vsel %vm1217, %v4170, %v4171
        %v4221 = vsel %vm1217, %v4169, %v4170
        %v4222 = vsel %vm1217, %v4168, %v4169
        %v4223 = vsel %vm1217, %v4167, %v4168
        %v4224 = vsel %vm1217, %v4166, %v4167
        %v4225 = vsel %vm1217, %v4165, %v4166
        %v4226 = vsel %vm1217, %v4164, %v4165
        %v4227 = vsel %vm1217, %v4195, %v4164
        %v4228 = vsel %vm1282, %v4226, 0.0
        %v4229 = vsel %vm1283, %v4225, 0.0
        %v4230 = vsel %vm1284, %v4224, 0.0
        %v4231 = vsel %vm1285, %v4223, 0.0
        %v4232 = vsel %vm1286, %v4222, 0.0
        %v4233 = vsel %vm1287, %v4221, 0.0
        %v4234 = vsel %vm1288, %v4220, 0.0
        %v4235 = vsel %vm1289, %v4219, 0.0
        %v4236 = vsel %vm1290, %v4218, 0.0
        %v4237 = vsel %vm1291, %v4217, 0.0
        %v4238 = vsel %vm1292, %v4216, 0.0
        %v4239 = vsel %vm1293, %v4215, 0.0
        %v4240 = vsel %vm1294, %v4214, 0.0
        %v4241 = vsel %vm1295, %v4213, 0.0
        %v4242 = vsel %vm1296, %v4212, 0.0
        %v4243 = vsel %vm1297, %v4211, 0.0
        %v4244 = vsel %vm1298, %v4210, 0.0
        %v4245 = vsel %vm1299, %v4209, 0.0
        %v4246 = vsel %vm1300, %v4208, 0.0
        %v4247 = vsel %vm1301, %v4207, 0.0
        %v4248 = vsel %vm1302, %v4206, 0.0
        %v4249 = vsel %vm1303, %v4205, 0.0
        %v4250 = vsel %vm1304, %v4204, 0.0
        %v4251 = vsel %vm1305, %v4203, 0.0
        %v4252 = vsel %vm1306, %v4202, 0.0
        %v4253 = vsel %vm1307, %v4201, 0.0
        %v4254 = vsel %vm1308, %v4200, 0.0
        %v4255 = vsel %vm1309, %v4199, 0.0
        %v4256 = vsel %vm1310, %v4198, 0.0
        %v4257 = vsel %vm1311, %v4197, 0.0
        %v4258 = vsel %vm1312, %v4196, 0.0
        %v4259 = vsel %vm1313, %v4227, 0.0
        %v4260 = vpack.c.bf16 %v4229, %v4228
        %v4261 = vpack.c.bf16 %v4231, %v4230
        %v4262 = vpack.c.bf16 %v4233, %v4232
        %v4263 = vpack.c.bf16 %v4235, %v4234
        %v4264 = vpack.c.bf16 %v4237, %v4236
        %v4265 = vpack.c.bf16 %v4239, %v4238
        %v4266 = vpack.c.bf16 %v4241, %v4240
        %v4267 = vpack.c.bf16 %v4243, %v4242
        %v4268 = vpack.c.bf16 %v4245, %v4244
        %v4269 = vpack.c.bf16 %v4247, %v4246
        %v4270 = vpack.c.bf16 %v4249, %v4248
        %v4271 = vpack.c.bf16 %v4251, %v4250
        %v4272 = vpack.c.bf16 %v4253, %v4252
        %v4273 = vpack.c.bf16 %v4255, %v4254
        %v4274 = vpack.c.bf16 %v4257, %v4256
        %v4275 = vpack.c.bf16 %v4259, %v4258
        %4276 = vst [vmem:[#allocation2 + $0x28] sm:$0xff] %v4260
        %4277 = vst [vmem:[#allocation2 + $0x40] sm:$0xff] %v4261
        %4278 = vst [vmem:[#allocation2 + $0x58] sm:$0xff] %v4262
        %4279 = vst [vmem:[#allocation2 + $0x70] sm:$0xff] %v4263
        %4280 = vst [vmem:[#allocation2 + $0x88] sm:$0xff] %v4264
        %4281 = vst [vmem:[#allocation2 + $0xa0] sm:$0xff] %v4265
        %4282 = vst [vmem:[#allocation2 + $0xb8] sm:$0xff] %v4266
        %4283 = vst [vmem:[#allocation2 + $0xd0] sm:$0xff] %v4267
        %4284 = vst [vmem:[#allocation2 + $0xe8] sm:$0xff] %v4268
        %4285 = vst [vmem:[#allocation2 + $0x100] sm:$0xff] %v4269
        %4286 = vst [vmem:[#allocation2 + $0x118] sm:$0xff] %v4270
        %4287 = vst [vmem:[#allocation2 + $0x130] sm:$0xff] %v4271
        %4288 = vst [vmem:[#allocation2 + $0x148] sm:$0xff] %v4272
        %4289 = vst [vmem:[#allocation2 + $0x160] sm:$0xff] %v4273
        %4290 = vst [vmem:[#allocation2 + $0x178] sm:$0xff] %v4274
        %4291 = vst [vmem:[#allocation2 + $0x190] sm:$0xff] %v4275
        %v4292 = vld [vmem:[#allocation2] sm:$0xff]
        %v4293 = vld [vmem:[#allocation2 + $0x8] sm:$0xff]
        %v4294 = vld [vmem:[#allocation2 + $0x10] sm:$0xff]
        %v4295 = vld [vmem:[#allocation2 + $0x18] sm:$0xff]
        %v4296 = vld [vmem:[#allocation2 + $0x20] sm:$0xff]
        %v4297 = vld [vmem:[#allocation2 + $0x28] sm:$0xff]
        %v4298 = vld [vmem:[#allocation2 + $0x30] sm:$0xff]
        %v4299 = vld [vmem:[#allocation2 + $0x38] sm:$0xff]
        %v4300 = vld [vmem:[#allocation2 + $0x40] sm:$0xff]
        %v4301 = vld [vmem:[#allocation2 + $0x48] sm:$0xff]
        %v4302 = vld [vmem:[#allocation2 + $0x50] sm:$0xff]
        %v4303 = vld [vmem:[#allocation2 + $0x58] sm:$0xff]
        %v4304 = vld [vmem:[#allocation2 + $0x60] sm:$0xff]
        %v4305 = vld [vmem:[#allocation2 + $0x68] sm:$0xff]
        %v4306 = vld [vmem:[#allocation2 + $0x70] sm:$0xff]
        %v4307 = vld [vmem:[#allocation2 + $0x78] sm:$0xff]
        %v4308 = vld [vmem:[#allocation2 + $0x80] sm:$0xff]
        %v4309 = vld [vmem:[#allocation2 + $0x88] sm:$0xff]
        %v4310 = vld [vmem:[#allocation2 + $0x90] sm:$0xff]
        %v4311 = vld [vmem:[#allocation2 + $0x98] sm:$0xff]
        %v4312 = vld [vmem:[#allocation2 + $0xa0] sm:$0xff]
        %v4313 = vld [vmem:[#allocation2 + $0xa8] sm:$0xff]
        %v4314 = vld [vmem:[#allocation2 + $0xb0] sm:$0xff]
        %v4315 = vld [vmem:[#allocation2 + $0xb8] sm:$0xff]
        %v4316 = vld [vmem:[#allocation9] sm:$0xf]
        %v4317 = vld [vmem:[#allocation9 + $0x4] sm:$0xf]
        %v4318 = vld [vmem:[#allocation9 + $0x8] sm:$0xf]
        %v4319 = vld [vmem:[#allocation9 + $0xc] sm:$0xf]
        %v4320 = vld [vmem:[#allocation9 + $0x10] sm:$0xf]
        %v4321 = vld [vmem:[#allocation9 + $0x14] sm:$0xf]
        %v4322 = vld [vmem:[#allocation9 + $0x18] sm:$0xf]
        %v4323 = vld [vmem:[#allocation9 + $0x1c] sm:$0xf]
        %v4324 = vld [vmem:[#allocation9 + $0x20] sm:$0xf]
        %v4325 = vld [vmem:[#allocation9 + $0x24] sm:$0xf]
        %v4326 = vld [vmem:[#allocation9 + $0x28] sm:$0xf]
        %v4327 = vld [vmem:[#allocation9 + $0x2c] sm:$0xf]
        %v4328 = vld [vmem:[#allocation9 + $0x30] sm:$0xf]
        %v4329 = vld [vmem:[#allocation9 + $0x34] sm:$0xf]
        %v4330 = vld [vmem:[#allocation9 + $0x38] sm:$0xf]
        %v4331 = vld [vmem:[#allocation9 + $0x3c] sm:$0xf]
        %v4332 = vld [vmem:[#allocation9 + $0x40] sm:$0xf]
        %v4333 = vld [vmem:[#allocation9 + $0x44] sm:$0xf]
        %v4334 = vld [vmem:[#allocation9 + $0x48] sm:$0xf]
        %v4335 = vld [vmem:[#allocation9 + $0x4c] sm:$0xf]
        %v4336 = vld [vmem:[#allocation9 + $0x50] sm:$0xf]
        %v4337 = vld [vmem:[#allocation9 + $0x54] sm:$0xf]
        %v4338 = vld [vmem:[#allocation9 + $0x58] sm:$0xf]
        %v4339 = vld [vmem:[#allocation9 + $0x5c] sm:$0xf]
        %v4340 = vld [vmem:[#allocation9 + $0x60] sm:$0xf]
        %v4341 = vld [vmem:[#allocation9 + $0x64] sm:$0xf]
        %v4342 = vld [vmem:[#allocation9 + $0x68] sm:$0xf]
        %v4343 = vld [vmem:[#allocation9 + $0x6c] sm:$0xf]
        %v4344 = vld [vmem:[#allocation9 + $0x70] sm:$0xf]
        %v4345 = vld [vmem:[#allocation9 + $0x74] sm:$0xf]
        %v4346 = vld [vmem:[#allocation9 + $0x78] sm:$0xf]
        %v4347 = vld [vmem:[#allocation9 + $0x7c] sm:$0xf]
        %v4348 = vld [vmem:[#allocation9 + $0x80] sm:$0xf]
        %v4349 = vld [vmem:[#allocation9 + $0x84] sm:$0xf]
        %v4350 = vld [vmem:[#allocation9 + $0x88] sm:$0xf]
        %v4351 = vld [vmem:[#allocation9 + $0x8c] sm:$0xf]
        %v4352 = vld [vmem:[#allocation9 + $0x90] sm:$0xf]
        %v4353 = vld [vmem:[#allocation9 + $0x94] sm:$0xf]
        %v4354 = vld [vmem:[#allocation9 + $0x98] sm:$0xf]
        %v4355 = vld [vmem:[#allocation9 + $0x9c] sm:$0xf]
        %v4356 = vld [vmem:[#allocation9 + $0xa0] sm:$0xf]
        %v4357 = vld [vmem:[#allocation9 + $0xa4] sm:$0xf]
        %v4358 = vld [vmem:[#allocation9 + $0xa8] sm:$0xf]
        %v4359 = vld [vmem:[#allocation9 + $0xac] sm:$0xf]
        %v4360 = vld [vmem:[#allocation9 + $0xb0] sm:$0xf]
        %v4361 = vld [vmem:[#allocation9 + $0xb4] sm:$0xf]
        %v4362 = vld [vmem:[#allocation9 + $0xb8] sm:$0xf]
        %v4363 = vld [vmem:[#allocation9 + $0xbc] sm:$0xf]
        %v4364 = vld [vmem:[#allocation2 + $0xc0] sm:$0xff]
        %v4365 = vld [vmem:[#allocation2 + $0xc8] sm:$0xff]
        %v4366 = vld [vmem:[#allocation2 + $0xd0] sm:$0xff]
        %s4367 = scalar_lea.vmem [#allocation9], 192
        %v4368 = vld [vmem:[%s4367] sm:$0xf]
        %v4369 = vld [vmem:[%s4367 + $0x4] sm:$0xf]
        %v4370 = vld [vmem:[%s4367 + $0x8] sm:$0xf]
        %v4371 = vld [vmem:[%s4367 + $0xc] sm:$0xf]
        %v4372 = vld [vmem:[%s4367 + $0x10] sm:$0xf]
        %v4373 = vld [vmem:[%s4367 + $0x14] sm:$0xf]
        %v4374 = vld [vmem:[%s4367 + $0x18] sm:$0xf]
        %v4375 = vld [vmem:[%s4367 + $0x1c] sm:$0xf]
        %v4376 = vld [vmem:[%s4367 + $0x20] sm:$0xf]
        %v4377 = vld [vmem:[%s4367 + $0x24] sm:$0xf]
        %v4378 = vld [vmem:[%s4367 + $0x28] sm:$0xf]
        %v4379 = vld [vmem:[%s4367 + $0x2c] sm:$0xf]
        %v4380 = vld [vmem:[%s4367 + $0x30] sm:$0xf]
        %v4381 = vld [vmem:[%s4367 + $0x34] sm:$0xf]
        %v4382 = vld [vmem:[%s4367 + $0x38] sm:$0xf]
        %v4383 = vld [vmem:[%s4367 + $0x3c] sm:$0xf]
        %v4384 = vld [vmem:[%s4367 + $0x40] sm:$0xf]
        %v4385 = vld [vmem:[%s4367 + $0x44] sm:$0xf]
        %v4386 = vld [vmem:[%s4367 + $0x48] sm:$0xf]
        %v4387 = vld [vmem:[%s4367 + $0x4c] sm:$0xf]
        %v4388 = vld [vmem:[%s4367 + $0x50] sm:$0xf]
        %v4389 = vld [vmem:[%s4367 + $0x54] sm:$0xf]
        %v4390 = vld [vmem:[%s4367 + $0x58] sm:$0xf]
        %v4391 = vld [vmem:[%s4367 + $0x5c] sm:$0xf]
        %v4392 = vld [vmem:[%s4367 + $0x60] sm:$0xf]
        %v4393 = vld [vmem:[%s4367 + $0x64] sm:$0xf]
        %v4394 = vld [vmem:[%s4367 + $0x68] sm:$0xf]
        %v4395 = vld [vmem:[%s4367 + $0x6c] sm:$0xf]
        %v4396 = vld [vmem:[%s4367 + $0x70] sm:$0xf]
        %v4397 = vld [vmem:[%s4367 + $0x74] sm:$0xf]
        %v4398 = vld [vmem:[%s4367 + $0x78] sm:$0xf]
        %v4399 = vld [vmem:[%s4367 + $0x7c] sm:$0xf]
        %v4400 = vld [vmem:[%s4367 + $0x80] sm:$0xf]
        %v4401 = vld [vmem:[%s4367 + $0x84] sm:$0xf]
        %v4402 = vld [vmem:[%s4367 + $0x88] sm:$0xf]
        %v4403 = vld [vmem:[%s4367 + $0x8c] sm:$0xf]
        %v4404 = vld [vmem:[%s4367 + $0x90] sm:$0xf]
        %v4405 = vld [vmem:[%s4367 + $0x94] sm:$0xf]
        %v4406 = vld [vmem:[%s4367 + $0x98] sm:$0xf]
        %v4407 = vld [vmem:[%s4367 + $0x9c] sm:$0xf]
        %v4408 = vld [vmem:[%s4367 + $0xa0] sm:$0xf]
        %v4409 = vld [vmem:[%s4367 + $0xa4] sm:$0xf]
        %v4410 = vld [vmem:[%s4367 + $0xa8] sm:$0xf]
        %v4411 = vld [vmem:[%s4367 + $0xac] sm:$0xf]
        %v4412 = vld [vmem:[%s4367 + $0xb0] sm:$0xf]
        %v4413 = vld [vmem:[%s4367 + $0xb4] sm:$0xf]
        %v4414 = vld [vmem:[%s4367 + $0xb8] sm:$0xf]
        %v4415 = vld [vmem:[%s4367 + $0xbc] sm:$0xf]
        %v4464 = vunpack.c.l.b16 %v4368
        %v4465 = vunpack.c.l.b16 %v4369
        %v4466 = vunpack.c.l.b16 %v4370
        %v4467 = vunpack.c.l.b16 %v4371
        %v4468 = vunpack.c.l.b16 %v4372
        %v4469 = vunpack.c.l.b16 %v4373
        %v4470 = vunpack.c.l.b16 %v4374
        %v4471 = vunpack.c.l.b16 %v4375
        %v4472 = vunpack.c.l.b16 %v4376
        %v4473 = vunpack.c.l.b16 %v4377
        %v4474 = vunpack.c.l.b16 %v4378
        %v4475 = vunpack.c.l.b16 %v4379
        %v4476 = vunpack.c.l.b16 %v4380
        %v4477 = vunpack.c.l.b16 %v4381
        %v4478 = vunpack.c.l.b16 %v4382
        %v4479 = vunpack.c.l.b16 %v4383
        %v4480 = vunpack.c.l.b16 %v4384
        %v4481 = vunpack.c.l.b16 %v4385
        %v4482 = vunpack.c.l.b16 %v4386
        %v4483 = vunpack.c.l.b16 %v4387
        %v4484 = vunpack.c.l.b16 %v4388
        %v4485 = vunpack.c.l.b16 %v4389
        %v4486 = vunpack.c.l.b16 %v4390
        %v4487 = vunpack.c.l.b16 %v4391
        %v4488 = vunpack.c.l.b16 %v4392
        %v4489 = vunpack.c.l.b16 %v4393
        %v4490 = vunpack.c.l.b16 %v4394
        %v4491 = vunpack.c.l.b16 %v4395
        %v4492 = vunpack.c.l.b16 %v4396
        %v4493 = vunpack.c.l.b16 %v4397
        %v4494 = vunpack.c.l.b16 %v4398
        %v4495 = vunpack.c.l.b16 %v4399
        %v4496 = vunpack.c.l.b16 %v4400
        %v4497 = vunpack.c.l.b16 %v4401
        %v4498 = vunpack.c.l.b16 %v4402
        %v4499 = vunpack.c.l.b16 %v4403
        %v4500 = vunpack.c.l.b16 %v4404
        %v4501 = vunpack.c.l.b16 %v4405
        %v4502 = vunpack.c.l.b16 %v4406
        %v4503 = vunpack.c.l.b16 %v4407
        %v4504 = vunpack.c.l.b16 %v4408
        %v4505 = vunpack.c.l.b16 %v4409
        %v4506 = vunpack.c.l.b16 %v4410
        %v4507 = vunpack.c.l.b16 %v4411
        %v4508 = vunpack.c.l.b16 %v4412
        %v4509 = vunpack.c.l.b16 %v4413
        %v4510 = vunpack.c.l.b16 %v4414
        %v4511 = vunpack.c.l.b16 %v4415
        %v4512 = vpack.c.b16 %v4465, %v4464
        %v4513 = vpack.c.b16 %v4467, %v4466
        %v4514 = vpack.c.b16 %v4469, %v4468
        %v4515 = vpack.c.b16 %v4471, %v4470
        %v4516 = vpack.c.b16 %v4473, %v4472
        %v4517 = vpack.c.b16 %v4475, %v4474
        %v4518 = vpack.c.b16 %v4477, %v4476
        %v4519 = vpack.c.b16 %v4479, %v4478
        %v4520 = vpack.c.b16 %v4481, %v4480
        %v4521 = vpack.c.b16 %v4483, %v4482
        %v4522 = vpack.c.b16 %v4485, %v4484
        %v4523 = vpack.c.b16 %v4487, %v4486
        %v4524 = vpack.c.b16 %v4489, %v4488
        %v4525 = vpack.c.b16 %v4491, %v4490
        %v4526 = vpack.c.b16 %v4493, %v4492
        %v4527 = vpack.c.b16 %v4495, %v4494
        %v4528 = vpack.c.b16 %v4497, %v4496
        %v4529 = vpack.c.b16 %v4499, %v4498
        %v4530 = vpack.c.b16 %v4501, %v4500
        %v4531 = vpack.c.b16 %v4503, %v4502
        %v4532 = vpack.c.b16 %v4505, %v4504
        %v4533 = vpack.c.b16 %v4507, %v4506
        %v4534 = vpack.c.b16 %v4509, %v4508
        %v4535 = vpack.c.b16 %v4511, %v4510
        %4560 = vmatprep.subr.bf16.mxu0 0
        %4561 = vmatpush1.bf16.msra.mxu0 %v4512
        %4562 = vmatprep.subr.bf16.mxu0 0
        %4563 = vmatpush1.bf16.msra.mxu0 %v4513
        %4564 = vmatprep.subr.bf16.mxu0 0
        %4565 = vmatpush1.bf16.msra.mxu0 %v4514
        %4566 = vmatprep.subr.bf16.mxu0 0
        %4567 = vmatpush1.bf16.msra.mxu0 %v4515
        %4568 = vmatprep.subr.bf16.mxu0 0
        %4569 = vmatpush1.bf16.msra.mxu0 %v4516
        %4570 = vmatprep.subr.bf16.mxu0 0
        %4571 = vmatpush1.bf16.msra.mxu0 %v4517
        %4572 = vmatprep.subr.bf16.mxu0 0
        %4573 = vmatpush1.bf16.msra.mxu0 %v4518
        %4574 = vmatprep.subr.bf16.mxu0 0
        %4575 = vmatpush1.bf16.msra.mxu0 %v4519
        %4576 = vmatprep.subr.bf16.mxu0 0
        %4577 = vmatpush1.bf16.msra.mxu0 %v4520
        %4578 = vmatprep.subr.bf16.mxu0 0
        %4579 = vmatpush1.bf16.msra.mxu0 %v4521
        %4580 = vmatprep.subr.bf16.mxu0 0
        %4581 = vmatpush1.bf16.msra.mxu0 %v4522
        %4582 = vmatprep.subr.bf16.mxu0 0
        %4583 = vmatpush1.bf16.msra.mxu0 %v4523
        %4584 = vmatprep.subr.bf16.mxu0 0
        %4585 = vmatpush1.bf16.msra.mxu0 %v4524
        %4586 = vmatprep.subr.bf16.mxu0 0
        %4587 = vmatpush1.bf16.msra.mxu0 %v4525
        %4588 = vmatprep.subr.bf16.mxu0 0
        %4589 = vmatpush1.bf16.msra.mxu0 %v4526
        %4590 = vmatprep.subr.bf16.mxu0 0
        %4591 = vmatpush1.bf16.msra.mxu0 %v4527
        %4592 = vmatprep.mubr.bf16.mxu0 %v4296
        %4593 = vmatmul.mubr.bf16.gmra.mrb[0].mxu0 %v4295
        %v4594 = vpop.f32.mrb[0].mxu0
        %v4595 = vadd.f32 0.0, %v4594
        %v4596 = vpop.f32.mrb[0].mxu0
        %v4597 = vpop.f32.mrb[0].mxu0
        %v4598 = vadd.f32 0.0, %v4597
        %v4599 = vpop.f32.mrb[0].mxu0
        %4600 = vmatprep.mubr.bf16.mxu0 %v4299
        %4601 = vmatmul.mubr.bf16.gmra.mrb[0].mxu0 %v4298
        %v4602 = vpop.f32.mrb[0].mxu0
        %v4603 = vadd.f32 0.0, %v4602
        %v4604 = vpop.f32.mrb[0].mxu0
        %v4605 = vpop.f32.mrb[0].mxu0
        %v4606 = vadd.f32 0.0, %v4605
        %v4607 = vpop.f32.mrb[0].mxu0
        %4608 = vmatprep.mubr.bf16.mxu0 %v4302
        %4609 = vmatmul.mubr.bf16.gmra.mrb[0].mxu0 %v4301
        %v4610 = vpop.f32.mrb[0].mxu0
        %v4611 = vadd.f32 0.0, %v4610
        %v4612 = vpop.f32.mrb[0].mxu0
        %v4613 = vpop.f32.mrb[0].mxu0
        %v4614 = vadd.f32 0.0, %v4613
        %v4615 = vpop.f32.mrb[0].mxu0
        %4616 = vmatprep.mubr.bf16.mxu0 %v4305
        %4617 = vmatmul.mubr.bf16.gmra.mrb[0].mxu0 %v4304
        %v4618 = vpop.f32.mrb[0].mxu0
        %v4619 = vadd.f32 0.0, %v4618
        %v4620 = vpop.f32.mrb[0].mxu0
        %v4621 = vpop.f32.mrb[0].mxu0
        %v4622 = vadd.f32 0.0, %v4621
        %v4623 = vpop.f32.mrb[0].mxu0
        %4624 = vmatprep.mubr.bf16.mxu0 %v4308
        %4625 = vmatmul.mubr.bf16.gmra.mrb[0].mxu0 %v4307
        %v4626 = vpop.f32.mrb[0].mxu0
        %v4627 = vadd.f32 0.0, %v4626
        %v4628 = vpop.f32.mrb[0].mxu0
        %v4629 = vpop.f32.mrb[0].mxu0
        %v4630 = vadd.f32 0.0, %v4629
        %v4631 = vpop.f32.mrb[0].mxu0
        %4632 = vmatprep.mubr.bf16.mxu0 %v4311
        %4633 = vmatmul.mubr.bf16.gmra.mrb[0].mxu0 %v4310
        %v4634 = vpop.f32.mrb[0].mxu0
        %v4635 = vadd.f32 0.0, %v4634
        %v4636 = vpop.f32.mrb[0].mxu0
        %v4637 = vpop.f32.mrb[0].mxu0
        %v4638 = vadd.f32 0.0, %v4637
        %v4639 = vpop.f32.mrb[0].mxu0
        %4640 = vmatprep.mubr.bf16.mxu0 %v4314
        %4641 = vmatmul.mubr.bf16.gmra.mrb[0].mxu0 %v4313
        %v4642 = vpop.f32.mrb[0].mxu0
        %v4643 = vadd.f32 0.0, %v4642
        %v4644 = vpop.f32.mrb[0].mxu0
        %v4645 = vpop.f32.mrb[0].mxu0
        %v4646 = vadd.f32 0.0, %v4645
        %v4647 = vpop.f32.mrb[0].mxu0
        %4648 = vmatprep.mubr.bf16.mxu0 %v4365
        %4649 = vmatmul.mubr.bf16.gmra.mrb[0].mxu0 %v4364
        %v4650 = vpop.f32.mrb[0].mxu0
        %v4651 = vadd.f32 0.0, %v4650
        %v4652 = vpop.f32.mrb[0].mxu0
        %v4653 = vpop.f32.mrb[0].mxu0
        %v4654 = vadd.f32 0.0, %v4653
        %v4655 = vpop.f32.mrb[0].mxu0
        %4656 = vdwg.mxu0
        %4657 = vmatprep.subr.bf16.mxu0 0
        %4658 = vmatpush1.bf16.msra.mxu0 %v4528
        %4659 = vmatprep.subr.bf16.mxu0 0
        %4660 = vmatpush1.bf16.msra.mxu0 %v4529
        %4661 = vmatprep.subr.bf16.mxu0 0
        %4662 = vmatpush1.bf16.msra.mxu0 %v4530
        %4663 = vmatprep.subr.bf16.mxu0 0
        %4664 = vmatpush1.bf16.msra.mxu0 %v4531
        %4665 = vmatprep.subr.bf16.mxu0 0
        %4666 = vmatpush1.bf16.msra.mxu0 %v4532
        %4667 = vmatprep.subr.bf16.mxu0 0
        %4668 = vmatpush1.bf16.msra.mxu0 %v4533
        %4669 = vmatprep.subr.bf16.mxu0 0
        %4670 = vmatpush1.bf16.msra.mxu0 %v4534
        %4671 = vmatprep.subr.bf16.mxu0 0
        %4672 = vmatpush1.bf16.msra.mxu0 %v4535
        %4673 = vmatprep.subr.bf16.mxu0 0
        %4674 = vmatpush1.bf16.msra.mxu0 0
        %4675 = vmatprep.subr.bf16.mxu0 0
        %4676 = vmatpush1.bf16.msra.mxu0 0
        %4677 = vmatprep.subr.bf16.mxu0 0
        %4678 = vmatpush1.bf16.msra.mxu0 0
        %4679 = vmatprep.subr.bf16.mxu0 0
        %4680 = vmatpush1.bf16.msra.mxu0 0
        %4681 = vmatprep.subr.bf16.mxu0 0
        %4682 = vmatpush1.bf16.msra.mxu0 0
        %4683 = vmatprep.subr.bf16.mxu0 0
        %4684 = vmatpush1.bf16.msra.mxu0 0
        %4685 = vmatprep.subr.bf16.mxu0 0
        %4686 = vmatpush1.bf16.msra.mxu0 0
        %4687 = vmatprep.subr.bf16.mxu0 0
        %4688 = vmatpush1.bf16.msra.mxu0 0
        %4689 = vmatprep.mubr.bf16.mxu0 0
        %4690 = vmatmul.mubr.bf16.gmra.mrb[0].mxu0 %v4297
        %v4691 = vpop.f32.mrb[0].mxu0
        %v4692 = vadd.f32 %v4595, %v4691
        %v4693 = vpop.f32.mrb[0].mxu0
        %v4694 = vpop.f32.mrb[0].mxu0
        %v4695 = vadd.f32 %v4598, %v4694
        %v4696 = vpop.f32.mrb[0].mxu0
        %4697 = vmatprep.mubr.bf16.mxu0 0
        %4698 = vmatmul.mubr.bf16.gmra.mrb[0].mxu0 %v4300
        %v4699 = vpop.f32.mrb[0].mxu0
        %v4700 = vadd.f32 %v4603, %v4699
        %v4701 = vpop.f32.mrb[0].mxu0
        %v4702 = vpop.f32.mrb[0].mxu0
        %v4703 = vadd.f32 %v4606, %v4702
        %v4704 = vpop.f32.mrb[0].mxu0
        %4705 = vmatprep.mubr.bf16.mxu0 0
        %4706 = vmatmul.mubr.bf16.gmra.mrb[0].mxu0 %v4303
        %v4707 = vpop.f32.mrb[0].mxu0
        %v4708 = vadd.f32 %v4611, %v4707
        %v4709 = vpop.f32.mrb[0].mxu0
        %v4710 = vpop.f32.mrb[0].mxu0
        %v4711 = vadd.f32 %v4614, %v4710
        %v4712 = vpop.f32.mrb[0].mxu0
        %4713 = vmatprep.mubr.bf16.mxu0 0
        %4714 = vmatmul.mubr.bf16.gmra.mrb[0].mxu0 %v4306
        %v4715 = vpop.f32.mrb[0].mxu0
        %v4716 = vadd.f32 %v4619, %v4715
        %v4717 = vpop.f32.mrb[0].mxu0
        %v4718 = vpop.f32.mrb[0].mxu0
        %v4719 = vadd.f32 %v4622, %v4718
        %v4720 = vpop.f32.mrb[0].mxu0
        %4721 = vmatprep.mubr.bf16.mxu0 0
        %4722 = vmatmul.mubr.bf16.gmra.mrb[0].mxu0 %v4309
        %v4723 = vpop.f32.mrb[0].mxu0
        %v4724 = vadd.f32 %v4627, %v4723
        %v4725 = vpop.f32.mrb[0].mxu0
        %v4726 = vpop.f32.mrb[0].mxu0
        %v4727 = vadd.f32 %v4630, %v4726
        %v4728 = vpop.f32.mrb[0].mxu0
        %4729 = vmatprep.mubr.bf16.mxu0 0
        %4730 = vmatmul.mubr.bf16.gmra.mrb[0].mxu0 %v4312
        %v4731 = vpop.f32.mrb[0].mxu0
        %v4732 = vadd.f32 %v4635, %v4731
        %v4733 = vpop.f32.mrb[0].mxu0
        %v4734 = vpop.f32.mrb[0].mxu0
        %v4735 = vadd.f32 %v4638, %v4734
        %v4736 = vpop.f32.mrb[0].mxu0
        %4737 = vmatprep.mubr.bf16.mxu0 0
        %4738 = vmatmul.mubr.bf16.gmra.mrb[0].mxu0 %v4315
        %v4739 = vpop.f32.mrb[0].mxu0
        %v4740 = vadd.f32 %v4643, %v4739
        %v4741 = vpop.f32.mrb[0].mxu0
        %v4742 = vpop.f32.mrb[0].mxu0
        %v4743 = vadd.f32 %v4646, %v4742
        %v4744 = vpop.f32.mrb[0].mxu0
        %4745 = vmatprep.mubr.bf16.mxu0 0
        %4746 = vmatmul.mubr.bf16.gmra.mrb[0].mxu0 %v4366
        %v4747 = vpop.f32.mrb[0].mxu0
        %v4748 = vadd.f32 %v4651, %v4747
        %v4749 = vpop.f32.mrb[0].mxu0
        %v4750 = vpop.f32.mrb[0].mxu0
        %v4751 = vadd.f32 %v4654, %v4750
        %v4752 = vpop.f32.mrb[0].mxu0
        %4753 = vdwg.mxu0
        %v4802 = vunpack.c.l.b16 %v4316
        %v4803 = vunpack.c.l.b16 %v4317
        %v4804 = vunpack.c.l.b16 %v4318
        %v4805 = vunpack.c.l.b16 %v4319
        %v4806 = vunpack.c.l.b16 %v4320
        %v4807 = vunpack.c.l.b16 %v4321
        %v4808 = vunpack.c.l.b16 %v4322
        %v4809 = vunpack.c.l.b16 %v4323
        %v4810 = vunpack.c.l.b16 %v4324
        %v4811 = vunpack.c.l.b16 %v4325
        %v4812 = vunpack.c.l.b16 %v4326
        %v4813 = vunpack.c.l.b16 %v4327
        %v4814 = vunpack.c.l.b16 %v4328
        %v4815 = vunpack.c.l.b16 %v4329
        %v4816 = vunpack.c.l.b16 %v4330
        %v4817 = vunpack.c.l.b16 %v4331
        %v4818 = vunpack.c.l.b16 %v4332
        %v4819 = vunpack.c.l.b16 %v4333
        %v4820 = vunpack.c.l.b16 %v4334
        %v4821 = vunpack.c.l.b16 %v4335
        %v4822 = vunpack.c.l.b16 %v4336
        %v4823 = vunpack.c.l.b16 %v4337
        %v4824 = vunpack.c.l.b16 %v4338
        %v4825 = vunpack.c.l.b16 %v4339
        %v4826 = vunpack.c.l.b16 %v4340
        %v4827 = vunpack.c.l.b16 %v4341
        %v4828 = vunpack.c.l.b16 %v4342
        %v4829 = vunpack.c.l.b16 %v4343
        %v4830 = vunpack.c.l.b16 %v4344
        %v4831 = vunpack.c.l.b16 %v4345
        %v4832 = vunpack.c.l.b16 %v4346
        %v4833 = vunpack.c.l.b16 %v4347
        %v4834 = vunpack.c.l.b16 %v4348
        %v4835 = vunpack.c.l.b16 %v4349
        %v4836 = vunpack.c.l.b16 %v4350
        %v4837 = vunpack.c.l.b16 %v4351
        %v4838 = vunpack.c.l.b16 %v4352
        %v4839 = vunpack.c.l.b16 %v4353
        %v4840 = vunpack.c.l.b16 %v4354
        %v4841 = vunpack.c.l.b16 %v4355
        %v4842 = vunpack.c.l.b16 %v4356
        %v4843 = vunpack.c.l.b16 %v4357
        %v4844 = vunpack.c.l.b16 %v4358
        %v4845 = vunpack.c.l.b16 %v4359
        %v4846 = vunpack.c.l.b16 %v4360
        %v4847 = vunpack.c.l.b16 %v4361
        %v4848 = vunpack.c.l.b16 %v4362
        %v4849 = vunpack.c.l.b16 %v4363
        %v4850 = vpack.c.b16 %v4803, %v4802
        %v4851 = vpack.c.b16 %v4805, %v4804
        %v4852 = vpack.c.b16 %v4807, %v4806
        %v4853 = vpack.c.b16 %v4809, %v4808
        %v4854 = vpack.c.b16 %v4811, %v4810
        %v4855 = vpack.c.b16 %v4813, %v4812
        %v4856 = vpack.c.b16 %v4815, %v4814
        %v4857 = vpack.c.b16 %v4817, %v4816
        %v4858 = vpack.c.b16 %v4819, %v4818
        %v4859 = vpack.c.b16 %v4821, %v4820
        %v4860 = vpack.c.b16 %v4823, %v4822
        %v4861 = vpack.c.b16 %v4825, %v4824
        %v4862 = vpack.c.b16 %v4827, %v4826
        %v4863 = vpack.c.b16 %v4829, %v4828
        %v4864 = vpack.c.b16 %v4831, %v4830
        %v4865 = vpack.c.b16 %v4833, %v4832
        %v4866 = vpack.c.b16 %v4835, %v4834
        %v4867 = vpack.c.b16 %v4837, %v4836
        %v4868 = vpack.c.b16 %v4839, %v4838
        %v4869 = vpack.c.b16 %v4841, %v4840
        %v4870 = vpack.c.b16 %v4843, %v4842
        %v4871 = vpack.c.b16 %v4845, %v4844
        %v4872 = vpack.c.b16 %v4847, %v4846
        %v4873 = vpack.c.b16 %v4849, %v4848
        %4898 = vmatprep.subr.bf16.mxu0 0
        %4899 = vmatpush1.bf16.msra.mxu0 %v4850
        %4900 = vmatprep.subr.bf16.mxu0 0
        %4901 = vmatpush1.bf16.msra.mxu0 %v4851
        %4902 = vmatprep.subr.bf16.mxu0 0
        %4903 = vmatpush1.bf16.msra.mxu0 %v4852
        %4904 = vmatprep.subr.bf16.mxu0 0
        %4905 = vmatpush1.bf16.msra.mxu0 %v4853
        %4906 = vmatprep.subr.bf16.mxu0 0
        %4907 = vmatpush1.bf16.msra.mxu0 %v4854
        %4908 = vmatprep.subr.bf16.mxu0 0
        %4909 = vmatpush1.bf16.msra.mxu0 %v4855
        %4910 = vmatprep.subr.bf16.mxu0 0
        %4911 = vmatpush1.bf16.msra.mxu0 %v4856
        %4912 = vmatprep.subr.bf16.mxu0 0
        %4913 = vmatpush1.bf16.msra.mxu0 %v4857
        %4914 = vmatprep.subr.bf16.mxu0 0
        %4915 = vmatpush1.bf16.msra.mxu0 %v4858
        %4916 = vmatprep.subr.bf16.mxu0 0
        %4917 = vmatpush1.bf16.msra.mxu0 %v4859
        %4918 = vmatprep.subr.bf16.mxu0 0
        %4919 = vmatpush1.bf16.msra.mxu0 %v4860
        %4920 = vmatprep.subr.bf16.mxu0 0
        %4921 = vmatpush1.bf16.msra.mxu0 %v4861
        %4922 = vmatprep.subr.bf16.mxu0 0
        %4923 = vmatpush1.bf16.msra.mxu0 %v4862
        %4924 = vmatprep.subr.bf16.mxu0 0
        %4925 = vmatpush1.bf16.msra.mxu0 %v4863
        %4926 = vmatprep.subr.bf16.mxu0 0
        %4927 = vmatpush1.bf16.msra.mxu0 %v4864
        %4928 = vmatprep.subr.bf16.mxu0 0
        %4929 = vmatpush1.bf16.msra.mxu0 %v4865
        %4930 = vmatprep.mubr.bf16.mxu0 %v4293
        %4931 = vmatmul.mubr.bf16.gmra.mrb[0].mxu0 %v4292
        %v4932 = vpop.f32.mrb[0].mxu0
        %v4933 = vadd.f32 %v4692, %v4932
        %v4934 = vpop.f32.mrb[0].mxu0
        %v4935 = vpop.f32.mrb[0].mxu0
        %v4936 = vadd.f32 %v4695, %v4935
        %v4937 = vpop.f32.mrb[0].mxu0
        %4938 = vmatprep.mubr.bf16.mxu0 %v4296
        %4939 = vmatmul.mubr.bf16.gmra.mrb[0].mxu0 %v4295
        %v4940 = vpop.f32.mrb[0].mxu0
        %v4941 = vadd.f32 %v4700, %v4940
        %v4942 = vpop.f32.mrb[0].mxu0
        %v4943 = vpop.f32.mrb[0].mxu0
        %v4944 = vadd.f32 %v4703, %v4943
        %v4945 = vpop.f32.mrb[0].mxu0
        %4946 = vmatprep.mubr.bf16.mxu0 %v4299
        %4947 = vmatmul.mubr.bf16.gmra.mrb[0].mxu0 %v4298
        %v4948 = vpop.f32.mrb[0].mxu0
        %v4949 = vadd.f32 %v4708, %v4948
        %v4950 = vpop.f32.mrb[0].mxu0
        %v4951 = vpop.f32.mrb[0].mxu0
        %v4952 = vadd.f32 %v4711, %v4951
        %v4953 = vpop.f32.mrb[0].mxu0
        %4954 = vmatprep.mubr.bf16.mxu0 %v4302
        %4955 = vmatmul.mubr.bf16.gmra.mrb[0].mxu0 %v4301
        %v4956 = vpop.f32.mrb[0].mxu0
        %v4957 = vadd.f32 %v4716, %v4956
        %v4958 = vpop.f32.mrb[0].mxu0
        %v4959 = vpop.f32.mrb[0].mxu0
        %v4960 = vadd.f32 %v4719, %v4959
        %v4961 = vpop.f32.mrb[0].mxu0
        %4962 = vmatprep.mubr.bf16.mxu0 %v4305
        %4963 = vmatmul.mubr.bf16.gmra.mrb[0].mxu0 %v4304
        %v4964 = vpop.f32.mrb[0].mxu0
        %v4965 = vadd.f32 %v4724, %v4964
        %v4966 = vpop.f32.mrb[0].mxu0
        %v4967 = vpop.f32.mrb[0].mxu0
        %v4968 = vadd.f32 %v4727, %v4967
        %v4969 = vpop.f32.mrb[0].mxu0
        %4970 = vmatprep.mubr.bf16.mxu0 %v4308
        %4971 = vmatmul.mubr.bf16.gmra.mrb[0].mxu0 %v4307
        %v4972 = vpop.f32.mrb[0].mxu0
        %v4973 = vadd.f32 %v4732, %v4972
        %v4974 = vpop.f32.mrb[0].mxu0
        %v4975 = vpop.f32.mrb[0].mxu0
        %v4976 = vadd.f32 %v4735, %v4975
        %v4977 = vpop.f32.mrb[0].mxu0
        %4978 = vmatprep.mubr.bf16.mxu0 %v4311
        %4979 = vmatmul.mubr.bf16.gmra.mrb[0].mxu0 %v4310
        %v4980 = vpop.f32.mrb[0].mxu0
        %v4981 = vadd.f32 %v4740, %v4980
        %v4982 = vpop.f32.mrb[0].mxu0
        %v4983 = vpop.f32.mrb[0].mxu0
        %v4984 = vadd.f32 %v4743, %v4983
        %v4985 = vpop.f32.mrb[0].mxu0
        %4986 = vmatprep.mubr.bf16.mxu0 %v4314
        %4987 = vmatmul.mubr.bf16.gmra.mrb[0].mxu0 %v4313
        %v4988 = vpop.f32.mrb[0].mxu0
        %v4989 = vadd.f32 %v4748, %v4988
        %v4990 = vpop.f32.mrb[0].mxu0
        %v4991 = vpop.f32.mrb[0].mxu0
        %v4992 = vadd.f32 %v4751, %v4991
        %v4993 = vpop.f32.mrb[0].mxu0
        %4994 = vdwg.mxu0
        %4995 = vmatprep.subr.bf16.mxu0 0
        %4996 = vmatpush1.bf16.msra.mxu0 %v4866
        %4997 = vmatprep.subr.bf16.mxu0 0
        %4998 = vmatpush1.bf16.msra.mxu0 %v4867
        %4999 = vmatprep.subr.bf16.mxu0 0
        %5000 = vmatpush1.bf16.msra.mxu0 %v4868
        %5001 = vmatprep.subr.bf16.mxu0 0
        %5002 = vmatpush1.bf16.msra.mxu0 %v4869
        %5003 = vmatprep.subr.bf16.mxu0 0
        %5004 = vmatpush1.bf16.msra.mxu0 %v4870
        %5005 = vmatprep.subr.bf16.mxu0 0
        %5006 = vmatpush1.bf16.msra.mxu0 %v4871
        %5007 = vmatprep.subr.bf16.mxu0 0
        %5008 = vmatpush1.bf16.msra.mxu0 %v4872
        %5009 = vmatprep.subr.bf16.mxu0 0
        %5010 = vmatpush1.bf16.msra.mxu0 %v4873
        %5011 = vmatprep.subr.bf16.mxu0 0
        %5012 = vmatpush1.bf16.msra.mxu0 0
        %5013 = vmatprep.subr.bf16.mxu0 0
        %5014 = vmatpush1.bf16.msra.mxu0 0
        %5015 = vmatprep.subr.bf16.mxu0 0
        %5016 = vmatpush1.bf16.msra.mxu0 0
        %5017 = vmatprep.subr.bf16.mxu0 0
        %5018 = vmatpush1.bf16.msra.mxu0 0
        %5019 = vmatprep.subr.bf16.mxu0 0
        %5020 = vmatpush1.bf16.msra.mxu0 0
        %5021 = vmatprep.subr.bf16.mxu0 0
        %5022 = vmatpush1.bf16.msra.mxu0 0
        %5023 = vmatprep.subr.bf16.mxu0 0
        %5024 = vmatpush1.bf16.msra.mxu0 0
        %5025 = vmatprep.subr.bf16.mxu0 0
        %5026 = vmatpush1.bf16.msra.mxu0 0
        %5027 = vmatprep.mubr.bf16.mxu0 0
        %5028 = vmatmul.mubr.bf16.gmra.mrb[0].mxu0 %v4294
        %v5029 = vpop.f32.mrb[0].mxu0
        %v5030 = vadd.f32 %v4933, %v5029
        %v5031 = vpop.f32.mrb[0].mxu0
        %v5032 = vpop.f32.mrb[0].mxu0
        %v5033 = vadd.f32 %v4936, %v5032
        %v5034 = vpop.f32.mrb[0].mxu0
        %5035 = vmatprep.mubr.bf16.mxu0 0
        %5036 = vmatmul.mubr.bf16.gmra.mrb[0].mxu0 %v4297
        %v5037 = vpop.f32.mrb[0].mxu0
        %v5038 = vadd.f32 %v4941, %v5037
        %v5039 = vpop.f32.mrb[0].mxu0
        %v5040 = vpop.f32.mrb[0].mxu0
        %v5041 = vadd.f32 %v4944, %v5040
        %v5042 = vpop.f32.mrb[0].mxu0
        %5043 = vmatprep.mubr.bf16.mxu0 0
        %5044 = vmatmul.mubr.bf16.gmra.mrb[0].mxu0 %v4300
        %v5045 = vpop.f32.mrb[0].mxu0
        %v5046 = vadd.f32 %v4949, %v5045
        %v5047 = vpop.f32.mrb[0].mxu0
        %v5048 = vpop.f32.mrb[0].mxu0
        %v5049 = vadd.f32 %v4952, %v5048
        %v5050 = vpop.f32.mrb[0].mxu0
        %5051 = vmatprep.mubr.bf16.mxu0 0
        %5052 = vmatmul.mubr.bf16.gmra.mrb[0].mxu0 %v4303
        %v5053 = vpop.f32.mrb[0].mxu0
        %v5054 = vadd.f32 %v4957, %v5053
        %v5055 = vpop.f32.mrb[0].mxu0
        %v5056 = vpop.f32.mrb[0].mxu0
        %v5057 = vadd.f32 %v4960, %v5056
        %v5058 = vpop.f32.mrb[0].mxu0
        %5059 = vmatprep.mubr.bf16.mxu0 0
        %5060 = vmatmul.mubr.bf16.gmra.mrb[0].mxu0 %v4306
        %v5061 = vpop.f32.mrb[0].mxu0
        %v5062 = vadd.f32 %v4965, %v5061
        %v5063 = vpop.f32.mrb[0].mxu0
        %v5064 = vpop.f32.mrb[0].mxu0
        %v5065 = vadd.f32 %v4968, %v5064
        %v5066 = vpop.f32.mrb[0].mxu0
        %5067 = vmatprep.mubr.bf16.mxu0 0
        %5068 = vmatmul.mubr.bf16.gmra.mrb[0].mxu0 %v4309
        %v5069 = vpop.f32.mrb[0].mxu0
        %v5070 = vadd.f32 %v4973, %v5069
        %v5071 = vpop.f32.mrb[0].mxu0
        %v5072 = vpop.f32.mrb[0].mxu0
        %v5073 = vadd.f32 %v4976, %v5072
        %v5074 = vpop.f32.mrb[0].mxu0
        %5075 = vmatprep.mubr.bf16.mxu0 0
        %5076 = vmatmul.mubr.bf16.gmra.mrb[0].mxu0 %v4312
        %v5077 = vpop.f32.mrb[0].mxu0
        %v5078 = vadd.f32 %v4981, %v5077
        %v5079 = vpop.f32.mrb[0].mxu0
        %v5080 = vpop.f32.mrb[0].mxu0
        %v5081 = vadd.f32 %v4984, %v5080
        %v5082 = vpop.f32.mrb[0].mxu0
        %5083 = vmatprep.mubr.bf16.mxu0 0
        %5084 = vmatmul.mubr.bf16.gmra.mrb[0].mxu0 %v4315
        %v5085 = vpop.f32.mrb[0].mxu0
        %v5086 = vadd.f32 %v4989, %v5085
        %v5087 = vpop.f32.mrb[0].mxu0
        %v5088 = vpop.f32.mrb[0].mxu0
        %v5089 = vadd.f32 %v4992, %v5088
        %v5090 = vpop.f32.mrb[0].mxu0
        %5091 = vdwg.mxu0
        %v5092 = vld [vmem:[#allocation2 + $0x30] sm:$0xff]
        %v5093 = vld [vmem:[#allocation2 + $0x38] sm:$0xff]
        %v5094 = vld [vmem:[#allocation2 + $0x40] sm:$0xff]
        %v5095 = vld [vmem:[#allocation2 + $0x48] sm:$0xff]
        %v5096 = vld [vmem:[#allocation2 + $0x50] sm:$0xff]
        %v5097 = vld [vmem:[#allocation2 + $0x58] sm:$0xff]
        %v5098 = vld [vmem:[#allocation2 + $0x60] sm:$0xff]
        %v5099 = vld [vmem:[#allocation2 + $0x68] sm:$0xff]
        %v5100 = vld [vmem:[#allocation2 + $0x70] sm:$0xff]
        %v5101 = vld [vmem:[#allocation2 + $0x78] sm:$0xff]
        %v5102 = vld [vmem:[#allocation2 + $0x80] sm:$0xff]
        %v5103 = vld [vmem:[#allocation2 + $0x88] sm:$0xff]
        %v5104 = vld [vmem:[#allocation2 + $0x90] sm:$0xff]
        %v5105 = vld [vmem:[#allocation2 + $0x98] sm:$0xff]
        %v5106 = vld [vmem:[#allocation2 + $0xa0] sm:$0xff]
        %v5107 = vld [vmem:[#allocation2 + $0xa8] sm:$0xff]
        %v5108 = vld [vmem:[#allocation2 + $0xb0] sm:$0xff]
        %v5109 = vld [vmem:[#allocation2 + $0xb8] sm:$0xff]
        %v5110 = vld [vmem:[#allocation2 + $0xc0] sm:$0xff]
        %v5111 = vld [vmem:[#allocation2 + $0xc8] sm:$0xff]
        %v5112 = vld [vmem:[#allocation2 + $0xd0] sm:$0xff]
        %v5113 = vld [vmem:[#allocation2 + $0xd8] sm:$0xff]
        %v5114 = vld [vmem:[#allocation2 + $0xe0] sm:$0xff]
        %v5115 = vld [vmem:[#allocation2 + $0xe8] sm:$0xff]
        %s5116 = scalar_lea.vmem [#allocation9], 384
        %v5117 = vld [vmem:[%s5116] sm:$0xf]
        %v5118 = vld [vmem:[%s5116 + $0x4] sm:$0xf]
        %v5119 = vld [vmem:[%s5116 + $0x8] sm:$0xf]
        %v5120 = vld [vmem:[%s5116 + $0xc] sm:$0xf]
        %v5121 = vld [vmem:[%s5116 + $0x10] sm:$0xf]
        %v5122 = vld [vmem:[%s5116 + $0x14] sm:$0xf]
        %v5123 = vld [vmem:[%s5116 + $0x18] sm:$0xf]
        %v5124 = vld [vmem:[%s5116 + $0x1c] sm:$0xf]
        %v5125 = vld [vmem:[%s5116 + $0x20] sm:$0xf]
        %v5126 = vld [vmem:[%s5116 + $0x24] sm:$0xf]
        %v5127 = vld [vmem:[%s5116 + $0x28] sm:$0xf]
        %v5128 = vld [vmem:[%s5116 + $0x2c] sm:$0xf]
        %v5129 = vld [vmem:[%s5116 + $0x30] sm:$0xf]
        %v5130 = vld [vmem:[%s5116 + $0x34] sm:$0xf]
        %v5131 = vld [vmem:[%s5116 + $0x38] sm:$0xf]
        %v5132 = vld [vmem:[%s5116 + $0x3c] sm:$0xf]
        %v5133 = vld [vmem:[%s5116 + $0x40] sm:$0xf]
        %v5134 = vld [vmem:[%s5116 + $0x44] sm:$0xf]
        %v5135 = vld [vmem:[%s5116 + $0x48] sm:$0xf]
        %v5136 = vld [vmem:[%s5116 + $0x4c] sm:$0xf]
        %v5137 = vld [vmem:[%s5116 + $0x50] sm:$0xf]
        %v5138 = vld [vmem:[%s5116 + $0x54] sm:$0xf]
        %v5139 = vld [vmem:[%s5116 + $0x58] sm:$0xf]
        %v5140 = vld [vmem:[%s5116 + $0x5c] sm:$0xf]
        %v5141 = vld [vmem:[%s5116 + $0x60] sm:$0xf]
        %v5142 = vld [vmem:[%s5116 + $0x64] sm:$0xf]
        %v5143 = vld [vmem:[%s5116 + $0x68] sm:$0xf]
        %v5144 = vld [vmem:[%s5116 + $0x6c] sm:$0xf]
        %v5145 = vld [vmem:[%s5116 + $0x70] sm:$0xf]
        %v5146 = vld [vmem:[%s5116 + $0x74] sm:$0xf]
        %v5147 = vld [vmem:[%s5116 + $0x78] sm:$0xf]
        %v5148 = vld [vmem:[%s5116 + $0x7c] sm:$0xf]
        %v5149 = vld [vmem:[%s5116 + $0x80] sm:$0xf]
        %v5150 = vld [vmem:[%s5116 + $0x84] sm:$0xf]
        %v5151 = vld [vmem:[%s5116 + $0x88] sm:$0xf]
        %v5152 = vld [vmem:[%s5116 + $0x8c] sm:$0xf]
        %v5153 = vld [vmem:[%s5116 + $0x90] sm:$0xf]
        %v5154 = vld [vmem:[%s5116 + $0x94] sm:$0xf]
        %v5155 = vld [vmem:[%s5116 + $0x98] sm:$0xf]
        %v5156 = vld [vmem:[%s5116 + $0x9c] sm:$0xf]
        %v5157 = vld [vmem:[%s5116 + $0xa0] sm:$0xf]
        %v5158 = vld [vmem:[%s5116 + $0xa4] sm:$0xf]
        %v5159 = vld [vmem:[%s5116 + $0xa8] sm:$0xf]
        %v5160 = vld [vmem:[%s5116 + $0xac] sm:$0xf]
        %v5161 = vld [vmem:[%s5116 + $0xb0] sm:$0xf]
        %v5162 = vld [vmem:[%s5116 + $0xb4] sm:$0xf]
        %v5163 = vld [vmem:[%s5116 + $0xb8] sm:$0xf]
        %v5164 = vld [vmem:[%s5116 + $0xbc] sm:$0xf]
        %v5213 = vunpack.c.l.b16 %v5117
        %v5214 = vunpack.c.l.b16 %v5118
        %v5215 = vunpack.c.l.b16 %v5119
        %v5216 = vunpack.c.l.b16 %v5120
        %v5217 = vunpack.c.l.b16 %v5121
        %v5218 = vunpack.c.l.b16 %v5122
        %v5219 = vunpack.c.l.b16 %v5123
        %v5220 = vunpack.c.l.b16 %v5124
        %v5221 = vunpack.c.l.b16 %v5125
        %v5222 = vunpack.c.l.b16 %v5126
        %v5223 = vunpack.c.l.b16 %v5127
        %v5224 = vunpack.c.l.b16 %v5128
        %v5225 = vunpack.c.l.b16 %v5129
        %v5226 = vunpack.c.l.b16 %v5130
        %v5227 = vunpack.c.l.b16 %v5131
        %v5228 = vunpack.c.l.b16 %v5132
        %v5229 = vunpack.c.l.b16 %v5133
        %v5230 = vunpack.c.l.b16 %v5134
        %v5231 = vunpack.c.l.b16 %v5135
        %v5232 = vunpack.c.l.b16 %v5136
        %v5233 = vunpack.c.l.b16 %v5137
        %v5234 = vunpack.c.l.b16 %v5138
        %v5235 = vunpack.c.l.b16 %v5139
        %v5236 = vunpack.c.l.b16 %v5140
        %v5237 = vunpack.c.l.b16 %v5141
        %v5238 = vunpack.c.l.b16 %v5142
        %v5239 = vunpack.c.l.b16 %v5143
        %v5240 = vunpack.c.l.b16 %v5144
        %v5241 = vunpack.c.l.b16 %v5145
        %v5242 = vunpack.c.l.b16 %v5146
        %v5243 = vunpack.c.l.b16 %v5147
        %v5244 = vunpack.c.l.b16 %v5148
        %v5245 = vunpack.c.l.b16 %v5149
        %v5246 = vunpack.c.l.b16 %v5150
        %v5247 = vunpack.c.l.b16 %v5151
        %v5248 = vunpack.c.l.b16 %v5152
        %v5249 = vunpack.c.l.b16 %v5153
        %v5250 = vunpack.c.l.b16 %v5154
        %v5251 = vunpack.c.l.b16 %v5155
        %v5252 = vunpack.c.l.b16 %v5156
        %v5253 = vunpack.c.l.b16 %v5157
        %v5254 = vunpack.c.l.b16 %v5158
        %v5255 = vunpack.c.l.b16 %v5159
        %v5256 = vunpack.c.l.b16 %v5160
        %v5257 = vunpack.c.l.b16 %v5161
        %v5258 = vunpack.c.l.b16 %v5162
        %v5259 = vunpack.c.l.b16 %v5163
        %v5260 = vunpack.c.l.b16 %v5164
        %v5261 = vpack.c.b16 %v5214, %v5213
        %v5262 = vpack.c.b16 %v5216, %v5215
        %v5263 = vpack.c.b16 %v5218, %v5217
        %v5264 = vpack.c.b16 %v5220, %v5219
        %v5265 = vpack.c.b16 %v5222, %v5221
        %v5266 = vpack.c.b16 %v5224, %v5223
        %v5267 = vpack.c.b16 %v5226, %v5225
        %v5268 = vpack.c.b16 %v5228, %v5227
        %v5269 = vpack.c.b16 %v5230, %v5229
        %v5270 = vpack.c.b16 %v5232, %v5231
        %v5271 = vpack.c.b16 %v5234, %v5233
        %v5272 = vpack.c.b16 %v5236, %v5235
        %v5273 = vpack.c.b16 %v5238, %v5237
        %v5274 = vpack.c.b16 %v5240, %v5239
        %v5275 = vpack.c.b16 %v5242, %v5241
        %v5276 = vpack.c.b16 %v5244, %v5243
        %v5277 = vpack.c.b16 %v5246, %v5245
        %v5278 = vpack.c.b16 %v5248, %v5247
        %v5279 = vpack.c.b16 %v5250, %v5249
        %v5280 = vpack.c.b16 %v5252, %v5251
        %v5281 = vpack.c.b16 %v5254, %v5253
        %v5282 = vpack.c.b16 %v5256, %v5255
        %v5283 = vpack.c.b16 %v5258, %v5257
        %v5284 = vpack.c.b16 %v5260, %v5259
        %5309 = vmatprep.subr.bf16.mxu0 0
        %5310 = vmatpush1.bf16.msra.mxu0 %v5261
        %5311 = vmatprep.subr.bf16.mxu0 0
        %5312 = vmatpush1.bf16.msra.mxu0 %v5262
        %5313 = vmatprep.subr.bf16.mxu0 0
        %5314 = vmatpush1.bf16.msra.mxu0 %v5263
        %5315 = vmatprep.subr.bf16.mxu0 0
        %5316 = vmatpush1.bf16.msra.mxu0 %v5264
        %5317 = vmatprep.subr.bf16.mxu0 0
        %5318 = vmatpush1.bf16.msra.mxu0 %v5265
        %5319 = vmatprep.subr.bf16.mxu0 0
        %5320 = vmatpush1.bf16.msra.mxu0 %v5266
        %5321 = vmatprep.subr.bf16.mxu0 0
        %5322 = vmatpush1.bf16.msra.mxu0 %v5267
        %5323 = vmatprep.subr.bf16.mxu0 0
        %5324 = vmatpush1.bf16.msra.mxu0 %v5268
        %5325 = vmatprep.subr.bf16.mxu0 0
        %5326 = vmatpush1.bf16.msra.mxu0 %v5269
        %5327 = vmatprep.subr.bf16.mxu0 0
        %5328 = vmatpush1.bf16.msra.mxu0 %v5270
        %5329 = vmatprep.subr.bf16.mxu0 0
        %5330 = vmatpush1.bf16.msra.mxu0 %v5271
        %5331 = vmatprep.subr.bf16.mxu0 0
        %5332 = vmatpush1.bf16.msra.mxu0 %v5272
        %5333 = vmatprep.subr.bf16.mxu0 0
        %5334 = vmatpush1.bf16.msra.mxu0 %v5273
        %5335 = vmatprep.subr.bf16.mxu0 0
        %5336 = vmatpush1.bf16.msra.mxu0 %v5274
        %5337 = vmatprep.subr.bf16.mxu0 0
        %5338 = vmatpush1.bf16.msra.mxu0 %v5275
        %5339 = vmatprep.subr.bf16.mxu0 0
        %5340 = vmatpush1.bf16.msra.mxu0 %v5276
        %5341 = vmatprep.mubr.bf16.mxu0 %v5093
        %5342 = vmatmul.mubr.bf16.gmra.mrb[0].mxu0 %v5092
        %v5343 = vpop.f32.mrb[0].mxu0
        %v5344 = vadd.f32 0.0, %v5343
        %v5345 = vpop.f32.mrb[0].mxu0
        %v5346 = vpop.f32.mrb[0].mxu0
        %v5347 = vadd.f32 0.0, %v5346
        %v5348 = vpop.f32.mrb[0].mxu0
        %5349 = vmatprep.mubr.bf16.mxu0 %v5096
        %5350 = vmatmul.mubr.bf16.gmra.mrb[0].mxu0 %v5095
        %v5351 = vpop.f32.mrb[0].mxu0
        %v5352 = vadd.f32 0.0, %v5351
        %v5353 = vpop.f32.mrb[0].mxu0
        %v5354 = vpop.f32.mrb[0].mxu0
        %v5355 = vadd.f32 0.0, %v5354
        %v5356 = vpop.f32.mrb[0].mxu0
        %5357 = vmatprep.mubr.bf16.mxu0 %v5099
        %5358 = vmatmul.mubr.bf16.gmra.mrb[0].mxu0 %v5098
        %v5359 = vpop.f32.mrb[0].mxu0
        %v5360 = vadd.f32 0.0, %v5359
        %v5361 = vpop.f32.mrb[0].mxu0
        %v5362 = vpop.f32.mrb[0].mxu0
        %v5363 = vadd.f32 0.0, %v5362
        %v5364 = vpop.f32.mrb[0].mxu0
        %5365 = vmatprep.mubr.bf16.mxu0 %v5102
        %5366 = vmatmul.mubr.bf16.gmra.mrb[0].mxu0 %v5101
        %v5367 = vpop.f32.mrb[0].mxu0
        %v5368 = vadd.f32 0.0, %v5367
        %v5369 = vpop.f32.mrb[0].mxu0
        %v5370 = vpop.f32.mrb[0].mxu0
        %v5371 = vadd.f32 0.0, %v5370
        %v5372 = vpop.f32.mrb[0].mxu0
        %5373 = vmatprep.mubr.bf16.mxu0 %v5105
        %5374 = vmatmul.mubr.bf16.gmra.mrb[0].mxu0 %v5104
        %v5375 = vpop.f32.mrb[0].mxu0
        %v5376 = vadd.f32 0.0, %v5375
        %v5377 = vpop.f32.mrb[0].mxu0
        %v5378 = vpop.f32.mrb[0].mxu0
        %v5379 = vadd.f32 0.0, %v5378
        %v5380 = vpop.f32.mrb[0].mxu0
        %5381 = vmatprep.mubr.bf16.mxu0 %v5108
        %5382 = vmatmul.mubr.bf16.gmra.mrb[0].mxu0 %v5107
        %v5383 = vpop.f32.mrb[0].mxu0
        %v5384 = vadd.f32 0.0, %v5383
        %v5385 = vpop.f32.mrb[0].mxu0
        %v5386 = vpop.f32.mrb[0].mxu0
        %v5387 = vadd.f32 0.0, %v5386
        %v5388 = vpop.f32.mrb[0].mxu0
        %5389 = vmatprep.mubr.bf16.mxu0 %v5111
        %5390 = vmatmul.mubr.bf16.gmra.mrb[0].mxu0 %v5110
        %v5391 = vpop.f32.mrb[0].mxu0
        %v5392 = vadd.f32 0.0, %v5391
        %v5393 = vpop.f32.mrb[0].mxu0
        %v5394 = vpop.f32.mrb[0].mxu0
        %v5395 = vadd.f32 0.0, %v5394
        %v5396 = vpop.f32.mrb[0].mxu0
        %5397 = vmatprep.mubr.bf16.mxu0 %v5114
        %5398 = vmatmul.mubr.bf16.gmra.mrb[0].mxu0 %v5113
        %v5399 = vpop.f32.mrb[0].mxu0
        %v5400 = vadd.f32 0.0, %v5399
        %v5401 = vpop.f32.mrb[0].mxu0
        %v5402 = vpop.f32.mrb[0].mxu0
        %v5403 = vadd.f32 0.0, %v5402
        %v5404 = vpop.f32.mrb[0].mxu0
        %5405 = vdwg.mxu0
        %5406 = vmatprep.subr.bf16.mxu0 0
        %5407 = vmatpush1.bf16.msra.mxu0 %v5277
        %5408 = vmatprep.subr.bf16.mxu0 0
        %5409 = vmatpush1.bf16.msra.mxu0 %v5278
        %5410 = vmatprep.subr.bf16.mxu0 0
        %5411 = vmatpush1.bf16.msra.mxu0 %v5279
        %5412 = vmatprep.subr.bf16.mxu0 0
        %5413 = vmatpush1.bf16.msra.mxu0 %v5280
        %5414 = vmatprep.subr.bf16.mxu0 0
        %5415 = vmatpush1.bf16.msra.mxu0 %v5281
        %5416 = vmatprep.subr.bf16.mxu0 0
        %5417 = vmatpush1.bf16.msra.mxu0 %v5282
        %5418 = vmatprep.subr.bf16.mxu0 0
        %5419 = vmatpush1.bf16.msra.mxu0 %v5283
        %5420 = vmatprep.subr.bf16.mxu0 0
        %5421 = vmatpush1.bf16.msra.mxu0 %v5284
        %5422 = vmatprep.subr.bf16.mxu0 0
        %5423 = vmatpush1.bf16.msra.mxu0 0
        %5424 = vmatprep.subr.bf16.mxu0 0
        %5425 = vmatpush1.bf16.msra.mxu0 0
        %5426 = vmatprep.subr.bf16.mxu0 0
        %5427 = vmatpush1.bf16.msra.mxu0 0
        %5428 = vmatprep.subr.bf16.mxu0 0
        %5429 = vmatpush1.bf16.msra.mxu0 0
        %5430 = vmatprep.subr.bf16.mxu0 0
        %5431 = vmatpush1.bf16.msra.mxu0 0
        %5432 = vmatprep.subr.bf16.mxu0 0
        %5433 = vmatpush1.bf16.msra.mxu0 0
        %5434 = vmatprep.subr.bf16.mxu0 0
        %5435 = vmatpush1.bf16.msra.mxu0 0
        %5436 = vmatprep.subr.bf16.mxu0 0
        %5437 = vmatpush1.bf16.msra.mxu0 0
        %5438 = vmatprep.mubr.bf16.mxu0 0
        %5439 = vmatmul.mubr.bf16.gmra.mrb[0].mxu0 %v5094
        %v5440 = vpop.f32.mrb[0].mxu0
        %v5441 = vadd.f32 %v5344, %v5440
        %v5442 = vpop.f32.mrb[0].mxu0
        %v5443 = vpop.f32.mrb[0].mxu0
        %v5444 = vadd.f32 %v5347, %v5443
        %v5445 = vpop.f32.mrb[0].mxu0
        %5446 = vmatprep.mubr.bf16.mxu0 0
        %5447 = vmatmul.mubr.bf16.gmra.mrb[0].mxu0 %v5097
        %v5448 = vpop.f32.mrb[0].mxu0
        %v5449 = vadd.f32 %v5352, %v5448
        %v5450 = vpop.f32.mrb[0].mxu0
        %v5451 = vpop.f32.mrb[0].mxu0
        %v5452 = vadd.f32 %v5355, %v5451
        %v5453 = vpop.f32.mrb[0].mxu0
        %5454 = vmatprep.mubr.bf16.mxu0 0
        %5455 = vmatmul.mubr.bf16.gmra.mrb[0].mxu0 %v5100
        %v5456 = vpop.f32.mrb[0].mxu0
        %v5457 = vadd.f32 %v5360, %v5456
        %v5458 = vpop.f32.mrb[0].mxu0
        %v5459 = vpop.f32.mrb[0].mxu0
        %v5460 = vadd.f32 %v5363, %v5459
        %v5461 = vpop.f32.mrb[0].mxu0
        %5462 = vmatprep.mubr.bf16.mxu0 0
        %5463 = vmatmul.mubr.bf16.gmra.mrb[0].mxu0 %v5103
        %v5464 = vpop.f32.mrb[0].mxu0
        %v5465 = vadd.f32 %v5368, %v5464
        %v5466 = vpop.f32.mrb[0].mxu0
        %v5467 = vpop.f32.mrb[0].mxu0
        %v5468 = vadd.f32 %v5371, %v5467
        %v5469 = vpop.f32.mrb[0].mxu0
        %5470 = vmatprep.mubr.bf16.mxu0 0
        %5471 = vmatmul.mubr.bf16.gmra.mrb[0].mxu0 %v5106
        %v5472 = vpop.f32.mrb[0].mxu0
        %v5473 = vadd.f32 %v5376, %v5472
        %v5474 = vpop.f32.mrb[0].mxu0
        %v5475 = vpop.f32.mrb[0].mxu0
        %v5476 = vadd.f32 %v5379, %v5475
        %v5477 = vpop.f32.mrb[0].mxu0
        %5478 = vmatprep.mubr.bf16.mxu0 0
        %5479 = vmatmul.mubr.bf16.gmra.mrb[0].mxu0 %v5109
        %v5480 = vpop.f32.mrb[0].mxu0
        %v5481 = vadd.f32 %v5384, %v5480
        %v5482 = vpop.f32.mrb[0].mxu0
        %v5483 = vpop.f32.mrb[0].mxu0
        %v5484 = vadd.f32 %v5387, %v5483
        %v5485 = vpop.f32.mrb[0].mxu0
        %5486 = vmatprep.mubr.bf16.mxu0 0
        %5487 = vmatmul.mubr.bf16.gmra.mrb[0].mxu0 %v5112
        %v5488 = vpop.f32.mrb[0].mxu0
        %v5489 = vadd.f32 %v5392, %v5488
        %v5490 = vpop.f32.mrb[0].mxu0
        %v5491 = vpop.f32.mrb[0].mxu0
        %v5492 = vadd.f32 %v5395, %v5491
        %v5493 = vpop.f32.mrb[0].mxu0
        %5494 = vmatprep.mubr.bf16.mxu0 0
        %5495 = vmatmul.mubr.bf16.gmra.mrb[0].mxu0 %v5115
        %v5496 = vpop.f32.mrb[0].mxu0
        %v5497 = vadd.f32 %v5400, %v5496
        %v5498 = vpop.f32.mrb[0].mxu0
        %v5499 = vpop.f32.mrb[0].mxu0
        %v5500 = vadd.f32 %v5403, %v5499
        %v5501 = vpop.f32.mrb[0].mxu0
        %5502 = vdwg.mxu0
        %v5503 = vadd.f32 %v5030, %v5441
        %v5504 = vadd.f32 %v5033, %v5444
        %v5505 = vadd.f32 %v5038, %v5449
        %v5506 = vadd.f32 %v5041, %v5452
        %v5507 = vadd.f32 %v5046, %v5457
        %v5508 = vadd.f32 %v5049, %v5460
        %v5509 = vadd.f32 %v5054, %v5465
        %v5510 = vadd.f32 %v5057, %v5468
        %v5511 = vadd.f32 %v5062, %v5473
        %v5512 = vadd.f32 %v5065, %v5476
        %v5513 = vadd.f32 %v5070, %v5481
        %v5514 = vadd.f32 %v5073, %v5484
        %v5515 = vadd.f32 %v5078, %v5489
        %v5516 = vadd.f32 %v5081, %v5492
        %v5517 = vadd.f32 %v5086, %v5497
        %v5518 = vadd.f32 %v5089, %v5500
        %v5519 = vld [vmem:[%s287] sm:$0xf]
        %v5520 = vld [vmem:[%s287 + $0x4] sm:$0xf]
        %v5521 = vld [vmem:[%s287 + $0x8] sm:$0xf]
        %v5522 = vld [vmem:[%s287 + $0xc] sm:$0xf]
        %v5523 = vld [vmem:[%s287 + $0x10] sm:$0xf]
        %v5524 = vld [vmem:[%s287 + $0x14] sm:$0xf]
        %v5525 = vld [vmem:[%s287 + $0x18] sm:$0xf]
        %v5526 = vld [vmem:[%s287 + $0x1c] sm:$0xf]
        %v5527 = vld [vmem:[%s287 + $0x20] sm:$0xf]
        %v5528 = vld [vmem:[%s287 + $0x24] sm:$0xf]
        %v5529 = vld [vmem:[%s287 + $0x28] sm:$0xf]
        %v5530 = vld [vmem:[%s287 + $0x2c] sm:$0xf]
        %v5531 = vld [vmem:[%s287 + $0x30] sm:$0xf]
        %v5532 = vld [vmem:[%s287 + $0x34] sm:$0xf]
        %v5533 = vld [vmem:[%s287 + $0x38] sm:$0xf]
        %v5534 = vld [vmem:[%s287 + $0x3c] sm:$0xf]
        %v5535 = vunpack.c.l.bf16 %v5519
        %v5536 = vunpack.c.l.bf16 %v5520
        %v5537 = vunpack.c.l.bf16 %v5521
        %v5538 = vunpack.c.l.bf16 %v5522
        %v5539 = vunpack.c.l.bf16 %v5523
        %v5540 = vunpack.c.l.bf16 %v5524
        %v5541 = vunpack.c.l.bf16 %v5525
        %v5542 = vunpack.c.l.bf16 %v5526
        %v5543 = vunpack.c.l.bf16 %v5527
        %v5544 = vunpack.c.l.bf16 %v5528
        %v5545 = vunpack.c.l.bf16 %v5529
        %v5546 = vunpack.c.l.bf16 %v5530
        %v5547 = vunpack.c.l.bf16 %v5531
        %v5548 = vunpack.c.l.bf16 %v5532
        %v5549 = vunpack.c.l.bf16 %v5533
        %v5550 = vunpack.c.l.bf16 %v5534
        %v5552 = vlaneseq
        %v5553 = vshrl.u32 %v5552, 7
        %v5554 = vsub.s32 0, %v5553
        %v5555 = vrot.slane %v3970, %v5554
        %v5557 = vmul.f32 %v5503, %v5555
        %v5558 = vmul.f32 %v5504, %v5555
        %v5559 = vmul.f32 %v5505, %v5555
        %v5560 = vmul.f32 %v5506, %v5555
        %v5561 = vmul.f32 %v5507, %v5555
        %v5562 = vmul.f32 %v5508, %v5555
        %v5563 = vmul.f32 %v5509, %v5555
        %v5564 = vmul.f32 %v5510, %v5555
        %v5565 = vmul.f32 %v5511, %v5555
        %v5566 = vmul.f32 %v5512, %v5555
        %v5567 = vmul.f32 %v5513, %v5555
        %v5568 = vmul.f32 %v5514, %v5555
        %v5569 = vmul.f32 %v5515, %v5555
        %v5570 = vmul.f32 %v5516, %v5555
        %v5571 = vmul.f32 %v5517, %v5555
        %v5572 = vmul.f32 %v5518, %v5555
        %v5574 = vlaneseq
        %v5575 = vshrl.u32 %v5574, 7
        %v5576 = vsub.s32 0, %v5575
        %v5577 = vrot.slane %v3971, %v5576
        %v5579 = vadd.f32 %v5557, %v5577
        %v5580 = vadd.f32 %v5558, %v5577
        %v5581 = vadd.f32 %v5559, %v5577
        %v5582 = vadd.f32 %v5560, %v5577
        %v5583 = vadd.f32 %v5561, %v5577
        %v5584 = vadd.f32 %v5562, %v5577
        %v5585 = vadd.f32 %v5563, %v5577
        %v5586 = vadd.f32 %v5564, %v5577
        %v5587 = vadd.f32 %v5565, %v5577
        %v5588 = vadd.f32 %v5566, %v5577
        %v5589 = vadd.f32 %v5567, %v5577
        %v5590 = vadd.f32 %v5568, %v5577
        %v5591 = vadd.f32 %v5569, %v5577
        %v5592 = vadd.f32 %v5570, %v5577
        %v5593 = vadd.f32 %v5571, %v5577
        %v5594 = vadd.f32 %v5572, %v5577
        %v5595 = vadd.f32 %v5579, %v5535
        %v5596 = vadd.f32 %v5580, %v5536
        %v5597 = vadd.f32 %v5581, %v5537
        %v5598 = vadd.f32 %v5582, %v5538
        %v5599 = vadd.f32 %v5583, %v5539
        %v5600 = vadd.f32 %v5584, %v5540
        %v5601 = vadd.f32 %v5585, %v5541
        %v5602 = vadd.f32 %v5586, %v5542
        %v5603 = vadd.f32 %v5587, %v5543
        %v5604 = vadd.f32 %v5588, %v5544
        %v5605 = vadd.f32 %v5589, %v5545
        %v5606 = vadd.f32 %v5590, %v5546
        %v5607 = vadd.f32 %v5591, %v5547
        %v5608 = vadd.f32 %v5592, %v5548
        %v5609 = vadd.f32 %v5593, %v5549
        %v5610 = vadd.f32 %v5594, %v5550
        %v5611 = vmax.f32 %v5595, 0.0
        %v5612 = vmax.f32 %v5596, 0.0
        %v5613 = vmax.f32 %v5597, 0.0
        %v5614 = vmax.f32 %v5598, 0.0
        %v5615 = vmax.f32 %v5599, 0.0
        %v5616 = vmax.f32 %v5600, 0.0
        %v5617 = vmax.f32 %v5601, 0.0
        %v5618 = vmax.f32 %v5602, 0.0
        %v5619 = vmax.f32 %v5603, 0.0
        %v5620 = vmax.f32 %v5604, 0.0
        %v5621 = vmax.f32 %v5605, 0.0
        %v5622 = vmax.f32 %v5606, 0.0
        %v5623 = vmax.f32 %v5607, 0.0
        %v5624 = vmax.f32 %v5608, 0.0
        %v5625 = vmax.f32 %v5609, 0.0
        %v5626 = vmax.f32 %v5610, 0.0
        %5627 = vst [vmem:[%s325] sm:$0xff] %v5611
        %5628 = vst [vmem:[%s325 + $0x8] sm:$0xff] %v5612
        %5629 = vst [vmem:[%s325 + $0x10] sm:$0xff] %v5613
        %5630 = vst [vmem:[%s325 + $0x18] sm:$0xff] %v5614
        %5631 = vst [vmem:[%s325 + $0x20] sm:$0xff] %v5615
        %5632 = vst [vmem:[%s325 + $0x28] sm:$0xff] %v5616
        %5633 = vst [vmem:[%s325 + $0x30] sm:$0xff] %v5617
        %5634 = vst [vmem:[%s325 + $0x38] sm:$0xff] %v5618
        %5635 = vst [vmem:[%s325 + $0x40] sm:$0xff] %v5619
        %5636 = vst [vmem:[%s325 + $0x48] sm:$0xff] %v5620
        %5637 = vst [vmem:[%s325 + $0x50] sm:$0xff] %v5621
        %5638 = vst [vmem:[%s325 + $0x58] sm:$0xff] %v5622
        %5639 = vst [vmem:[%s325 + $0x60] sm:$0xff] %v5623
        %5640 = vst [vmem:[%s325 + $0x68] sm:$0xff] %v5624
        %5641 = vst [vmem:[%s325 + $0x70] sm:$0xff] %v5625
        %5642 = vst [vmem:[%s325 + $0x78] sm:$0xff] %v5626
        %v5643 = vld [vmem:[#allocation2 + $0xc0] sm:$0xff]
        %v5644 = vld [vmem:[#allocation2 + $0xc8] sm:$0xff]
        %v5645 = vld [vmem:[#allocation2 + $0xd0] sm:$0xff]
        %v5646 = vld [vmem:[#allocation2 + $0xd8] sm:$0xff]
        %v5647 = vld [vmem:[#allocation2 + $0xe0] sm:$0xff]
        %v5648 = vld [vmem:[#allocation2 + $0xe8] sm:$0xff]
        %v5649 = vld [vmem:[#allocation2 + $0xf0] sm:$0xff]
        %v5650 = vld [vmem:[#allocation2 + $0xf8] sm:$0xff]
        %v5651 = vld [vmem:[#allocation2 + $0x100] sm:$0xff]
        %v5652 = vld [vmem:[#allocation2 + $0x108] sm:$0xff]
        %v5653 = vld [vmem:[#allocation2 + $0x110] sm:$0xff]
        %v5654 = vld [vmem:[#allocation2 + $0x118] sm:$0xff]
        %v5655 = vld [vmem:[#allocation2 + $0x120] sm:$0xff]
        %v5656 = vld [vmem:[#allocation2 + $0x128] sm:$0xff]
        %v5657 = vld [vmem:[#allocation2 + $0x130] sm:$0xff]
        %v5658 = vld [vmem:[#allocation2 + $0x138] sm:$0xff]
        %v5659 = vld [vmem:[#allocation2 + $0x140] sm:$0xff]
        %v5660 = vld [vmem:[#allocation2 + $0x148] sm:$0xff]
        %v5661 = vld [vmem:[#allocation2 + $0x150] sm:$0xff]
        %v5662 = vld [vmem:[#allocation2 + $0x158] sm:$0xff]
        %v5663 = vld [vmem:[#allocation2 + $0x160] sm:$0xff]
        %v5664 = vld [vmem:[#allocation2 + $0x168] sm:$0xff]
        %v5665 = vld [vmem:[#allocation2 + $0x170] sm:$0xff]
        %v5666 = vld [vmem:[#allocation2 + $0x178] sm:$0xff]
        %v5667 = vld [vmem:[#allocation9] sm:$0xf]
        %v5668 = vld [vmem:[#allocation9 + $0x4] sm:$0xf]
        %v5669 = vld [vmem:[#allocation9 + $0x8] sm:$0xf]
        %v5670 = vld [vmem:[#allocation9 + $0xc] sm:$0xf]
        %v5671 = vld [vmem:[#allocation9 + $0x10] sm:$0xf]
        %v5672 = vld [vmem:[#allocation9 + $0x14] sm:$0xf]
        %v5673 = vld [vmem:[#allocation9 + $0x18] sm:$0xf]
        %v5674 = vld [vmem:[#allocation9 + $0x1c] sm:$0xf]
        %v5675 = vld [vmem:[#allocation9 + $0x20] sm:$0xf]
        %v5676 = vld [vmem:[#allocation9 + $0x24] sm:$0xf]
        %v5677 = vld [vmem:[#allocation9 + $0x28] sm:$0xf]
        %v5678 = vld [vmem:[#allocation9 + $0x2c] sm:$0xf]
        %v5679 = vld [vmem:[#allocation9 + $0x30] sm:$0xf]
        %v5680 = vld [vmem:[#allocation9 + $0x34] sm:$0xf]
        %v5681 = vld [vmem:[#allocation9 + $0x38] sm:$0xf]
        %v5682 = vld [vmem:[#allocation9 + $0x3c] sm:$0xf]
        %v5683 = vld [vmem:[#allocation9 + $0x40] sm:$0xf]
        %v5684 = vld [vmem:[#allocation9 + $0x44] sm:$0xf]
        %v5685 = vld [vmem:[#allocation9 + $0x48] sm:$0xf]
        %v5686 = vld [vmem:[#allocation9 + $0x4c] sm:$0xf]
        %v5687 = vld [vmem:[#allocation9 + $0x50] sm:$0xf]
        %v5688 = vld [vmem:[#allocation9 + $0x54] sm:$0xf]
        %v5689 = vld [vmem:[#allocation9 + $0x58] sm:$0xf]
        %v5690 = vld [vmem:[#allocation9 + $0x5c] sm:$0xf]
        %v5691 = vld [vmem:[#allocation9 + $0x60] sm:$0xf]
        %v5692 = vld [vmem:[#allocation9 + $0x64] sm:$0xf]
        %v5693 = vld [vmem:[#allocation9 + $0x68] sm:$0xf]
        %v5694 = vld [vmem:[#allocation9 + $0x6c] sm:$0xf]
        %v5695 = vld [vmem:[#allocation9 + $0x70] sm:$0xf]
        %v5696 = vld [vmem:[#allocation9 + $0x74] sm:$0xf]
        %v5697 = vld [vmem:[#allocation9 + $0x78] sm:$0xf]
        %v5698 = vld [vmem:[#allocation9 + $0x7c] sm:$0xf]
        %v5699 = vld [vmem:[#allocation9 + $0x80] sm:$0xf]
        %v5700 = vld [vmem:[#allocation9 + $0x84] sm:$0xf]
        %v5701 = vld [vmem:[#allocation9 + $0x88] sm:$0xf]
        %v5702 = vld [vmem:[#allocation9 + $0x8c] sm:$0xf]
        %v5703 = vld [vmem:[#allocation9 + $0x90] sm:$0xf]
        %v5704 = vld [vmem:[#allocation9 + $0x94] sm:$0xf]
        %v5705 = vld [vmem:[#allocation9 + $0x98] sm:$0xf]
        %v5706 = vld [vmem:[#allocation9 + $0x9c] sm:$0xf]
        %v5707 = vld [vmem:[#allocation9 + $0xa0] sm:$0xf]
        %v5708 = vld [vmem:[#allocation9 + $0xa4] sm:$0xf]
        %v5709 = vld [vmem:[#allocation9 + $0xa8] sm:$0xf]
        %v5710 = vld [vmem:[#allocation9 + $0xac] sm:$0xf]
        %v5711 = vld [vmem:[#allocation9 + $0xb0] sm:$0xf]
        %v5712 = vld [vmem:[#allocation9 + $0xb4] sm:$0xf]
        %v5713 = vld [vmem:[#allocation9 + $0xb8] sm:$0xf]
        %v5714 = vld [vmem:[#allocation9 + $0xbc] sm:$0xf]
        %v5715 = vld [vmem:[#allocation2 + $0x180] sm:$0xff]
        %v5716 = vld [vmem:[#allocation2 + $0x188] sm:$0xff]
        %v5717 = vld [vmem:[#allocation2 + $0x190] sm:$0xff]
        %v5718 = vld [vmem:[%s4367] sm:$0xf]
        %v5719 = vld [vmem:[%s4367 + $0x4] sm:$0xf]
        %v5720 = vld [vmem:[%s4367 + $0x8] sm:$0xf]
        %v5721 = vld [vmem:[%s4367 + $0xc] sm:$0xf]
        %v5722 = vld [vmem:[%s4367 + $0x10] sm:$0xf]
        %v5723 = vld [vmem:[%s4367 + $0x14] sm:$0xf]
        %v5724 = vld [vmem:[%s4367 + $0x18] sm:$0xf]
        %v5725 = vld [vmem:[%s4367 + $0x1c] sm:$0xf]
        %v5726 = vld [vmem:[%s4367 + $0x20] sm:$0xf]
        %v5727 = vld [vmem:[%s4367 + $0x24] sm:$0xf]
        %v5728 = vld [vmem:[%s4367 + $0x28] sm:$0xf]
        %v5729 = vld [vmem:[%s4367 + $0x2c] sm:$0xf]
        %v5730 = vld [vmem:[%s4367 + $0x30] sm:$0xf]
        %v5731 = vld [vmem:[%s4367 + $0x34] sm:$0xf]
        %v5732 = vld [vmem:[%s4367 + $0x38] sm:$0xf]
        %v5733 = vld [vmem:[%s4367 + $0x3c] sm:$0xf]
        %v5734 = vld [vmem:[%s4367 + $0x40] sm:$0xf]
        %v5735 = vld [vmem:[%s4367 + $0x44] sm:$0xf]
        %v5736 = vld [vmem:[%s4367 + $0x48] sm:$0xf]
        %v5737 = vld [vmem:[%s4367 + $0x4c] sm:$0xf]
        %v5738 = vld [vmem:[%s4367 + $0x50] sm:$0xf]
        %v5739 = vld [vmem:[%s4367 + $0x54] sm:$0xf]
        %v5740 = vld [vmem:[%s4367 + $0x58] sm:$0xf]
        %v5741 = vld [vmem:[%s4367 + $0x5c] sm:$0xf]
        %v5742 = vld [vmem:[%s4367 + $0x60] sm:$0xf]
        %v5743 = vld [vmem:[%s4367 + $0x64] sm:$0xf]
        %v5744 = vld [vmem:[%s4367 + $0x68] sm:$0xf]
        %v5745 = vld [vmem:[%s4367 + $0x6c] sm:$0xf]
        %v5746 = vld [vmem:[%s4367 + $0x70] sm:$0xf]
        %v5747 = vld [vmem:[%s4367 + $0x74] sm:$0xf]
        %v5748 = vld [vmem:[%s4367 + $0x78] sm:$0xf]
        %v5749 = vld [vmem:[%s4367 + $0x7c] sm:$0xf]
        %v5750 = vld [vmem:[%s4367 + $0x80] sm:$0xf]
        %v5751 = vld [vmem:[%s4367 + $0x84] sm:$0xf]
        %v5752 = vld [vmem:[%s4367 + $0x88] sm:$0xf]
        %v5753 = vld [vmem:[%s4367 + $0x8c] sm:$0xf]
        %v5754 = vld [vmem:[%s4367 + $0x90] sm:$0xf]
        %v5755 = vld [vmem:[%s4367 + $0x94] sm:$0xf]
        %v5756 = vld [vmem:[%s4367 + $0x98] sm:$0xf]
        %v5757 = vld [vmem:[%s4367 + $0x9c] sm:$0xf]
        %v5758 = vld [vmem:[%s4367 + $0xa0] sm:$0xf]
        %v5759 = vld [vmem:[%s4367 + $0xa4] sm:$0xf]
        %v5760 = vld [vmem:[%s4367 + $0xa8] sm:$0xf]
        %v5761 = vld [vmem:[%s4367 + $0xac] sm:$0xf]
        %v5762 = vld [vmem:[%s4367 + $0xb0] sm:$0xf]
        %v5763 = vld [vmem:[%s4367 + $0xb4] sm:$0xf]
        %v5764 = vld [vmem:[%s4367 + $0xb8] sm:$0xf]
        %v5765 = vld [vmem:[%s4367 + $0xbc] sm:$0xf]
        %v5814 = vunpack.c.l.b16 %v5718
        %v5815 = vunpack.c.l.b16 %v5719
        %v5816 = vunpack.c.l.b16 %v5720
        %v5817 = vunpack.c.l.b16 %v5721
        %v5818 = vunpack.c.l.b16 %v5722
        %v5819 = vunpack.c.l.b16 %v5723
        %v5820 = vunpack.c.l.b16 %v5724
        %v5821 = vunpack.c.l.b16 %v5725
        %v5822 = vunpack.c.l.b16 %v5726
        %v5823 = vunpack.c.l.b16 %v5727
        %v5824 = vunpack.c.l.b16 %v5728
        %v5825 = vunpack.c.l.b16 %v5729
        %v5826 = vunpack.c.l.b16 %v5730
        %v5827 = vunpack.c.l.b16 %v5731
        %v5828 = vunpack.c.l.b16 %v5732
        %v5829 = vunpack.c.l.b16 %v5733
        %v5830 = vunpack.c.l.b16 %v5734
        %v5831 = vunpack.c.l.b16 %v5735
        %v5832 = vunpack.c.l.b16 %v5736
        %v5833 = vunpack.c.l.b16 %v5737
        %v5834 = vunpack.c.l.b16 %v5738
        %v5835 = vunpack.c.l.b16 %v5739
        %v5836 = vunpack.c.l.b16 %v5740
        %v5837 = vunpack.c.l.b16 %v5741
        %v5838 = vunpack.c.l.b16 %v5742
        %v5839 = vunpack.c.l.b16 %v5743
        %v5840 = vunpack.c.l.b16 %v5744
        %v5841 = vunpack.c.l.b16 %v5745
        %v5842 = vunpack.c.l.b16 %v5746
        %v5843 = vunpack.c.l.b16 %v5747
        %v5844 = vunpack.c.l.b16 %v5748
        %v5845 = vunpack.c.l.b16 %v5749
        %v5846 = vunpack.c.l.b16 %v5750
        %v5847 = vunpack.c.l.b16 %v5751
        %v5848 = vunpack.c.l.b16 %v5752
        %v5849 = vunpack.c.l.b16 %v5753
        %v5850 = vunpack.c.l.b16 %v5754
        %v5851 = vunpack.c.l.b16 %v5755
        %v5852 = vunpack.c.l.b16 %v5756
        %v5853 = vunpack.c.l.b16 %v5757
        %v5854 = vunpack.c.l.b16 %v5758
        %v5855 = vunpack.c.l.b16 %v5759
        %v5856 = vunpack.c.l.b16 %v5760
        %v5857 = vunpack.c.l.b16 %v5761
        %v5858 = vunpack.c.l.b16 %v5762
        %v5859 = vunpack.c.l.b16 %v5763
        %v5860 = vunpack.c.l.b16 %v5764
        %v5861 = vunpack.c.l.b16 %v5765
        %v5862 = vpack.c.b16 %v5815, %v5814
        %v5863 = vpack.c.b16 %v5817, %v5816
        %v5864 = vpack.c.b16 %v5819, %v5818
        %v5865 = vpack.c.b16 %v5821, %v5820
        %v5866 = vpack.c.b16 %v5823, %v5822
        %v5867 = vpack.c.b16 %v5825, %v5824
        %v5868 = vpack.c.b16 %v5827, %v5826
        %v5869 = vpack.c.b16 %v5829, %v5828
        %v5870 = vpack.c.b16 %v5831, %v5830
        %v5871 = vpack.c.b16 %v5833, %v5832
        %v5872 = vpack.c.b16 %v5835, %v5834
        %v5873 = vpack.c.b16 %v5837, %v5836
        %v5874 = vpack.c.b16 %v5839, %v5838
        %v5875 = vpack.c.b16 %v5841, %v5840
        %v5876 = vpack.c.b16 %v5843, %v5842
        %v5877 = vpack.c.b16 %v5845, %v5844
        %v5878 = vpack.c.b16 %v5847, %v5846
        %v5879 = vpack.c.b16 %v5849, %v5848
        %v5880 = vpack.c.b16 %v5851, %v5850
        %v5881 = vpack.c.b16 %v5853, %v5852
        %v5882 = vpack.c.b16 %v5855, %v5854
        %v5883 = vpack.c.b16 %v5857, %v5856
        %v5884 = vpack.c.b16 %v5859, %v5858
        %v5885 = vpack.c.b16 %v5861, %v5860
        %5910 = vmatprep.subr.bf16.mxu0 0
        %5911 = vmatpush1.bf16.msra.mxu0 %v5862
        %5912 = vmatprep.subr.bf16.mxu0 0
        %5913 = vmatpush1.bf16.msra.mxu0 %v5863
        %5914 = vmatprep.subr.bf16.mxu0 0
        %5915 = vmatpush1.bf16.msra.mxu0 %v5864
        %5916 = vmatprep.subr.bf16.mxu0 0
        %5917 = vmatpush1.bf16.msra.mxu0 %v5865
        %5918 = vmatprep.subr.bf16.mxu0 0
        %5919 = vmatpush1.bf16.msra.mxu0 %v5866
        %5920 = vmatprep.subr.bf16.mxu0 0
        %5921 = vmatpush1.bf16.msra.mxu0 %v5867
        %5922 = vmatprep.subr.bf16.mxu0 0
        %5923 = vmatpush1.bf16.msra.mxu0 %v5868
        %5924 = vmatprep.subr.bf16.mxu0 0
        %5925 = vmatpush1.bf16.msra.mxu0 %v5869
        %5926 = vmatprep.subr.bf16.mxu0 0
        %5927 = vmatpush1.bf16.msra.mxu0 %v5870
        %5928 = vmatprep.subr.bf16.mxu0 0
        %5929 = vmatpush1.bf16.msra.mxu0 %v5871
        %5930 = vmatprep.subr.bf16.mxu0 0
        %5931 = vmatpush1.bf16.msra.mxu0 %v5872
        %5932 = vmatprep.subr.bf16.mxu0 0
        %5933 = vmatpush1.bf16.msra.mxu0 %v5873
        %5934 = vmatprep.subr.bf16.mxu0 0
        %5935 = vmatpush1.bf16.msra.mxu0 %v5874
        %5936 = vmatprep.subr.bf16.mxu0 0
        %5937 = vmatpush1.bf16.msra.mxu0 %v5875
        %5938 = vmatprep.subr.bf16.mxu0 0
        %5939 = vmatpush1.bf16.msra.mxu0 %v5876
        %5940 = vmatprep.subr.bf16.mxu0 0
        %5941 = vmatpush1.bf16.msra.mxu0 %v5877
        %5942 = vmatprep.mubr.bf16.mxu0 %v5647
        %5943 = vmatmul.mubr.bf16.gmra.mrb[0].mxu0 %v5646
        %v5944 = vpop.f32.mrb[0].mxu0
        %v5945 = vadd.f32 0.0, %v5944
        %v5946 = vpop.f32.mrb[0].mxu0
        %v5947 = vpop.f32.mrb[0].mxu0
        %v5948 = vadd.f32 0.0, %v5947
        %v5949 = vpop.f32.mrb[0].mxu0
        %5950 = vmatprep.mubr.bf16.mxu0 %v5650
        %5951 = vmatmul.mubr.bf16.gmra.mrb[0].mxu0 %v5649
        %v5952 = vpop.f32.mrb[0].mxu0
        %v5953 = vadd.f32 0.0, %v5952
        %v5954 = vpop.f32.mrb[0].mxu0
        %v5955 = vpop.f32.mrb[0].mxu0
        %v5956 = vadd.f32 0.0, %v5955
        %v5957 = vpop.f32.mrb[0].mxu0
        %5958 = vmatprep.mubr.bf16.mxu0 %v5653
        %5959 = vmatmul.mubr.bf16.gmra.mrb[0].mxu0 %v5652
        %v5960 = vpop.f32.mrb[0].mxu0
        %v5961 = vadd.f32 0.0, %v5960
        %v5962 = vpop.f32.mrb[0].mxu0
        %v5963 = vpop.f32.mrb[0].mxu0
        %v5964 = vadd.f32 0.0, %v5963
        %v5965 = vpop.f32.mrb[0].mxu0
        %5966 = vmatprep.mubr.bf16.mxu0 %v5656
        %5967 = vmatmul.mubr.bf16.gmra.mrb[0].mxu0 %v5655
        %v5968 = vpop.f32.mrb[0].mxu0
        %v5969 = vadd.f32 0.0, %v5968
        %v5970 = vpop.f32.mrb[0].mxu0
        %v5971 = vpop.f32.mrb[0].mxu0
        %v5972 = vadd.f32 0.0, %v5971
        %v5973 = vpop.f32.mrb[0].mxu0
        %5974 = vmatprep.mubr.bf16.mxu0 %v5659
        %5975 = vmatmul.mubr.bf16.gmra.mrb[0].mxu0 %v5658
        %v5976 = vpop.f32.mrb[0].mxu0
        %v5977 = vadd.f32 0.0, %v5976
        %v5978 = vpop.f32.mrb[0].mxu0
        %v5979 = vpop.f32.mrb[0].mxu0
        %v5980 = vadd.f32 0.0, %v5979
        %v5981 = vpop.f32.mrb[0].mxu0
        %5982 = vmatprep.mubr.bf16.mxu0 %v5662
        %5983 = vmatmul.mubr.bf16.gmra.mrb[0].mxu0 %v5661
        %v5984 = vpop.f32.mrb[0].mxu0
        %v5985 = vadd.f32 0.0, %v5984
        %v5986 = vpop.f32.mrb[0].mxu0
        %v5987 = vpop.f32.mrb[0].mxu0
        %v5988 = vadd.f32 0.0, %v5987
        %v5989 = vpop.f32.mrb[0].mxu0
        %5990 = vmatprep.mubr.bf16.mxu0 %v5665
        %5991 = vmatmul.mubr.bf16.gmra.mrb[0].mxu0 %v5664
        %v5992 = vpop.f32.mrb[0].mxu0
        %v5993 = vadd.f32 0.0, %v5992
        %v5994 = vpop.f32.mrb[0].mxu0
        %v5995 = vpop.f32.mrb[0].mxu0
        %v5996 = vadd.f32 0.0, %v5995
        %v5997 = vpop.f32.mrb[0].mxu0
        %5998 = vmatprep.mubr.bf16.mxu0 %v5716
        %5999 = vmatmul.mubr.bf16.gmra.mrb[0].mxu0 %v5715
        %v6000 = vpop.f32.mrb[0].mxu0
        %v6001 = vadd.f32 0.0, %v6000
        %v6002 = vpop.f32.mrb[0].mxu0
        %v6003 = vpop.f32.mrb[0].mxu0
        %v6004 = vadd.f32 0.0, %v6003
        %v6005 = vpop.f32.mrb[0].mxu0
        %6006 = vdwg.mxu0
        %6007 = vmatprep.subr.bf16.mxu0 0
        %6008 = vmatpush1.bf16.msra.mxu0 %v5878
        %6009 = vmatprep.subr.bf16.mxu0 0
        %6010 = vmatpush1.bf16.msra.mxu0 %v5879
        %6011 = vmatprep.subr.bf16.mxu0 0
        %6012 = vmatpush1.bf16.msra.mxu0 %v5880
        %6013 = vmatprep.subr.bf16.mxu0 0
        %6014 = vmatpush1.bf16.msra.mxu0 %v5881
        %6015 = vmatprep.subr.bf16.mxu0 0
        %6016 = vmatpush1.bf16.msra.mxu0 %v5882
        %6017 = vmatprep.subr.bf16.mxu0 0
        %6018 = vmatpush1.bf16.msra.mxu0 %v5883
        %6019 = vmatprep.subr.bf16.mxu0 0
        %6020 = vmatpush1.bf16.msra.mxu0 %v5884
        %6021 = vmatprep.subr.bf16.mxu0 0
        %6022 = vmatpush1.bf16.msra.mxu0 %v5885
        %6023 = vmatprep.subr.bf16.mxu0 0
        %6024 = vmatpush1.bf16.msra.mxu0 0
        %6025 = vmatprep.subr.bf16.mxu0 0
        %6026 = vmatpush1.bf16.msra.mxu0 0
        %6027 = vmatprep.subr.bf16.mxu0 0
        %6028 = vmatpush1.bf16.msra.mxu0 0
        %6029 = vmatprep.subr.bf16.mxu0 0
        %6030 = vmatpush1.bf16.msra.mxu0 0
        %6031 = vmatprep.subr.bf16.mxu0 0
        %6032 = vmatpush1.bf16.msra.mxu0 0
        %6033 = vmatprep.subr.bf16.mxu0 0
        %6034 = vmatpush1.bf16.msra.mxu0 0
        %6035 = vmatprep.subr.bf16.mxu0 0
        %6036 = vmatpush1.bf16.msra.mxu0 0
        %6037 = vmatprep.subr.bf16.mxu0 0
        %6038 = vmatpush1.bf16.msra.mxu0 0
        %6039 = vmatprep.mubr.bf16.mxu0 0
        %6040 = vmatmul.mubr.bf16.gmra.mrb[0].mxu0 %v5648
        %v6041 = vpop.f32.mrb[0].mxu0
        %v6042 = vadd.f32 %v5945, %v6041
        %v6043 = vpop.f32.mrb[0].mxu0
        %v6044 = vpop.f32.mrb[0].mxu0
        %v6045 = vadd.f32 %v5948, %v6044
        %v6046 = vpop.f32.mrb[0].mxu0
        %6047 = vmatprep.mubr.bf16.mxu0 0
        %6048 = vmatmul.mubr.bf16.gmra.mrb[0].mxu0 %v5651
        %v6049 = vpop.f32.mrb[0].mxu0
        %v6050 = vadd.f32 %v5953, %v6049
        %v6051 = vpop.f32.mrb[0].mxu0
        %v6052 = vpop.f32.mrb[0].mxu0
        %v6053 = vadd.f32 %v5956, %v6052
        %v6054 = vpop.f32.mrb[0].mxu0
        %6055 = vmatprep.mubr.bf16.mxu0 0
        %6056 = vmatmul.mubr.bf16.gmra.mrb[0].mxu0 %v5654
        %v6057 = vpop.f32.mrb[0].mxu0
        %v6058 = vadd.f32 %v5961, %v6057
        %v6059 = vpop.f32.mrb[0].mxu0
        %v6060 = vpop.f32.mrb[0].mxu0
        %v6061 = vadd.f32 %v5964, %v6060
        %v6062 = vpop.f32.mrb[0].mxu0
        %6063 = vmatprep.mubr.bf16.mxu0 0
        %6064 = vmatmul.mubr.bf16.gmra.mrb[0].mxu0 %v5657
        %v6065 = vpop.f32.mrb[0].mxu0
        %v6066 = vadd.f32 %v5969, %v6065
        %v6067 = vpop.f32.mrb[0].mxu0
        %v6068 = vpop.f32.mrb[0].mxu0
        %v6069 = vadd.f32 %v5972, %v6068
        %v6070 = vpop.f32.mrb[0].mxu0
        %6071 = vmatprep.mubr.bf16.mxu0 0
        %6072 = vmatmul.mubr.bf16.gmra.mrb[0].mxu0 %v5660
        %v6073 = vpop.f32.mrb[0].mxu0
        %v6074 = vadd.f32 %v5977, %v6073
        %v6075 = vpop.f32.mrb[0].mxu0
        %v6076 = vpop.f32.mrb[0].mxu0
        %v6077 = vadd.f32 %v5980, %v6076
        %v6078 = vpop.f32.mrb[0].mxu0
        %6079 = vmatprep.mubr.bf16.mxu0 0
        %6080 = vmatmul.mubr.bf16.gmra.mrb[0].mxu0 %v5663
        %v6081 = vpop.f32.mrb[0].mxu0
        %v6082 = vadd.f32 %v5985, %v6081
        %v6083 = vpop.f32.mrb[0].mxu0
        %v6084 = vpop.f32.mrb[0].mxu0
        %v6085 = vadd.f32 %v5988, %v6084
        %v6086 = vpop.f32.mrb[0].mxu0
        %6087 = vmatprep.mubr.bf16.mxu0 0
        %6088 = vmatmul.mubr.bf16.gmra.mrb[0].mxu0 %v5666
        %v6089 = vpop.f32.mrb[0].mxu0
        %v6090 = vadd.f32 %v5993, %v6089
        %v6091 = vpop.f32.mrb[0].mxu0
        %v6092 = vpop.f32.mrb[0].mxu0
        %v6093 = vadd.f32 %v5996, %v6092
        %v6094 = vpop.f32.mrb[0].mxu0
        %6095 = vmatprep.mubr.bf16.mxu0 0
        %6096 = vmatmul.mubr.bf16.gmra.mrb[0].mxu0 %v5717
        %v6097 = vpop.f32.mrb[0].mxu0
        %v6098 = vadd.f32 %v6001, %v6097
        %v6099 = vpop.f32.mrb[0].mxu0
        %v6100 = vpop.f32.mrb[0].mxu0
        %v6101 = vadd.f32 %v6004, %v6100
        %v6102 = vpop.f32.mrb[0].mxu0
        %6103 = vdwg.mxu0
        %v6152 = vunpack.c.l.b16 %v5667
        %v6153 = vunpack.c.l.b16 %v5668
        %v6154 = vunpack.c.l.b16 %v5669
        %v6155 = vunpack.c.l.b16 %v5670
        %v6156 = vunpack.c.l.b16 %v5671
        %v6157 = vunpack.c.l.b16 %v5672
        %v6158 = vunpack.c.l.b16 %v5673
        %v6159 = vunpack.c.l.b16 %v5674
        %v6160 = vunpack.c.l.b16 %v5675
        %v6161 = vunpack.c.l.b16 %v5676
        %v6162 = vunpack.c.l.b16 %v5677
        %v6163 = vunpack.c.l.b16 %v5678
        %v6164 = vunpack.c.l.b16 %v5679
        %v6165 = vunpack.c.l.b16 %v5680
        %v6166 = vunpack.c.l.b16 %v5681
        %v6167 = vunpack.c.l.b16 %v5682
        %v6168 = vunpack.c.l.b16 %v5683
        %v6169 = vunpack.c.l.b16 %v5684
        %v6170 = vunpack.c.l.b16 %v5685
        %v6171 = vunpack.c.l.b16 %v5686
        %v6172 = vunpack.c.l.b16 %v5687
        %v6173 = vunpack.c.l.b16 %v5688
        %v6174 = vunpack.c.l.b16 %v5689
        %v6175 = vunpack.c.l.b16 %v5690
        %v6176 = vunpack.c.l.b16 %v5691
        %v6177 = vunpack.c.l.b16 %v5692
        %v6178 = vunpack.c.l.b16 %v5693
        %v6179 = vunpack.c.l.b16 %v5694
        %v6180 = vunpack.c.l.b16 %v5695
        %v6181 = vunpack.c.l.b16 %v5696
        %v6182 = vunpack.c.l.b16 %v5697
        %v6183 = vunpack.c.l.b16 %v5698
        %v6184 = vunpack.c.l.b16 %v5699
        %v6185 = vunpack.c.l.b16 %v5700
        %v6186 = vunpack.c.l.b16 %v5701
        %v6187 = vunpack.c.l.b16 %v5702
        %v6188 = vunpack.c.l.b16 %v5703
        %v6189 = vunpack.c.l.b16 %v5704
        %v6190 = vunpack.c.l.b16 %v5705
        %v6191 = vunpack.c.l.b16 %v5706
        %v6192 = vunpack.c.l.b16 %v5707
        %v6193 = vunpack.c.l.b16 %v5708
        %v6194 = vunpack.c.l.b16 %v5709
        %v6195 = vunpack.c.l.b16 %v5710
        %v6196 = vunpack.c.l.b16 %v5711
        %v6197 = vunpack.c.l.b16 %v5712
        %v6198 = vunpack.c.l.b16 %v5713
        %v6199 = vunpack.c.l.b16 %v5714
        %v6200 = vpack.c.b16 %v6153, %v6152
        %v6201 = vpack.c.b16 %v6155, %v6154
        %v6202 = vpack.c.b16 %v6157, %v6156
        %v6203 = vpack.c.b16 %v6159, %v6158
        %v6204 = vpack.c.b16 %v6161, %v6160
        %v6205 = vpack.c.b16 %v6163, %v6162
        %v6206 = vpack.c.b16 %v6165, %v6164
        %v6207 = vpack.c.b16 %v6167, %v6166
        %v6208 = vpack.c.b16 %v6169, %v6168
        %v6209 = vpack.c.b16 %v6171, %v6170
        %v6210 = vpack.c.b16 %v6173, %v6172
        %v6211 = vpack.c.b16 %v6175, %v6174
        %v6212 = vpack.c.b16 %v6177, %v6176
        %v6213 = vpack.c.b16 %v6179, %v6178
        %v6214 = vpack.c.b16 %v6181, %v6180
        %v6215 = vpack.c.b16 %v6183, %v6182
        %v6216 = vpack.c.b16 %v6185, %v6184
        %v6217 = vpack.c.b16 %v6187, %v6186
        %v6218 = vpack.c.b16 %v6189, %v6188
        %v6219 = vpack.c.b16 %v6191, %v6190
        %v6220 = vpack.c.b16 %v6193, %v6192
        %v6221 = vpack.c.b16 %v6195, %v6194
        %v6222 = vpack.c.b16 %v6197, %v6196
        %v6223 = vpack.c.b16 %v6199, %v6198
        %6248 = vmatprep.subr.bf16.mxu0 0
        %6249 = vmatpush1.bf16.msra.mxu0 %v6200
        %6250 = vmatprep.subr.bf16.mxu0 0
        %6251 = vmatpush1.bf16.msra.mxu0 %v6201
        %6252 = vmatprep.subr.bf16.mxu0 0
        %6253 = vmatpush1.bf16.msra.mxu0 %v6202
        %6254 = vmatprep.subr.bf16.mxu0 0
        %6255 = vmatpush1.bf16.msra.mxu0 %v6203
        %6256 = vmatprep.subr.bf16.mxu0 0
        %6257 = vmatpush1.bf16.msra.mxu0 %v6204
        %6258 = vmatprep.subr.bf16.mxu0 0
        %6259 = vmatpush1.bf16.msra.mxu0 %v6205
        %6260 = vmatprep.subr.bf16.mxu0 0
        %6261 = vmatpush1.bf16.msra.mxu0 %v6206
        %6262 = vmatprep.subr.bf16.mxu0 0
        %6263 = vmatpush1.bf16.msra.mxu0 %v6207
        %6264 = vmatprep.subr.bf16.mxu0 0
        %6265 = vmatpush1.bf16.msra.mxu0 %v6208
        %6266 = vmatprep.subr.bf16.mxu0 0
        %6267 = vmatpush1.bf16.msra.mxu0 %v6209
        %6268 = vmatprep.subr.bf16.mxu0 0
        %6269 = vmatpush1.bf16.msra.mxu0 %v6210
        %6270 = vmatprep.subr.bf16.mxu0 0
        %6271 = vmatpush1.bf16.msra.mxu0 %v6211
        %6272 = vmatprep.subr.bf16.mxu0 0
        %6273 = vmatpush1.bf16.msra.mxu0 %v6212
        %6274 = vmatprep.subr.bf16.mxu0 0
        %6275 = vmatpush1.bf16.msra.mxu0 %v6213
        %6276 = vmatprep.subr.bf16.mxu0 0
        %6277 = vmatpush1.bf16.msra.mxu0 %v6214
        %6278 = vmatprep.subr.bf16.mxu0 0
        %6279 = vmatpush1.bf16.msra.mxu0 %v6215
        %6280 = vmatprep.mubr.bf16.mxu0 %v5644
        %6281 = vmatmul.mubr.bf16.gmra.mrb[0].mxu0 %v5643
        %v6282 = vpop.f32.mrb[0].mxu0
        %v6283 = vadd.f32 %v6042, %v6282
        %v6284 = vpop.f32.mrb[0].mxu0
        %v6285 = vpop.f32.mrb[0].mxu0
        %v6286 = vadd.f32 %v6045, %v6285
        %v6287 = vpop.f32.mrb[0].mxu0
        %6288 = vmatprep.mubr.bf16.mxu0 %v5647
        %6289 = vmatmul.mubr.bf16.gmra.mrb[0].mxu0 %v5646
        %v6290 = vpop.f32.mrb[0].mxu0
        %v6291 = vadd.f32 %v6050, %v6290
        %v6292 = vpop.f32.mrb[0].mxu0
        %v6293 = vpop.f32.mrb[0].mxu0
        %v6294 = vadd.f32 %v6053, %v6293
        %v6295 = vpop.f32.mrb[0].mxu0
        %6296 = vmatprep.mubr.bf16.mxu0 %v5650
        %6297 = vmatmul.mubr.bf16.gmra.mrb[0].mxu0 %v5649
        %v6298 = vpop.f32.mrb[0].mxu0
        %v6299 = vadd.f32 %v6058, %v6298
        %v6300 = vpop.f32.mrb[0].mxu0
        %v6301 = vpop.f32.mrb[0].mxu0
        %v6302 = vadd.f32 %v6061, %v6301
        %v6303 = vpop.f32.mrb[0].mxu0
        %6304 = vmatprep.mubr.bf16.mxu0 %v5653
        %6305 = vmatmul.mubr.bf16.gmra.mrb[0].mxu0 %v5652
        %v6306 = vpop.f32.mrb[0].mxu0
        %v6307 = vadd.f32 %v6066, %v6306
        %v6308 = vpop.f32.mrb[0].mxu0
        %v6309 = vpop.f32.mrb[0].mxu0
        %v6310 = vadd.f32 %v6069, %v6309
        %v6311 = vpop.f32.mrb[0].mxu0
        %6312 = vmatprep.mubr.bf16.mxu0 %v5656
        %6313 = vmatmul.mubr.bf16.gmra.mrb[0].mxu0 %v5655
        %v6314 = vpop.f32.mrb[0].mxu0
        %v6315 = vadd.f32 %v6074, %v6314
        %v6316 = vpop.f32.mrb[0].mxu0
        %v6317 = vpop.f32.mrb[0].mxu0
        %v6318 = vadd.f32 %v6077, %v6317
        %v6319 = vpop.f32.mrb[0].mxu0
        %6320 = vmatprep.mubr.bf16.mxu0 %v5659
        %6321 = vmatmul.mubr.bf16.gmra.mrb[0].mxu0 %v5658
        %v6322 = vpop.f32.mrb[0].mxu0
        %v6323 = vadd.f32 %v6082, %v6322
        %v6324 = vpop.f32.mrb[0].mxu0
        %v6325 = vpop.f32.mrb[0].mxu0
        %v6326 = vadd.f32 %v6085, %v6325
        %v6327 = vpop.f32.mrb[0].mxu0
        %6328 = vmatprep.mubr.bf16.mxu0 %v5662
        %6329 = vmatmul.mubr.bf16.gmra.mrb[0].mxu0 %v5661
        %v6330 = vpop.f32.mrb[0].mxu0
        %v6331 = vadd.f32 %v6090, %v6330
        %v6332 = vpop.f32.mrb[0].mxu0
        %v6333 = vpop.f32.mrb[0].mxu0
        %v6334 = vadd.f32 %v6093, %v6333
        %v6335 = vpop.f32.mrb[0].mxu0
        %6336 = vmatprep.mubr.bf16.mxu0 %v5665
        %6337 = vmatmul.mubr.bf16.gmra.mrb[0].mxu0 %v5664
        %v6338 = vpop.f32.mrb[0].mxu0
        %v6339 = vadd.f32 %v6098, %v6338
        %v6340 = vpop.f32.mrb[0].mxu0
        %v6341 = vpop.f32.mrb[0].mxu0
        %v6342 = vadd.f32 %v6101, %v6341
        %v6343 = vpop.f32.mrb[0].mxu0
        %6344 = vdwg.mxu0
        %6345 = vmatprep.subr.bf16.mxu0 0
        %6346 = vmatpush1.bf16.msra.mxu0 %v6216
        %6347 = vmatprep.subr.bf16.mxu0 0
        %6348 = vmatpush1.bf16.msra.mxu0 %v6217
        %6349 = vmatprep.subr.bf16.mxu0 0
        %6350 = vmatpush1.bf16.msra.mxu0 %v6218
        %6351 = vmatprep.subr.bf16.mxu0 0
        %6352 = vmatpush1.bf16.msra.mxu0 %v6219
        %6353 = vmatprep.subr.bf16.mxu0 0
        %6354 = vmatpush1.bf16.msra.mxu0 %v6220
        %6355 = vmatprep.subr.bf16.mxu0 0
        %6356 = vmatpush1.bf16.msra.mxu0 %v6221
        %6357 = vmatprep.subr.bf16.mxu0 0
        %6358 = vmatpush1.bf16.msra.mxu0 %v6222
        %6359 = vmatprep.subr.bf16.mxu0 0
        %6360 = vmatpush1.bf16.msra.mxu0 %v6223
        %6361 = vmatprep.subr.bf16.mxu0 0
        %6362 = vmatpush1.bf16.msra.mxu0 0
        %6363 = vmatprep.subr.bf16.mxu0 0
        %6364 = vmatpush1.bf16.msra.mxu0 0
        %6365 = vmatprep.subr.bf16.mxu0 0
        %6366 = vmatpush1.bf16.msra.mxu0 0
        %6367 = vmatprep.subr.bf16.mxu0 0
        %6368 = vmatpush1.bf16.msra.mxu0 0
        %6369 = vmatprep.subr.bf16.mxu0 0
        %6370 = vmatpush1.bf16.msra.mxu0 0
        %6371 = vmatprep.subr.bf16.mxu0 0
        %6372 = vmatpush1.bf16.msra.mxu0 0
        %6373 = vmatprep.subr.bf16.mxu0 0
        %6374 = vmatpush1.bf16.msra.mxu0 0
        %6375 = vmatprep.subr.bf16.mxu0 0
        %6376 = vmatpush1.bf16.msra.mxu0 0
        %6377 = vmatprep.mubr.bf16.mxu0 0
        %6378 = vmatmul.mubr.bf16.gmra.mrb[0].mxu0 %v5645
        %v6379 = vpop.f32.mrb[0].mxu0
        %v6380 = vadd.f32 %v6283, %v6379
        %v6381 = vpop.f32.mrb[0].mxu0
        %v6382 = vpop.f32.mrb[0].mxu0
        %v6383 = vadd.f32 %v6286, %v6382
        %v6384 = vpop.f32.mrb[0].mxu0
        %6385 = vmatprep.mubr.bf16.mxu0 0
        %6386 = vmatmul.mubr.bf16.gmra.mrb[0].mxu0 %v5648
        %v6387 = vpop.f32.mrb[0].mxu0
        %v6388 = vadd.f32 %v6291, %v6387
        %v6389 = vpop.f32.mrb[0].mxu0
        %v6390 = vpop.f32.mrb[0].mxu0
        %v6391 = vadd.f32 %v6294, %v6390
        %v6392 = vpop.f32.mrb[0].mxu0
        %6393 = vmatprep.mubr.bf16.mxu0 0
        %6394 = vmatmul.mubr.bf16.gmra.mrb[0].mxu0 %v5651
        %v6395 = vpop.f32.mrb[0].mxu0
        %v6396 = vadd.f32 %v6299, %v6395
        %v6397 = vpop.f32.mrb[0].mxu0
        %v6398 = vpop.f32.mrb[0].mxu0
        %v6399 = vadd.f32 %v6302, %v6398
        %v6400 = vpop.f32.mrb[0].mxu0
        %6401 = vmatprep.mubr.bf16.mxu0 0
        %6402 = vmatmul.mubr.bf16.gmra.mrb[0].mxu0 %v5654
        %v6403 = vpop.f32.mrb[0].mxu0
        %v6404 = vadd.f32 %v6307, %v6403
        %v6405 = vpop.f32.mrb[0].mxu0
        %v6406 = vpop.f32.mrb[0].mxu0
        %v6407 = vadd.f32 %v6310, %v6406
        %v6408 = vpop.f32.mrb[0].mxu0
        %6409 = vmatprep.mubr.bf16.mxu0 0
        %6410 = vmatmul.mubr.bf16.gmra.mrb[0].mxu0 %v5657
        %v6411 = vpop.f32.mrb[0].mxu0
        %v6412 = vadd.f32 %v6315, %v6411
        %v6413 = vpop.f32.mrb[0].mxu0
        %v6414 = vpop.f32.mrb[0].mxu0
        %v6415 = vadd.f32 %v6318, %v6414
        %v6416 = vpop.f32.mrb[0].mxu0
        %6417 = vmatprep.mubr.bf16.mxu0 0
        %6418 = vmatmul.mubr.bf16.gmra.mrb[0].mxu0 %v5660
        %v6419 = vpop.f32.mrb[0].mxu0
        %v6420 = vadd.f32 %v6323, %v6419
        %v6421 = vpop.f32.mrb[0].mxu0
        %v6422 = vpop.f32.mrb[0].mxu0
        %v6423 = vadd.f32 %v6326, %v6422
        %v6424 = vpop.f32.mrb[0].mxu0
        %6425 = vmatprep.mubr.bf16.mxu0 0
        %6426 = vmatmul.mubr.bf16.gmra.mrb[0].mxu0 %v5663
        %v6427 = vpop.f32.mrb[0].mxu0
        %v6428 = vadd.f32 %v6331, %v6427
        %v6429 = vpop.f32.mrb[0].mxu0
        %v6430 = vpop.f32.mrb[0].mxu0
        %v6431 = vadd.f32 %v6334, %v6430
        %v6432 = vpop.f32.mrb[0].mxu0
        %6433 = vmatprep.mubr.bf16.mxu0 0
        %6434 = vmatmul.mubr.bf16.gmra.mrb[0].mxu0 %v5666
        %v6435 = vpop.f32.mrb[0].mxu0
        %v6436 = vadd.f32 %v6339, %v6435
        %v6437 = vpop.f32.mrb[0].mxu0
        %v6438 = vpop.f32.mrb[0].mxu0
        %v6439 = vadd.f32 %v6342, %v6438
        %v6440 = vpop.f32.mrb[0].mxu0
        %6441 = vdwg.mxu0
        %v6442 = vld [vmem:[#allocation2 + $0xf0] sm:$0xff]
        %v6443 = vld [vmem:[#allocation2 + $0xf8] sm:$0xff]
        %v6444 = vld [vmem:[#allocation2 + $0x100] sm:$0xff]
        %v6445 = vld [vmem:[#allocation2 + $0x108] sm:$0xff]
        %v6446 = vld [vmem:[#allocation2 + $0x110] sm:$0xff]
        %v6447 = vld [vmem:[#allocation2 + $0x118] sm:$0xff]
        %v6448 = vld [vmem:[#allocation2 + $0x120] sm:$0xff]
        %v6449 = vld [vmem:[#allocation2 + $0x128] sm:$0xff]
        %v6450 = vld [vmem:[#allocation2 + $0x130] sm:$0xff]
        %v6451 = vld [vmem:[#allocation2 + $0x138] sm:$0xff]
        %v6452 = vld [vmem:[#allocation2 + $0x140] sm:$0xff]
        %v6453 = vld [vmem:[#allocation2 + $0x148] sm:$0xff]
        %v6454 = vld [vmem:[#allocation2 + $0x150] sm:$0xff]
        %v6455 = vld [vmem:[#allocation2 + $0x158] sm:$0xff]
        %v6456 = vld [vmem:[#allocation2 + $0x160] sm:$0xff]
        %v6457 = vld [vmem:[#allocation2 + $0x168] sm:$0xff]
        %v6458 = vld [vmem:[#allocation2 + $0x170] sm:$0xff]
        %v6459 = vld [vmem:[#allocation2 + $0x178] sm:$0xff]
        %v6460 = vld [vmem:[#allocation2 + $0x180] sm:$0xff]
        %v6461 = vld [vmem:[#allocation2 + $0x188] sm:$0xff]
        %v6462 = vld [vmem:[#allocation2 + $0x190] sm:$0xff]
        %v6463 = vld [vmem:[#allocation2 + $0x198] sm:$0xff]
        %v6464 = vld [vmem:[#allocation2 + $0x1a0] sm:$0xff]
        %v6465 = vld [vmem:[#allocation2 + $0x1a8] sm:$0xff]
        %v6466 = vld [vmem:[%s5116] sm:$0xf]
        %v6467 = vld [vmem:[%s5116 + $0x4] sm:$0xf]
        %v6468 = vld [vmem:[%s5116 + $0x8] sm:$0xf]
        %v6469 = vld [vmem:[%s5116 + $0xc] sm:$0xf]
        %v6470 = vld [vmem:[%s5116 + $0x10] sm:$0xf]
        %v6471 = vld [vmem:[%s5116 + $0x14] sm:$0xf]
        %v6472 = vld [vmem:[%s5116 + $0x18] sm:$0xf]
        %v6473 = vld [vmem:[%s5116 + $0x1c] sm:$0xf]
        %v6474 = vld [vmem:[%s5116 + $0x20] sm:$0xf]
        %v6475 = vld [vmem:[%s5116 + $0x24] sm:$0xf]
        %v6476 = vld [vmem:[%s5116 + $0x28] sm:$0xf]
        %v6477 = vld [vmem:[%s5116 + $0x2c] sm:$0xf]
        %v6478 = vld [vmem:[%s5116 + $0x30] sm:$0xf]
        %v6479 = vld [vmem:[%s5116 + $0x34] sm:$0xf]
        %v6480 = vld [vmem:[%s5116 + $0x38] sm:$0xf]
        %v6481 = vld [vmem:[%s5116 + $0x3c] sm:$0xf]
        %v6482 = vld [vmem:[%s5116 + $0x40] sm:$0xf]
        %v6483 = vld [vmem:[%s5116 + $0x44] sm:$0xf]
        %v6484 = vld [vmem:[%s5116 + $0x48] sm:$0xf]
        %v6485 = vld [vmem:[%s5116 + $0x4c] sm:$0xf]
        %v6486 = vld [vmem:[%s5116 + $0x50] sm:$0xf]
        %v6487 = vld [vmem:[%s5116 + $0x54] sm:$0xf]
        %v6488 = vld [vmem:[%s5116 + $0x58] sm:$0xf]
        %v6489 = vld [vmem:[%s5116 + $0x5c] sm:$0xf]
        %v6490 = vld [vmem:[%s5116 + $0x60] sm:$0xf]
        %v6491 = vld [vmem:[%s5116 + $0x64] sm:$0xf]
        %v6492 = vld [vmem:[%s5116 + $0x68] sm:$0xf]
        %v6493 = vld [vmem:[%s5116 + $0x6c] sm:$0xf]
        %v6494 = vld [vmem:[%s5116 + $0x70] sm:$0xf]
        %v6495 = vld [vmem:[%s5116 + $0x74] sm:$0xf]
        %v6496 = vld [vmem:[%s5116 + $0x78] sm:$0xf]
        %v6497 = vld [vmem:[%s5116 + $0x7c] sm:$0xf]
        %v6498 = vld [vmem:[%s5116 + $0x80] sm:$0xf]
        %v6499 = vld [vmem:[%s5116 + $0x84] sm:$0xf]
        %v6500 = vld [vmem:[%s5116 + $0x88] sm:$0xf]
        %v6501 = vld [vmem:[%s5116 + $0x8c] sm:$0xf]
        %v6502 = vld [vmem:[%s5116 + $0x90] sm:$0xf]
        %v6503 = vld [vmem:[%s5116 + $0x94] sm:$0xf]
        %v6504 = vld [vmem:[%s5116 + $0x98] sm:$0xf]
        %v6505 = vld [vmem:[%s5116 + $0x9c] sm:$0xf]
        %v6506 = vld [vmem:[%s5116 + $0xa0] sm:$0xf]
        %v6507 = vld [vmem:[%s5116 + $0xa4] sm:$0xf]
        %v6508 = vld [vmem:[%s5116 + $0xa8] sm:$0xf]
        %v6509 = vld [vmem:[%s5116 + $0xac] sm:$0xf]
        %v6510 = vld [vmem:[%s5116 + $0xb0] sm:$0xf]
        %v6511 = vld [vmem:[%s5116 + $0xb4] sm:$0xf]
        %v6512 = vld [vmem:[%s5116 + $0xb8] sm:$0xf]
        %v6513 = vld [vmem:[%s5116 + $0xbc] sm:$0xf]
        %v6562 = vunpack.c.l.b16 %v6466
        %v6563 = vunpack.c.l.b16 %v6467
        %v6564 = vunpack.c.l.b16 %v6468
        %v6565 = vunpack.c.l.b16 %v6469
        %v6566 = vunpack.c.l.b16 %v6470
        %v6567 = vunpack.c.l.b16 %v6471
        %v6568 = vunpack.c.l.b16 %v6472
        %v6569 = vunpack.c.l.b16 %v6473
        %v6570 = vunpack.c.l.b16 %v6474
        %v6571 = vunpack.c.l.b16 %v6475
        %v6572 = vunpack.c.l.b16 %v6476
        %v6573 = vunpack.c.l.b16 %v6477
        %v6574 = vunpack.c.l.b16 %v6478
        %v6575 = vunpack.c.l.b16 %v6479
        %v6576 = vunpack.c.l.b16 %v6480
        %v6577 = vunpack.c.l.b16 %v6481
        %v6578 = vunpack.c.l.b16 %v6482
        %v6579 = vunpack.c.l.b16 %v6483
        %v6580 = vunpack.c.l.b16 %v6484
        %v6581 = vunpack.c.l.b16 %v6485
        %v6582 = vunpack.c.l.b16 %v6486
        %v6583 = vunpack.c.l.b16 %v6487
        %v6584 = vunpack.c.l.b16 %v6488
        %v6585 = vunpack.c.l.b16 %v6489
        %v6586 = vunpack.c.l.b16 %v6490
        %v6587 = vunpack.c.l.b16 %v6491
        %v6588 = vunpack.c.l.b16 %v6492
        %v6589 = vunpack.c.l.b16 %v6493
        %v6590 = vunpack.c.l.b16 %v6494
        %v6591 = vunpack.c.l.b16 %v6495
        %v6592 = vunpack.c.l.b16 %v6496
        %v6593 = vunpack.c.l.b16 %v6497
        %v6594 = vunpack.c.l.b16 %v6498
        %v6595 = vunpack.c.l.b16 %v6499
        %v6596 = vunpack.c.l.b16 %v6500
        %v6597 = vunpack.c.l.b16 %v6501
        %v6598 = vunpack.c.l.b16 %v6502
        %v6599 = vunpack.c.l.b16 %v6503
        %v6600 = vunpack.c.l.b16 %v6504
        %v6601 = vunpack.c.l.b16 %v6505
        %v6602 = vunpack.c.l.b16 %v6506
        %v6603 = vunpack.c.l.b16 %v6507
        %v6604 = vunpack.c.l.b16 %v6508
        %v6605 = vunpack.c.l.b16 %v6509
        %v6606 = vunpack.c.l.b16 %v6510
        %v6607 = vunpack.c.l.b16 %v6511
        %v6608 = vunpack.c.l.b16 %v6512
        %v6609 = vunpack.c.l.b16 %v6513
        %v6610 = vpack.c.b16 %v6563, %v6562
        %v6611 = vpack.c.b16 %v6565, %v6564
        %v6612 = vpack.c.b16 %v6567, %v6566
        %v6613 = vpack.c.b16 %v6569, %v6568
        %v6614 = vpack.c.b16 %v6571, %v6570
        %v6615 = vpack.c.b16 %v6573, %v6572
        %v6616 = vpack.c.b16 %v6575, %v6574
        %v6617 = vpack.c.b16 %v6577, %v6576
        %v6618 = vpack.c.b16 %v6579, %v6578
        %v6619 = vpack.c.b16 %v6581, %v6580
        %v6620 = vpack.c.b16 %v6583, %v6582
        %v6621 = vpack.c.b16 %v6585, %v6584
        %v6622 = vpack.c.b16 %v6587, %v6586
        %v6623 = vpack.c.b16 %v6589, %v6588
        %v6624 = vpack.c.b16 %v6591, %v6590
        %v6625 = vpack.c.b16 %v6593, %v6592
        %v6626 = vpack.c.b16 %v6595, %v6594
        %v6627 = vpack.c.b16 %v6597, %v6596
        %v6628 = vpack.c.b16 %v6599, %v6598
        %v6629 = vpack.c.b16 %v6601, %v6600
        %v6630 = vpack.c.b16 %v6603, %v6602
        %v6631 = vpack.c.b16 %v6605, %v6604
        %v6632 = vpack.c.b16 %v6607, %v6606
        %v6633 = vpack.c.b16 %v6609, %v6608
        %6658 = vmatprep.subr.bf16.mxu0 0
        %6659 = vmatpush1.bf16.msra.mxu0 %v6610
        %6660 = vmatprep.subr.bf16.mxu0 0
        %6661 = vmatpush1.bf16.msra.mxu0 %v6611
        %6662 = vmatprep.subr.bf16.mxu0 0
        %6663 = vmatpush1.bf16.msra.mxu0 %v6612
        %6664 = vmatprep.subr.bf16.mxu0 0
        %6665 = vmatpush1.bf16.msra.mxu0 %v6613
        %6666 = vmatprep.subr.bf16.mxu0 0
        %6667 = vmatpush1.bf16.msra.mxu0 %v6614
        %6668 = vmatprep.subr.bf16.mxu0 0
        %6669 = vmatpush1.bf16.msra.mxu0 %v6615
        %6670 = vmatprep.subr.bf16.mxu0 0
        %6671 = vmatpush1.bf16.msra.mxu0 %v6616
        %6672 = vmatprep.subr.bf16.mxu0 0
        %6673 = vmatpush1.bf16.msra.mxu0 %v6617
        %6674 = vmatprep.subr.bf16.mxu0 0
        %6675 = vmatpush1.bf16.msra.mxu0 %v6618
        %6676 = vmatprep.subr.bf16.mxu0 0
        %6677 = vmatpush1.bf16.msra.mxu0 %v6619
        %6678 = vmatprep.subr.bf16.mxu0 0
        %6679 = vmatpush1.bf16.msra.mxu0 %v6620
        %6680 = vmatprep.subr.bf16.mxu0 0
        %6681 = vmatpush1.bf16.msra.mxu0 %v6621
        %6682 = vmatprep.subr.bf16.mxu0 0
        %6683 = vmatpush1.bf16.msra.mxu0 %v6622
        %6684 = vmatprep.subr.bf16.mxu0 0
        %6685 = vmatpush1.bf16.msra.mxu0 %v6623
        %6686 = vmatprep.subr.bf16.mxu0 0
        %6687 = vmatpush1.bf16.msra.mxu0 %v6624
        %6688 = vmatprep.subr.bf16.mxu0 0
        %6689 = vmatpush1.bf16.msra.mxu0 %v6625
        %6690 = vmatprep.mubr.bf16.mxu0 %v6443
        %6691 = vmatmul.mubr.bf16.gmra.mrb[0].mxu0 %v6442
        %v6692 = vpop.f32.mrb[0].mxu0
        %v6693 = vadd.f32 0.0, %v6692
        %v6694 = vpop.f32.mrb[0].mxu0
        %v6695 = vpop.f32.mrb[0].mxu0
        %v6696 = vadd.f32 0.0, %v6695
        %v6697 = vpop.f32.mrb[0].mxu0
        %6698 = vmatprep.mubr.bf16.mxu0 %v6446
        %6699 = vmatmul.mubr.bf16.gmra.mrb[0].mxu0 %v6445
        %v6700 = vpop.f32.mrb[0].mxu0
        %v6701 = vadd.f32 0.0, %v6700
        %v6702 = vpop.f32.mrb[0].mxu0
        %v6703 = vpop.f32.mrb[0].mxu0
        %v6704 = vadd.f32 0.0, %v6703
        %v6705 = vpop.f32.mrb[0].mxu0
        %6706 = vmatprep.mubr.bf16.mxu0 %v6449
        %6707 = vmatmul.mubr.bf16.gmra.mrb[0].mxu0 %v6448
        %v6708 = vpop.f32.mrb[0].mxu0
        %v6709 = vadd.f32 0.0, %v6708
        %v6710 = vpop.f32.mrb[0].mxu0
        %v6711 = vpop.f32.mrb[0].mxu0
        %v6712 = vadd.f32 0.0, %v6711
        %v6713 = vpop.f32.mrb[0].mxu0
        %6714 = vmatprep.mubr.bf16.mxu0 %v6452
        %6715 = vmatmul.mubr.bf16.gmra.mrb[0].mxu0 %v6451
        %v6716 = vpop.f32.mrb[0].mxu0
        %v6717 = vadd.f32 0.0, %v6716
        %v6718 = vpop.f32.mrb[0].mxu0
        %v6719 = vpop.f32.mrb[0].mxu0
        %v6720 = vadd.f32 0.0, %v6719
        %v6721 = vpop.f32.mrb[0].mxu0
        %6722 = vmatprep.mubr.bf16.mxu0 %v6455
        %6723 = vmatmul.mubr.bf16.gmra.mrb[0].mxu0 %v6454
        %v6724 = vpop.f32.mrb[0].mxu0
        %v6725 = vadd.f32 0.0, %v6724
        %v6726 = vpop.f32.mrb[0].mxu0
        %v6727 = vpop.f32.mrb[0].mxu0
        %v6728 = vadd.f32 0.0, %v6727
        %v6729 = vpop.f32.mrb[0].mxu0
        %6730 = vmatprep.mubr.bf16.mxu0 %v6458
        %6731 = vmatmul.mubr.bf16.gmra.mrb[0].mxu0 %v6457
        %v6732 = vpop.f32.mrb[0].mxu0
        %v6733 = vadd.f32 0.0, %v6732
        %v6734 = vpop.f32.mrb[0].mxu0
        %v6735 = vpop.f32.mrb[0].mxu0
        %v6736 = vadd.f32 0.0, %v6735
        %v6737 = vpop.f32.mrb[0].mxu0
        %6738 = vmatprep.mubr.bf16.mxu0 %v6461
        %6739 = vmatmul.mubr.bf16.gmra.mrb[0].mxu0 %v6460
        %v6740 = vpop.f32.mrb[0].mxu0
        %v6741 = vadd.f32 0.0, %v6740
        %v6742 = vpop.f32.mrb[0].mxu0
        %v6743 = vpop.f32.mrb[0].mxu0
        %v6744 = vadd.f32 0.0, %v6743
        %v6745 = vpop.f32.mrb[0].mxu0
        %6746 = vmatprep.mubr.bf16.mxu0 %v6464
        %6747 = vmatmul.mubr.bf16.gmra.mrb[0].mxu0 %v6463
        %v6748 = vpop.f32.mrb[0].mxu0
        %v6749 = vadd.f32 0.0, %v6748
        %v6750 = vpop.f32.mrb[0].mxu0
        %v6751 = vpop.f32.mrb[0].mxu0
        %v6752 = vadd.f32 0.0, %v6751
        %v6753 = vpop.f32.mrb[0].mxu0
        %6754 = vdwg.mxu0
        %6755 = vmatprep.subr.bf16.mxu0 0
        %6756 = vmatpush1.bf16.msra.mxu0 %v6626
        %6757 = vmatprep.subr.bf16.mxu0 0
        %6758 = vmatpush1.bf16.msra.mxu0 %v6627
        %6759 = vmatprep.subr.bf16.mxu0 0
        %6760 = vmatpush1.bf16.msra.mxu0 %v6628
        %6761 = vmatprep.subr.bf16.mxu0 0
        %6762 = vmatpush1.bf16.msra.mxu0 %v6629
        %6763 = vmatprep.subr.bf16.mxu0 0
        %6764 = vmatpush1.bf16.msra.mxu0 %v6630
        %6765 = vmatprep.subr.bf16.mxu0 0
        %6766 = vmatpush1.bf16.msra.mxu0 %v6631
        %6767 = vmatprep.subr.bf16.mxu0 0
        %6768 = vmatpush1.bf16.msra.mxu0 %v6632
        %6769 = vmatprep.subr.bf16.mxu0 0
        %6770 = vmatpush1.bf16.msra.mxu0 %v6633
        %6771 = vmatprep.subr.bf16.mxu0 0
        %6772 = vmatpush1.bf16.msra.mxu0 0
        %6773 = vmatprep.subr.bf16.mxu0 0
        %6774 = vmatpush1.bf16.msra.mxu0 0
        %6775 = vmatprep.subr.bf16.mxu0 0
        %6776 = vmatpush1.bf16.msra.mxu0 0
        %6777 = vmatprep.subr.bf16.mxu0 0
        %6778 = vmatpush1.bf16.msra.mxu0 0
        %6779 = vmatprep.subr.bf16.mxu0 0
        %6780 = vmatpush1.bf16.msra.mxu0 0
        %6781 = vmatprep.subr.bf16.mxu0 0
        %6782 = vmatpush1.bf16.msra.mxu0 0
        %6783 = vmatprep.subr.bf16.mxu0 0
        %6784 = vmatpush1.bf16.msra.mxu0 0
        %6785 = vmatprep.subr.bf16.mxu0 0
        %6786 = vmatpush1.bf16.msra.mxu0 0
        %6787 = vmatprep.mubr.bf16.mxu0 0
        %6788 = vmatmul.mubr.bf16.gmra.mrb[0].mxu0 %v6444
        %v6789 = vpop.f32.mrb[0].mxu0
        %v6790 = vadd.f32 %v6693, %v6789
        %v6791 = vpop.f32.mrb[0].mxu0
        %v6792 = vpop.f32.mrb[0].mxu0
        %v6793 = vadd.f32 %v6696, %v6792
        %v6794 = vpop.f32.mrb[0].mxu0
        %6795 = vmatprep.mubr.bf16.mxu0 0
        %6796 = vmatmul.mubr.bf16.gmra.mrb[0].mxu0 %v6447
        %v6797 = vpop.f32.mrb[0].mxu0
        %v6798 = vadd.f32 %v6701, %v6797
        %v6799 = vpop.f32.mrb[0].mxu0
        %v6800 = vpop.f32.mrb[0].mxu0
        %v6801 = vadd.f32 %v6704, %v6800
        %v6802 = vpop.f32.mrb[0].mxu0
        %6803 = vmatprep.mubr.bf16.mxu0 0
        %6804 = vmatmul.mubr.bf16.gmra.mrb[0].mxu0 %v6450
        %v6805 = vpop.f32.mrb[0].mxu0
        %v6806 = vadd.f32 %v6709, %v6805
        %v6807 = vpop.f32.mrb[0].mxu0
        %v6808 = vpop.f32.mrb[0].mxu0
        %v6809 = vadd.f32 %v6712, %v6808
        %v6810 = vpop.f32.mrb[0].mxu0
        %6811 = vmatprep.mubr.bf16.mxu0 0
        %6812 = vmatmul.mubr.bf16.gmra.mrb[0].mxu0 %v6453
        %v6813 = vpop.f32.mrb[0].mxu0
        %v6814 = vadd.f32 %v6717, %v6813
        %v6815 = vpop.f32.mrb[0].mxu0
        %v6816 = vpop.f32.mrb[0].mxu0
        %v6817 = vadd.f32 %v6720, %v6816
        %v6818 = vpop.f32.mrb[0].mxu0
        %6819 = vmatprep.mubr.bf16.mxu0 0
        %6820 = vmatmul.mubr.bf16.gmra.mrb[0].mxu0 %v6456
        %v6821 = vpop.f32.mrb[0].mxu0
        %v6822 = vadd.f32 %v6725, %v6821
        %v6823 = vpop.f32.mrb[0].mxu0
        %v6824 = vpop.f32.mrb[0].mxu0
        %v6825 = vadd.f32 %v6728, %v6824
        %v6826 = vpop.f32.mrb[0].mxu0
        %6827 = vmatprep.mubr.bf16.mxu0 0
        %6828 = vmatmul.mubr.bf16.gmra.mrb[0].mxu0 %v6459
        %v6829 = vpop.f32.mrb[0].mxu0
        %v6830 = vadd.f32 %v6733, %v6829
        %v6831 = vpop.f32.mrb[0].mxu0
        %v6832 = vpop.f32.mrb[0].mxu0
        %v6833 = vadd.f32 %v6736, %v6832
        %v6834 = vpop.f32.mrb[0].mxu0
        %6835 = vmatprep.mubr.bf16.mxu0 0
        %6836 = vmatmul.mubr.bf16.gmra.mrb[0].mxu0 %v6462
        %v6837 = vpop.f32.mrb[0].mxu0
        %v6838 = vadd.f32 %v6741, %v6837
        %v6839 = vpop.f32.mrb[0].mxu0
        %v6840 = vpop.f32.mrb[0].mxu0
        %v6841 = vadd.f32 %v6744, %v6840
        %v6842 = vpop.f32.mrb[0].mxu0
        %6843 = vmatprep.mubr.bf16.mxu0 0
        %6844 = vmatmul.mubr.bf16.gmra.mrb[0].mxu0 %v6465
        %v6845 = vpop.f32.mrb[0].mxu0
        %v6846 = vadd.f32 %v6749, %v6845
        %v6847 = vpop.f32.mrb[0].mxu0
        %v6848 = vpop.f32.mrb[0].mxu0
        %v6849 = vadd.f32 %v6752, %v6848
        %v6850 = vpop.f32.mrb[0].mxu0
        %6851 = vdwg.mxu0
        %v6852 = vadd.f32 %v6380, %v6790
        %v6853 = vadd.f32 %v6383, %v6793
        %v6854 = vadd.f32 %v6388, %v6798
        %v6855 = vadd.f32 %v6391, %v6801
        %v6856 = vadd.f32 %v6396, %v6806
        %v6857 = vadd.f32 %v6399, %v6809
        %v6858 = vadd.f32 %v6404, %v6814
        %v6859 = vadd.f32 %v6407, %v6817
        %v6860 = vadd.f32 %v6412, %v6822
        %v6861 = vadd.f32 %v6415, %v6825
        %v6862 = vadd.f32 %v6420, %v6830
        %v6863 = vadd.f32 %v6423, %v6833
        %v6864 = vadd.f32 %v6428, %v6838
        %v6865 = vadd.f32 %v6431, %v6841
        %v6866 = vadd.f32 %v6436, %v6846
        %v6867 = vadd.f32 %v6439, %v6849
        %v6868 = vld [vmem:[%s287 + $0x40] sm:$0xf]
        %v6869 = vld [vmem:[%s287 + $0x44] sm:$0xf]
        %v6870 = vld [vmem:[%s287 + $0x48] sm:$0xf]
        %v6871 = vld [vmem:[%s287 + $0x4c] sm:$0xf]
        %v6872 = vld [vmem:[%s287 + $0x50] sm:$0xf]
        %v6873 = vld [vmem:[%s287 + $0x54] sm:$0xf]
        %v6874 = vld [vmem:[%s287 + $0x58] sm:$0xf]
        %v6875 = vld [vmem:[%s287 + $0x5c] sm:$0xf]
        %v6876 = vld [vmem:[%s287 + $0x60] sm:$0xf]
        %v6877 = vld [vmem:[%s287 + $0x64] sm:$0xf]
        %v6878 = vld [vmem:[%s287 + $0x68] sm:$0xf]
        %v6879 = vld [vmem:[%s287 + $0x6c] sm:$0xf]
        %v6880 = vld [vmem:[%s287 + $0x70] sm:$0xf]
        %v6881 = vld [vmem:[%s287 + $0x74] sm:$0xf]
        %v6882 = vld [vmem:[%s287 + $0x78] sm:$0xf]
        %v6883 = vld [vmem:[%s287 + $0x7c] sm:$0xf]
        %v6884 = vunpack.c.l.bf16 %v6868
        %v6885 = vunpack.c.l.bf16 %v6869
        %v6886 = vunpack.c.l.bf16 %v6870
        %v6887 = vunpack.c.l.bf16 %v6871
        %v6888 = vunpack.c.l.bf16 %v6872
        %v6889 = vunpack.c.l.bf16 %v6873
        %v6890 = vunpack.c.l.bf16 %v6874
        %v6891 = vunpack.c.l.bf16 %v6875
        %v6892 = vunpack.c.l.bf16 %v6876
        %v6893 = vunpack.c.l.bf16 %v6877
        %v6894 = vunpack.c.l.bf16 %v6878
        %v6895 = vunpack.c.l.bf16 %v6879
        %v6896 = vunpack.c.l.bf16 %v6880
        %v6897 = vunpack.c.l.bf16 %v6881
        %v6898 = vunpack.c.l.bf16 %v6882
        %v6899 = vunpack.c.l.bf16 %v6883
        %v6900 = vmul.f32 %v6852, %v5555
        %v6901 = vmul.f32 %v6853, %v5555
        %v6902 = vmul.f32 %v6854, %v5555
        %v6903 = vmul.f32 %v6855, %v5555
        %v6904 = vmul.f32 %v6856, %v5555
        %v6905 = vmul.f32 %v6857, %v5555
        %v6906 = vmul.f32 %v6858, %v5555
        %v6907 = vmul.f32 %v6859, %v5555
        %v6908 = vmul.f32 %v6860, %v5555
        %v6909 = vmul.f32 %v6861, %v5555
        %v6910 = vmul.f32 %v6862, %v5555
        %v6911 = vmul.f32 %v6863, %v5555
        %v6912 = vmul.f32 %v6864, %v5555
        %v6913 = vmul.f32 %v6865, %v5555
        %v6914 = vmul.f32 %v6866, %v5555
        %v6915 = vmul.f32 %v6867, %v5555
        %v6916 = vadd.f32 %v6900, %v5577
        %v6917 = vadd.f32 %v6901, %v5577
        %v6918 = vadd.f32 %v6902, %v5577
        %v6919 = vadd.f32 %v6903, %v5577
        %v6920 = vadd.f32 %v6904, %v5577
        %v6921 = vadd.f32 %v6905, %v5577
        %v6922 = vadd.f32 %v6906, %v5577
        %v6923 = vadd.f32 %v6907, %v5577
        %v6924 = vadd.f32 %v6908, %v5577
        %v6925 = vadd.f32 %v6909, %v5577
        %v6926 = vadd.f32 %v6910, %v5577
        %v6927 = vadd.f32 %v6911, %v5577
        %v6928 = vadd.f32 %v6912, %v5577
        %v6929 = vadd.f32 %v6913, %v5577
        %v6930 = vadd.f32 %v6914, %v5577
        %v6931 = vadd.f32 %v6915, %v5577
        %v6932 = vadd.f32 %v6916, %v6884
        %v6933 = vadd.f32 %v6917, %v6885
        %v6934 = vadd.f32 %v6918, %v6886
        %v6935 = vadd.f32 %v6919, %v6887
        %v6936 = vadd.f32 %v6920, %v6888
        %v6937 = vadd.f32 %v6921, %v6889
        %v6938 = vadd.f32 %v6922, %v6890
        %v6939 = vadd.f32 %v6923, %v6891
        %v6940 = vadd.f32 %v6924, %v6892
        %v6941 = vadd.f32 %v6925, %v6893
        %v6942 = vadd.f32 %v6926, %v6894
        %v6943 = vadd.f32 %v6927, %v6895
        %v6944 = vadd.f32 %v6928, %v6896
        %v6945 = vadd.f32 %v6929, %v6897
        %v6946 = vadd.f32 %v6930, %v6898
        %v6947 = vadd.f32 %v6931, %v6899
        %v6948 = vmax.f32 %v6932, 0.0
        %v6949 = vmax.f32 %v6933, 0.0
        %v6950 = vmax.f32 %v6934, 0.0
        %v6951 = vmax.f32 %v6935, 0.0
        %v6952 = vmax.f32 %v6936, 0.0
        %v6953 = vmax.f32 %v6937, 0.0
        %v6954 = vmax.f32 %v6938, 0.0
        %v6955 = vmax.f32 %v6939, 0.0
        %v6956 = vmax.f32 %v6940, 0.0
        %v6957 = vmax.f32 %v6941, 0.0
        %v6958 = vmax.f32 %v6942, 0.0
        %v6959 = vmax.f32 %v6943, 0.0
        %v6960 = vmax.f32 %v6944, 0.0
        %v6961 = vmax.f32 %v6945, 0.0
        %v6962 = vmax.f32 %v6946, 0.0
        %v6963 = vmax.f32 %v6947, 0.0
        %6964 = vst [vmem:[%s325 + $0x80] sm:$0xff] %v6948
        %6965 = vst [vmem:[%s325 + $0x88] sm:$0xff] %v6949
        %6966 = vst [vmem:[%s325 + $0x90] sm:$0xff] %v6950
        %6967 = vst [vmem:[%s325 + $0x98] sm:$0xff] %v6951
        %6968 = vst [vmem:[%s325 + $0xa0] sm:$0xff] %v6952
        %6969 = vst [vmem:[%s325 + $0xa8] sm:$0xff] %v6953
        %6970 = vst [vmem:[%s325 + $0xb0] sm:$0xff] %v6954
        %6971 = vst [vmem:[%s325 + $0xb8] sm:$0xff] %v6955
        %6972 = vst [vmem:[%s325 + $0xc0] sm:$0xff] %v6956
        %6973 = vst [vmem:[%s325 + $0xc8] sm:$0xff] %v6957
        %6974 = vst [vmem:[%s325 + $0xd0] sm:$0xff] %v6958
        %6975 = vst [vmem:[%s325 + $0xd8] sm:$0xff] %v6959
        %6976 = vst [vmem:[%s325 + $0xe0] sm:$0xff] %v6960
        %6977 = vst [vmem:[%s325 + $0xe8] sm:$0xff] %v6961
        %6978 = vst [vmem:[%s325 + $0xf0] sm:$0xff] %v6962
        %6979 = vst [vmem:[%s325 + $0xf8] sm:$0xff] %v6963
        %s6980 = sand.u32 %s185, 1
        %s6981 = scalar_lea.sflag [#allocation6], %s6980
        %s6982 = sand.u32 %s185, 1
        %s6983 = smul.addr %s6982, 256
        %s6984 = scalar_lea.vmem [#allocation10], %s6983
        // Predicated region
        $region61: #{tpu_custom_call.1} parent=47 // pred_check
          %p6985 = pneg %p195
        $region62: #{tpu_custom_call.1} parent=47 // pred_check_branch
          %6987 = sbr.rel (%p6985) target = $region64
        $region63: #{tpu_custom_call.1} parent=47 // pred_region
          %s6989 = ssub.s32 4096, 4096
          %6990 = vsyncadd %s6981, %s6989
          %s6991 = smul.addr %s25, 32
          %s6992 = smul.addr %s6991, 128
          %s6993 = scalar_lea.hbm %s7, %s6992
          %s6994 = sshll.u32 %s6984, 4
          %s6995 = int_to_ptr.vmem [resolvable:$true] %s6994
          %7000 = dma.vmem_to_hbm [thread:$0]  %s6995, 4096, %s6993, %s6981, 128, 128, 8
        $region64: #{tpu_custom_call.1} parent=47 // pred_fallthru
          _
      $region48: #{tpu_custom_call.1} parent=5 // pred_fallthru
        _
      %p7001 = scmp.le.s32.totalorder 2, %s20
      // Predicated region
      $region65: #{tpu_custom_call.1} parent=5 // pred_check
        %p7002 = pneg %p7001
      $region66: #{tpu_custom_call.1} parent=5 // pred_check_branch
        %7004 = sbr.rel (%p7002) target = $region68
      $region67: #{tpu_custom_call.1} parent=5 // pred_region
        %s7005 = ssub.s32 %s20, 2
        // Predicated region
        $region69: #{tpu_custom_call.1} parent=67 // pred_check
          %p7006 = pneg %p201
        $region70: #{tpu_custom_call.1} parent=67 // pred_check_branch
          %7008 = sbr.rel (%p7006) target = $region72
        $region71: #{tpu_custom_call.1} parent=67 // pred_region
          %s7009 = sand.u32 %s186, 1
          %s7010 = scalar_lea.sflag [#allocation6], %s7009
          %s7011 = sand.u32 %s186, 1
          %s7012 = smul.addr %s7011, 256
          %s7013 = scalar_lea.vmem [#allocation10], %s7012
          %7014 = dma.done %s7010, 4096
        $region72: #{tpu_custom_call.1} parent=67 // pred_fallthru
          _
      $region68: #{tpu_custom_call.1} parent=5 // pred_fallthru
        _
    $region6: #{tpu_custom_call.1} parent=1 // loop_footer
      %s24 = sadd.s32 1, %s20
    $region7: #{tpu_custom_call.1} parent=1 // loop_footer_branch
      %19 = sbr.rel target = $region3
    $region8: #{tpu_custom_call.1} parent=1 // loop_exit
      _
    %7015 = vsyncpa [#allocation5], 1
    %s7016 = scalar_lea.sflag [#allocation5], 1
    %7017 = vsyncpa %s7016, 1
    %7018 = vsyncpa [#allocation8], 1
    %7019 = vsyncpa [#allocation6], 1
    %s7020 = scalar_lea.sflag [#allocation6], 1
    %7021 = vsyncpa %s7020, 1

</llo_original>
